<compile_context>
chip_gen: v6e
topology: v6e:2x2x1
jax: 0.10.0
libtpu: 0.0.40
codegen_flags: <defaults>
</compile_context>

<pallas_src>
import math

import jax
import jax.numpy as jnp
from jax.experimental import pallas as pl
from jax.experimental.pallas import tpu as pltpu

# ---- module hyper-parameters (LLM side is a small synthetic config) ---------
LIDAR_EMBED_DIM = 384            # hardcoded in MLM_LIDAR.__init__
LIDAR_FFN_DIM = 4 * 384          # 1536
LLM_EMBED_DIM = 256              # llm_backbone.config.hidden_size (synthetic)
LLM_NUM_HEADS = 4                # llm_backbone.config.num_attention_heads
LLM_HEAD_DIM = LLM_EMBED_DIM // LLM_NUM_HEADS
LLM_NUM_LAYERS = 8               # llm_backbone.config.n_layer (synthetic)
BACKWARD_DEPTH = 4
LINKER_TEMPERATURE = 1.0


def _round_up(x, mult):
    return ((x + mult - 1) // mult) * mult


def _gelu_exact(x):
    # PyTorch nn.GELU() default: exact erf-based GELU.
    return 0.5 * x * (1.0 + jax.lax.erf(x * (1.0 / math.sqrt(2.0))))


# -----------------------------------------------------------------------------
# Fused kernel:
#   h  = GELU(x @ [Wk1 | Wv1] + [bk1 | bv1])          (one 384 -> 3072 matmul)
#   yk = h[:, :1536] @ Wk2 + bk2
#   yv = h[:, 1536:] @ Wv2 + bv2
#   for d in range(BACKWARD_DEPTH):
#       kout[d] = yk * cw[d];  vout[d] = yv * cw[d]
# x / W* are bf16 (f32 MXU accumulation), biases & epilogue f32,
# cw = sigmoid(linker / T) lives in SMEM (4 scalars).
# -----------------------------------------------------------------------------
def fused_aligner_kv_kernel(cw_ref, x_ref,
                            w1_ref, b1_ref,
                            kw2_ref, kb2_ref,
                            vw2_ref, vb2_ref,
                            kout_ref, vout_ref):
    x = x_ref[...]                                                  # (tm, 384) bf16

    # fused first layers of both aligners (single MXU sequence, single GELU)
    h = jnp.dot(x, w1_ref[...], preferred_element_type=jnp.float32)  # (tm, 3072) f32
    h = _gelu_exact(h + b1_ref[...])
    h_bf = h.astype(kw2_ref.dtype)

    hk = h_bf[:, :LIDAR_FFN_DIM]                                    # lane-aligned slice
    hv = h_bf[:, LIDAR_FFN_DIM:]

    # second layers
    yk = jnp.dot(hk, kw2_ref[...],
                 preferred_element_type=jnp.float32) + kb2_ref[...]  # (tm, 256) f32
    yv = jnp.dot(hv, vw2_ref[...],
                 preferred_element_type=jnp.float32) + vb2_ref[...]  # (tm, 256) f32

    # epilogue: per-depth scaling, lane-dense (last dim = 256) stores
    for d in range(BACKWARD_DEPTH):                                  # static unroll
        s = cw_ref[d]                                                # SMEM scalar
        kout_ref[d] = (yk * s).astype(kout_ref.dtype)
        vout_ref[d] = (yv * s).astype(vout_ref.dtype)


def fused_aligner_kv(cw, x, w1, b1, kw2, kb2, vw2, vb2, *, max_tile_m=256):
    """cw: (BACKWARD_DEPTH,) f32; x: (M, 384) bf16;
    w1: (384, 3072) bf16 (key|value concat), b1: (1, 3072) f32;
    kw2 / vw2: (1536, 256) bf16, kb2 / vb2: (1, 256) f32.

    Returns (key_scaled, value_scaled), each (BACKWARD_DEPTH, M, LLM_EMBED_DIM) f32.
    """
    m, d_in = x.shape
    ffn2 = w1.shape[1]            # 2 * LIDAR_FFN_DIM
    ffn = kw2.shape[0]
    d_out = kw2.shape[1]

    tile_m = min(max_tile_m, _round_up(m, 8))
    m_pad = _round_up(m, tile_m)
    if m_pad != m:
        x = jnp.pad(x, ((0, m_pad - m), (0, 0)))

    wspec = lambda r, c: pl.BlockSpec((r, c), lambda i: (0, 0))      # resident weights

    kout, vout = pl.pallas_call(
        fused_aligner_kv_kernel,
        out_shape=(
            jax.ShapeDtypeStruct((BACKWARD_DEPTH, m_pad, d_out), jnp.float32),
            jax.ShapeDtypeStruct((BACKWARD_DEPTH, m_pad, d_out), jnp.float32),
        ),
        grid_spec=pltpu.PrefetchScalarGridSpec(
            num_scalar_prefetch=0,
            grid=(m_pad // tile_m,),
            in_specs=[
                pl.BlockSpec(memory_space=pltpu.MemorySpace.SMEM),   # cw (4 scalars)
                pl.BlockSpec((tile_m, d_in), lambda i: (i, 0)),      # x row tile
                wspec(d_in, ffn2), wspec(1, ffn2),                   # fused W1, b1
                wspec(ffn, d_out), wspec(1, d_out),                  # key   W2, b2
                wspec(ffn, d_out), wspec(1, d_out),                  # value W2, b2
            ],
            out_specs=(
                pl.BlockSpec((BACKWARD_DEPTH, tile_m, d_out), lambda i: (0, i, 0)),
                pl.BlockSpec((BACKWARD_DEPTH, tile_m, d_out), lambda i: (0, i, 0)),
            ),
        ),
        compiler_params=pltpu.CompilerParams(
            dimension_semantics=("parallel",),
            # ~4 MB bf16 weights (x2 buffering) + x tile + (tm,3072) f32 hidden
            # + 2x(4,tm,256) f32 output tiles stays well under 32 MiB at tm=256.
            vmem_limit_bytes=32 * 1024 * 1024,
        ),
    )(cw, x, w1, b1, kw2, kb2, vw2, vb2)

    if m_pad != m:
        kout = kout[:, :m, :]
        vout = vout[:, :m, :]
    return kout, vout


# -----------------------------------------------------------------------------
# Forward (trainable path of MLM_LIDAR.forward)
# -----------------------------------------------------------------------------
def mlm_lidar_forward(params, mm_tokens):
    """mm_tokens: (B, S, LIDAR_EMBED_DIM) -- output of the external lidar encoder.

    Returns mm_key_values: list of LLM_NUM_LAYERS (key, value) pairs with
      key   : (B * LLM_NUM_HEADS, LLM_HEAD_DIM, S)
      value : (B * LLM_NUM_HEADS, S, LLM_HEAD_DIM)
    (zeros for the first LLM_NUM_LAYERS - BACKWARD_DEPTH layers).
    """
    b, s, _ = mm_tokens.shape
    x = mm_tokens.reshape(b * s, LIDAR_EMBED_DIM).astype(jnp.bfloat16)

    # 4 scalars; computed once outside the kernel and fed through SMEM.
    cw = jax.nn.sigmoid(params["linker_weights"] * (1.0 / LINKER_TEMPERATURE))

    bf = lambda w: w.astype(jnp.bfloat16)
    # fuse the two first-layer weight matrices along the output dim (384 -> 3072)
    w1_cat = jnp.concatenate([bf(params["k_w1"]), bf(params["v_w1"])], axis=1)
    b1_cat = jnp.concatenate([params["k_b1"], params["v_b1"]], axis=1)

    key_scaled_flat, val_scaled_flat = fused_aligner_kv(
        cw, x,
        w1_cat, b1_cat,
        bf(params["k_w2"]), params["k_b2"],
        bf(params["v_w2"]), params["v_b2"],
    )
    # key_scaled_flat / val_scaled_flat: (DEPTH, B*S, LLM_EMBED_DIM) f32

    # multi-head reshape / key transpose in XLA on the lane-dense scaled tensors
    k = key_scaled_flat.reshape(BACKWARD_DEPTH, b, s, LLM_NUM_HEADS, LLM_HEAD_DIM)
    keys_scaled = k.transpose(0, 1, 3, 4, 2).reshape(
        BACKWARD_DEPTH, b * LLM_NUM_HEADS, LLM_HEAD_DIM, s)
    v = val_scaled_flat.reshape(BACKWARD_DEPTH, b, s, LLM_NUM_HEADS, LLM_HEAD_DIM)
    values_scaled = v.transpose(0, 1, 3, 2, 4).reshape(
        BACKWARD_DEPTH, b * LLM_NUM_HEADS, s, LLM_HEAD_DIM)

    zeros_k = jnp.zeros((b * LLM_NUM_HEADS, LLM_HEAD_DIM, s), jnp.float32)
    zeros_v = jnp.zeros((b * LLM_NUM_HEADS, s, LLM_HEAD_DIM), jnp.float32)
    mm_key_values = [(zeros_k, zeros_v)
                     for _ in range(LLM_NUM_LAYERS - BACKWARD_DEPTH)]
    mm_key_values += [(keys_scaled[i], values_scaled[i])
                      for i in range(BACKWARD_DEPTH)]
    # TODO(synk): outputs = llm_backbone(input_ids, attention_mask, labels,
    #   past_key_values=mm_key_values) is an external frozen HF model; not translated.
    return mm_key_values


# -----------------------------------------------------------------------------
# Pure-JAX reference (f32, HIGHEST precision) for validation
# -----------------------------------------------------------------------------
def reference_forward(params, mm_tokens):
    b, s, _ = mm_tokens.shape
    x = mm_tokens.reshape(b * s, LIDAR_EMBED_DIM)
    hi = jax.lax.Precision.HIGHEST

    def mlp(x, w1, b1, w2, b2):
        h = _gelu_exact(jnp.dot(x, w1, precision=hi) + b1)
        return jnp.dot(h, w2, precision=hi) + b2

    key_flat = mlp(x, params["k_w1"], params["k_b1"], params["k_w2"], params["k_b2"])
    val_flat = mlp(x, params["v_w1"], params["v_b1"], params["v_w2"], params["v_b2"])

    def to_multihead(y):
        return y.reshape(b, s, LLM_NUM_HEADS, LLM_HEAD_DIM).transpose(0, 2, 1, 3)

    mm_key = to_multihead(key_flat).reshape(
        b * LLM_NUM_HEADS, s, LLM_HEAD_DIM).transpose(0, 2, 1)
    mm_value = to_multihead(val_flat).reshape(b * LLM_NUM_HEADS, s, LLM_HEAD_DIM)

    cw = jax.nn.sigmoid(params["linker_weights"] / LINKER_TEMPERATURE)
    out = [(jnp.zeros_like(mm_key), jnp.zeros_like(mm_value))
           for _ in range(LLM_NUM_LAYERS - BACKWARD_DEPTH)]
    out += [(mm_key * cw[i], mm_value * cw[i]) for i in range(BACKWARD_DEPTH)]
    return out


# -----------------------------------------------------------------------------
# Deterministic parameter init (mirrors nn.Linear default init + uniform(-1,1))
# -----------------------------------------------------------------------------
def init_params(key):
    ks = jax.random.split(key, 5)

    def linear(k, fan_in, fan_out):
        kw, kb = jax.random.split(k)
        bound = 1.0 / math.sqrt(fan_in)
        w = jax.random.uniform(kw, (fan_in, fan_out), jnp.float32, -bound, bound)
        b = jax.random.uniform(kb, (1, fan_out), jnp.float32, -bound, bound)
        return w, b

    k_w1, k_b1 = linear(ks[0], LIDAR_EMBED_DIM, LIDAR_FFN_DIM)
    k_w2, k_b2 = linear(ks[1], LIDAR_FFN_DIM, LLM_EMBED_DIM)
    v_w1, v_b1 = linear(ks[2], LIDAR_EMBED_DIM, LIDAR_FFN_DIM)
    v_w2, v_b2 = linear(ks[3], LIDAR_FFN_DIM, LLM_EMBED_DIM)
    linker = jax.random.uniform(ks[4], (BACKWARD_DEPTH,), jnp.float32, -1.0, 1.0)
    return dict(k_w1=k_w1, k_b1=k_b1, k_w2=k_w2, k_b2=k_b2,
                v_w1=v_w1, v_b1=v_b1, v_w2=v_w2, v_b2=v_b2,
                linker_weights=linker)


if __name__ == "__main__":
    root = jax.random.PRNGKey(0)
    kp, kx = jax.random.split(root)
    params = init_params(kp)

    B, S = 2, 32  # small synthetic "lidar token" sequence from the encoder
    # TODO(synk): lidar_encoder(lidar_top) is an external frozen ViT; its output
    #   mm_tokens is stubbed with random data of the correct shape/dtype.
    mm_tokens = jax.random.normal(kx, (B, S, LIDAR_EMBED_DIM), jnp.float32)

    out = jax.block_until_ready(mlm_lidar_forward(params, mm_tokens))
    ref = reference_forward(params, mm_tokens)

    assert len(out) == LLM_NUM_LAYERS
    # bf16 inputs / f32 MXU accumulation vs f32 HIGHEST reference -> loosened tol.
    for (k_p, v_p), (k_r, v_r) in zip(out, ref):
        assert k_p.shape == (B * LLM_NUM_HEADS, LLM_HEAD_DIM, S)
        assert v_p.shape == (B * LLM_NUM_HEADS, S, LLM_HEAD_DIM)
        assert jnp.allclose(k_p, k_r, atol=2e-2, rtol=2e-2)
        assert jnp.allclose(v_p, v_r, atol=2e-2, rtol=2e-2)

    print("KERNEL_OK")
</pallas_src>

<mosaic_0001>
module attributes {stable_mosaic.version = 11 : i64} {
  func.func @fused_aligner_kv_kernel(%arg0: i32, %arg1: memref<4xf32, #tpu.memory_space<smem>>, %arg2: memref<64x384xbf16, #tpu.memory_space<vmem>>, %arg3: memref<384x3072xbf16, #tpu.memory_space<vmem>>, %arg4: memref<1x3072xf32, #tpu.memory_space<vmem>>, %arg5: memref<1536x256xbf16, #tpu.memory_space<vmem>>, %arg6: memref<1x256xf32, #tpu.memory_space<vmem>>, %arg7: memref<1536x256xbf16, #tpu.memory_space<vmem>>, %arg8: memref<1x256xf32, #tpu.memory_space<vmem>>, %arg9: memref<4x64x256xf32, #tpu.memory_space<vmem>>, %arg10: memref<4x64x256xf32, #tpu.memory_space<vmem>>) attributes {dimension_semantics = [#tpu.dimension_semantics<parallel>], iteration_bounds = array<i64: 1>, scalar_prefetch = 0 : i64, scratch_operands = 0 : i64, tpu.core_type = #tpu.core_type<tc>, window_params = [{transform_indices = @transform_0, window_bounds = array<i64: 4>}, {transform_indices = @transform_1, window_bounds = array<i64: 64, 384>}, {pipeline_mode = #tpu.pipeline_mode<synchronous>, transform_indices = @transform_2, window_bounds = array<i64: 384, 3072>}, {pipeline_mode = #tpu.pipeline_mode<synchronous>, transform_indices = @transform_3, window_bounds = array<i64: 1, 3072>}, {pipeline_mode = #tpu.pipeline_mode<synchronous>, transform_indices = @transform_4, window_bounds = array<i64: 1536, 256>}, {pipeline_mode = #tpu.pipeline_mode<synchronous>, transform_indices = @transform_5, window_bounds = array<i64: 1, 256>}, {pipeline_mode = #tpu.pipeline_mode<synchronous>, transform_indices = @transform_6, window_bounds = array<i64: 1536, 256>}, {pipeline_mode = #tpu.pipeline_mode<synchronous>, transform_indices = @transform_7, window_bounds = array<i64: 1, 256>}, {transform_indices = @transform_8, window_bounds = array<i64: 4, 64, 256>}, {transform_indices = @transform_9, window_bounds = array<i64: 4, 64, 256>}]} {
    %c0 = arith.constant 0 : index
    %c0_0 = arith.constant 0 : index
    %0 = vector.load %arg2[%c0, %c0_0] : memref<64x384xbf16, #tpu.memory_space<vmem>>, vector<64x384xbf16>
    %c0_1 = arith.constant 0 : index
    %c0_2 = arith.constant 0 : index
    %1 = vector.load %arg3[%c0_1, %c0_2] : memref<384x3072xbf16, #tpu.memory_space<vmem>>, vector<384x3072xbf16>
    %cst = arith.constant dense<0.000000e+00> : vector<64x3072xf32>
    %2 = tpu.matmul %0, %1, %cst {dimension_numbers = #tpu.dot_dimension_numbers<[1], [0], [0], [1], [0, 0, 1, 1], [], []>} : vector<64x384xbf16>, vector<384x3072xbf16>, vector<64x3072xf32> -> vector<64x3072xf32>
    %c0_3 = arith.constant 0 : index
    %c0_4 = arith.constant 0 : index
    %3 = vector.load %arg4[%c0_3, %c0_4] : memref<1x3072xf32, #tpu.memory_space<vmem>>, vector<1x3072xf32>
    %4 = vector.broadcast %3 : vector<1x3072xf32> to vector<64x3072xf32>
    %5 = arith.addf %2, %4 : vector<64x3072xf32>
    %cst_5 = arith.constant 5.000000e-01 : f32
    %6 = vector.broadcast %cst_5 : f32 to vector<64x3072xf32>
    %7 = arith.mulf %6, %5 : vector<64x3072xf32>
    %cst_6 = arith.constant 0.707106769 : f32
    %8 = vector.broadcast %cst_6 : f32 to vector<64x3072xf32>
    %9 = arith.mulf %5, %8 : vector<64x3072xf32>
    %10 = math.erf %9 : vector<64x3072xf32>
    %cst_7 = arith.constant 1.000000e+00 : f32
    %11 = vector.broadcast %cst_7 : f32 to vector<64x3072xf32>
    %12 = arith.addf %11, %10 : vector<64x3072xf32>
    %13 = arith.mulf %7, %12 : vector<64x3072xf32>
    %14 = arith.truncf %13 : vector<64x3072xf32> to vector<64x3072xbf16>
    %15 = vector.extract_strided_slice %14 {offsets = [0, 0], sizes = [64, 1536], strides = [1, 1]} : vector<64x3072xbf16> to vector<64x1536xbf16>
    %16 = vector.extract_strided_slice %14 {offsets = [0, 1536], sizes = [64, 1536], strides = [1, 1]} : vector<64x3072xbf16> to vector<64x1536xbf16>
    %c0_8 = arith.constant 0 : index
    %c0_9 = arith.constant 0 : index
    %17 = vector.load %arg5[%c0_8, %c0_9] : memref<1536x256xbf16, #tpu.memory_space<vmem>>, vector<1536x256xbf16>
    %cst_10 = arith.constant dense<0.000000e+00> : vector<64x256xf32>
    %18 = tpu.matmul %15, %17, %cst_10 {dimension_numbers = #tpu.dot_dimension_numbers<[1], [0], [0], [1], [0, 0, 1, 1], [], []>} : vector<64x1536xbf16>, vector<1536x256xbf16>, vector<64x256xf32> -> vector<64x256xf32>
    %c0_11 = arith.constant 0 : index
    %c0_12 = arith.constant 0 : index
    %19 = vector.load %arg6[%c0_11, %c0_12] : memref<1x256xf32, #tpu.memory_space<vmem>>, vector<1x256xf32>
    %20 = vector.broadcast %19 : vector<1x256xf32> to vector<64x256xf32>
    %21 = arith.addf %18, %20 : vector<64x256xf32>
    %c0_13 = arith.constant 0 : index
    %c0_14 = arith.constant 0 : index
    %22 = vector.load %arg7[%c0_13, %c0_14] : memref<1536x256xbf16, #tpu.memory_space<vmem>>, vector<1536x256xbf16>
    %cst_15 = arith.constant dense<0.000000e+00> : vector<64x256xf32>
    %23 = tpu.matmul %16, %22, %cst_15 {dimension_numbers = #tpu.dot_dimension_numbers<[1], [0], [0], [1], [0, 0, 1, 1], [], []>} : vector<64x1536xbf16>, vector<1536x256xbf16>, vector<64x256xf32> -> vector<64x256xf32>
    %c0_16 = arith.constant 0 : index
    %c0_17 = arith.constant 0 : index
    %24 = vector.load %arg8[%c0_16, %c0_17] : memref<1x256xf32, #tpu.memory_space<vmem>>, vector<1x256xf32>
    %25 = vector.broadcast %24 : vector<1x256xf32> to vector<64x256xf32>
    %26 = arith.addf %23, %25 : vector<64x256xf32>
    %c0_18 = arith.constant 0 : index
    %27 = memref.load %arg1[%c0_18] : memref<4xf32, #tpu.memory_space<smem>>
    %28 = vector.broadcast %27 : f32 to vector<64x256xf32>
    %29 = arith.mulf %21, %28 : vector<64x256xf32>
    %c0_19 = arith.constant 0 : index
    %c0_20 = arith.constant 0 : index
    %c0_21 = arith.constant 0 : index
    %30 = vector.load %arg9[%c0_19, %c0_20, %c0_21] : memref<4x64x256xf32, #tpu.memory_space<vmem>>, vector<1x64x256xf32>
    %31 = vector.shape_cast %30 : vector<1x64x256xf32> to vector<64x256xf32>
    %32 = vector.shape_cast %29 : vector<64x256xf32> to vector<1x64x256xf32>
    tpu.vector_store %arg9[%c0_19, %c0_20, %c0_21], %32 {strides = array<i32>} : memref<4x64x256xf32, #tpu.memory_space<vmem>>, vector<1x64x256xf32>,
    %33 = vector.broadcast %27 : f32 to vector<64x256xf32>
    %34 = arith.mulf %26, %33 : vector<64x256xf32>
    %c0_22 = arith.constant 0 : index
    %c0_23 = arith.constant 0 : index
    %c0_24 = arith.constant 0 : index
    %35 = vector.load %arg10[%c0_22, %c0_23, %c0_24] : memref<4x64x256xf32, #tpu.memory_space<vmem>>, vector<1x64x256xf32>
    %36 = vector.shape_cast %35 : vector<1x64x256xf32> to vector<64x256xf32>
    %37 = vector.shape_cast %34 : vector<64x256xf32> to vector<1x64x256xf32>
    tpu.vector_store %arg10[%c0_22, %c0_23, %c0_24], %37 {strides = array<i32>} : memref<4x64x256xf32, #tpu.memory_space<vmem>>, vector<1x64x256xf32>,
    %c1 = arith.constant 1 : index
    %38 = memref.load %arg1[%c1] : memref<4xf32, #tpu.memory_space<smem>>
    %39 = vector.broadcast %38 : f32 to vector<64x256xf32>
    %40 = arith.mulf %21, %39 : vector<64x256xf32>
    %c1_25 = arith.constant 1 : index
    %c0_26 = arith.constant 0 : index
    %c0_27 = arith.constant 0 : index
    %41 = vector.load %arg9[%c1_25, %c0_26, %c0_27] : memref<4x64x256xf32, #tpu.memory_space<vmem>>, vector<1x64x256xf32>
    %42 = vector.shape_cast %41 : vector<1x64x256xf32> to vector<64x256xf32>
    %43 = vector.shape_cast %40 : vector<64x256xf32> to vector<1x64x256xf32>
    tpu.vector_store %arg9[%c1_25, %c0_26, %c0_27], %43 {strides = array<i32>} : memref<4x64x256xf32, #tpu.memory_space<vmem>>, vector<1x64x256xf32>,
    %44 = vector.broadcast %38 : f32 to vector<64x256xf32>
    %45 = arith.mulf %26, %44 : vector<64x256xf32>
    %c1_28 = arith.constant 1 : index
    %c0_29 = arith.constant 0 : index
    %c0_30 = arith.constant 0 : index
    %46 = vector.load %arg10[%c1_28, %c0_29, %c0_30] : memref<4x64x256xf32, #tpu.memory_space<vmem>>, vector<1x64x256xf32>
    %47 = vector.shape_cast %46 : vector<1x64x256xf32> to vector<64x256xf32>
    %48 = vector.shape_cast %45 : vector<64x256xf32> to vector<1x64x256xf32>
    tpu.vector_store %arg10[%c1_28, %c0_29, %c0_30], %48 {strides = array<i32>} : memref<4x64x256xf32, #tpu.memory_space<vmem>>, vector<1x64x256xf32>,
    %c2 = arith.constant 2 : index
    %49 = memref.load %arg1[%c2] : memref<4xf32, #tpu.memory_space<smem>>
    %50 = vector.broadcast %49 : f32 to vector<64x256xf32>
    %51 = arith.mulf %21, %50 : vector<64x256xf32>
    %c2_31 = arith.constant 2 : index
    %c0_32 = arith.constant 0 : index
    %c0_33 = arith.constant 0 : index
    %52 = vector.load %arg9[%c2_31, %c0_32, %c0_33] : memref<4x64x256xf32, #tpu.memory_space<vmem>>, vector<1x64x256xf32>
    %53 = vector.shape_cast %52 : vector<1x64x256xf32> to vector<64x256xf32>
    %54 = vector.shape_cast %51 : vector<64x256xf32> to vector<1x64x256xf32>
    tpu.vector_store %arg9[%c2_31, %c0_32, %c0_33], %54 {strides = array<i32>} : memref<4x64x256xf32, #tpu.memory_space<vmem>>, vector<1x64x256xf32>,
    %55 = vector.broadcast %49 : f32 to vector<64x256xf32>
    %56 = arith.mulf %26, %55 : vector<64x256xf32>
    %c2_34 = arith.constant 2 : index
    %c0_35 = arith.constant 0 : index
    %c0_36 = arith.constant 0 : index
    %57 = vector.load %arg10[%c2_34, %c0_35, %c0_36] : memref<4x64x256xf32, #tpu.memory_space<vmem>>, vector<1x64x256xf32>
    %58 = vector.shape_cast %57 : vector<1x64x256xf32> to vector<64x256xf32>
    %59 = vector.shape_cast %56 : vector<64x256xf32> to vector<1x64x256xf32>
    tpu.vector_store %arg10[%c2_34, %c0_35, %c0_36], %59 {strides = array<i32>} : memref<4x64x256xf32, #tpu.memory_space<vmem>>, vector<1x64x256xf32>,
    %c3 = arith.constant 3 : index
    %60 = memref.load %arg1[%c3] : memref<4xf32, #tpu.memory_space<smem>>
    %61 = vector.broadcast %60 : f32 to vector<64x256xf32>
    %62 = arith.mulf %21, %61 : vector<64x256xf32>
    %c3_37 = arith.constant 3 : index
    %c0_38 = arith.constant 0 : index
    %c0_39 = arith.constant 0 : index
    %63 = vector.load %arg9[%c3_37, %c0_38, %c0_39] : memref<4x64x256xf32, #tpu.memory_space<vmem>>, vector<1x64x256xf32>
    %64 = vector.shape_cast %63 : vector<1x64x256xf32> to vector<64x256xf32>
    %65 = vector.shape_cast %62 : vector<64x256xf32> to vector<1x64x256xf32>
    tpu.vector_store %arg9[%c3_37, %c0_38, %c0_39], %65 {strides = array<i32>} : memref<4x64x256xf32, #tpu.memory_space<vmem>>, vector<1x64x256xf32>,
    %66 = vector.broadcast %60 : f32 to vector<64x256xf32>
    %67 = arith.mulf %26, %66 : vector<64x256xf32>
    %c3_40 = arith.constant 3 : index
    %c0_41 = arith.constant 0 : index
    %c0_42 = arith.constant 0 : index
    %68 = vector.load %arg10[%c3_40, %c0_41, %c0_42] : memref<4x64x256xf32, #tpu.memory_space<vmem>>, vector<1x64x256xf32>
    %69 = vector.shape_cast %68 : vector<1x64x256xf32> to vector<64x256xf32>
    %70 = vector.shape_cast %67 : vector<64x256xf32> to vector<1x64x256xf32>
    tpu.vector_store %arg10[%c3_40, %c0_41, %c0_42], %70 {strides = array<i32>} : memref<4x64x256xf32, #tpu.memory_space<vmem>>, vector<1x64x256xf32>,
    return
  }
  func.func @transform_0(%arg0: i32) -> i32 {
    %c0_i32 = arith.constant 0 : i32
    %c0_i32_0 = arith.constant 0 : i32
    return %c0_i32 : i32
  }
  func.func @transform_1(%arg0: i32) -> (i32, i32) {
    %c0_i32 = arith.constant 0 : i32
    %c0_i32_0 = arith.constant 0 : i32
    return %arg0, %c0_i32 : i32, i32
  }
  func.func @transform_2(%arg0: i32) -> (i32, i32) {
    %c0_i32 = arith.constant 0 : i32
    %c0_i32_0 = arith.constant 0 : i32
    %c0_i32_1 = arith.constant 0 : i32
    return %c0_i32, %c0_i32_0 : i32, i32
  }
  func.func @transform_3(%arg0: i32) -> (i32, i32) {
    %c0_i32 = arith.constant 0 : i32
    %c0_i32_0 = arith.constant 0 : i32
    %c0_i32_1 = arith.constant 0 : i32
    return %c0_i32, %c0_i32_0 : i32, i32
  }
  func.func @transform_4(%arg0: i32) -> (i32, i32) {
    %c0_i32 = arith.constant 0 : i32
    %c0_i32_0 = arith.constant 0 : i32
    %c0_i32_1 = arith.constant 0 : i32
    return %c0_i32, %c0_i32_0 : i32, i32
  }
  func.func @transform_5(%arg0: i32) -> (i32, i32) {
    %c0_i32 = arith.constant 0 : i32
    %c0_i32_0 = arith.constant 0 : i32
    %c0_i32_1 = arith.constant 0 : i32
    return %c0_i32, %c0_i32_0 : i32, i32
  }
  func.func @transform_6(%arg0: i32) -> (i32, i32) {
    %c0_i32 = arith.constant 0 : i32
    %c0_i32_0 = arith.constant 0 : i32
    %c0_i32_1 = arith.constant 0 : i32
    return %c0_i32, %c0_i32_0 : i32, i32
  }
  func.func @transform_7(%arg0: i32) -> (i32, i32) {
    %c0_i32 = arith.constant 0 : i32
    %c0_i32_0 = arith.constant 0 : i32
    %c0_i32_1 = arith.constant 0 : i32
    return %c0_i32, %c0_i32_0 : i32, i32
  }
  func.func @transform_8(%arg0: i32) -> (i32, i32, i32) {
    %c0_i32 = arith.constant 0 : i32
    %c0_i32_0 = arith.constant 0 : i32
    %c0_i32_1 = arith.constant 0 : i32
    return %c0_i32, %arg0, %c0_i32_0 : i32, i32, i32
  }
  func.func @transform_9(%arg0: i32) -> (i32, i32, i32) {
    %c0_i32 = arith.constant 0 : i32
    %c0_i32_0 = arith.constant 0 : i32
    %c0_i32_1 = arith.constant 0 : i32
    return %c0_i32, %arg0, %c0_i32_0 : i32, i32, i32
  }
}

</mosaic_0001>

<llo_original>
// kernel: tpu_custom_call.1
$region0: #{tpu_custom_call.1}
  #allocation0 [shape = 'u32[]', space=smem, size = 0x4, offset = 0x4, fixed_abs, tag = 'smem constant byte address 0x4 - core index']
  #allocation1 [shape = 'u32[144,128]{1,0:T(1,128)}', space=vmem, size = 0x12000, scoped, tag = 'internal scratch']
  %s0 = inlined_call_operand.hbm [shape: f32[4], index: 0, kind: input, shape index: {}]
  %s1 = inlined_call_operand.hbm [shape: bf16[64,384], index: 1, kind: input, shape index: {}]
  %s2 = inlined_call_operand.hbm [shape: bf16[384,3072], index: 2, kind: input, shape index: {}]
  %s3 = inlined_call_operand.hbm [shape: f32[1,3072], index: 3, kind: input, shape index: {}]
  %s4 = inlined_call_operand.hbm [shape: bf16[1536,256], index: 4, kind: input, shape index: {}]
  %s5 = inlined_call_operand.hbm [shape: f32[1,256], index: 5, kind: input, shape index: {}]
  %s6 = inlined_call_operand.hbm [shape: bf16[1536,256], index: 6, kind: input, shape index: {}]
  %s7 = inlined_call_operand.hbm [shape: f32[1,256], index: 7, kind: input, shape index: {}]
  %s8 = inlined_call_operand.hbm [shape: f32[4,64,256], index: 8, kind: output, shape index: {0}]
  %s9 = inlined_call_operand.hbm [shape: f32[4,64,256], index: 9, kind: output, shape index: {1}]
  %10 = xla_tuple %s8, %s9
  %s11 = sld [smem:[#allocation0]]
  $region82: #{tpu_custom_call.1} parent=0
    _
  %s13 = ssub.s32 1, %s11
  %s14 = scalar_select 0, %s13, %s11
  $region1: #{tpu_custom_call.1} parent=0
    #allocation2 [shape = 'u8[512]{0}', space=smem, size = 0x200, scoped, tag = 'input window, operand 0, single buffered']
    #allocation3 [shape = 's32[1]{0}', space=sflag, size = 0x4, scoped, tag = 'scoped memory for tpu_custom_call.1']
    #allocation4 [shape = 's32[1]{0}', space=sflag, size = 0x4, scoped, tag = 'scoped memory for tpu_custom_call.1']
    #allocation5 [shape = 's32[1]{0}', space=sflag, size = 0x4, scoped, tag = 'scoped memory for tpu_custom_call.1']
    #allocation6 [shape = 'u8[49152]{0}', space=vmem, size = 0xc000, scoped, tag = 'input window, operand 1, single buffered']
    #allocation7 [shape = 'u8[2359296]{0}', space=vmem, size = 0x240000, scoped, tag = 'input window, operand 2, single buffered']
    #allocation8 [shape = 's32[1]{0}', space=sflag, size = 0x4, scoped, tag = 'scoped memory for tpu_custom_call.1']
    #allocation9 [shape = 'u8[12288]{0}', space=vmem, size = 0x3000, scoped, tag = 'input window, operand 3, single buffered']
    #allocation10 [shape = 'u8[786432]{0}', space=vmem, size = 0xc0000, scoped, tag = 'input window, operand 4, single buffered']
    #allocation11 [shape = 's32[1]{0}', space=sflag, size = 0x4, scoped, tag = 'scoped memory for tpu_custom_call.1']
    #allocation12 [shape = 'u8[1024]{0}', space=vmem, size = 0x400, scoped, tag = 'input window, operand 5, single buffered']
    #allocation13 [shape = 'u8[786432]{0}', space=vmem, size = 0xc0000, scoped, tag = 'input window, operand 6, single buffered']
    #allocation14 [shape = 's32[1]{0}', space=sflag, size = 0x4, scoped, tag = 'scoped memory for tpu_custom_call.1']
    #allocation15 [shape = 'u8[1024]{0}', space=vmem, size = 0x400, scoped, tag = 'input window, operand 7, single buffered']
    #allocation16 [shape = 'u8[262144]{0}', space=vmem, size = 0x40000, scoped, tag = 'output window, operand 0, single buffered']
    #allocation17 [shape = 'u8[262144]{0}', space=vmem, size = 0x40000, scoped, tag = 'output window, operand 1, single buffered']
    #allocation18 [shape = 's32[1]{0}', space=sflag, size = 0x4, scoped, tag = 'scoped memory for tpu_custom_call.1']
    %15 = vsyncpa [#allocation5], 0
    %16 = vsyncpa [#allocation3], 0
    %17 = vsyncpa [#allocation8], 0
    %18 = vsyncpa [#allocation11], 0
    %19 = vsyncpa [#allocation14], 0
    %20 = vsyncpa [#allocation4], 0
    %21 = vsyncpa [#allocation18], 0
    // Predicated region
    $region2: #{tpu_custom_call.1} parent=1 // pred_check
      _
    $region3: #{tpu_custom_call.1} parent=1 // pred_check_branch
      %23 = sbr.rel (0) target = $region5
    $region4: #{tpu_custom_call.1} parent=1 // pred_region
      %s25 = ssub.s32 16, 16
      %26 = vsyncadd [#allocation5], %s25
      %29 = dma.hbm_to_smem %s0, 16, [#allocation2], [#allocation5]
    $region5: #{tpu_custom_call.1} parent=1 // pred_fallthru
      _
    // Predicated region
    $region6: #{tpu_custom_call.1} parent=1 // pred_check
      _
    $region7: #{tpu_custom_call.1} parent=1 // pred_check_branch
      %31 = sbr.rel (0) target = $region9
    $region8: #{tpu_custom_call.1} parent=1 // pred_region
      %s33 = ssub.s32 1536, 1536
      %34 = vsyncadd [#allocation3], %s33
      %s35 = sshll.u32 [#allocation6], 4
      %s36 = int_to_ptr.vmem [resolvable:$true] %s35
      %41 = dma.hbm_to_vmem [thread:$0]  %s1, 1536, %s36, [#allocation3], 192, 192, 12
    $region9: #{tpu_custom_call.1} parent=1 // pred_fallthru
      _
    // Predicated region
    $region10: #{tpu_custom_call.1} parent=1 // pred_check
      _
    $region11: #{tpu_custom_call.1} parent=1 // pred_check_branch
      %43 = sbr.rel (0) target = $region13
    $region12: #{tpu_custom_call.1} parent=1 // pred_region
      %s45 = ssub.s32 73728, 73728
      %46 = vsyncadd [#allocation8], %s45
      %s47 = sshll.u32 [#allocation7], 4
      %s48 = int_to_ptr.vmem [resolvable:$true] %s47
      %53 = dma.hbm_to_vmem [thread:$0]  %s2, 73728, %s48, [#allocation8], 1536, 1536, 96
    $region13: #{tpu_custom_call.1} parent=1 // pred_fallthru
      _
    // Predicated region
    $region14: #{tpu_custom_call.1} parent=1 // pred_check
      _
    $region15: #{tpu_custom_call.1} parent=1 // pred_check_branch
      %55 = sbr.rel (0) target = $region17
    $region16: #{tpu_custom_call.1} parent=1 // pred_region
      %s57 = ssub.s32 384, 384
      %58 = vsyncadd [#allocation8], %s57
      %s60 = sshll.u32 [#allocation9], 4
      %s61 = int_to_ptr.vmem [resolvable:$true] %s60
      %63 = dma.hbm_to_vmem [thread:$0]  %s3, 384, %s61, [#allocation8]
    $region17: #{tpu_custom_call.1} parent=1 // pred_fallthru
      _
    // Predicated region
    $region18: #{tpu_custom_call.1} parent=1 // pred_check
      _
    $region19: #{tpu_custom_call.1} parent=1 // pred_check_branch
      %65 = sbr.rel (0) target = $region21
    $region20: #{tpu_custom_call.1} parent=1 // pred_region
      %s67 = ssub.s32 24576, 24576
      %68 = vsyncadd [#allocation11], %s67
      %s69 = sshll.u32 [#allocation10], 4
      %s70 = int_to_ptr.vmem [resolvable:$true] %s69
      %75 = dma.hbm_to_vmem [thread:$0]  %s4, 24576, %s70, [#allocation11], 128, 128, 8
    $region21: #{tpu_custom_call.1} parent=1 // pred_fallthru
      _
    // Predicated region
    $region22: #{tpu_custom_call.1} parent=1 // pred_check
      _
    $region23: #{tpu_custom_call.1} parent=1 // pred_check_branch
      %77 = sbr.rel (0) target = $region25
    $region24: #{tpu_custom_call.1} parent=1 // pred_region
      %s79 = ssub.s32 32, 32
      %80 = vsyncadd [#allocation11], %s79
      %s82 = sshll.u32 [#allocation12], 4
      %s83 = int_to_ptr.vmem [resolvable:$true] %s82
      %85 = dma.hbm_to_vmem [thread:$0]  %s5, 32, %s83, [#allocation11]
    $region25: #{tpu_custom_call.1} parent=1 // pred_fallthru
      _
    // Predicated region
    $region26: #{tpu_custom_call.1} parent=1 // pred_check
      _
    $region27: #{tpu_custom_call.1} parent=1 // pred_check_branch
      %87 = sbr.rel (0) target = $region29
    $region28: #{tpu_custom_call.1} parent=1 // pred_region
      %s89 = ssub.s32 24576, 24576
      %90 = vsyncadd [#allocation14], %s89
      %s91 = sshll.u32 [#allocation13], 4
      %s92 = int_to_ptr.vmem [resolvable:$true] %s91
      %97 = dma.hbm_to_vmem [thread:$0]  %s6, 24576, %s92, [#allocation14], 128, 128, 8
    $region29: #{tpu_custom_call.1} parent=1 // pred_fallthru
      _
    // Predicated region
    $region30: #{tpu_custom_call.1} parent=1 // pred_check
      _
    $region31: #{tpu_custom_call.1} parent=1 // pred_check_branch
      %99 = sbr.rel (0) target = $region33
    $region32: #{tpu_custom_call.1} parent=1 // pred_region
      %s101 = ssub.s32 32, 32
      %102 = vsyncadd [#allocation14], %s101
      %s104 = sshll.u32 [#allocation15], 4
      %s105 = int_to_ptr.vmem [resolvable:$true] %s104
      %107 = dma.hbm_to_vmem [thread:$0]  %s7, 32, %s105, [#allocation14]
    $region33: #{tpu_custom_call.1} parent=1 // pred_fallthru
      _
    // Predicated region
    $region34: #{tpu_custom_call.1} parent=1 // pred_check
      _
    $region35: #{tpu_custom_call.1} parent=1 // pred_check_branch
      %109 = sbr.rel (0) target = $region37
    $region36: #{tpu_custom_call.1} parent=1 // pred_region
      %110 = dma.done [#allocation5], 16
    $region37: #{tpu_custom_call.1} parent=1 // pred_fallthru
      _
    // Predicated region
    $region38: #{tpu_custom_call.1} parent=1 // pred_check
      _
    $region39: #{tpu_custom_call.1} parent=1 // pred_check_branch
      %112 = sbr.rel (0) target = $region41
    $region40: #{tpu_custom_call.1} parent=1 // pred_region
      %113 = dma.done [#allocation3], 1536
    $region41: #{tpu_custom_call.1} parent=1 // pred_fallthru
      _
    // Predicated region
    $region42: #{tpu_custom_call.1} parent=1 // pred_check
      _
    $region43: #{tpu_custom_call.1} parent=1 // pred_check_branch
      %115 = sbr.rel (0) target = $region45
    $region44: #{tpu_custom_call.1} parent=1 // pred_region
      %116 = dma.done [#allocation8], 73728
    $region45: #{tpu_custom_call.1} parent=1 // pred_fallthru
      _
    // Predicated region
    $region46: #{tpu_custom_call.1} parent=1 // pred_check
      _
    $region47: #{tpu_custom_call.1} parent=1 // pred_check_branch
      %118 = sbr.rel (0) target = $region49
    $region48: #{tpu_custom_call.1} parent=1 // pred_region
      %119 = dma.done [#allocation8], 384
    $region49: #{tpu_custom_call.1} parent=1 // pred_fallthru
      _
    // Predicated region
    $region50: #{tpu_custom_call.1} parent=1 // pred_check
      _
    $region51: #{tpu_custom_call.1} parent=1 // pred_check_branch
      %121 = sbr.rel (0) target = $region53
    $region52: #{tpu_custom_call.1} parent=1 // pred_region
      %122 = dma.done [#allocation11], 24576
    $region53: #{tpu_custom_call.1} parent=1 // pred_fallthru
      _
    // Predicated region
    $region54: #{tpu_custom_call.1} parent=1 // pred_check
      _
    $region55: #{tpu_custom_call.1} parent=1 // pred_check_branch
      %124 = sbr.rel (0) target = $region57
    $region56: #{tpu_custom_call.1} parent=1 // pred_region
      %125 = dma.done [#allocation11], 32
    $region57: #{tpu_custom_call.1} parent=1 // pred_fallthru
      _
    // Predicated region
    $region58: #{tpu_custom_call.1} parent=1 // pred_check
      _
    $region59: #{tpu_custom_call.1} parent=1 // pred_check_branch
      %127 = sbr.rel (0) target = $region61
    $region60: #{tpu_custom_call.1} parent=1 // pred_region
      %128 = dma.done [#allocation14], 24576
    $region61: #{tpu_custom_call.1} parent=1 // pred_fallthru
      _
    // Predicated region
    $region62: #{tpu_custom_call.1} parent=1 // pred_check
      _
    $region63: #{tpu_custom_call.1} parent=1 // pred_check_branch
      %130 = sbr.rel (0) target = $region65
    $region64: #{tpu_custom_call.1} parent=1 // pred_region
      %131 = dma.done [#allocation14], 32
    $region65: #{tpu_custom_call.1} parent=1 // pred_fallthru
      _
    %132 = sfence
    %v134 = vld [vmem:[#allocation6] sm:$0xff]
    %v135 = vld [vmem:[#allocation6 + $0x8] sm:$0xf]
    %v136 = vld [vmem:[#allocation6 + $0xc] sm:$0xff]
    %v137 = vld [vmem:[#allocation6 + $0x14] sm:$0xf]
    %v138 = vld [vmem:[#allocation6 + $0x18] sm:$0xff]
    %v139 = vld [vmem:[#allocation6 + $0x20] sm:$0xf]
    %v140 = vld [vmem:[#allocation6 + $0x24] sm:$0xff]
    %v141 = vld [vmem:[#allocation6 + $0x2c] sm:$0xf]
    %v142 = vld [vmem:[#allocation6 + $0x30] sm:$0xff]
    %v143 = vld [vmem:[#allocation6 + $0x38] sm:$0xf]
    %v144 = vld [vmem:[#allocation6 + $0x3c] sm:$0xff]
    %v145 = vld [vmem:[#allocation6 + $0x44] sm:$0xf]
    %v146 = vld [vmem:[#allocation6 + $0x48] sm:$0xff]
    %v147 = vld [vmem:[#allocation6 + $0x50] sm:$0xf]
    %v148 = vld [vmem:[#allocation6 + $0x54] sm:$0xff]
    %v149 = vld [vmem:[#allocation6 + $0x5c] sm:$0xf]
    %v150 = vld [vmem:[#allocation7] sm:$0xff]
    %v151 = vld [vmem:[#allocation7 + $0x8] sm:$0xff]
    %v152 = vld [vmem:[#allocation7 + $0x10] sm:$0xff]
    %v153 = vld [vmem:[#allocation7 + $0x18] sm:$0xff]
    %v154 = vld [vmem:[#allocation7 + $0x20] sm:$0xff]
    %v155 = vld [vmem:[#allocation7 + $0x28] sm:$0xff]
    %v156 = vld [vmem:[#allocation7 + $0x30] sm:$0xff]
    %v157 = vld [vmem:[#allocation7 + $0x38] sm:$0xff]
    %v158 = vld [vmem:[#allocation7 + $0x40] sm:$0xff]
    %v159 = vld [vmem:[#allocation7 + $0x48] sm:$0xff]
    %v160 = vld [vmem:[#allocation7 + $0x50] sm:$0xff]
    %v161 = vld [vmem:[#allocation7 + $0x58] sm:$0xff]
    %v162 = vld [vmem:[#allocation7 + $0x60] sm:$0xff]
    %v163 = vld [vmem:[#allocation7 + $0x68] sm:$0xff]
    %v164 = vld [vmem:[#allocation7 + $0x70] sm:$0xff]
    %v165 = vld [vmem:[#allocation7 + $0x78] sm:$0xff]
    %v166 = vld [vmem:[#allocation7 + $0x80] sm:$0xff]
    %v167 = vld [vmem:[#allocation7 + $0x88] sm:$0xff]
    %v168 = vld [vmem:[#allocation7 + $0x90] sm:$0xff]
    %v169 = vld [vmem:[#allocation7 + $0x98] sm:$0xff]
    %v170 = vld [vmem:[#allocation7 + $0xa0] sm:$0xff]
    %v171 = vld [vmem:[#allocation7 + $0xa8] sm:$0xff]
    %v172 = vld [vmem:[#allocation7 + $0xb0] sm:$0xff]
    %v173 = vld [vmem:[#allocation7 + $0xb8] sm:$0xff]
    %v174 = vld [vmem:[#allocation7 + $0xc0] sm:$0xff]
    %v175 = vld [vmem:[#allocation7 + $0xc8] sm:$0xff]
    %v176 = vld [vmem:[#allocation7 + $0xd0] sm:$0xff]
    %v177 = vld [vmem:[#allocation7 + $0xd8] sm:$0xff]
    %v178 = vld [vmem:[#allocation7 + $0xe0] sm:$0xff]
    %v179 = vld [vmem:[#allocation7 + $0xe8] sm:$0xff]
    %v180 = vld [vmem:[#allocation7 + $0xf0] sm:$0xff]
    %v181 = vld [vmem:[#allocation7 + $0xf8] sm:$0xff]
    %v182 = vld [vmem:[#allocation7 + $0x100] sm:$0xff]
    %v183 = vld [vmem:[#allocation7 + $0x108] sm:$0xff]
    %v184 = vld [vmem:[#allocation7 + $0x110] sm:$0xff]
    %v185 = vld [vmem:[#allocation7 + $0x118] sm:$0xff]
    %v186 = vld [vmem:[#allocation7 + $0x120] sm:$0xff]
    %v187 = vld [vmem:[#allocation7 + $0x128] sm:$0xff]
    %v188 = vld [vmem:[#allocation7 + $0x130] sm:$0xff]
    %v189 = vld [vmem:[#allocation7 + $0x138] sm:$0xff]
    %v190 = vld [vmem:[#allocation7 + $0x140] sm:$0xff]
    %v191 = vld [vmem:[#allocation7 + $0x148] sm:$0xff]
    %v192 = vld [vmem:[#allocation7 + $0x150] sm:$0xff]
    %v193 = vld [vmem:[#allocation7 + $0x158] sm:$0xff]
    %v194 = vld [vmem:[#allocation7 + $0x160] sm:$0xff]
    %v195 = vld [vmem:[#allocation7 + $0x168] sm:$0xff]
    %v196 = vld [vmem:[#allocation7 + $0x170] sm:$0xff]
    %v197 = vld [vmem:[#allocation7 + $0x178] sm:$0xff]
    %v198 = vld [vmem:[#allocation7 + $0x180] sm:$0xff]
    %v199 = vld [vmem:[#allocation7 + $0x188] sm:$0xff]
    %v200 = vld [vmem:[#allocation7 + $0x190] sm:$0xff]
    %v201 = vld [vmem:[#allocation7 + $0x198] sm:$0xff]
    %v202 = vld [vmem:[#allocation7 + $0x1a0] sm:$0xff]
    %v203 = vld [vmem:[#allocation7 + $0x1a8] sm:$0xff]
    %v204 = vld [vmem:[#allocation7 + $0x1b0] sm:$0xff]
    %v205 = vld [vmem:[#allocation7 + $0x1b8] sm:$0xff]
    %v206 = vld [vmem:[#allocation7 + $0x1c0] sm:$0xff]
    %v207 = vld [vmem:[#allocation7 + $0x1c8] sm:$0xff]
    %v208 = vld [vmem:[#allocation7 + $0x1d0] sm:$0xff]
    %v209 = vld [vmem:[#allocation7 + $0x1d8] sm:$0xff]
    %v210 = vld [vmem:[#allocation7 + $0x1e0] sm:$0xff]
    %v211 = vld [vmem:[#allocation7 + $0x1e8] sm:$0xff]
    %v212 = vld [vmem:[#allocation7 + $0x1f0] sm:$0xff]
    %v213 = vld [vmem:[#allocation7 + $0x1f8] sm:$0xff]
    %v214 = vld [vmem:[#allocation7 + $0x200] sm:$0xff]
    %v215 = vld [vmem:[#allocation7 + $0x208] sm:$0xff]
    %v216 = vld [vmem:[#allocation7 + $0x210] sm:$0xff]
    %v217 = vld [vmem:[#allocation7 + $0x218] sm:$0xff]
    %v218 = vld [vmem:[#allocation7 + $0x220] sm:$0xff]
    %v219 = vld [vmem:[#allocation7 + $0x228] sm:$0xff]
    %v220 = vld [vmem:[#allocation7 + $0x230] sm:$0xff]
    %v221 = vld [vmem:[#allocation7 + $0x238] sm:$0xff]
    %v222 = vld [vmem:[#allocation7 + $0x240] sm:$0xff]
    %v223 = vld [vmem:[#allocation7 + $0x248] sm:$0xff]
    %v224 = vld [vmem:[#allocation7 + $0x250] sm:$0xff]
    %v225 = vld [vmem:[#allocation7 + $0x258] sm:$0xff]
    %v226 = vld [vmem:[#allocation7 + $0x260] sm:$0xff]
    %v227 = vld [vmem:[#allocation7 + $0x268] sm:$0xff]
    %v228 = vld [vmem:[#allocation7 + $0x270] sm:$0xff]
    %v229 = vld [vmem:[#allocation7 + $0x278] sm:$0xff]
    %v230 = vld [vmem:[#allocation7 + $0x280] sm:$0xff]
    %v231 = vld [vmem:[#allocation7 + $0x288] sm:$0xff]
    %v232 = vld [vmem:[#allocation7 + $0x290] sm:$0xff]
    %v233 = vld [vmem:[#allocation7 + $0x298] sm:$0xff]
    %v234 = vld [vmem:[#allocation7 + $0x2a0] sm:$0xff]
    %v235 = vld [vmem:[#allocation7 + $0x2a8] sm:$0xff]
    %v236 = vld [vmem:[#allocation7 + $0x2b0] sm:$0xff]
    %v237 = vld [vmem:[#allocation7 + $0x2b8] sm:$0xff]
    %v238 = vld [vmem:[#allocation7 + $0x2c0] sm:$0xff]
    %v239 = vld [vmem:[#allocation7 + $0x2c8] sm:$0xff]
    %v240 = vld [vmem:[#allocation7 + $0x2d0] sm:$0xff]
    %v241 = vld [vmem:[#allocation7 + $0x2d8] sm:$0xff]
    %v242 = vld [vmem:[#allocation7 + $0x2e0] sm:$0xff]
    %v243 = vld [vmem:[#allocation7 + $0x2e8] sm:$0xff]
    %v244 = vld [vmem:[#allocation7 + $0x2f0] sm:$0xff]
    %v245 = vld [vmem:[#allocation7 + $0x2f8] sm:$0xff]
    %v246 = vld [vmem:[#allocation7 + $0x300] sm:$0xff]
    %v247 = vld [vmem:[#allocation7 + $0x308] sm:$0xff]
    %v248 = vld [vmem:[#allocation7 + $0x310] sm:$0xff]
    %v249 = vld [vmem:[#allocation7 + $0x318] sm:$0xff]
    %v250 = vld [vmem:[#allocation7 + $0x320] sm:$0xff]
    %v251 = vld [vmem:[#allocation7 + $0x328] sm:$0xff]
    %v252 = vld [vmem:[#allocation7 + $0x330] sm:$0xff]
    %v253 = vld [vmem:[#allocation7 + $0x338] sm:$0xff]
    %v254 = vld [vmem:[#allocation7 + $0x340] sm:$0xff]
    %v255 = vld [vmem:[#allocation7 + $0x348] sm:$0xff]
    %v256 = vld [vmem:[#allocation7 + $0x350] sm:$0xff]
    %v257 = vld [vmem:[#allocation7 + $0x358] sm:$0xff]
    %v258 = vld [vmem:[#allocation7 + $0x360] sm:$0xff]
    %v259 = vld [vmem:[#allocation7 + $0x368] sm:$0xff]
    %v260 = vld [vmem:[#allocation7 + $0x370] sm:$0xff]
    %v261 = vld [vmem:[#allocation7 + $0x378] sm:$0xff]
    %v262 = vld [vmem:[#allocation7 + $0x380] sm:$0xff]
    %v263 = vld [vmem:[#allocation7 + $0x388] sm:$0xff]
    %v264 = vld [vmem:[#allocation7 + $0x390] sm:$0xff]
    %v265 = vld [vmem:[#allocation7 + $0x398] sm:$0xff]
    %v266 = vld [vmem:[#allocation7 + $0x3a0] sm:$0xff]
    %v267 = vld [vmem:[#allocation7 + $0x3a8] sm:$0xff]
    %v268 = vld [vmem:[#allocation7 + $0x3b0] sm:$0xff]
    %v269 = vld [vmem:[#allocation7 + $0x3b8] sm:$0xff]
    %v270 = vld [vmem:[#allocation7 + $0x3c0] sm:$0xff]
    %v271 = vld [vmem:[#allocation7 + $0x3c8] sm:$0xff]
    %v272 = vld [vmem:[#allocation7 + $0x3d0] sm:$0xff]
    %v273 = vld [vmem:[#allocation7 + $0x3d8] sm:$0xff]
    %v274 = vld [vmem:[#allocation7 + $0x3e0] sm:$0xff]
    %v275 = vld [vmem:[#allocation7 + $0x3e8] sm:$0xff]
    %v276 = vld [vmem:[#allocation7 + $0x3f0] sm:$0xff]
    %v277 = vld [vmem:[#allocation7 + $0x3f8] sm:$0xff]
    %v278 = vld [vmem:[#allocation7 + $0x400] sm:$0xff]
    %v279 = vld [vmem:[#allocation7 + $0x408] sm:$0xff]
    %v280 = vld [vmem:[#allocation7 + $0x410] sm:$0xff]
    %v281 = vld [vmem:[#allocation7 + $0x418] sm:$0xff]
    %v282 = vld [vmem:[#allocation7 + $0x420] sm:$0xff]
    %v283 = vld [vmem:[#allocation7 + $0x428] sm:$0xff]
    %v284 = vld [vmem:[#allocation7 + $0x430] sm:$0xff]
    %v285 = vld [vmem:[#allocation7 + $0x438] sm:$0xff]
    %v286 = vld [vmem:[#allocation7 + $0x440] sm:$0xff]
    %v287 = vld [vmem:[#allocation7 + $0x448] sm:$0xff]
    %v288 = vld [vmem:[#allocation7 + $0x450] sm:$0xff]
    %v289 = vld [vmem:[#allocation7 + $0x458] sm:$0xff]
    %v290 = vld [vmem:[#allocation7 + $0x460] sm:$0xff]
    %v291 = vld [vmem:[#allocation7 + $0x468] sm:$0xff]
    %v292 = vld [vmem:[#allocation7 + $0x470] sm:$0xff]
    %v293 = vld [vmem:[#allocation7 + $0x478] sm:$0xff]
    %v294 = vld [vmem:[#allocation7 + $0x480] sm:$0xff]
    %v295 = vld [vmem:[#allocation7 + $0x488] sm:$0xff]
    %v296 = vld [vmem:[#allocation7 + $0x490] sm:$0xff]
    %v297 = vld [vmem:[#allocation7 + $0x498] sm:$0xff]
    %v298 = vld [vmem:[#allocation7 + $0x4a0] sm:$0xff]
    %v299 = vld [vmem:[#allocation7 + $0x4a8] sm:$0xff]
    %v300 = vld [vmem:[#allocation7 + $0x4b0] sm:$0xff]
    %v301 = vld [vmem:[#allocation7 + $0x4b8] sm:$0xff]
    %v302 = vld [vmem:[#allocation7 + $0x4c0] sm:$0xff]
    %v303 = vld [vmem:[#allocation7 + $0x4c8] sm:$0xff]
    %v304 = vld [vmem:[#allocation7 + $0x4d0] sm:$0xff]
    %v305 = vld [vmem:[#allocation7 + $0x4d8] sm:$0xff]
    %v306 = vld [vmem:[#allocation7 + $0x4e0] sm:$0xff]
    %v307 = vld [vmem:[#allocation7 + $0x4e8] sm:$0xff]
    %v308 = vld [vmem:[#allocation7 + $0x4f0] sm:$0xff]
    %v309 = vld [vmem:[#allocation7 + $0x4f8] sm:$0xff]
    %v310 = vld [vmem:[#allocation7 + $0x500] sm:$0xff]
    %v311 = vld [vmem:[#allocation7 + $0x508] sm:$0xff]
    %v312 = vld [vmem:[#allocation7 + $0x510] sm:$0xff]
    %v313 = vld [vmem:[#allocation7 + $0x518] sm:$0xff]
    %v314 = vld [vmem:[#allocation7 + $0x520] sm:$0xff]
    %v315 = vld [vmem:[#allocation7 + $0x528] sm:$0xff]
    %v316 = vld [vmem:[#allocation7 + $0x530] sm:$0xff]
    %v317 = vld [vmem:[#allocation7 + $0x538] sm:$0xff]
    %v318 = vld [vmem:[#allocation7 + $0x540] sm:$0xff]
    %v319 = vld [vmem:[#allocation7 + $0x548] sm:$0xff]
    %v320 = vld [vmem:[#allocation7 + $0x550] sm:$0xff]
    %v321 = vld [vmem:[#allocation7 + $0x558] sm:$0xff]
    %v322 = vld [vmem:[#allocation7 + $0x560] sm:$0xff]
    %v323 = vld [vmem:[#allocation7 + $0x568] sm:$0xff]
    %v324 = vld [vmem:[#allocation7 + $0x570] sm:$0xff]
    %v325 = vld [vmem:[#allocation7 + $0x578] sm:$0xff]
    %v326 = vld [vmem:[#allocation7 + $0x580] sm:$0xff]
    %v327 = vld [vmem:[#allocation7 + $0x588] sm:$0xff]
    %v328 = vld [vmem:[#allocation7 + $0x590] sm:$0xff]
    %v329 = vld [vmem:[#allocation7 + $0x598] sm:$0xff]
    %v330 = vld [vmem:[#allocation7 + $0x5a0] sm:$0xff]
    %v331 = vld [vmem:[#allocation7 + $0x5a8] sm:$0xff]
    %v332 = vld [vmem:[#allocation7 + $0x5b0] sm:$0xff]
    %v333 = vld [vmem:[#allocation7 + $0x5b8] sm:$0xff]
    %v334 = vld [vmem:[#allocation7 + $0x5c0] sm:$0xff]
    %v335 = vld [vmem:[#allocation7 + $0x5c8] sm:$0xff]
    %v336 = vld [vmem:[#allocation7 + $0x5d0] sm:$0xff]
    %v337 = vld [vmem:[#allocation7 + $0x5d8] sm:$0xff]
    %v338 = vld [vmem:[#allocation7 + $0x5e0] sm:$0xff]
    %v339 = vld [vmem:[#allocation7 + $0x5e8] sm:$0xff]
    %v340 = vld [vmem:[#allocation7 + $0x5f0] sm:$0xff]
    %v341 = vld [vmem:[#allocation7 + $0x5f8] sm:$0xff]
    %v342 = vld [vmem:[#allocation7 + $0x600] sm:$0xff]
    %v343 = vld [vmem:[#allocation7 + $0x608] sm:$0xff]
    %v344 = vld [vmem:[#allocation7 + $0x610] sm:$0xff]
    %v345 = vld [vmem:[#allocation7 + $0x618] sm:$0xff]
    %v346 = vld [vmem:[#allocation7 + $0x620] sm:$0xff]
    %v347 = vld [vmem:[#allocation7 + $0x628] sm:$0xff]
    %v348 = vld [vmem:[#allocation7 + $0x630] sm:$0xff]
    %v349 = vld [vmem:[#allocation7 + $0x638] sm:$0xff]
    %v350 = vld [vmem:[#allocation7 + $0x640] sm:$0xff]
    %v351 = vld [vmem:[#allocation7 + $0x648] sm:$0xff]
    %v352 = vld [vmem:[#allocation7 + $0x650] sm:$0xff]
    %v353 = vld [vmem:[#allocation7 + $0x658] sm:$0xff]
    %v354 = vld [vmem:[#allocation7 + $0x660] sm:$0xff]
    %v355 = vld [vmem:[#allocation7 + $0x668] sm:$0xff]
    %v356 = vld [vmem:[#allocation7 + $0x670] sm:$0xff]
    %v357 = vld [vmem:[#allocation7 + $0x678] sm:$0xff]
    %v358 = vld [vmem:[#allocation7 + $0x680] sm:$0xff]
    %v359 = vld [vmem:[#allocation7 + $0x688] sm:$0xff]
    %v360 = vld [vmem:[#allocation7 + $0x690] sm:$0xff]
    %v361 = vld [vmem:[#allocation7 + $0x698] sm:$0xff]
    %v362 = vld [vmem:[#allocation7 + $0x6a0] sm:$0xff]
    %v363 = vld [vmem:[#allocation7 + $0x6a8] sm:$0xff]
    %v364 = vld [vmem:[#allocation7 + $0x6b0] sm:$0xff]
    %v365 = vld [vmem:[#allocation7 + $0x6b8] sm:$0xff]
    %v366 = vld [vmem:[#allocation7 + $0x6c0] sm:$0xff]
    %v367 = vld [vmem:[#allocation7 + $0x6c8] sm:$0xff]
    %v368 = vld [vmem:[#allocation7 + $0x6d0] sm:$0xff]
    %v369 = vld [vmem:[#allocation7 + $0x6d8] sm:$0xff]
    %v370 = vld [vmem:[#allocation7 + $0x6e0] sm:$0xff]
    %v371 = vld [vmem:[#allocation7 + $0x6e8] sm:$0xff]
    %v372 = vld [vmem:[#allocation7 + $0x6f0] sm:$0xff]
    %v373 = vld [vmem:[#allocation7 + $0x6f8] sm:$0xff]
    %v374 = vld [vmem:[#allocation7 + $0x700] sm:$0xff]
    %v375 = vld [vmem:[#allocation7 + $0x708] sm:$0xff]
    %v376 = vld [vmem:[#allocation7 + $0x710] sm:$0xff]
    %v377 = vld [vmem:[#allocation7 + $0x718] sm:$0xff]
    %v378 = vld [vmem:[#allocation7 + $0x720] sm:$0xff]
    %v379 = vld [vmem:[#allocation7 + $0x728] sm:$0xff]
    %v380 = vld [vmem:[#allocation7 + $0x730] sm:$0xff]
    %v381 = vld [vmem:[#allocation7 + $0x738] sm:$0xff]
    %v382 = vld [vmem:[#allocation7 + $0x740] sm:$0xff]
    %v383 = vld [vmem:[#allocation7 + $0x748] sm:$0xff]
    %v384 = vld [vmem:[#allocation7 + $0x750] sm:$0xff]
    %v385 = vld [vmem:[#allocation7 + $0x758] sm:$0xff]
    %v386 = vld [vmem:[#allocation7 + $0x760] sm:$0xff]
    %v387 = vld [vmem:[#allocation7 + $0x768] sm:$0xff]
    %v388 = vld [vmem:[#allocation7 + $0x770] sm:$0xff]
    %v389 = vld [vmem:[#allocation7 + $0x778] sm:$0xff]
    %v390 = vld [vmem:[#allocation7 + $0x780] sm:$0xff]
    %v391 = vld [vmem:[#allocation7 + $0x788] sm:$0xff]
    %v392 = vld [vmem:[#allocation7 + $0x790] sm:$0xff]
    %v393 = vld [vmem:[#allocation7 + $0x798] sm:$0xff]
    %v394 = vld [vmem:[#allocation7 + $0x7a0] sm:$0xff]
    %v395 = vld [vmem:[#allocation7 + $0x7a8] sm:$0xff]
    %v396 = vld [vmem:[#allocation7 + $0x7b0] sm:$0xff]
    %v397 = vld [vmem:[#allocation7 + $0x7b8] sm:$0xff]
    %v398 = vld [vmem:[#allocation7 + $0x7c0] sm:$0xff]
    %v399 = vld [vmem:[#allocation7 + $0x7c8] sm:$0xff]
    %v400 = vld [vmem:[#allocation7 + $0x7d0] sm:$0xff]
    %v401 = vld [vmem:[#allocation7 + $0x7d8] sm:$0xff]
    %v402 = vld [vmem:[#allocation7 + $0x7e0] sm:$0xff]
    %v403 = vld [vmem:[#allocation7 + $0x7e8] sm:$0xff]
    %v404 = vld [vmem:[#allocation7 + $0x7f0] sm:$0xff]
    %v405 = vld [vmem:[#allocation7 + $0x7f8] sm:$0xff]
    %v406 = vld [vmem:[#allocation7 + $0x800] sm:$0xff]
    %v407 = vld [vmem:[#allocation7 + $0x808] sm:$0xff]
    %v408 = vld [vmem:[#allocation7 + $0x810] sm:$0xff]
    %v409 = vld [vmem:[#allocation7 + $0x818] sm:$0xff]
    %v410 = vld [vmem:[#allocation7 + $0x820] sm:$0xff]
    %v411 = vld [vmem:[#allocation7 + $0x828] sm:$0xff]
    %v412 = vld [vmem:[#allocation7 + $0x830] sm:$0xff]
    %v413 = vld [vmem:[#allocation7 + $0x838] sm:$0xff]
    %v414 = vld [vmem:[#allocation7 + $0x840] sm:$0xff]
    %v415 = vld [vmem:[#allocation7 + $0x848] sm:$0xff]
    %v416 = vld [vmem:[#allocation7 + $0x850] sm:$0xff]
    %v417 = vld [vmem:[#allocation7 + $0x858] sm:$0xff]
    %v418 = vld [vmem:[#allocation7 + $0x860] sm:$0xff]
    %v419 = vld [vmem:[#allocation7 + $0x868] sm:$0xff]
    %v420 = vld [vmem:[#allocation7 + $0x870] sm:$0xff]
    %v421 = vld [vmem:[#allocation7 + $0x878] sm:$0xff]
    %v422 = vld [vmem:[#allocation7 + $0x880] sm:$0xff]
    %v423 = vld [vmem:[#allocation7 + $0x888] sm:$0xff]
    %v424 = vld [vmem:[#allocation7 + $0x890] sm:$0xff]
    %v425 = vld [vmem:[#allocation7 + $0x898] sm:$0xff]
    %v426 = vld [vmem:[#allocation7 + $0x8a0] sm:$0xff]
    %v427 = vld [vmem:[#allocation7 + $0x8a8] sm:$0xff]
    %v428 = vld [vmem:[#allocation7 + $0x8b0] sm:$0xff]
    %v429 = vld [vmem:[#allocation7 + $0x8b8] sm:$0xff]
    %v430 = vld [vmem:[#allocation7 + $0x8c0] sm:$0xff]
    %v431 = vld [vmem:[#allocation7 + $0x8c8] sm:$0xff]
    %v432 = vld [vmem:[#allocation7 + $0x8d0] sm:$0xff]
    %v433 = vld [vmem:[#allocation7 + $0x8d8] sm:$0xff]
    %v434 = vld [vmem:[#allocation7 + $0x8e0] sm:$0xff]
    %v435 = vld [vmem:[#allocation7 + $0x8e8] sm:$0xff]
    %v436 = vld [vmem:[#allocation7 + $0x8f0] sm:$0xff]
    %v437 = vld [vmem:[#allocation7 + $0x8f8] sm:$0xff]
    %v438 = vld [vmem:[#allocation7 + $0x900] sm:$0xff]
    %v439 = vld [vmem:[#allocation7 + $0x908] sm:$0xff]
    %v440 = vld [vmem:[#allocation7 + $0x910] sm:$0xff]
    %v441 = vld [vmem:[#allocation7 + $0x918] sm:$0xff]
    %v442 = vld [vmem:[#allocation7 + $0x920] sm:$0xff]
    %v443 = vld [vmem:[#allocation7 + $0x928] sm:$0xff]
    %v444 = vld [vmem:[#allocation7 + $0x930] sm:$0xff]
    %v445 = vld [vmem:[#allocation7 + $0x938] sm:$0xff]
    %v446 = vld [vmem:[#allocation7 + $0x940] sm:$0xff]
    %v447 = vld [vmem:[#allocation7 + $0x948] sm:$0xff]
    %v448 = vld [vmem:[#allocation7 + $0x950] sm:$0xff]
    %v449 = vld [vmem:[#allocation7 + $0x958] sm:$0xff]
    %v450 = vld [vmem:[#allocation7 + $0x960] sm:$0xff]
    %v451 = vld [vmem:[#allocation7 + $0x968] sm:$0xff]
    %v452 = vld [vmem:[#allocation7 + $0x970] sm:$0xff]
    %v453 = vld [vmem:[#allocation7 + $0x978] sm:$0xff]
    %v454 = vld [vmem:[#allocation7 + $0x980] sm:$0xff]
    %v455 = vld [vmem:[#allocation7 + $0x988] sm:$0xff]
    %v456 = vld [vmem:[#allocation7 + $0x990] sm:$0xff]
    %v457 = vld [vmem:[#allocation7 + $0x998] sm:$0xff]
    %v458 = vld [vmem:[#allocation7 + $0x9a0] sm:$0xff]
    %v459 = vld [vmem:[#allocation7 + $0x9a8] sm:$0xff]
    %v460 = vld [vmem:[#allocation7 + $0x9b0] sm:$0xff]
    %v461 = vld [vmem:[#allocation7 + $0x9b8] sm:$0xff]
    %v462 = vld [vmem:[#allocation7 + $0x9c0] sm:$0xff]
    %v463 = vld [vmem:[#allocation7 + $0x9c8] sm:$0xff]
    %v464 = vld [vmem:[#allocation7 + $0x9d0] sm:$0xff]
    %v465 = vld [vmem:[#allocation7 + $0x9d8] sm:$0xff]
    %v466 = vld [vmem:[#allocation7 + $0x9e0] sm:$0xff]
    %v467 = vld [vmem:[#allocation7 + $0x9e8] sm:$0xff]
    %v468 = vld [vmem:[#allocation7 + $0x9f0] sm:$0xff]
    %v469 = vld [vmem:[#allocation7 + $0x9f8] sm:$0xff]
    %v470 = vld [vmem:[#allocation7 + $0xa00] sm:$0xff]
    %v471 = vld [vmem:[#allocation7 + $0xa08] sm:$0xff]
    %v472 = vld [vmem:[#allocation7 + $0xa10] sm:$0xff]
    %v473 = vld [vmem:[#allocation7 + $0xa18] sm:$0xff]
    %v474 = vld [vmem:[#allocation7 + $0xa20] sm:$0xff]
    %v475 = vld [vmem:[#allocation7 + $0xa28] sm:$0xff]
    %v476 = vld [vmem:[#allocation7 + $0xa30] sm:$0xff]
    %v477 = vld [vmem:[#allocation7 + $0xa38] sm:$0xff]
    %v478 = vld [vmem:[#allocation7 + $0xa40] sm:$0xff]
    %v479 = vld [vmem:[#allocation7 + $0xa48] sm:$0xff]
    %v480 = vld [vmem:[#allocation7 + $0xa50] sm:$0xff]
    %v481 = vld [vmem:[#allocation7 + $0xa58] sm:$0xff]
    %v482 = vld [vmem:[#allocation7 + $0xa60] sm:$0xff]
    %v483 = vld [vmem:[#allocation7 + $0xa68] sm:$0xff]
    %v484 = vld [vmem:[#allocation7 + $0xa70] sm:$0xff]
    %v485 = vld [vmem:[#allocation7 + $0xa78] sm:$0xff]
    %v486 = vld [vmem:[#allocation7 + $0xa80] sm:$0xff]
    %v487 = vld [vmem:[#allocation7 + $0xa88] sm:$0xff]
    %v488 = vld [vmem:[#allocation7 + $0xa90] sm:$0xff]
    %v489 = vld [vmem:[#allocation7 + $0xa98] sm:$0xff]
    %v490 = vld [vmem:[#allocation7 + $0xaa0] sm:$0xff]
    %v491 = vld [vmem:[#allocation7 + $0xaa8] sm:$0xff]
    %v492 = vld [vmem:[#allocation7 + $0xab0] sm:$0xff]
    %v493 = vld [vmem:[#allocation7 + $0xab8] sm:$0xff]
    %v494 = vld [vmem:[#allocation7 + $0xac0] sm:$0xff]
    %v495 = vld [vmem:[#allocation7 + $0xac8] sm:$0xff]
    %v496 = vld [vmem:[#allocation7 + $0xad0] sm:$0xff]
    %v497 = vld [vmem:[#allocation7 + $0xad8] sm:$0xff]
    %v498 = vld [vmem:[#allocation7 + $0xae0] sm:$0xff]
    %v499 = vld [vmem:[#allocation7 + $0xae8] sm:$0xff]
    %v500 = vld [vmem:[#allocation7 + $0xaf0] sm:$0xff]
    %v501 = vld [vmem:[#allocation7 + $0xaf8] sm:$0xff]
    %v502 = vld [vmem:[#allocation7 + $0xb00] sm:$0xff]
    %v503 = vld [vmem:[#allocation7 + $0xb08] sm:$0xff]
    %v504 = vld [vmem:[#allocation7 + $0xb10] sm:$0xff]
    %v505 = vld [vmem:[#allocation7 + $0xb18] sm:$0xff]
    %v506 = vld [vmem:[#allocation7 + $0xb20] sm:$0xff]
    %v507 = vld [vmem:[#allocation7 + $0xb28] sm:$0xff]
    %v508 = vld [vmem:[#allocation7 + $0xb30] sm:$0xff]
    %v509 = vld [vmem:[#allocation7 + $0xb38] sm:$0xff]
    %v510 = vld [vmem:[#allocation7 + $0xb40] sm:$0xff]
    %v511 = vld [vmem:[#allocation7 + $0xb48] sm:$0xff]
    %v512 = vld [vmem:[#allocation7 + $0xb50] sm:$0xff]
    %v513 = vld [vmem:[#allocation7 + $0xb58] sm:$0xff]
    %v514 = vld [vmem:[#allocation7 + $0xb60] sm:$0xff]
    %v515 = vld [vmem:[#allocation7 + $0xb68] sm:$0xff]
    %v516 = vld [vmem:[#allocation7 + $0xb70] sm:$0xff]
    %v517 = vld [vmem:[#allocation7 + $0xb78] sm:$0xff]
    %v518 = vld [vmem:[#allocation7 + $0xb80] sm:$0xff]
    %v519 = vld [vmem:[#allocation7 + $0xb88] sm:$0xff]
    %v520 = vld [vmem:[#allocation7 + $0xb90] sm:$0xff]
    %v521 = vld [vmem:[#allocation7 + $0xb98] sm:$0xff]
    %v522 = vld [vmem:[#allocation7 + $0xba0] sm:$0xff]
    %v523 = vld [vmem:[#allocation7 + $0xba8] sm:$0xff]
    %v524 = vld [vmem:[#allocation7 + $0xbb0] sm:$0xff]
    %v525 = vld [vmem:[#allocation7 + $0xbb8] sm:$0xff]
    %v526 = vld [vmem:[#allocation7 + $0xbc0] sm:$0xff]
    %v527 = vld [vmem:[#allocation7 + $0xbc8] sm:$0xff]
    %v528 = vld [vmem:[#allocation7 + $0xbd0] sm:$0xff]
    %v529 = vld [vmem:[#allocation7 + $0xbd8] sm:$0xff]
    %v530 = vld [vmem:[#allocation7 + $0xbe0] sm:$0xff]
    %v531 = vld [vmem:[#allocation7 + $0xbe8] sm:$0xff]
    %v532 = vld [vmem:[#allocation7 + $0xbf0] sm:$0xff]
    %v533 = vld [vmem:[#allocation7 + $0xbf8] sm:$0xff]
    %v534 = vld [vmem:[#allocation7 + $0xc00] sm:$0xff]
    %v535 = vld [vmem:[#allocation7 + $0xc08] sm:$0xff]
    %v536 = vld [vmem:[#allocation7 + $0xc10] sm:$0xff]
    %v537 = vld [vmem:[#allocation7 + $0xc18] sm:$0xff]
    %v538 = vld [vmem:[#allocation7 + $0xc20] sm:$0xff]
    %v539 = vld [vmem:[#allocation7 + $0xc28] sm:$0xff]
    %v540 = vld [vmem:[#allocation7 + $0xc30] sm:$0xff]
    %v541 = vld [vmem:[#allocation7 + $0xc38] sm:$0xff]
    %v542 = vld [vmem:[#allocation7 + $0xc40] sm:$0xff]
    %v543 = vld [vmem:[#allocation7 + $0xc48] sm:$0xff]
    %v544 = vld [vmem:[#allocation7 + $0xc50] sm:$0xff]
    %v545 = vld [vmem:[#allocation7 + $0xc58] sm:$0xff]
    %v546 = vld [vmem:[#allocation7 + $0xc60] sm:$0xff]
    %v547 = vld [vmem:[#allocation7 + $0xc68] sm:$0xff]
    %v548 = vld [vmem:[#allocation7 + $0xc70] sm:$0xff]
    %v549 = vld [vmem:[#allocation7 + $0xc78] sm:$0xff]
    %v550 = vld [vmem:[#allocation7 + $0xc80] sm:$0xff]
    %v551 = vld [vmem:[#allocation7 + $0xc88] sm:$0xff]
    %v552 = vld [vmem:[#allocation7 + $0xc90] sm:$0xff]
    %v553 = vld [vmem:[#allocation7 + $0xc98] sm:$0xff]
    %v554 = vld [vmem:[#allocation7 + $0xca0] sm:$0xff]
    %v555 = vld [vmem:[#allocation7 + $0xca8] sm:$0xff]
    %v556 = vld [vmem:[#allocation7 + $0xcb0] sm:$0xff]
    %v557 = vld [vmem:[#allocation7 + $0xcb8] sm:$0xff]
    %v558 = vld [vmem:[#allocation7 + $0xcc0] sm:$0xff]
    %v559 = vld [vmem:[#allocation7 + $0xcc8] sm:$0xff]
    %v560 = vld [vmem:[#allocation7 + $0xcd0] sm:$0xff]
    %v561 = vld [vmem:[#allocation7 + $0xcd8] sm:$0xff]
    %v562 = vld [vmem:[#allocation7 + $0xce0] sm:$0xff]
    %v563 = vld [vmem:[#allocation7 + $0xce8] sm:$0xff]
    %v564 = vld [vmem:[#allocation7 + $0xcf0] sm:$0xff]
    %v565 = vld [vmem:[#allocation7 + $0xcf8] sm:$0xff]
    %v566 = vld [vmem:[#allocation7 + $0xd00] sm:$0xff]
    %v567 = vld [vmem:[#allocation7 + $0xd08] sm:$0xff]
    %v568 = vld [vmem:[#allocation7 + $0xd10] sm:$0xff]
    %v569 = vld [vmem:[#allocation7 + $0xd18] sm:$0xff]
    %v570 = vld [vmem:[#allocation7 + $0xd20] sm:$0xff]
    %v571 = vld [vmem:[#allocation7 + $0xd28] sm:$0xff]
    %v572 = vld [vmem:[#allocation7 + $0xd30] sm:$0xff]
    %v573 = vld [vmem:[#allocation7 + $0xd38] sm:$0xff]
    %v574 = vld [vmem:[#allocation7 + $0xd40] sm:$0xff]
    %v575 = vld [vmem:[#allocation7 + $0xd48] sm:$0xff]
    %v576 = vld [vmem:[#allocation7 + $0xd50] sm:$0xff]
    %v577 = vld [vmem:[#allocation7 + $0xd58] sm:$0xff]
    %v578 = vld [vmem:[#allocation7 + $0xd60] sm:$0xff]
    %v579 = vld [vmem:[#allocation7 + $0xd68] sm:$0xff]
    %v580 = vld [vmem:[#allocation7 + $0xd70] sm:$0xff]
    %v581 = vld [vmem:[#allocation7 + $0xd78] sm:$0xff]
    %v582 = vld [vmem:[#allocation7 + $0xd80] sm:$0xff]
    %v583 = vld [vmem:[#allocation7 + $0xd88] sm:$0xff]
    %v584 = vld [vmem:[#allocation7 + $0xd90] sm:$0xff]
    %v585 = vld [vmem:[#allocation7 + $0xd98] sm:$0xff]
    %v586 = vld [vmem:[#allocation7 + $0xda0] sm:$0xff]
    %v587 = vld [vmem:[#allocation7 + $0xda8] sm:$0xff]
    %v588 = vld [vmem:[#allocation7 + $0xdb0] sm:$0xff]
    %v589 = vld [vmem:[#allocation7 + $0xdb8] sm:$0xff]
    %v590 = vld [vmem:[#allocation7 + $0xdc0] sm:$0xff]
    %v591 = vld [vmem:[#allocation7 + $0xdc8] sm:$0xff]
    %v592 = vld [vmem:[#allocation7 + $0xdd0] sm:$0xff]
    %v593 = vld [vmem:[#allocation7 + $0xdd8] sm:$0xff]
    %v594 = vld [vmem:[#allocation7 + $0xde0] sm:$0xff]
    %v595 = vld [vmem:[#allocation7 + $0xde8] sm:$0xff]
    %v596 = vld [vmem:[#allocation7 + $0xdf0] sm:$0xff]
    %v597 = vld [vmem:[#allocation7 + $0xdf8] sm:$0xff]
    %v598 = vld [vmem:[#allocation7 + $0xe00] sm:$0xff]
    %v599 = vld [vmem:[#allocation7 + $0xe08] sm:$0xff]
    %v600 = vld [vmem:[#allocation7 + $0xe10] sm:$0xff]
    %v601 = vld [vmem:[#allocation7 + $0xe18] sm:$0xff]
    %v602 = vld [vmem:[#allocation7 + $0xe20] sm:$0xff]
    %v603 = vld [vmem:[#allocation7 + $0xe28] sm:$0xff]
    %v604 = vld [vmem:[#allocation7 + $0xe30] sm:$0xff]
    %v605 = vld [vmem:[#allocation7 + $0xe38] sm:$0xff]
    %v606 = vld [vmem:[#allocation7 + $0xe40] sm:$0xff]
    %v607 = vld [vmem:[#allocation7 + $0xe48] sm:$0xff]
    %v608 = vld [vmem:[#allocation7 + $0xe50] sm:$0xff]
    %v609 = vld [vmem:[#allocation7 + $0xe58] sm:$0xff]
    %v610 = vld [vmem:[#allocation7 + $0xe60] sm:$0xff]
    %v611 = vld [vmem:[#allocation7 + $0xe68] sm:$0xff]
    %v612 = vld [vmem:[#allocation7 + $0xe70] sm:$0xff]
    %v613 = vld [vmem:[#allocation7 + $0xe78] sm:$0xff]
    %v614 = vld [vmem:[#allocation7 + $0xe80] sm:$0xff]
    %v615 = vld [vmem:[#allocation7 + $0xe88] sm:$0xff]
    %v616 = vld [vmem:[#allocation7 + $0xe90] sm:$0xff]
    %v617 = vld [vmem:[#allocation7 + $0xe98] sm:$0xff]
    %v618 = vld [vmem:[#allocation7 + $0xea0] sm:$0xff]
    %v619 = vld [vmem:[#allocation7 + $0xea8] sm:$0xff]
    %v620 = vld [vmem:[#allocation7 + $0xeb0] sm:$0xff]
    %v621 = vld [vmem:[#allocation7 + $0xeb8] sm:$0xff]
    %v622 = vld [vmem:[#allocation7 + $0xec0] sm:$0xff]
    %v623 = vld [vmem:[#allocation7 + $0xec8] sm:$0xff]
    %v624 = vld [vmem:[#allocation7 + $0xed0] sm:$0xff]
    %v625 = vld [vmem:[#allocation7 + $0xed8] sm:$0xff]
    %v626 = vld [vmem:[#allocation7 + $0xee0] sm:$0xff]
    %v627 = vld [vmem:[#allocation7 + $0xee8] sm:$0xff]
    %v628 = vld [vmem:[#allocation7 + $0xef0] sm:$0xff]
    %v629 = vld [vmem:[#allocation7 + $0xef8] sm:$0xff]
    %v630 = vld [vmem:[#allocation7 + $0xf00] sm:$0xff]
    %v631 = vld [vmem:[#allocation7 + $0xf08] sm:$0xff]
    %v632 = vld [vmem:[#allocation7 + $0xf10] sm:$0xff]
    %v633 = vld [vmem:[#allocation7 + $0xf18] sm:$0xff]
    %v634 = vld [vmem:[#allocation7 + $0xf20] sm:$0xff]
    %v635 = vld [vmem:[#allocation7 + $0xf28] sm:$0xff]
    %v636 = vld [vmem:[#allocation7 + $0xf30] sm:$0xff]
    %v637 = vld [vmem:[#allocation7 + $0xf38] sm:$0xff]
    %v638 = vld [vmem:[#allocation7 + $0xf40] sm:$0xff]
    %v639 = vld [vmem:[#allocation7 + $0xf48] sm:$0xff]
    %v640 = vld [vmem:[#allocation7 + $0xf50] sm:$0xff]
    %v641 = vld [vmem:[#allocation7 + $0xf58] sm:$0xff]
    %v642 = vld [vmem:[#allocation7 + $0xf60] sm:$0xff]
    %v643 = vld [vmem:[#allocation7 + $0xf68] sm:$0xff]
    %v644 = vld [vmem:[#allocation7 + $0xf70] sm:$0xff]
    %v645 = vld [vmem:[#allocation7 + $0xf78] sm:$0xff]
    %v646 = vld [vmem:[#allocation7 + $0xf80] sm:$0xff]
    %v647 = vld [vmem:[#allocation7 + $0xf88] sm:$0xff]
    %v648 = vld [vmem:[#allocation7 + $0xf90] sm:$0xff]
    %v649 = vld [vmem:[#allocation7 + $0xf98] sm:$0xff]
    %v650 = vld [vmem:[#allocation7 + $0xfa0] sm:$0xff]
    %v651 = vld [vmem:[#allocation7 + $0xfa8] sm:$0xff]
    %v652 = vld [vmem:[#allocation7 + $0xfb0] sm:$0xff]
    %v653 = vld [vmem:[#allocation7 + $0xfb8] sm:$0xff]
    %v654 = vld [vmem:[#allocation7 + $0xfc0] sm:$0xff]
    %v655 = vld [vmem:[#allocation7 + $0xfc8] sm:$0xff]
    %v656 = vld [vmem:[#allocation7 + $0xfd0] sm:$0xff]
    %v657 = vld [vmem:[#allocation7 + $0xfd8] sm:$0xff]
    %v658 = vld [vmem:[#allocation7 + $0xfe0] sm:$0xff]
    %v659 = vld [vmem:[#allocation7 + $0xfe8] sm:$0xff]
    %v660 = vld [vmem:[#allocation7 + $0xff0] sm:$0xff]
    %v661 = vld [vmem:[#allocation7 + $0xff8] sm:$0xff]
    %v662 = vld [vmem:[#allocation7 + $0x1000] sm:$0xff]
    %v663 = vld [vmem:[#allocation7 + $0x1008] sm:$0xff]
    %v664 = vld [vmem:[#allocation7 + $0x1010] sm:$0xff]
    %v665 = vld [vmem:[#allocation7 + $0x1018] sm:$0xff]
    %v666 = vld [vmem:[#allocation7 + $0x1020] sm:$0xff]
    %v667 = vld [vmem:[#allocation7 + $0x1028] sm:$0xff]
    %v668 = vld [vmem:[#allocation7 + $0x1030] sm:$0xff]
    %v669 = vld [vmem:[#allocation7 + $0x1038] sm:$0xff]
    %v670 = vld [vmem:[#allocation7 + $0x1040] sm:$0xff]
    %v671 = vld [vmem:[#allocation7 + $0x1048] sm:$0xff]
    %v672 = vld [vmem:[#allocation7 + $0x1050] sm:$0xff]
    %v673 = vld [vmem:[#allocation7 + $0x1058] sm:$0xff]
    %v674 = vld [vmem:[#allocation7 + $0x1060] sm:$0xff]
    %v675 = vld [vmem:[#allocation7 + $0x1068] sm:$0xff]
    %v676 = vld [vmem:[#allocation7 + $0x1070] sm:$0xff]
    %v677 = vld [vmem:[#allocation7 + $0x1078] sm:$0xff]
    %v678 = vld [vmem:[#allocation7 + $0x1080] sm:$0xff]
    %v679 = vld [vmem:[#allocation7 + $0x1088] sm:$0xff]
    %v680 = vld [vmem:[#allocation7 + $0x1090] sm:$0xff]
    %v681 = vld [vmem:[#allocation7 + $0x1098] sm:$0xff]
    %v682 = vld [vmem:[#allocation7 + $0x10a0] sm:$0xff]
    %v683 = vld [vmem:[#allocation7 + $0x10a8] sm:$0xff]
    %v684 = vld [vmem:[#allocation7 + $0x10b0] sm:$0xff]
    %v685 = vld [vmem:[#allocation7 + $0x10b8] sm:$0xff]
    %v686 = vld [vmem:[#allocation7 + $0x10c0] sm:$0xff]
    %v687 = vld [vmem:[#allocation7 + $0x10c8] sm:$0xff]
    %v688 = vld [vmem:[#allocation7 + $0x10d0] sm:$0xff]
    %v689 = vld [vmem:[#allocation7 + $0x10d8] sm:$0xff]
    %v690 = vld [vmem:[#allocation7 + $0x10e0] sm:$0xff]
    %v691 = vld [vmem:[#allocation7 + $0x10e8] sm:$0xff]
    %v692 = vld [vmem:[#allocation7 + $0x10f0] sm:$0xff]
    %v693 = vld [vmem:[#allocation7 + $0x10f8] sm:$0xff]
    %v694 = vld [vmem:[#allocation7 + $0x1100] sm:$0xff]
    %v695 = vld [vmem:[#allocation7 + $0x1108] sm:$0xff]
    %v696 = vld [vmem:[#allocation7 + $0x1110] sm:$0xff]
    %v697 = vld [vmem:[#allocation7 + $0x1118] sm:$0xff]
    %v698 = vld [vmem:[#allocation7 + $0x1120] sm:$0xff]
    %v699 = vld [vmem:[#allocation7 + $0x1128] sm:$0xff]
    %v700 = vld [vmem:[#allocation7 + $0x1130] sm:$0xff]
    %v701 = vld [vmem:[#allocation7 + $0x1138] sm:$0xff]
    %v702 = vld [vmem:[#allocation7 + $0x1140] sm:$0xff]
    %v703 = vld [vmem:[#allocation7 + $0x1148] sm:$0xff]
    %v704 = vld [vmem:[#allocation7 + $0x1150] sm:$0xff]
    %v705 = vld [vmem:[#allocation7 + $0x1158] sm:$0xff]
    %v706 = vld [vmem:[#allocation7 + $0x1160] sm:$0xff]
    %v707 = vld [vmem:[#allocation7 + $0x1168] sm:$0xff]
    %v708 = vld [vmem:[#allocation7 + $0x1170] sm:$0xff]
    %v709 = vld [vmem:[#allocation7 + $0x1178] sm:$0xff]
    %v710 = vld [vmem:[#allocation7 + $0x1180] sm:$0xff]
    %v711 = vld [vmem:[#allocation7 + $0x1188] sm:$0xff]
    %v712 = vld [vmem:[#allocation7 + $0x1190] sm:$0xff]
    %v713 = vld [vmem:[#allocation7 + $0x1198] sm:$0xff]
    %v714 = vld [vmem:[#allocation7 + $0x11a0] sm:$0xff]
    %v715 = vld [vmem:[#allocation7 + $0x11a8] sm:$0xff]
    %v716 = vld [vmem:[#allocation7 + $0x11b0] sm:$0xff]
    %v717 = vld [vmem:[#allocation7 + $0x11b8] sm:$0xff]
    %v718 = vld [vmem:[#allocation7 + $0x11c0] sm:$0xff]
    %v719 = vld [vmem:[#allocation7 + $0x11c8] sm:$0xff]
    %v720 = vld [vmem:[#allocation7 + $0x11d0] sm:$0xff]
    %v721 = vld [vmem:[#allocation7 + $0x11d8] sm:$0xff]
    %v722 = vld [vmem:[#allocation7 + $0x11e0] sm:$0xff]
    %v723 = vld [vmem:[#allocation7 + $0x11e8] sm:$0xff]
    %v724 = vld [vmem:[#allocation7 + $0x11f0] sm:$0xff]
    %v725 = vld [vmem:[#allocation7 + $0x11f8] sm:$0xff]
    %v726 = vld [vmem:[#allocation9] sm:$0xff]
    %v727 = vld [vmem:[#allocation9 + $0x8] sm:$0xff]
    %v728 = vld [vmem:[#allocation9 + $0x10] sm:$0xff]
    %v732 = vlaneseq
    %v733 = vshrl.u32 %v732, 7
    %v734 = vsub.s32 0, %v733
    %v735 = vrot.slane %v726, %v734
    %v736 = vlaneseq
    %v737 = vshrl.u32 %v736, 7
    %v738 = vsub.s32 1, %v737
    %v739 = vrot.slane %v726, %v738
    %v740 = vlaneseq
    %v741 = vshrl.u32 %v740, 7
    %v742 = vsub.s32 2, %v741
    %v743 = vrot.slane %v726, %v742
    %v744 = vlaneseq
    %v745 = vshrl.u32 %v744, 7
    %v746 = vsub.s32 3, %v745
    %v747 = vrot.slane %v726, %v746
    %v748 = vlaneseq
    %v749 = vshrl.u32 %v748, 7
    %v750 = vsub.s32 4, %v749
    %v751 = vrot.slane %v726, %v750
    %v752 = vlaneseq
    %v753 = vshrl.u32 %v752, 7
    %v754 = vsub.s32 5, %v753
    %v755 = vrot.slane %v726, %v754
    %v756 = vlaneseq
    %v757 = vshrl.u32 %v756, 7
    %v758 = vsub.s32 6, %v757
    %v759 = vrot.slane %v726, %v758
    %v760 = vlaneseq
    %v761 = vshrl.u32 %v760, 7
    %v762 = vsub.s32 7, %v761
    %v763 = vrot.slane %v726, %v762
    %v764 = vlaneseq
    %v765 = vshrl.u32 %v764, 7
    %v766 = vsub.s32 0, %v765
    %v767 = vrot.slane %v727, %v766
    %v768 = vlaneseq
    %v769 = vshrl.u32 %v768, 7
    %v770 = vsub.s32 1, %v769
    %v771 = vrot.slane %v727, %v770
    %v772 = vlaneseq
    %v773 = vshrl.u32 %v772, 7
    %v774 = vsub.s32 2, %v773
    %v775 = vrot.slane %v727, %v774
    %v776 = vlaneseq
    %v777 = vshrl.u32 %v776, 7
    %v778 = vsub.s32 3, %v777
    %v779 = vrot.slane %v727, %v778
    %v780 = vlaneseq
    %v781 = vshrl.u32 %v780, 7
    %v782 = vsub.s32 4, %v781
    %v783 = vrot.slane %v727, %v782
    %v784 = vlaneseq
    %v785 = vshrl.u32 %v784, 7
    %v786 = vsub.s32 5, %v785
    %v787 = vrot.slane %v727, %v786
    %v788 = vlaneseq
    %v789 = vshrl.u32 %v788, 7
    %v790 = vsub.s32 6, %v789
    %v791 = vrot.slane %v727, %v790
    %v792 = vlaneseq
    %v793 = vshrl.u32 %v792, 7
    %v794 = vsub.s32 7, %v793
    %v795 = vrot.slane %v727, %v794
    %v796 = vlaneseq
    %v797 = vshrl.u32 %v796, 7
    %v798 = vsub.s32 0, %v797
    %v799 = vrot.slane %v728, %v798
    %v800 = vlaneseq
    %v801 = vshrl.u32 %v800, 7
    %v802 = vsub.s32 1, %v801
    %v803 = vrot.slane %v728, %v802
    %v804 = vlaneseq
    %v805 = vshrl.u32 %v804, 7
    %v806 = vsub.s32 2, %v805
    %v807 = vrot.slane %v728, %v806
    %v808 = vlaneseq
    %v809 = vshrl.u32 %v808, 7
    %v810 = vsub.s32 3, %v809
    %v811 = vrot.slane %v728, %v810
    %v812 = vlaneseq
    %v813 = vshrl.u32 %v812, 7
    %v814 = vsub.s32 4, %v813
    %v815 = vrot.slane %v728, %v814
    %v816 = vlaneseq
    %v817 = vshrl.u32 %v816, 7
    %v818 = vsub.s32 5, %v817
    %v819 = vrot.slane %v728, %v818
    %v820 = vlaneseq
    %v821 = vshrl.u32 %v820, 7
    %v822 = vsub.s32 6, %v821
    %v823 = vrot.slane %v728, %v822
    %v824 = vlaneseq
    %v825 = vshrl.u32 %v824, 7
    %v826 = vsub.s32 7, %v825
    %v827 = vrot.slane %v728, %v826
    %v868 = vunpack.c.l.b16 %v134
    %v869 = vunpack.c.h.b16 %v134
    %v870 = vunpack.c.l.b16 %v135
    %v871 = vunpack.c.l.b16 %v136
    %v872 = vunpack.c.h.b16 %v136
    %v873 = vunpack.c.l.b16 %v137
    %v874 = vunpack.c.l.b16 %v138
    %v875 = vunpack.c.h.b16 %v138
    %v876 = vunpack.c.l.b16 %v139
    %v877 = vunpack.c.l.b16 %v140
    %v878 = vunpack.c.h.b16 %v140
    %v879 = vunpack.c.l.b16 %v141
    %v880 = vunpack.c.l.b16 %v142
    %v881 = vunpack.c.h.b16 %v142
    %v882 = vunpack.c.l.b16 %v143
    %v883 = vunpack.c.l.b16 %v144
    %v884 = vunpack.c.h.b16 %v144
    %v885 = vunpack.c.l.b16 %v145
    %v886 = vunpack.c.l.b16 %v146
    %v887 = vunpack.c.h.b16 %v146
    %v888 = vunpack.c.l.b16 %v147
    %v889 = vunpack.c.l.b16 %v148
    %v890 = vunpack.c.h.b16 %v148
    %v891 = vunpack.c.l.b16 %v149
    %v892 = vpack.c.b16 %v871, %v868
    %v893 = vpack.c.b16 %v872, %v869
    %v894 = vpack.c.b16 %v873, %v870
    %v895 = vpack.c.b16 %v877, %v874
    %v896 = vpack.c.b16 %v878, %v875
    %v897 = vpack.c.b16 %v879, %v876
    %v898 = vpack.c.b16 %v883, %v880
    %v899 = vpack.c.b16 %v884, %v881
    %v900 = vpack.c.b16 %v885, %v882
    %v901 = vpack.c.b16 %v889, %v886
    %v902 = vpack.c.b16 %v890, %v887
    %v903 = vpack.c.b16 %v891, %v888
    %v1492 = vunpack.c.l.b16 %v150
    %v1493 = vunpack.c.h.b16 %v150
    %v1494 = vunpack.c.l.b16 %v151
    %v1495 = vunpack.c.h.b16 %v151
    %v1496 = vunpack.c.l.b16 %v152
    %v1497 = vunpack.c.h.b16 %v152
    %v1498 = vunpack.c.l.b16 %v153
    %v1499 = vunpack.c.h.b16 %v153
    %v1500 = vunpack.c.l.b16 %v154
    %v1501 = vunpack.c.h.b16 %v154
    %v1502 = vunpack.c.l.b16 %v155
    %v1503 = vunpack.c.h.b16 %v155
    %v1504 = vunpack.c.l.b16 %v156
    %v1505 = vunpack.c.h.b16 %v156
    %v1506 = vunpack.c.l.b16 %v157
    %v1507 = vunpack.c.h.b16 %v157
    %v1508 = vunpack.c.l.b16 %v158
    %v1509 = vunpack.c.h.b16 %v158
    %v1510 = vunpack.c.l.b16 %v159
    %v1511 = vunpack.c.h.b16 %v159
    %v1512 = vunpack.c.l.b16 %v160
    %v1513 = vunpack.c.h.b16 %v160
    %v1514 = vunpack.c.l.b16 %v161
    %v1515 = vunpack.c.h.b16 %v161
    %v1516 = vunpack.c.l.b16 %v162
    %v1517 = vunpack.c.h.b16 %v162
    %v1518 = vunpack.c.l.b16 %v163
    %v1519 = vunpack.c.h.b16 %v163
    %v1520 = vunpack.c.l.b16 %v164
    %v1521 = vunpack.c.h.b16 %v164
    %v1522 = vunpack.c.l.b16 %v165
    %v1523 = vunpack.c.h.b16 %v165
    %v1524 = vunpack.c.l.b16 %v166
    %v1525 = vunpack.c.h.b16 %v166
    %v1526 = vunpack.c.l.b16 %v167
    %v1527 = vunpack.c.h.b16 %v167
    %v1528 = vunpack.c.l.b16 %v168
    %v1529 = vunpack.c.h.b16 %v168
    %v1530 = vunpack.c.l.b16 %v169
    %v1531 = vunpack.c.h.b16 %v169
    %v1532 = vunpack.c.l.b16 %v170
    %v1533 = vunpack.c.h.b16 %v170
    %v1534 = vunpack.c.l.b16 %v171
    %v1535 = vunpack.c.h.b16 %v171
    %v1536 = vunpack.c.l.b16 %v172
    %v1537 = vunpack.c.h.b16 %v172
    %v1538 = vunpack.c.l.b16 %v173
    %v1539 = vunpack.c.h.b16 %v173
    %v1540 = vunpack.c.l.b16 %v174
    %v1541 = vunpack.c.h.b16 %v174
    %v1542 = vunpack.c.l.b16 %v175
    %v1543 = vunpack.c.h.b16 %v175
    %v1544 = vunpack.c.l.b16 %v176
    %v1545 = vunpack.c.h.b16 %v176
    %v1546 = vunpack.c.l.b16 %v177
    %v1547 = vunpack.c.h.b16 %v177
    %v1548 = vunpack.c.l.b16 %v178
    %v1549 = vunpack.c.h.b16 %v178
    %v1550 = vunpack.c.l.b16 %v179
    %v1551 = vunpack.c.h.b16 %v179
    %v1552 = vunpack.c.l.b16 %v180
    %v1553 = vunpack.c.h.b16 %v180
    %v1554 = vunpack.c.l.b16 %v181
    %v1555 = vunpack.c.h.b16 %v181
    %v1556 = vunpack.c.l.b16 %v182
    %v1557 = vunpack.c.h.b16 %v182
    %v1558 = vunpack.c.l.b16 %v183
    %v1559 = vunpack.c.h.b16 %v183
    %v1560 = vunpack.c.l.b16 %v184
    %v1561 = vunpack.c.h.b16 %v184
    %v1562 = vunpack.c.l.b16 %v185
    %v1563 = vunpack.c.h.b16 %v185
    %v1564 = vunpack.c.l.b16 %v186
    %v1565 = vunpack.c.h.b16 %v186
    %v1566 = vunpack.c.l.b16 %v187
    %v1567 = vunpack.c.h.b16 %v187
    %v1568 = vunpack.c.l.b16 %v188
    %v1569 = vunpack.c.h.b16 %v188
    %v1570 = vunpack.c.l.b16 %v189
    %v1571 = vunpack.c.h.b16 %v189
    %v1572 = vunpack.c.l.b16 %v190
    %v1573 = vunpack.c.h.b16 %v190
    %v1574 = vunpack.c.l.b16 %v191
    %v1575 = vunpack.c.h.b16 %v191
    %v1576 = vunpack.c.l.b16 %v192
    %v1577 = vunpack.c.h.b16 %v192
    %v1578 = vunpack.c.l.b16 %v193
    %v1579 = vunpack.c.h.b16 %v193
    %v1580 = vunpack.c.l.b16 %v194
    %v1581 = vunpack.c.h.b16 %v194
    %v1582 = vunpack.c.l.b16 %v195
    %v1583 = vunpack.c.h.b16 %v195
    %v1584 = vunpack.c.l.b16 %v196
    %v1585 = vunpack.c.h.b16 %v196
    %v1586 = vunpack.c.l.b16 %v197
    %v1587 = vunpack.c.h.b16 %v197
    %v1588 = vunpack.c.l.b16 %v198
    %v1589 = vunpack.c.h.b16 %v198
    %v1590 = vunpack.c.l.b16 %v199
    %v1591 = vunpack.c.h.b16 %v199
    %v1592 = vunpack.c.l.b16 %v200
    %v1593 = vunpack.c.h.b16 %v200
    %v1594 = vunpack.c.l.b16 %v201
    %v1595 = vunpack.c.h.b16 %v201
    %v1596 = vunpack.c.l.b16 %v202
    %v1597 = vunpack.c.h.b16 %v202
    %v1598 = vunpack.c.l.b16 %v203
    %v1599 = vunpack.c.h.b16 %v203
    %v1600 = vunpack.c.l.b16 %v204
    %v1601 = vunpack.c.h.b16 %v204
    %v1602 = vunpack.c.l.b16 %v205
    %v1603 = vunpack.c.h.b16 %v205
    %v1604 = vunpack.c.l.b16 %v206
    %v1605 = vunpack.c.h.b16 %v206
    %v1606 = vunpack.c.l.b16 %v207
    %v1607 = vunpack.c.h.b16 %v207
    %v1608 = vunpack.c.l.b16 %v208
    %v1609 = vunpack.c.h.b16 %v208
    %v1610 = vunpack.c.l.b16 %v209
    %v1611 = vunpack.c.h.b16 %v209
    %v1612 = vunpack.c.l.b16 %v210
    %v1613 = vunpack.c.h.b16 %v210
    %v1614 = vunpack.c.l.b16 %v211
    %v1615 = vunpack.c.h.b16 %v211
    %v1616 = vunpack.c.l.b16 %v212
    %v1617 = vunpack.c.h.b16 %v212
    %v1618 = vunpack.c.l.b16 %v213
    %v1619 = vunpack.c.h.b16 %v213
    %v1620 = vunpack.c.l.b16 %v214
    %v1621 = vunpack.c.h.b16 %v214
    %v1622 = vunpack.c.l.b16 %v215
    %v1623 = vunpack.c.h.b16 %v215
    %v1624 = vunpack.c.l.b16 %v216
    %v1625 = vunpack.c.h.b16 %v216
    %v1626 = vunpack.c.l.b16 %v217
    %v1627 = vunpack.c.h.b16 %v217
    %v1628 = vunpack.c.l.b16 %v218
    %v1629 = vunpack.c.h.b16 %v218
    %v1630 = vunpack.c.l.b16 %v219
    %v1631 = vunpack.c.h.b16 %v219
    %v1632 = vunpack.c.l.b16 %v220
    %v1633 = vunpack.c.h.b16 %v220
    %v1634 = vunpack.c.l.b16 %v221
    %v1635 = vunpack.c.h.b16 %v221
    %v1636 = vunpack.c.l.b16 %v222
    %v1637 = vunpack.c.h.b16 %v222
    %v1638 = vunpack.c.l.b16 %v223
    %v1639 = vunpack.c.h.b16 %v223
    %v1640 = vunpack.c.l.b16 %v224
    %v1641 = vunpack.c.h.b16 %v224
    %v1642 = vunpack.c.l.b16 %v225
    %v1643 = vunpack.c.h.b16 %v225
    %v1644 = vunpack.c.l.b16 %v226
    %v1645 = vunpack.c.h.b16 %v226
    %v1646 = vunpack.c.l.b16 %v227
    %v1647 = vunpack.c.h.b16 %v227
    %v1648 = vunpack.c.l.b16 %v228
    %v1649 = vunpack.c.h.b16 %v228
    %v1650 = vunpack.c.l.b16 %v229
    %v1651 = vunpack.c.h.b16 %v229
    %v1652 = vunpack.c.l.b16 %v230
    %v1653 = vunpack.c.h.b16 %v230
    %v1654 = vunpack.c.l.b16 %v231
    %v1655 = vunpack.c.h.b16 %v231
    %v1656 = vunpack.c.l.b16 %v232
    %v1657 = vunpack.c.h.b16 %v232
    %v1658 = vunpack.c.l.b16 %v233
    %v1659 = vunpack.c.h.b16 %v233
    %v1660 = vunpack.c.l.b16 %v234
    %v1661 = vunpack.c.h.b16 %v234
    %v1662 = vunpack.c.l.b16 %v235
    %v1663 = vunpack.c.h.b16 %v235
    %v1664 = vunpack.c.l.b16 %v236
    %v1665 = vunpack.c.h.b16 %v236
    %v1666 = vunpack.c.l.b16 %v237
    %v1667 = vunpack.c.h.b16 %v237
    %v1668 = vunpack.c.l.b16 %v238
    %v1669 = vunpack.c.h.b16 %v238
    %v1670 = vunpack.c.l.b16 %v239
    %v1671 = vunpack.c.h.b16 %v239
    %v1672 = vunpack.c.l.b16 %v240
    %v1673 = vunpack.c.h.b16 %v240
    %v1674 = vunpack.c.l.b16 %v241
    %v1675 = vunpack.c.h.b16 %v241
    %v1676 = vunpack.c.l.b16 %v242
    %v1677 = vunpack.c.h.b16 %v242
    %v1678 = vunpack.c.l.b16 %v243
    %v1679 = vunpack.c.h.b16 %v243
    %v1680 = vunpack.c.l.b16 %v244
    %v1681 = vunpack.c.h.b16 %v244
    %v1682 = vunpack.c.l.b16 %v245
    %v1683 = vunpack.c.h.b16 %v245
    %v1684 = vunpack.c.l.b16 %v246
    %v1685 = vunpack.c.h.b16 %v246
    %v1686 = vunpack.c.l.b16 %v247
    %v1687 = vunpack.c.h.b16 %v247
    %v1688 = vunpack.c.l.b16 %v248
    %v1689 = vunpack.c.h.b16 %v248
    %v1690 = vunpack.c.l.b16 %v249
    %v1691 = vunpack.c.h.b16 %v249
    %v1692 = vunpack.c.l.b16 %v250
    %v1693 = vunpack.c.h.b16 %v250
    %v1694 = vunpack.c.l.b16 %v251
    %v1695 = vunpack.c.h.b16 %v251
    %v1696 = vunpack.c.l.b16 %v252
    %v1697 = vunpack.c.h.b16 %v252
    %v1698 = vunpack.c.l.b16 %v253
    %v1699 = vunpack.c.h.b16 %v253
    %v1700 = vunpack.c.l.b16 %v254
    %v1701 = vunpack.c.h.b16 %v254
    %v1702 = vunpack.c.l.b16 %v255
    %v1703 = vunpack.c.h.b16 %v255
    %v1704 = vunpack.c.l.b16 %v256
    %v1705 = vunpack.c.h.b16 %v256
    %v1706 = vunpack.c.l.b16 %v257
    %v1707 = vunpack.c.h.b16 %v257
    %v1708 = vunpack.c.l.b16 %v258
    %v1709 = vunpack.c.h.b16 %v258
    %v1710 = vunpack.c.l.b16 %v259
    %v1711 = vunpack.c.h.b16 %v259
    %v1712 = vunpack.c.l.b16 %v260
    %v1713 = vunpack.c.h.b16 %v260
    %v1714 = vunpack.c.l.b16 %v261
    %v1715 = vunpack.c.h.b16 %v261
    %v1716 = vunpack.c.l.b16 %v262
    %v1717 = vunpack.c.h.b16 %v262
    %v1718 = vunpack.c.l.b16 %v263
    %v1719 = vunpack.c.h.b16 %v263
    %v1720 = vunpack.c.l.b16 %v264
    %v1721 = vunpack.c.h.b16 %v264
    %v1722 = vunpack.c.l.b16 %v265
    %v1723 = vunpack.c.h.b16 %v265
    %v1724 = vunpack.c.l.b16 %v266
    %v1725 = vunpack.c.h.b16 %v266
    %v1726 = vunpack.c.l.b16 %v267
    %v1727 = vunpack.c.h.b16 %v267
    %v1728 = vunpack.c.l.b16 %v268
    %v1729 = vunpack.c.h.b16 %v268
    %v1730 = vunpack.c.l.b16 %v269
    %v1731 = vunpack.c.h.b16 %v269
    %v1732 = vunpack.c.l.b16 %v270
    %v1733 = vunpack.c.h.b16 %v270
    %v1734 = vunpack.c.l.b16 %v271
    %v1735 = vunpack.c.h.b16 %v271
    %v1736 = vunpack.c.l.b16 %v272
    %v1737 = vunpack.c.h.b16 %v272
    %v1738 = vunpack.c.l.b16 %v273
    %v1739 = vunpack.c.h.b16 %v273
    %v1740 = vunpack.c.l.b16 %v274
    %v1741 = vunpack.c.h.b16 %v274
    %v1742 = vunpack.c.l.b16 %v275
    %v1743 = vunpack.c.h.b16 %v275
    %v1744 = vunpack.c.l.b16 %v276
    %v1745 = vunpack.c.h.b16 %v276
    %v1746 = vunpack.c.l.b16 %v277
    %v1747 = vunpack.c.h.b16 %v277
    %v1748 = vunpack.c.l.b16 %v278
    %v1749 = vunpack.c.h.b16 %v278
    %v1750 = vunpack.c.l.b16 %v279
    %v1751 = vunpack.c.h.b16 %v279
    %v1752 = vunpack.c.l.b16 %v280
    %v1753 = vunpack.c.h.b16 %v280
    %v1754 = vunpack.c.l.b16 %v281
    %v1755 = vunpack.c.h.b16 %v281
    %v1756 = vunpack.c.l.b16 %v282
    %v1757 = vunpack.c.h.b16 %v282
    %v1758 = vunpack.c.l.b16 %v283
    %v1759 = vunpack.c.h.b16 %v283
    %v1760 = vunpack.c.l.b16 %v284
    %v1761 = vunpack.c.h.b16 %v284
    %v1762 = vunpack.c.l.b16 %v285
    %v1763 = vunpack.c.h.b16 %v285
    %v1764 = vunpack.c.l.b16 %v286
    %v1765 = vunpack.c.h.b16 %v286
    %v1766 = vunpack.c.l.b16 %v287
    %v1767 = vunpack.c.h.b16 %v287
    %v1768 = vunpack.c.l.b16 %v288
    %v1769 = vunpack.c.h.b16 %v288
    %v1770 = vunpack.c.l.b16 %v289
    %v1771 = vunpack.c.h.b16 %v289
    %v1772 = vunpack.c.l.b16 %v290
    %v1773 = vunpack.c.h.b16 %v290
    %v1774 = vunpack.c.l.b16 %v291
    %v1775 = vunpack.c.h.b16 %v291
    %v1776 = vunpack.c.l.b16 %v292
    %v1777 = vunpack.c.h.b16 %v292
    %v1778 = vunpack.c.l.b16 %v293
    %v1779 = vunpack.c.h.b16 %v293
    %v1780 = vunpack.c.l.b16 %v294
    %v1781 = vunpack.c.h.b16 %v294
    %v1782 = vunpack.c.l.b16 %v295
    %v1783 = vunpack.c.h.b16 %v295
    %v1784 = vunpack.c.l.b16 %v296
    %v1785 = vunpack.c.h.b16 %v296
    %v1786 = vunpack.c.l.b16 %v297
    %v1787 = vunpack.c.h.b16 %v297
    %v1788 = vunpack.c.l.b16 %v298
    %v1789 = vunpack.c.h.b16 %v298
    %v1790 = vunpack.c.l.b16 %v299
    %v1791 = vunpack.c.h.b16 %v299
    %v1792 = vunpack.c.l.b16 %v300
    %v1793 = vunpack.c.h.b16 %v300
    %v1794 = vunpack.c.l.b16 %v301
    %v1795 = vunpack.c.h.b16 %v301
    %v1796 = vunpack.c.l.b16 %v302
    %v1797 = vunpack.c.h.b16 %v302
    %v1798 = vunpack.c.l.b16 %v303
    %v1799 = vunpack.c.h.b16 %v303
    %v1800 = vunpack.c.l.b16 %v304
    %v1801 = vunpack.c.h.b16 %v304
    %v1802 = vunpack.c.l.b16 %v305
    %v1803 = vunpack.c.h.b16 %v305
    %v1804 = vunpack.c.l.b16 %v306
    %v1805 = vunpack.c.h.b16 %v306
    %v1806 = vunpack.c.l.b16 %v307
    %v1807 = vunpack.c.h.b16 %v307
    %v1808 = vunpack.c.l.b16 %v308
    %v1809 = vunpack.c.h.b16 %v308
    %v1810 = vunpack.c.l.b16 %v309
    %v1811 = vunpack.c.h.b16 %v309
    %v1812 = vunpack.c.l.b16 %v310
    %v1813 = vunpack.c.h.b16 %v310
    %v1814 = vunpack.c.l.b16 %v311
    %v1815 = vunpack.c.h.b16 %v311
    %v1816 = vunpack.c.l.b16 %v312
    %v1817 = vunpack.c.h.b16 %v312
    %v1818 = vunpack.c.l.b16 %v313
    %v1819 = vunpack.c.h.b16 %v313
    %v1820 = vunpack.c.l.b16 %v314
    %v1821 = vunpack.c.h.b16 %v314
    %v1822 = vunpack.c.l.b16 %v315
    %v1823 = vunpack.c.h.b16 %v315
    %v1824 = vunpack.c.l.b16 %v316
    %v1825 = vunpack.c.h.b16 %v316
    %v1826 = vunpack.c.l.b16 %v317
    %v1827 = vunpack.c.h.b16 %v317
    %v1828 = vunpack.c.l.b16 %v318
    %v1829 = vunpack.c.h.b16 %v318
    %v1830 = vunpack.c.l.b16 %v319
    %v1831 = vunpack.c.h.b16 %v319
    %v1832 = vunpack.c.l.b16 %v320
    %v1833 = vunpack.c.h.b16 %v320
    %v1834 = vunpack.c.l.b16 %v321
    %v1835 = vunpack.c.h.b16 %v321
    %v1836 = vunpack.c.l.b16 %v322
    %v1837 = vunpack.c.h.b16 %v322
    %v1838 = vunpack.c.l.b16 %v323
    %v1839 = vunpack.c.h.b16 %v323
    %v1840 = vunpack.c.l.b16 %v324
    %v1841 = vunpack.c.h.b16 %v324
    %v1842 = vunpack.c.l.b16 %v325
    %v1843 = vunpack.c.h.b16 %v325
    %v1844 = vunpack.c.l.b16 %v326
    %v1845 = vunpack.c.h.b16 %v326
    %v1846 = vunpack.c.l.b16 %v327
    %v1847 = vunpack.c.h.b16 %v327
    %v1848 = vunpack.c.l.b16 %v328
    %v1849 = vunpack.c.h.b16 %v328
    %v1850 = vunpack.c.l.b16 %v329
    %v1851 = vunpack.c.h.b16 %v329
    %v1852 = vunpack.c.l.b16 %v330
    %v1853 = vunpack.c.h.b16 %v330
    %v1854 = vunpack.c.l.b16 %v331
    %v1855 = vunpack.c.h.b16 %v331
    %v1856 = vunpack.c.l.b16 %v332
    %v1857 = vunpack.c.h.b16 %v332
    %v1858 = vunpack.c.l.b16 %v333
    %v1859 = vunpack.c.h.b16 %v333
    %v1860 = vunpack.c.l.b16 %v334
    %v1861 = vunpack.c.h.b16 %v334
    %v1862 = vunpack.c.l.b16 %v335
    %v1863 = vunpack.c.h.b16 %v335
    %v1864 = vunpack.c.l.b16 %v336
    %v1865 = vunpack.c.h.b16 %v336
    %v1866 = vunpack.c.l.b16 %v337
    %v1867 = vunpack.c.h.b16 %v337
    %v1868 = vunpack.c.l.b16 %v338
    %v1869 = vunpack.c.h.b16 %v338
    %v1870 = vunpack.c.l.b16 %v339
    %v1871 = vunpack.c.h.b16 %v339
    %v1872 = vunpack.c.l.b16 %v340
    %v1873 = vunpack.c.h.b16 %v340
    %v1874 = vunpack.c.l.b16 %v341
    %v1875 = vunpack.c.h.b16 %v341
    %v1876 = vunpack.c.l.b16 %v342
    %v1877 = vunpack.c.h.b16 %v342
    %v1878 = vunpack.c.l.b16 %v343
    %v1879 = vunpack.c.h.b16 %v343
    %v1880 = vunpack.c.l.b16 %v344
    %v1881 = vunpack.c.h.b16 %v344
    %v1882 = vunpack.c.l.b16 %v345
    %v1883 = vunpack.c.h.b16 %v345
    %v1884 = vunpack.c.l.b16 %v346
    %v1885 = vunpack.c.h.b16 %v346
    %v1886 = vunpack.c.l.b16 %v347
    %v1887 = vunpack.c.h.b16 %v347
    %v1888 = vunpack.c.l.b16 %v348
    %v1889 = vunpack.c.h.b16 %v348
    %v1890 = vunpack.c.l.b16 %v349
    %v1891 = vunpack.c.h.b16 %v349
    %v1892 = vunpack.c.l.b16 %v350
    %v1893 = vunpack.c.h.b16 %v350
    %v1894 = vunpack.c.l.b16 %v351
    %v1895 = vunpack.c.h.b16 %v351
    %v1896 = vunpack.c.l.b16 %v352
    %v1897 = vunpack.c.h.b16 %v352
    %v1898 = vunpack.c.l.b16 %v353
    %v1899 = vunpack.c.h.b16 %v353
    %v1900 = vunpack.c.l.b16 %v354
    %v1901 = vunpack.c.h.b16 %v354
    %v1902 = vunpack.c.l.b16 %v355
    %v1903 = vunpack.c.h.b16 %v355
    %v1904 = vunpack.c.l.b16 %v356
    %v1905 = vunpack.c.h.b16 %v356
    %v1906 = vunpack.c.l.b16 %v357
    %v1907 = vunpack.c.h.b16 %v357
    %v1908 = vunpack.c.l.b16 %v358
    %v1909 = vunpack.c.h.b16 %v358
    %v1910 = vunpack.c.l.b16 %v359
    %v1911 = vunpack.c.h.b16 %v359
    %v1912 = vunpack.c.l.b16 %v360
    %v1913 = vunpack.c.h.b16 %v360
    %v1914 = vunpack.c.l.b16 %v361
    %v1915 = vunpack.c.h.b16 %v361
    %v1916 = vunpack.c.l.b16 %v362
    %v1917 = vunpack.c.h.b16 %v362
    %v1918 = vunpack.c.l.b16 %v363
    %v1919 = vunpack.c.h.b16 %v363
    %v1920 = vunpack.c.l.b16 %v364
    %v1921 = vunpack.c.h.b16 %v364
    %v1922 = vunpack.c.l.b16 %v365
    %v1923 = vunpack.c.h.b16 %v365
    %v1924 = vunpack.c.l.b16 %v366
    %v1925 = vunpack.c.h.b16 %v366
    %v1926 = vunpack.c.l.b16 %v367
    %v1927 = vunpack.c.h.b16 %v367
    %v1928 = vunpack.c.l.b16 %v368
    %v1929 = vunpack.c.h.b16 %v368
    %v1930 = vunpack.c.l.b16 %v369
    %v1931 = vunpack.c.h.b16 %v369
    %v1932 = vunpack.c.l.b16 %v370
    %v1933 = vunpack.c.h.b16 %v370
    %v1934 = vunpack.c.l.b16 %v371
    %v1935 = vunpack.c.h.b16 %v371
    %v1936 = vunpack.c.l.b16 %v372
    %v1937 = vunpack.c.h.b16 %v372
    %v1938 = vunpack.c.l.b16 %v373
    %v1939 = vunpack.c.h.b16 %v373
    %v1940 = vunpack.c.l.b16 %v374
    %v1941 = vunpack.c.h.b16 %v374
    %v1942 = vunpack.c.l.b16 %v375
    %v1943 = vunpack.c.h.b16 %v375
    %v1944 = vunpack.c.l.b16 %v376
    %v1945 = vunpack.c.h.b16 %v376
    %v1946 = vunpack.c.l.b16 %v377
    %v1947 = vunpack.c.h.b16 %v377
    %v1948 = vunpack.c.l.b16 %v378
    %v1949 = vunpack.c.h.b16 %v378
    %v1950 = vunpack.c.l.b16 %v379
    %v1951 = vunpack.c.h.b16 %v379
    %v1952 = vunpack.c.l.b16 %v380
    %v1953 = vunpack.c.h.b16 %v380
    %v1954 = vunpack.c.l.b16 %v381
    %v1955 = vunpack.c.h.b16 %v381
    %v1956 = vunpack.c.l.b16 %v382
    %v1957 = vunpack.c.h.b16 %v382
    %v1958 = vunpack.c.l.b16 %v383
    %v1959 = vunpack.c.h.b16 %v383
    %v1960 = vunpack.c.l.b16 %v384
    %v1961 = vunpack.c.h.b16 %v384
    %v1962 = vunpack.c.l.b16 %v385
    %v1963 = vunpack.c.h.b16 %v385
    %v1964 = vunpack.c.l.b16 %v386
    %v1965 = vunpack.c.h.b16 %v386
    %v1966 = vunpack.c.l.b16 %v387
    %v1967 = vunpack.c.h.b16 %v387
    %v1968 = vunpack.c.l.b16 %v388
    %v1969 = vunpack.c.h.b16 %v388
    %v1970 = vunpack.c.l.b16 %v389
    %v1971 = vunpack.c.h.b16 %v389
    %v1972 = vunpack.c.l.b16 %v390
    %v1973 = vunpack.c.h.b16 %v390
    %v1974 = vunpack.c.l.b16 %v391
    %v1975 = vunpack.c.h.b16 %v391
    %v1976 = vunpack.c.l.b16 %v392
    %v1977 = vunpack.c.h.b16 %v392
    %v1978 = vunpack.c.l.b16 %v393
    %v1979 = vunpack.c.h.b16 %v393
    %v1980 = vunpack.c.l.b16 %v394
    %v1981 = vunpack.c.h.b16 %v394
    %v1982 = vunpack.c.l.b16 %v395
    %v1983 = vunpack.c.h.b16 %v395
    %v1984 = vunpack.c.l.b16 %v396
    %v1985 = vunpack.c.h.b16 %v396
    %v1986 = vunpack.c.l.b16 %v397
    %v1987 = vunpack.c.h.b16 %v397
    %v1988 = vunpack.c.l.b16 %v398
    %v1989 = vunpack.c.h.b16 %v398
    %v1990 = vunpack.c.l.b16 %v399
    %v1991 = vunpack.c.h.b16 %v399
    %v1992 = vunpack.c.l.b16 %v400
    %v1993 = vunpack.c.h.b16 %v400
    %v1994 = vunpack.c.l.b16 %v401
    %v1995 = vunpack.c.h.b16 %v401
    %v1996 = vunpack.c.l.b16 %v402
    %v1997 = vunpack.c.h.b16 %v402
    %v1998 = vunpack.c.l.b16 %v403
    %v1999 = vunpack.c.h.b16 %v403
    %v2000 = vunpack.c.l.b16 %v404
    %v2001 = vunpack.c.h.b16 %v404
    %v2002 = vunpack.c.l.b16 %v405
    %v2003 = vunpack.c.h.b16 %v405
    %v2004 = vunpack.c.l.b16 %v406
    %v2005 = vunpack.c.h.b16 %v406
    %v2006 = vunpack.c.l.b16 %v407
    %v2007 = vunpack.c.h.b16 %v407
    %v2008 = vunpack.c.l.b16 %v408
    %v2009 = vunpack.c.h.b16 %v408
    %v2010 = vunpack.c.l.b16 %v409
    %v2011 = vunpack.c.h.b16 %v409
    %v2012 = vunpack.c.l.b16 %v410
    %v2013 = vunpack.c.h.b16 %v410
    %v2014 = vunpack.c.l.b16 %v411
    %v2015 = vunpack.c.h.b16 %v411
    %v2016 = vunpack.c.l.b16 %v412
    %v2017 = vunpack.c.h.b16 %v412
    %v2018 = vunpack.c.l.b16 %v413
    %v2019 = vunpack.c.h.b16 %v413
    %v2020 = vunpack.c.l.b16 %v414
    %v2021 = vunpack.c.h.b16 %v414
    %v2022 = vunpack.c.l.b16 %v415
    %v2023 = vunpack.c.h.b16 %v415
    %v2024 = vunpack.c.l.b16 %v416
    %v2025 = vunpack.c.h.b16 %v416
    %v2026 = vunpack.c.l.b16 %v417
    %v2027 = vunpack.c.h.b16 %v417
    %v2028 = vunpack.c.l.b16 %v418
    %v2029 = vunpack.c.h.b16 %v418
    %v2030 = vunpack.c.l.b16 %v419
    %v2031 = vunpack.c.h.b16 %v419
    %v2032 = vunpack.c.l.b16 %v420
    %v2033 = vunpack.c.h.b16 %v420
    %v2034 = vunpack.c.l.b16 %v421
    %v2035 = vunpack.c.h.b16 %v421
    %v2036 = vunpack.c.l.b16 %v422
    %v2037 = vunpack.c.h.b16 %v422
    %v2038 = vunpack.c.l.b16 %v423
    %v2039 = vunpack.c.h.b16 %v423
    %v2040 = vunpack.c.l.b16 %v424
    %v2041 = vunpack.c.h.b16 %v424
    %v2042 = vunpack.c.l.b16 %v425
    %v2043 = vunpack.c.h.b16 %v425
    %v2044 = vunpack.c.l.b16 %v426
    %v2045 = vunpack.c.h.b16 %v426
    %v2046 = vunpack.c.l.b16 %v427
    %v2047 = vunpack.c.h.b16 %v427
    %v2048 = vunpack.c.l.b16 %v428
    %v2049 = vunpack.c.h.b16 %v428
    %v2050 = vunpack.c.l.b16 %v429
    %v2051 = vunpack.c.h.b16 %v429
    %v2052 = vunpack.c.l.b16 %v430
    %v2053 = vunpack.c.h.b16 %v430
    %v2054 = vunpack.c.l.b16 %v431
    %v2055 = vunpack.c.h.b16 %v431
    %v2056 = vunpack.c.l.b16 %v432
    %v2057 = vunpack.c.h.b16 %v432
    %v2058 = vunpack.c.l.b16 %v433
    %v2059 = vunpack.c.h.b16 %v433
    %v2060 = vunpack.c.l.b16 %v434
    %v2061 = vunpack.c.h.b16 %v434
    %v2062 = vunpack.c.l.b16 %v435
    %v2063 = vunpack.c.h.b16 %v435
    %v2064 = vunpack.c.l.b16 %v436
    %v2065 = vunpack.c.h.b16 %v436
    %v2066 = vunpack.c.l.b16 %v437
    %v2067 = vunpack.c.h.b16 %v437
    %v2068 = vunpack.c.l.b16 %v438
    %v2069 = vunpack.c.h.b16 %v438
    %v2070 = vunpack.c.l.b16 %v439
    %v2071 = vunpack.c.h.b16 %v439
    %v2072 = vunpack.c.l.b16 %v440
    %v2073 = vunpack.c.h.b16 %v440
    %v2074 = vunpack.c.l.b16 %v441
    %v2075 = vunpack.c.h.b16 %v441
    %v2076 = vunpack.c.l.b16 %v442
    %v2077 = vunpack.c.h.b16 %v442
    %v2078 = vunpack.c.l.b16 %v443
    %v2079 = vunpack.c.h.b16 %v443
    %v2080 = vunpack.c.l.b16 %v444
    %v2081 = vunpack.c.h.b16 %v444
    %v2082 = vunpack.c.l.b16 %v445
    %v2083 = vunpack.c.h.b16 %v445
    %v2084 = vunpack.c.l.b16 %v446
    %v2085 = vunpack.c.h.b16 %v446
    %v2086 = vunpack.c.l.b16 %v447
    %v2087 = vunpack.c.h.b16 %v447
    %v2088 = vunpack.c.l.b16 %v448
    %v2089 = vunpack.c.h.b16 %v448
    %v2090 = vunpack.c.l.b16 %v449
    %v2091 = vunpack.c.h.b16 %v449
    %v2092 = vunpack.c.l.b16 %v450
    %v2093 = vunpack.c.h.b16 %v450
    %v2094 = vunpack.c.l.b16 %v451
    %v2095 = vunpack.c.h.b16 %v451
    %v2096 = vunpack.c.l.b16 %v452
    %v2097 = vunpack.c.h.b16 %v452
    %v2098 = vunpack.c.l.b16 %v453
    %v2099 = vunpack.c.h.b16 %v453
    %v2100 = vunpack.c.l.b16 %v454
    %v2101 = vunpack.c.h.b16 %v454
    %v2102 = vunpack.c.l.b16 %v455
    %v2103 = vunpack.c.h.b16 %v455
    %v2104 = vunpack.c.l.b16 %v456
    %v2105 = vunpack.c.h.b16 %v456
    %v2106 = vunpack.c.l.b16 %v457
    %v2107 = vunpack.c.h.b16 %v457
    %v2108 = vunpack.c.l.b16 %v458
    %v2109 = vunpack.c.h.b16 %v458
    %v2110 = vunpack.c.l.b16 %v459
    %v2111 = vunpack.c.h.b16 %v459
    %v2112 = vunpack.c.l.b16 %v460
    %v2113 = vunpack.c.h.b16 %v460
    %v2114 = vunpack.c.l.b16 %v461
    %v2115 = vunpack.c.h.b16 %v461
    %v2116 = vunpack.c.l.b16 %v462
    %v2117 = vunpack.c.h.b16 %v462
    %v2118 = vunpack.c.l.b16 %v463
    %v2119 = vunpack.c.h.b16 %v463
    %v2120 = vunpack.c.l.b16 %v464
    %v2121 = vunpack.c.h.b16 %v464
    %v2122 = vunpack.c.l.b16 %v465
    %v2123 = vunpack.c.h.b16 %v465
    %v2124 = vunpack.c.l.b16 %v466
    %v2125 = vunpack.c.h.b16 %v466
    %v2126 = vunpack.c.l.b16 %v467
    %v2127 = vunpack.c.h.b16 %v467
    %v2128 = vunpack.c.l.b16 %v468
    %v2129 = vunpack.c.h.b16 %v468
    %v2130 = vunpack.c.l.b16 %v469
    %v2131 = vunpack.c.h.b16 %v469
    %v2132 = vunpack.c.l.b16 %v470
    %v2133 = vunpack.c.h.b16 %v470
    %v2134 = vunpack.c.l.b16 %v471
    %v2135 = vunpack.c.h.b16 %v471
    %v2136 = vunpack.c.l.b16 %v472
    %v2137 = vunpack.c.h.b16 %v472
    %v2138 = vunpack.c.l.b16 %v473
    %v2139 = vunpack.c.h.b16 %v473
    %v2140 = vunpack.c.l.b16 %v474
    %v2141 = vunpack.c.h.b16 %v474
    %v2142 = vunpack.c.l.b16 %v475
    %v2143 = vunpack.c.h.b16 %v475
    %v2144 = vunpack.c.l.b16 %v476
    %v2145 = vunpack.c.h.b16 %v476
    %v2146 = vunpack.c.l.b16 %v477
    %v2147 = vunpack.c.h.b16 %v477
    %v2148 = vunpack.c.l.b16 %v478
    %v2149 = vunpack.c.h.b16 %v478
    %v2150 = vunpack.c.l.b16 %v479
    %v2151 = vunpack.c.h.b16 %v479
    %v2152 = vunpack.c.l.b16 %v480
    %v2153 = vunpack.c.h.b16 %v480
    %v2154 = vunpack.c.l.b16 %v481
    %v2155 = vunpack.c.h.b16 %v481
    %v2156 = vunpack.c.l.b16 %v482
    %v2157 = vunpack.c.h.b16 %v482
    %v2158 = vunpack.c.l.b16 %v483
    %v2159 = vunpack.c.h.b16 %v483
    %v2160 = vunpack.c.l.b16 %v484
    %v2161 = vunpack.c.h.b16 %v484
    %v2162 = vunpack.c.l.b16 %v485
    %v2163 = vunpack.c.h.b16 %v485
    %v2164 = vunpack.c.l.b16 %v486
    %v2165 = vunpack.c.h.b16 %v486
    %v2166 = vunpack.c.l.b16 %v487
    %v2167 = vunpack.c.h.b16 %v487
    %v2168 = vunpack.c.l.b16 %v488
    %v2169 = vunpack.c.h.b16 %v488
    %v2170 = vunpack.c.l.b16 %v489
    %v2171 = vunpack.c.h.b16 %v489
    %v2172 = vunpack.c.l.b16 %v490
    %v2173 = vunpack.c.h.b16 %v490
    %v2174 = vunpack.c.l.b16 %v491
    %v2175 = vunpack.c.h.b16 %v491
    %v2176 = vunpack.c.l.b16 %v492
    %v2177 = vunpack.c.h.b16 %v492
    %v2178 = vunpack.c.l.b16 %v493
    %v2179 = vunpack.c.h.b16 %v493
    %v2180 = vunpack.c.l.b16 %v494
    %v2181 = vunpack.c.h.b16 %v494
    %v2182 = vunpack.c.l.b16 %v495
    %v2183 = vunpack.c.h.b16 %v495
    %v2184 = vunpack.c.l.b16 %v496
    %v2185 = vunpack.c.h.b16 %v496
    %v2186 = vunpack.c.l.b16 %v497
    %v2187 = vunpack.c.h.b16 %v497
    %v2188 = vunpack.c.l.b16 %v498
    %v2189 = vunpack.c.h.b16 %v498
    %v2190 = vunpack.c.l.b16 %v499
    %v2191 = vunpack.c.h.b16 %v499
    %v2192 = vunpack.c.l.b16 %v500
    %v2193 = vunpack.c.h.b16 %v500
    %v2194 = vunpack.c.l.b16 %v501
    %v2195 = vunpack.c.h.b16 %v501
    %v2196 = vunpack.c.l.b16 %v502
    %v2197 = vunpack.c.h.b16 %v502
    %v2198 = vunpack.c.l.b16 %v503
    %v2199 = vunpack.c.h.b16 %v503
    %v2200 = vunpack.c.l.b16 %v504
    %v2201 = vunpack.c.h.b16 %v504
    %v2202 = vunpack.c.l.b16 %v505
    %v2203 = vunpack.c.h.b16 %v505
    %v2204 = vunpack.c.l.b16 %v506
    %v2205 = vunpack.c.h.b16 %v506
    %v2206 = vunpack.c.l.b16 %v507
    %v2207 = vunpack.c.h.b16 %v507
    %v2208 = vunpack.c.l.b16 %v508
    %v2209 = vunpack.c.h.b16 %v508
    %v2210 = vunpack.c.l.b16 %v509
    %v2211 = vunpack.c.h.b16 %v509
    %v2212 = vunpack.c.l.b16 %v510
    %v2213 = vunpack.c.h.b16 %v510
    %v2214 = vunpack.c.l.b16 %v511
    %v2215 = vunpack.c.h.b16 %v511
    %v2216 = vunpack.c.l.b16 %v512
    %v2217 = vunpack.c.h.b16 %v512
    %v2218 = vunpack.c.l.b16 %v513
    %v2219 = vunpack.c.h.b16 %v513
    %v2220 = vunpack.c.l.b16 %v514
    %v2221 = vunpack.c.h.b16 %v514
    %v2222 = vunpack.c.l.b16 %v515
    %v2223 = vunpack.c.h.b16 %v515
    %v2224 = vunpack.c.l.b16 %v516
    %v2225 = vunpack.c.h.b16 %v516
    %v2226 = vunpack.c.l.b16 %v517
    %v2227 = vunpack.c.h.b16 %v517
    %v2228 = vunpack.c.l.b16 %v518
    %v2229 = vunpack.c.h.b16 %v518
    %v2230 = vunpack.c.l.b16 %v519
    %v2231 = vunpack.c.h.b16 %v519
    %v2232 = vunpack.c.l.b16 %v520
    %v2233 = vunpack.c.h.b16 %v520
    %v2234 = vunpack.c.l.b16 %v521
    %v2235 = vunpack.c.h.b16 %v521
    %v2236 = vunpack.c.l.b16 %v522
    %v2237 = vunpack.c.h.b16 %v522
    %v2238 = vunpack.c.l.b16 %v523
    %v2239 = vunpack.c.h.b16 %v523
    %v2240 = vunpack.c.l.b16 %v524
    %v2241 = vunpack.c.h.b16 %v524
    %v2242 = vunpack.c.l.b16 %v525
    %v2243 = vunpack.c.h.b16 %v525
    %v2244 = vunpack.c.l.b16 %v526
    %v2245 = vunpack.c.h.b16 %v526
    %v2246 = vunpack.c.l.b16 %v527
    %v2247 = vunpack.c.h.b16 %v527
    %v2248 = vunpack.c.l.b16 %v528
    %v2249 = vunpack.c.h.b16 %v528
    %v2250 = vunpack.c.l.b16 %v529
    %v2251 = vunpack.c.h.b16 %v529
    %v2252 = vunpack.c.l.b16 %v530
    %v2253 = vunpack.c.h.b16 %v530
    %v2254 = vunpack.c.l.b16 %v531
    %v2255 = vunpack.c.h.b16 %v531
    %v2256 = vunpack.c.l.b16 %v532
    %v2257 = vunpack.c.h.b16 %v532
    %v2258 = vunpack.c.l.b16 %v533
    %v2259 = vunpack.c.h.b16 %v533
    %v2260 = vunpack.c.l.b16 %v534
    %v2261 = vunpack.c.h.b16 %v534
    %v2262 = vunpack.c.l.b16 %v535
    %v2263 = vunpack.c.h.b16 %v535
    %v2264 = vunpack.c.l.b16 %v536
    %v2265 = vunpack.c.h.b16 %v536
    %v2266 = vunpack.c.l.b16 %v537
    %v2267 = vunpack.c.h.b16 %v537
    %v2268 = vunpack.c.l.b16 %v538
    %v2269 = vunpack.c.h.b16 %v538
    %v2270 = vunpack.c.l.b16 %v539
    %v2271 = vunpack.c.h.b16 %v539
    %v2272 = vunpack.c.l.b16 %v540
    %v2273 = vunpack.c.h.b16 %v540
    %v2274 = vunpack.c.l.b16 %v541
    %v2275 = vunpack.c.h.b16 %v541
    %v2276 = vunpack.c.l.b16 %v542
    %v2277 = vunpack.c.h.b16 %v542
    %v2278 = vunpack.c.l.b16 %v543
    %v2279 = vunpack.c.h.b16 %v543
    %v2280 = vunpack.c.l.b16 %v544
    %v2281 = vunpack.c.h.b16 %v544
    %v2282 = vunpack.c.l.b16 %v545
    %v2283 = vunpack.c.h.b16 %v545
    %v2284 = vunpack.c.l.b16 %v546
    %v2285 = vunpack.c.h.b16 %v546
    %v2286 = vunpack.c.l.b16 %v547
    %v2287 = vunpack.c.h.b16 %v547
    %v2288 = vunpack.c.l.b16 %v548
    %v2289 = vunpack.c.h.b16 %v548
    %v2290 = vunpack.c.l.b16 %v549
    %v2291 = vunpack.c.h.b16 %v549
    %v2292 = vunpack.c.l.b16 %v550
    %v2293 = vunpack.c.h.b16 %v550
    %v2294 = vunpack.c.l.b16 %v551
    %v2295 = vunpack.c.h.b16 %v551
    %v2296 = vunpack.c.l.b16 %v552
    %v2297 = vunpack.c.h.b16 %v552
    %v2298 = vunpack.c.l.b16 %v553
    %v2299 = vunpack.c.h.b16 %v553
    %v2300 = vunpack.c.l.b16 %v554
    %v2301 = vunpack.c.h.b16 %v554
    %v2302 = vunpack.c.l.b16 %v555
    %v2303 = vunpack.c.h.b16 %v555
    %v2304 = vunpack.c.l.b16 %v556
    %v2305 = vunpack.c.h.b16 %v556
    %v2306 = vunpack.c.l.b16 %v557
    %v2307 = vunpack.c.h.b16 %v557
    %v2308 = vunpack.c.l.b16 %v558
    %v2309 = vunpack.c.h.b16 %v558
    %v2310 = vunpack.c.l.b16 %v559
    %v2311 = vunpack.c.h.b16 %v559
    %v2312 = vunpack.c.l.b16 %v560
    %v2313 = vunpack.c.h.b16 %v560
    %v2314 = vunpack.c.l.b16 %v561
    %v2315 = vunpack.c.h.b16 %v561
    %v2316 = vunpack.c.l.b16 %v562
    %v2317 = vunpack.c.h.b16 %v562
    %v2318 = vunpack.c.l.b16 %v563
    %v2319 = vunpack.c.h.b16 %v563
    %v2320 = vunpack.c.l.b16 %v564
    %v2321 = vunpack.c.h.b16 %v564
    %v2322 = vunpack.c.l.b16 %v565
    %v2323 = vunpack.c.h.b16 %v565
    %v2324 = vunpack.c.l.b16 %v566
    %v2325 = vunpack.c.h.b16 %v566
    %v2326 = vunpack.c.l.b16 %v567
    %v2327 = vunpack.c.h.b16 %v567
    %v2328 = vunpack.c.l.b16 %v568
    %v2329 = vunpack.c.h.b16 %v568
    %v2330 = vunpack.c.l.b16 %v569
    %v2331 = vunpack.c.h.b16 %v569
    %v2332 = vunpack.c.l.b16 %v570
    %v2333 = vunpack.c.h.b16 %v570
    %v2334 = vunpack.c.l.b16 %v571
    %v2335 = vunpack.c.h.b16 %v571
    %v2336 = vunpack.c.l.b16 %v572
    %v2337 = vunpack.c.h.b16 %v572
    %v2338 = vunpack.c.l.b16 %v573
    %v2339 = vunpack.c.h.b16 %v573
    %v2340 = vunpack.c.l.b16 %v574
    %v2341 = vunpack.c.h.b16 %v574
    %v2342 = vunpack.c.l.b16 %v575
    %v2343 = vunpack.c.h.b16 %v575
    %v2344 = vunpack.c.l.b16 %v576
    %v2345 = vunpack.c.h.b16 %v576
    %v2346 = vunpack.c.l.b16 %v577
    %v2347 = vunpack.c.h.b16 %v577
    %v2348 = vunpack.c.l.b16 %v578
    %v2349 = vunpack.c.h.b16 %v578
    %v2350 = vunpack.c.l.b16 %v579
    %v2351 = vunpack.c.h.b16 %v579
    %v2352 = vunpack.c.l.b16 %v580
    %v2353 = vunpack.c.h.b16 %v580
    %v2354 = vunpack.c.l.b16 %v581
    %v2355 = vunpack.c.h.b16 %v581
    %v2356 = vunpack.c.l.b16 %v582
    %v2357 = vunpack.c.h.b16 %v582
    %v2358 = vunpack.c.l.b16 %v583
    %v2359 = vunpack.c.h.b16 %v583
    %v2360 = vunpack.c.l.b16 %v584
    %v2361 = vunpack.c.h.b16 %v584
    %v2362 = vunpack.c.l.b16 %v585
    %v2363 = vunpack.c.h.b16 %v585
    %v2364 = vunpack.c.l.b16 %v586
    %v2365 = vunpack.c.h.b16 %v586
    %v2366 = vunpack.c.l.b16 %v587
    %v2367 = vunpack.c.h.b16 %v587
    %v2368 = vunpack.c.l.b16 %v588
    %v2369 = vunpack.c.h.b16 %v588
    %v2370 = vunpack.c.l.b16 %v589
    %v2371 = vunpack.c.h.b16 %v589
    %v2372 = vunpack.c.l.b16 %v590
    %v2373 = vunpack.c.h.b16 %v590
    %v2374 = vunpack.c.l.b16 %v591
    %v2375 = vunpack.c.h.b16 %v591
    %v2376 = vunpack.c.l.b16 %v592
    %v2377 = vunpack.c.h.b16 %v592
    %v2378 = vunpack.c.l.b16 %v593
    %v2379 = vunpack.c.h.b16 %v593
    %v2380 = vunpack.c.l.b16 %v594
    %v2381 = vunpack.c.h.b16 %v594
    %v2382 = vunpack.c.l.b16 %v595
    %v2383 = vunpack.c.h.b16 %v595
    %v2384 = vunpack.c.l.b16 %v596
    %v2385 = vunpack.c.h.b16 %v596
    %v2386 = vunpack.c.l.b16 %v597
    %v2387 = vunpack.c.h.b16 %v597
    %v2388 = vunpack.c.l.b16 %v598
    %v2389 = vunpack.c.h.b16 %v598
    %v2390 = vunpack.c.l.b16 %v599
    %v2391 = vunpack.c.h.b16 %v599
    %v2392 = vunpack.c.l.b16 %v600
    %v2393 = vunpack.c.h.b16 %v600
    %v2394 = vunpack.c.l.b16 %v601
    %v2395 = vunpack.c.h.b16 %v601
    %v2396 = vunpack.c.l.b16 %v602
    %v2397 = vunpack.c.h.b16 %v602
    %v2398 = vunpack.c.l.b16 %v603
    %v2399 = vunpack.c.h.b16 %v603
    %v2400 = vunpack.c.l.b16 %v604
    %v2401 = vunpack.c.h.b16 %v604
    %v2402 = vunpack.c.l.b16 %v605
    %v2403 = vunpack.c.h.b16 %v605
    %v2404 = vunpack.c.l.b16 %v606
    %v2405 = vunpack.c.h.b16 %v606
    %v2406 = vunpack.c.l.b16 %v607
    %v2407 = vunpack.c.h.b16 %v607
    %v2408 = vunpack.c.l.b16 %v608
    %v2409 = vunpack.c.h.b16 %v608
    %v2410 = vunpack.c.l.b16 %v609
    %v2411 = vunpack.c.h.b16 %v609
    %v2412 = vunpack.c.l.b16 %v610
    %v2413 = vunpack.c.h.b16 %v610
    %v2414 = vunpack.c.l.b16 %v611
    %v2415 = vunpack.c.h.b16 %v611
    %v2416 = vunpack.c.l.b16 %v612
    %v2417 = vunpack.c.h.b16 %v612
    %v2418 = vunpack.c.l.b16 %v613
    %v2419 = vunpack.c.h.b16 %v613
    %v2420 = vunpack.c.l.b16 %v614
    %v2421 = vunpack.c.h.b16 %v614
    %v2422 = vunpack.c.l.b16 %v615
    %v2423 = vunpack.c.h.b16 %v615
    %v2424 = vunpack.c.l.b16 %v616
    %v2425 = vunpack.c.h.b16 %v616
    %v2426 = vunpack.c.l.b16 %v617
    %v2427 = vunpack.c.h.b16 %v617
    %v2428 = vunpack.c.l.b16 %v618
    %v2429 = vunpack.c.h.b16 %v618
    %v2430 = vunpack.c.l.b16 %v619
    %v2431 = vunpack.c.h.b16 %v619
    %v2432 = vunpack.c.l.b16 %v620
    %v2433 = vunpack.c.h.b16 %v620
    %v2434 = vunpack.c.l.b16 %v621
    %v2435 = vunpack.c.h.b16 %v621
    %v2436 = vunpack.c.l.b16 %v622
    %v2437 = vunpack.c.h.b16 %v622
    %v2438 = vunpack.c.l.b16 %v623
    %v2439 = vunpack.c.h.b16 %v623
    %v2440 = vunpack.c.l.b16 %v624
    %v2441 = vunpack.c.h.b16 %v624
    %v2442 = vunpack.c.l.b16 %v625
    %v2443 = vunpack.c.h.b16 %v625
    %v2444 = vunpack.c.l.b16 %v626
    %v2445 = vunpack.c.h.b16 %v626
    %v2446 = vunpack.c.l.b16 %v627
    %v2447 = vunpack.c.h.b16 %v627
    %v2448 = vunpack.c.l.b16 %v628
    %v2449 = vunpack.c.h.b16 %v628
    %v2450 = vunpack.c.l.b16 %v629
    %v2451 = vunpack.c.h.b16 %v629
    %v2452 = vunpack.c.l.b16 %v630
    %v2453 = vunpack.c.h.b16 %v630
    %v2454 = vunpack.c.l.b16 %v631
    %v2455 = vunpack.c.h.b16 %v631
    %v2456 = vunpack.c.l.b16 %v632
    %v2457 = vunpack.c.h.b16 %v632
    %v2458 = vunpack.c.l.b16 %v633
    %v2459 = vunpack.c.h.b16 %v633
    %v2460 = vunpack.c.l.b16 %v634
    %v2461 = vunpack.c.h.b16 %v634
    %v2462 = vunpack.c.l.b16 %v635
    %v2463 = vunpack.c.h.b16 %v635
    %v2464 = vunpack.c.l.b16 %v636
    %v2465 = vunpack.c.h.b16 %v636
    %v2466 = vunpack.c.l.b16 %v637
    %v2467 = vunpack.c.h.b16 %v637
    %v2468 = vunpack.c.l.b16 %v638
    %v2469 = vunpack.c.h.b16 %v638
    %v2470 = vunpack.c.l.b16 %v639
    %v2471 = vunpack.c.h.b16 %v639
    %v2472 = vunpack.c.l.b16 %v640
    %v2473 = vunpack.c.h.b16 %v640
    %v2474 = vunpack.c.l.b16 %v641
    %v2475 = vunpack.c.h.b16 %v641
    %v2476 = vunpack.c.l.b16 %v642
    %v2477 = vunpack.c.h.b16 %v642
    %v2478 = vunpack.c.l.b16 %v643
    %v2479 = vunpack.c.h.b16 %v643
    %v2480 = vunpack.c.l.b16 %v644
    %v2481 = vunpack.c.h.b16 %v644
    %v2482 = vunpack.c.l.b16 %v645
    %v2483 = vunpack.c.h.b16 %v645
    %v2484 = vunpack.c.l.b16 %v646
    %v2485 = vunpack.c.h.b16 %v646
    %v2486 = vunpack.c.l.b16 %v647
    %v2487 = vunpack.c.h.b16 %v647
    %v2488 = vunpack.c.l.b16 %v648
    %v2489 = vunpack.c.h.b16 %v648
    %v2490 = vunpack.c.l.b16 %v649
    %v2491 = vunpack.c.h.b16 %v649
    %v2492 = vunpack.c.l.b16 %v650
    %v2493 = vunpack.c.h.b16 %v650
    %v2494 = vunpack.c.l.b16 %v651
    %v2495 = vunpack.c.h.b16 %v651
    %v2496 = vunpack.c.l.b16 %v652
    %v2497 = vunpack.c.h.b16 %v652
    %v2498 = vunpack.c.l.b16 %v653
    %v2499 = vunpack.c.h.b16 %v653
    %v2500 = vunpack.c.l.b16 %v654
    %v2501 = vunpack.c.h.b16 %v654
    %v2502 = vunpack.c.l.b16 %v655
    %v2503 = vunpack.c.h.b16 %v655
    %v2504 = vunpack.c.l.b16 %v656
    %v2505 = vunpack.c.h.b16 %v656
    %v2506 = vunpack.c.l.b16 %v657
    %v2507 = vunpack.c.h.b16 %v657
    %v2508 = vunpack.c.l.b16 %v658
    %v2509 = vunpack.c.h.b16 %v658
    %v2510 = vunpack.c.l.b16 %v659
    %v2511 = vunpack.c.h.b16 %v659
    %v2512 = vunpack.c.l.b16 %v660
    %v2513 = vunpack.c.h.b16 %v660
    %v2514 = vunpack.c.l.b16 %v661
    %v2515 = vunpack.c.h.b16 %v661
    %v2516 = vunpack.c.l.b16 %v662
    %v2517 = vunpack.c.h.b16 %v662
    %v2518 = vunpack.c.l.b16 %v663
    %v2519 = vunpack.c.h.b16 %v663
    %v2520 = vunpack.c.l.b16 %v664
    %v2521 = vunpack.c.h.b16 %v664
    %v2522 = vunpack.c.l.b16 %v665
    %v2523 = vunpack.c.h.b16 %v665
    %v2524 = vunpack.c.l.b16 %v666
    %v2525 = vunpack.c.h.b16 %v666
    %v2526 = vunpack.c.l.b16 %v667
    %v2527 = vunpack.c.h.b16 %v667
    %v2528 = vunpack.c.l.b16 %v668
    %v2529 = vunpack.c.h.b16 %v668
    %v2530 = vunpack.c.l.b16 %v669
    %v2531 = vunpack.c.h.b16 %v669
    %v2532 = vunpack.c.l.b16 %v670
    %v2533 = vunpack.c.h.b16 %v670
    %v2534 = vunpack.c.l.b16 %v671
    %v2535 = vunpack.c.h.b16 %v671
    %v2536 = vunpack.c.l.b16 %v672
    %v2537 = vunpack.c.h.b16 %v672
    %v2538 = vunpack.c.l.b16 %v673
    %v2539 = vunpack.c.h.b16 %v673
    %v2540 = vunpack.c.l.b16 %v674
    %v2541 = vunpack.c.h.b16 %v674
    %v2542 = vunpack.c.l.b16 %v675
    %v2543 = vunpack.c.h.b16 %v675
    %v2544 = vunpack.c.l.b16 %v676
    %v2545 = vunpack.c.h.b16 %v676
    %v2546 = vunpack.c.l.b16 %v677
    %v2547 = vunpack.c.h.b16 %v677
    %v2548 = vunpack.c.l.b16 %v678
    %v2549 = vunpack.c.h.b16 %v678
    %v2550 = vunpack.c.l.b16 %v679
    %v2551 = vunpack.c.h.b16 %v679
    %v2552 = vunpack.c.l.b16 %v680
    %v2553 = vunpack.c.h.b16 %v680
    %v2554 = vunpack.c.l.b16 %v681
    %v2555 = vunpack.c.h.b16 %v681
    %v2556 = vunpack.c.l.b16 %v682
    %v2557 = vunpack.c.h.b16 %v682
    %v2558 = vunpack.c.l.b16 %v683
    %v2559 = vunpack.c.h.b16 %v683
    %v2560 = vunpack.c.l.b16 %v684
    %v2561 = vunpack.c.h.b16 %v684
    %v2562 = vunpack.c.l.b16 %v685
    %v2563 = vunpack.c.h.b16 %v685
    %v2564 = vunpack.c.l.b16 %v686
    %v2565 = vunpack.c.h.b16 %v686
    %v2566 = vunpack.c.l.b16 %v687
    %v2567 = vunpack.c.h.b16 %v687
    %v2568 = vunpack.c.l.b16 %v688
    %v2569 = vunpack.c.h.b16 %v688
    %v2570 = vunpack.c.l.b16 %v689
    %v2571 = vunpack.c.h.b16 %v689
    %v2572 = vunpack.c.l.b16 %v690
    %v2573 = vunpack.c.h.b16 %v690
    %v2574 = vunpack.c.l.b16 %v691
    %v2575 = vunpack.c.h.b16 %v691
    %v2576 = vunpack.c.l.b16 %v692
    %v2577 = vunpack.c.h.b16 %v692
    %v2578 = vunpack.c.l.b16 %v693
    %v2579 = vunpack.c.h.b16 %v693
    %v2580 = vunpack.c.l.b16 %v694
    %v2581 = vunpack.c.h.b16 %v694
    %v2582 = vunpack.c.l.b16 %v695
    %v2583 = vunpack.c.h.b16 %v695
    %v2584 = vunpack.c.l.b16 %v696
    %v2585 = vunpack.c.h.b16 %v696
    %v2586 = vunpack.c.l.b16 %v697
    %v2587 = vunpack.c.h.b16 %v697
    %v2588 = vunpack.c.l.b16 %v698
    %v2589 = vunpack.c.h.b16 %v698
    %v2590 = vunpack.c.l.b16 %v699
    %v2591 = vunpack.c.h.b16 %v699
    %v2592 = vunpack.c.l.b16 %v700
    %v2593 = vunpack.c.h.b16 %v700
    %v2594 = vunpack.c.l.b16 %v701
    %v2595 = vunpack.c.h.b16 %v701
    %v2596 = vunpack.c.l.b16 %v702
    %v2597 = vunpack.c.h.b16 %v702
    %v2598 = vunpack.c.l.b16 %v703
    %v2599 = vunpack.c.h.b16 %v703
    %v2600 = vunpack.c.l.b16 %v704
    %v2601 = vunpack.c.h.b16 %v704
    %v2602 = vunpack.c.l.b16 %v705
    %v2603 = vunpack.c.h.b16 %v705
    %v2604 = vunpack.c.l.b16 %v706
    %v2605 = vunpack.c.h.b16 %v706
    %v2606 = vunpack.c.l.b16 %v707
    %v2607 = vunpack.c.h.b16 %v707
    %v2608 = vunpack.c.l.b16 %v708
    %v2609 = vunpack.c.h.b16 %v708
    %v2610 = vunpack.c.l.b16 %v709
    %v2611 = vunpack.c.h.b16 %v709
    %v2612 = vunpack.c.l.b16 %v710
    %v2613 = vunpack.c.h.b16 %v710
    %v2614 = vunpack.c.l.b16 %v711
    %v2615 = vunpack.c.h.b16 %v711
    %v2616 = vunpack.c.l.b16 %v712
    %v2617 = vunpack.c.h.b16 %v712
    %v2618 = vunpack.c.l.b16 %v713
    %v2619 = vunpack.c.h.b16 %v713
    %v2620 = vunpack.c.l.b16 %v714
    %v2621 = vunpack.c.h.b16 %v714
    %v2622 = vunpack.c.l.b16 %v715
    %v2623 = vunpack.c.h.b16 %v715
    %v2624 = vunpack.c.l.b16 %v716
    %v2625 = vunpack.c.h.b16 %v716
    %v2626 = vunpack.c.l.b16 %v717
    %v2627 = vunpack.c.h.b16 %v717
    %v2628 = vunpack.c.l.b16 %v718
    %v2629 = vunpack.c.h.b16 %v718
    %v2630 = vunpack.c.l.b16 %v719
    %v2631 = vunpack.c.h.b16 %v719
    %v2632 = vunpack.c.l.b16 %v720
    %v2633 = vunpack.c.h.b16 %v720
    %v2634 = vunpack.c.l.b16 %v721
    %v2635 = vunpack.c.h.b16 %v721
    %v2636 = vunpack.c.l.b16 %v722
    %v2637 = vunpack.c.h.b16 %v722
    %v2638 = vunpack.c.l.b16 %v723
    %v2639 = vunpack.c.h.b16 %v723
    %v2640 = vunpack.c.l.b16 %v724
    %v2641 = vunpack.c.h.b16 %v724
    %v2642 = vunpack.c.l.b16 %v725
    %v2643 = vunpack.c.h.b16 %v725
    %v2644 = vpack.c.b16 %v1516, %v1492
    %v2645 = vpack.c.b16 %v1517, %v1493
    %v2646 = vpack.c.b16 %v1518, %v1494
    %v2647 = vpack.c.b16 %v1519, %v1495
    %v2648 = vpack.c.b16 %v1520, %v1496
    %v2649 = vpack.c.b16 %v1521, %v1497
    %v2650 = vpack.c.b16 %v1522, %v1498
    %v2651 = vpack.c.b16 %v1523, %v1499
    %v2652 = vpack.c.b16 %v1524, %v1500
    %v2653 = vpack.c.b16 %v1525, %v1501
    %v2654 = vpack.c.b16 %v1526, %v1502
    %v2655 = vpack.c.b16 %v1527, %v1503
    %v2656 = vpack.c.b16 %v1528, %v1504
    %v2657 = vpack.c.b16 %v1529, %v1505
    %v2658 = vpack.c.b16 %v1530, %v1506
    %v2659 = vpack.c.b16 %v1531, %v1507
    %v2660 = vpack.c.b16 %v1532, %v1508
    %v2661 = vpack.c.b16 %v1533, %v1509
    %v2662 = vpack.c.b16 %v1534, %v1510
    %v2663 = vpack.c.b16 %v1535, %v1511
    %v2664 = vpack.c.b16 %v1536, %v1512
    %v2665 = vpack.c.b16 %v1537, %v1513
    %v2666 = vpack.c.b16 %v1538, %v1514
    %v2667 = vpack.c.b16 %v1539, %v1515
    %v2668 = vpack.c.b16 %v1564, %v1540
    %v2669 = vpack.c.b16 %v1565, %v1541
    %v2670 = vpack.c.b16 %v1566, %v1542
    %v2671 = vpack.c.b16 %v1567, %v1543
    %v2672 = vpack.c.b16 %v1568, %v1544
    %v2673 = vpack.c.b16 %v1569, %v1545
    %v2674 = vpack.c.b16 %v1570, %v1546
    %v2675 = vpack.c.b16 %v1571, %v1547
    %v2676 = vpack.c.b16 %v1572, %v1548
    %v2677 = vpack.c.b16 %v1573, %v1549
    %v2678 = vpack.c.b16 %v1574, %v1550
    %v2679 = vpack.c.b16 %v1575, %v1551
    %v2680 = vpack.c.b16 %v1576, %v1552
    %v2681 = vpack.c.b16 %v1577, %v1553
    %v2682 = vpack.c.b16 %v1578, %v1554
    %v2683 = vpack.c.b16 %v1579, %v1555
    %v2684 = vpack.c.b16 %v1580, %v1556
    %v2685 = vpack.c.b16 %v1581, %v1557
    %v2686 = vpack.c.b16 %v1582, %v1558
    %v2687 = vpack.c.b16 %v1583, %v1559
    %v2688 = vpack.c.b16 %v1584, %v1560
    %v2689 = vpack.c.b16 %v1585, %v1561
    %v2690 = vpack.c.b16 %v1586, %v1562
    %v2691 = vpack.c.b16 %v1587, %v1563
    %v2692 = vpack.c.b16 %v1612, %v1588
    %v2693 = vpack.c.b16 %v1613, %v1589
    %v2694 = vpack.c.b16 %v1614, %v1590
    %v2695 = vpack.c.b16 %v1615, %v1591
    %v2696 = vpack.c.b16 %v1616, %v1592
    %v2697 = vpack.c.b16 %v1617, %v1593
    %v2698 = vpack.c.b16 %v1618, %v1594
    %v2699 = vpack.c.b16 %v1619, %v1595
    %v2700 = vpack.c.b16 %v1620, %v1596
    %v2701 = vpack.c.b16 %v1621, %v1597
    %v2702 = vpack.c.b16 %v1622, %v1598
    %v2703 = vpack.c.b16 %v1623, %v1599
    %v2704 = vpack.c.b16 %v1624, %v1600
    %v2705 = vpack.c.b16 %v1625, %v1601
    %v2706 = vpack.c.b16 %v1626, %v1602
    %v2707 = vpack.c.b16 %v1627, %v1603
    %v2708 = vpack.c.b16 %v1628, %v1604
    %v2709 = vpack.c.b16 %v1629, %v1605
    %v2710 = vpack.c.b16 %v1630, %v1606
    %v2711 = vpack.c.b16 %v1631, %v1607
    %v2712 = vpack.c.b16 %v1632, %v1608
    %v2713 = vpack.c.b16 %v1633, %v1609
    %v2714 = vpack.c.b16 %v1634, %v1610
    %v2715 = vpack.c.b16 %v1635, %v1611
    %v2716 = vpack.c.b16 %v1660, %v1636
    %v2717 = vpack.c.b16 %v1661, %v1637
    %v2718 = vpack.c.b16 %v1662, %v1638
    %v2719 = vpack.c.b16 %v1663, %v1639
    %v2720 = vpack.c.b16 %v1664, %v1640
    %v2721 = vpack.c.b16 %v1665, %v1641
    %v2722 = vpack.c.b16 %v1666, %v1642
    %v2723 = vpack.c.b16 %v1667, %v1643
    %v2724 = vpack.c.b16 %v1668, %v1644
    %v2725 = vpack.c.b16 %v1669, %v1645
    %v2726 = vpack.c.b16 %v1670, %v1646
    %v2727 = vpack.c.b16 %v1671, %v1647
    %v2728 = vpack.c.b16 %v1672, %v1648
    %v2729 = vpack.c.b16 %v1673, %v1649
    %v2730 = vpack.c.b16 %v1674, %v1650
    %v2731 = vpack.c.b16 %v1675, %v1651
    %v2732 = vpack.c.b16 %v1676, %v1652
    %v2733 = vpack.c.b16 %v1677, %v1653
    %v2734 = vpack.c.b16 %v1678, %v1654
    %v2735 = vpack.c.b16 %v1679, %v1655
    %v2736 = vpack.c.b16 %v1680, %v1656
    %v2737 = vpack.c.b16 %v1681, %v1657
    %v2738 = vpack.c.b16 %v1682, %v1658
    %v2739 = vpack.c.b16 %v1683, %v1659
    %v2740 = vpack.c.b16 %v1708, %v1684
    %v2741 = vpack.c.b16 %v1709, %v1685
    %v2742 = vpack.c.b16 %v1710, %v1686
    %v2743 = vpack.c.b16 %v1711, %v1687
    %v2744 = vpack.c.b16 %v1712, %v1688
    %v2745 = vpack.c.b16 %v1713, %v1689
    %v2746 = vpack.c.b16 %v1714, %v1690
    %v2747 = vpack.c.b16 %v1715, %v1691
    %v2748 = vpack.c.b16 %v1716, %v1692
    %v2749 = vpack.c.b16 %v1717, %v1693
    %v2750 = vpack.c.b16 %v1718, %v1694
    %v2751 = vpack.c.b16 %v1719, %v1695
    %v2752 = vpack.c.b16 %v1720, %v1696
    %v2753 = vpack.c.b16 %v1721, %v1697
    %v2754 = vpack.c.b16 %v1722, %v1698
    %v2755 = vpack.c.b16 %v1723, %v1699
    %v2756 = vpack.c.b16 %v1724, %v1700
    %v2757 = vpack.c.b16 %v1725, %v1701
    %v2758 = vpack.c.b16 %v1726, %v1702
    %v2759 = vpack.c.b16 %v1727, %v1703
    %v2760 = vpack.c.b16 %v1728, %v1704
    %v2761 = vpack.c.b16 %v1729, %v1705
    %v2762 = vpack.c.b16 %v1730, %v1706
    %v2763 = vpack.c.b16 %v1731, %v1707
    %v2764 = vpack.c.b16 %v1756, %v1732
    %v2765 = vpack.c.b16 %v1757, %v1733
    %v2766 = vpack.c.b16 %v1758, %v1734
    %v2767 = vpack.c.b16 %v1759, %v1735
    %v2768 = vpack.c.b16 %v1760, %v1736
    %v2769 = vpack.c.b16 %v1761, %v1737
    %v2770 = vpack.c.b16 %v1762, %v1738
    %v2771 = vpack.c.b16 %v1763, %v1739
    %v2772 = vpack.c.b16 %v1764, %v1740
    %v2773 = vpack.c.b16 %v1765, %v1741
    %v2774 = vpack.c.b16 %v1766, %v1742
    %v2775 = vpack.c.b16 %v1767, %v1743
    %v2776 = vpack.c.b16 %v1768, %v1744
    %v2777 = vpack.c.b16 %v1769, %v1745
    %v2778 = vpack.c.b16 %v1770, %v1746
    %v2779 = vpack.c.b16 %v1771, %v1747
    %v2780 = vpack.c.b16 %v1772, %v1748
    %v2781 = vpack.c.b16 %v1773, %v1749
    %v2782 = vpack.c.b16 %v1774, %v1750
    %v2783 = vpack.c.b16 %v1775, %v1751
    %v2784 = vpack.c.b16 %v1776, %v1752
    %v2785 = vpack.c.b16 %v1777, %v1753
    %v2786 = vpack.c.b16 %v1778, %v1754
    %v2787 = vpack.c.b16 %v1779, %v1755
    %v2788 = vpack.c.b16 %v1804, %v1780
    %v2789 = vpack.c.b16 %v1805, %v1781
    %v2790 = vpack.c.b16 %v1806, %v1782
    %v2791 = vpack.c.b16 %v1807, %v1783
    %v2792 = vpack.c.b16 %v1808, %v1784
    %v2793 = vpack.c.b16 %v1809, %v1785
    %v2794 = vpack.c.b16 %v1810, %v1786
    %v2795 = vpack.c.b16 %v1811, %v1787
    %v2796 = vpack.c.b16 %v1812, %v1788
    %v2797 = vpack.c.b16 %v1813, %v1789
    %v2798 = vpack.c.b16 %v1814, %v1790
    %v2799 = vpack.c.b16 %v1815, %v1791
    %v2800 = vpack.c.b16 %v1816, %v1792
    %v2801 = vpack.c.b16 %v1817, %v1793
    %v2802 = vpack.c.b16 %v1818, %v1794
    %v2803 = vpack.c.b16 %v1819, %v1795
    %v2804 = vpack.c.b16 %v1820, %v1796
    %v2805 = vpack.c.b16 %v1821, %v1797
    %v2806 = vpack.c.b16 %v1822, %v1798
    %v2807 = vpack.c.b16 %v1823, %v1799
    %v2808 = vpack.c.b16 %v1824, %v1800
    %v2809 = vpack.c.b16 %v1825, %v1801
    %v2810 = vpack.c.b16 %v1826, %v1802
    %v2811 = vpack.c.b16 %v1827, %v1803
    %v2812 = vpack.c.b16 %v1852, %v1828
    %v2813 = vpack.c.b16 %v1853, %v1829
    %v2814 = vpack.c.b16 %v1854, %v1830
    %v2815 = vpack.c.b16 %v1855, %v1831
    %v2816 = vpack.c.b16 %v1856, %v1832
    %v2817 = vpack.c.b16 %v1857, %v1833
    %v2818 = vpack.c.b16 %v1858, %v1834
    %v2819 = vpack.c.b16 %v1859, %v1835
    %v2820 = vpack.c.b16 %v1860, %v1836
    %v2821 = vpack.c.b16 %v1861, %v1837
    %v2822 = vpack.c.b16 %v1862, %v1838
    %v2823 = vpack.c.b16 %v1863, %v1839
    %v2824 = vpack.c.b16 %v1864, %v1840
    %v2825 = vpack.c.b16 %v1865, %v1841
    %v2826 = vpack.c.b16 %v1866, %v1842
    %v2827 = vpack.c.b16 %v1867, %v1843
    %v2828 = vpack.c.b16 %v1868, %v1844
    %v2829 = vpack.c.b16 %v1869, %v1845
    %v2830 = vpack.c.b16 %v1870, %v1846
    %v2831 = vpack.c.b16 %v1871, %v1847
    %v2832 = vpack.c.b16 %v1872, %v1848
    %v2833 = vpack.c.b16 %v1873, %v1849
    %v2834 = vpack.c.b16 %v1874, %v1850
    %v2835 = vpack.c.b16 %v1875, %v1851
    %v2836 = vpack.c.b16 %v1900, %v1876
    %v2837 = vpack.c.b16 %v1901, %v1877
    %v2838 = vpack.c.b16 %v1902, %v1878
    %v2839 = vpack.c.b16 %v1903, %v1879
    %v2840 = vpack.c.b16 %v1904, %v1880
    %v2841 = vpack.c.b16 %v1905, %v1881
    %v2842 = vpack.c.b16 %v1906, %v1882
    %v2843 = vpack.c.b16 %v1907, %v1883
    %v2844 = vpack.c.b16 %v1908, %v1884
    %v2845 = vpack.c.b16 %v1909, %v1885
    %v2846 = vpack.c.b16 %v1910, %v1886
    %v2847 = vpack.c.b16 %v1911, %v1887
    %v2848 = vpack.c.b16 %v1912, %v1888
    %v2849 = vpack.c.b16 %v1913, %v1889
    %v2850 = vpack.c.b16 %v1914, %v1890
    %v2851 = vpack.c.b16 %v1915, %v1891
    %v2852 = vpack.c.b16 %v1916, %v1892
    %v2853 = vpack.c.b16 %v1917, %v1893
    %v2854 = vpack.c.b16 %v1918, %v1894
    %v2855 = vpack.c.b16 %v1919, %v1895
    %v2856 = vpack.c.b16 %v1920, %v1896
    %v2857 = vpack.c.b16 %v1921, %v1897
    %v2858 = vpack.c.b16 %v1922, %v1898
    %v2859 = vpack.c.b16 %v1923, %v1899
    %v2860 = vpack.c.b16 %v1948, %v1924
    %v2861 = vpack.c.b16 %v1949, %v1925
    %v2862 = vpack.c.b16 %v1950, %v1926
    %v2863 = vpack.c.b16 %v1951, %v1927
    %v2864 = vpack.c.b16 %v1952, %v1928
    %v2865 = vpack.c.b16 %v1953, %v1929
    %v2866 = vpack.c.b16 %v1954, %v1930
    %v2867 = vpack.c.b16 %v1955, %v1931
    %v2868 = vpack.c.b16 %v1956, %v1932
    %v2869 = vpack.c.b16 %v1957, %v1933
    %v2870 = vpack.c.b16 %v1958, %v1934
    %v2871 = vpack.c.b16 %v1959, %v1935
    %v2872 = vpack.c.b16 %v1960, %v1936
    %v2873 = vpack.c.b16 %v1961, %v1937
    %v2874 = vpack.c.b16 %v1962, %v1938
    %v2875 = vpack.c.b16 %v1963, %v1939
    %v2876 = vpack.c.b16 %v1964, %v1940
    %v2877 = vpack.c.b16 %v1965, %v1941
    %v2878 = vpack.c.b16 %v1966, %v1942
    %v2879 = vpack.c.b16 %v1967, %v1943
    %v2880 = vpack.c.b16 %v1968, %v1944
    %v2881 = vpack.c.b16 %v1969, %v1945
    %v2882 = vpack.c.b16 %v1970, %v1946
    %v2883 = vpack.c.b16 %v1971, %v1947
    %v2884 = vpack.c.b16 %v1996, %v1972
    %v2885 = vpack.c.b16 %v1997, %v1973
    %v2886 = vpack.c.b16 %v1998, %v1974
    %v2887 = vpack.c.b16 %v1999, %v1975
    %v2888 = vpack.c.b16 %v2000, %v1976
    %v2889 = vpack.c.b16 %v2001, %v1977
    %v2890 = vpack.c.b16 %v2002, %v1978
    %v2891 = vpack.c.b16 %v2003, %v1979
    %v2892 = vpack.c.b16 %v2004, %v1980
    %v2893 = vpack.c.b16 %v2005, %v1981
    %v2894 = vpack.c.b16 %v2006, %v1982
    %v2895 = vpack.c.b16 %v2007, %v1983
    %v2896 = vpack.c.b16 %v2008, %v1984
    %v2897 = vpack.c.b16 %v2009, %v1985
    %v2898 = vpack.c.b16 %v2010, %v1986
    %v2899 = vpack.c.b16 %v2011, %v1987
    %v2900 = vpack.c.b16 %v2012, %v1988
    %v2901 = vpack.c.b16 %v2013, %v1989
    %v2902 = vpack.c.b16 %v2014, %v1990
    %v2903 = vpack.c.b16 %v2015, %v1991
    %v2904 = vpack.c.b16 %v2016, %v1992
    %v2905 = vpack.c.b16 %v2017, %v1993
    %v2906 = vpack.c.b16 %v2018, %v1994
    %v2907 = vpack.c.b16 %v2019, %v1995
    %v2908 = vpack.c.b16 %v2044, %v2020
    %v2909 = vpack.c.b16 %v2045, %v2021
    %v2910 = vpack.c.b16 %v2046, %v2022
    %v2911 = vpack.c.b16 %v2047, %v2023
    %v2912 = vpack.c.b16 %v2048, %v2024
    %v2913 = vpack.c.b16 %v2049, %v2025
    %v2914 = vpack.c.b16 %v2050, %v2026
    %v2915 = vpack.c.b16 %v2051, %v2027
    %v2916 = vpack.c.b16 %v2052, %v2028
    %v2917 = vpack.c.b16 %v2053, %v2029
    %v2918 = vpack.c.b16 %v2054, %v2030
    %v2919 = vpack.c.b16 %v2055, %v2031
    %v2920 = vpack.c.b16 %v2056, %v2032
    %v2921 = vpack.c.b16 %v2057, %v2033
    %v2922 = vpack.c.b16 %v2058, %v2034
    %v2923 = vpack.c.b16 %v2059, %v2035
    %v2924 = vpack.c.b16 %v2060, %v2036
    %v2925 = vpack.c.b16 %v2061, %v2037
    %v2926 = vpack.c.b16 %v2062, %v2038
    %v2927 = vpack.c.b16 %v2063, %v2039
    %v2928 = vpack.c.b16 %v2064, %v2040
    %v2929 = vpack.c.b16 %v2065, %v2041
    %v2930 = vpack.c.b16 %v2066, %v2042
    %v2931 = vpack.c.b16 %v2067, %v2043
    %v2932 = vpack.c.b16 %v2092, %v2068
    %v2933 = vpack.c.b16 %v2093, %v2069
    %v2934 = vpack.c.b16 %v2094, %v2070
    %v2935 = vpack.c.b16 %v2095, %v2071
    %v2936 = vpack.c.b16 %v2096, %v2072
    %v2937 = vpack.c.b16 %v2097, %v2073
    %v2938 = vpack.c.b16 %v2098, %v2074
    %v2939 = vpack.c.b16 %v2099, %v2075
    %v2940 = vpack.c.b16 %v2100, %v2076
    %v2941 = vpack.c.b16 %v2101, %v2077
    %v2942 = vpack.c.b16 %v2102, %v2078
    %v2943 = vpack.c.b16 %v2103, %v2079
    %v2944 = vpack.c.b16 %v2104, %v2080
    %v2945 = vpack.c.b16 %v2105, %v2081
    %v2946 = vpack.c.b16 %v2106, %v2082
    %v2947 = vpack.c.b16 %v2107, %v2083
    %v2948 = vpack.c.b16 %v2108, %v2084
    %v2949 = vpack.c.b16 %v2109, %v2085
    %v2950 = vpack.c.b16 %v2110, %v2086
    %v2951 = vpack.c.b16 %v2111, %v2087
    %v2952 = vpack.c.b16 %v2112, %v2088
    %v2953 = vpack.c.b16 %v2113, %v2089
    %v2954 = vpack.c.b16 %v2114, %v2090
    %v2955 = vpack.c.b16 %v2115, %v2091
    %v2956 = vpack.c.b16 %v2140, %v2116
    %v2957 = vpack.c.b16 %v2141, %v2117
    %v2958 = vpack.c.b16 %v2142, %v2118
    %v2959 = vpack.c.b16 %v2143, %v2119
    %v2960 = vpack.c.b16 %v2144, %v2120
    %v2961 = vpack.c.b16 %v2145, %v2121
    %v2962 = vpack.c.b16 %v2146, %v2122
    %v2963 = vpack.c.b16 %v2147, %v2123
    %v2964 = vpack.c.b16 %v2148, %v2124
    %v2965 = vpack.c.b16 %v2149, %v2125
    %v2966 = vpack.c.b16 %v2150, %v2126
    %v2967 = vpack.c.b16 %v2151, %v2127
    %v2968 = vpack.c.b16 %v2152, %v2128
    %v2969 = vpack.c.b16 %v2153, %v2129
    %v2970 = vpack.c.b16 %v2154, %v2130
    %v2971 = vpack.c.b16 %v2155, %v2131
    %v2972 = vpack.c.b16 %v2156, %v2132
    %v2973 = vpack.c.b16 %v2157, %v2133
    %v2974 = vpack.c.b16 %v2158, %v2134
    %v2975 = vpack.c.b16 %v2159, %v2135
    %v2976 = vpack.c.b16 %v2160, %v2136
    %v2977 = vpack.c.b16 %v2161, %v2137
    %v2978 = vpack.c.b16 %v2162, %v2138
    %v2979 = vpack.c.b16 %v2163, %v2139
    %v2980 = vpack.c.b16 %v2188, %v2164
    %v2981 = vpack.c.b16 %v2189, %v2165
    %v2982 = vpack.c.b16 %v2190, %v2166
    %v2983 = vpack.c.b16 %v2191, %v2167
    %v2984 = vpack.c.b16 %v2192, %v2168
    %v2985 = vpack.c.b16 %v2193, %v2169
    %v2986 = vpack.c.b16 %v2194, %v2170
    %v2987 = vpack.c.b16 %v2195, %v2171
    %v2988 = vpack.c.b16 %v2196, %v2172
    %v2989 = vpack.c.b16 %v2197, %v2173
    %v2990 = vpack.c.b16 %v2198, %v2174
    %v2991 = vpack.c.b16 %v2199, %v2175
    %v2992 = vpack.c.b16 %v2200, %v2176
    %v2993 = vpack.c.b16 %v2201, %v2177
    %v2994 = vpack.c.b16 %v2202, %v2178
    %v2995 = vpack.c.b16 %v2203, %v2179
    %v2996 = vpack.c.b16 %v2204, %v2180
    %v2997 = vpack.c.b16 %v2205, %v2181
    %v2998 = vpack.c.b16 %v2206, %v2182
    %v2999 = vpack.c.b16 %v2207, %v2183
    %v3000 = vpack.c.b16 %v2208, %v2184
    %v3001 = vpack.c.b16 %v2209, %v2185
    %v3002 = vpack.c.b16 %v2210, %v2186
    %v3003 = vpack.c.b16 %v2211, %v2187
    %v3004 = vpack.c.b16 %v2236, %v2212
    %v3005 = vpack.c.b16 %v2237, %v2213
    %v3006 = vpack.c.b16 %v2238, %v2214
    %v3007 = vpack.c.b16 %v2239, %v2215
    %v3008 = vpack.c.b16 %v2240, %v2216
    %v3009 = vpack.c.b16 %v2241, %v2217
    %v3010 = vpack.c.b16 %v2242, %v2218
    %v3011 = vpack.c.b16 %v2243, %v2219
    %v3012 = vpack.c.b16 %v2244, %v2220
    %v3013 = vpack.c.b16 %v2245, %v2221
    %v3014 = vpack.c.b16 %v2246, %v2222
    %v3015 = vpack.c.b16 %v2247, %v2223
    %v3016 = vpack.c.b16 %v2248, %v2224
    %v3017 = vpack.c.b16 %v2249, %v2225
    %v3018 = vpack.c.b16 %v2250, %v2226
    %v3019 = vpack.c.b16 %v2251, %v2227
    %v3020 = vpack.c.b16 %v2252, %v2228
    %v3021 = vpack.c.b16 %v2253, %v2229
    %v3022 = vpack.c.b16 %v2254, %v2230
    %v3023 = vpack.c.b16 %v2255, %v2231
    %v3024 = vpack.c.b16 %v2256, %v2232
    %v3025 = vpack.c.b16 %v2257, %v2233
    %v3026 = vpack.c.b16 %v2258, %v2234
    %v3027 = vpack.c.b16 %v2259, %v2235
    %v3028 = vpack.c.b16 %v2284, %v2260
    %v3029 = vpack.c.b16 %v2285, %v2261
    %v3030 = vpack.c.b16 %v2286, %v2262
    %v3031 = vpack.c.b16 %v2287, %v2263
    %v3032 = vpack.c.b16 %v2288, %v2264
    %v3033 = vpack.c.b16 %v2289, %v2265
    %v3034 = vpack.c.b16 %v2290, %v2266
    %v3035 = vpack.c.b16 %v2291, %v2267
    %v3036 = vpack.c.b16 %v2292, %v2268
    %v3037 = vpack.c.b16 %v2293, %v2269
    %v3038 = vpack.c.b16 %v2294, %v2270
    %v3039 = vpack.c.b16 %v2295, %v2271
    %v3040 = vpack.c.b16 %v2296, %v2272
    %v3041 = vpack.c.b16 %v2297, %v2273
    %v3042 = vpack.c.b16 %v2298, %v2274
    %v3043 = vpack.c.b16 %v2299, %v2275
    %v3044 = vpack.c.b16 %v2300, %v2276
    %v3045 = vpack.c.b16 %v2301, %v2277
    %v3046 = vpack.c.b16 %v2302, %v2278
    %v3047 = vpack.c.b16 %v2303, %v2279
    %v3048 = vpack.c.b16 %v2304, %v2280
    %v3049 = vpack.c.b16 %v2305, %v2281
    %v3050 = vpack.c.b16 %v2306, %v2282
    %v3051 = vpack.c.b16 %v2307, %v2283
    %v3052 = vpack.c.b16 %v2332, %v2308
    %v3053 = vpack.c.b16 %v2333, %v2309
    %v3054 = vpack.c.b16 %v2334, %v2310
    %v3055 = vpack.c.b16 %v2335, %v2311
    %v3056 = vpack.c.b16 %v2336, %v2312
    %v3057 = vpack.c.b16 %v2337, %v2313
    %v3058 = vpack.c.b16 %v2338, %v2314
    %v3059 = vpack.c.b16 %v2339, %v2315
    %v3060 = vpack.c.b16 %v2340, %v2316
    %v3061 = vpack.c.b16 %v2341, %v2317
    %v3062 = vpack.c.b16 %v2342, %v2318
    %v3063 = vpack.c.b16 %v2343, %v2319
    %v3064 = vpack.c.b16 %v2344, %v2320
    %v3065 = vpack.c.b16 %v2345, %v2321
    %v3066 = vpack.c.b16 %v2346, %v2322
    %v3067 = vpack.c.b16 %v2347, %v2323
    %v3068 = vpack.c.b16 %v2348, %v2324
    %v3069 = vpack.c.b16 %v2349, %v2325
    %v3070 = vpack.c.b16 %v2350, %v2326
    %v3071 = vpack.c.b16 %v2351, %v2327
    %v3072 = vpack.c.b16 %v2352, %v2328
    %v3073 = vpack.c.b16 %v2353, %v2329
    %v3074 = vpack.c.b16 %v2354, %v2330
    %v3075 = vpack.c.b16 %v2355, %v2331
    %v3076 = vpack.c.b16 %v2380, %v2356
    %v3077 = vpack.c.b16 %v2381, %v2357
    %v3078 = vpack.c.b16 %v2382, %v2358
    %v3079 = vpack.c.b16 %v2383, %v2359
    %v3080 = vpack.c.b16 %v2384, %v2360
    %v3081 = vpack.c.b16 %v2385, %v2361
    %v3082 = vpack.c.b16 %v2386, %v2362
    %v3083 = vpack.c.b16 %v2387, %v2363
    %v3084 = vpack.c.b16 %v2388, %v2364
    %v3085 = vpack.c.b16 %v2389, %v2365
    %v3086 = vpack.c.b16 %v2390, %v2366
    %v3087 = vpack.c.b16 %v2391, %v2367
    %v3088 = vpack.c.b16 %v2392, %v2368
    %v3089 = vpack.c.b16 %v2393, %v2369
    %v3090 = vpack.c.b16 %v2394, %v2370
    %v3091 = vpack.c.b16 %v2395, %v2371
    %v3092 = vpack.c.b16 %v2396, %v2372
    %v3093 = vpack.c.b16 %v2397, %v2373
    %v3094 = vpack.c.b16 %v2398, %v2374
    %v3095 = vpack.c.b16 %v2399, %v2375
    %v3096 = vpack.c.b16 %v2400, %v2376
    %v3097 = vpack.c.b16 %v2401, %v2377
    %v3098 = vpack.c.b16 %v2402, %v2378
    %v3099 = vpack.c.b16 %v2403, %v2379
    %v3100 = vpack.c.b16 %v2428, %v2404
    %v3101 = vpack.c.b16 %v2429, %v2405
    %v3102 = vpack.c.b16 %v2430, %v2406
    %v3103 = vpack.c.b16 %v2431, %v2407
    %v3104 = vpack.c.b16 %v2432, %v2408
    %v3105 = vpack.c.b16 %v2433, %v2409
    %v3106 = vpack.c.b16 %v2434, %v2410
    %v3107 = vpack.c.b16 %v2435, %v2411
    %v3108 = vpack.c.b16 %v2436, %v2412
    %v3109 = vpack.c.b16 %v2437, %v2413
    %v3110 = vpack.c.b16 %v2438, %v2414
    %v3111 = vpack.c.b16 %v2439, %v2415
    %v3112 = vpack.c.b16 %v2440, %v2416
    %v3113 = vpack.c.b16 %v2441, %v2417
    %v3114 = vpack.c.b16 %v2442, %v2418
    %v3115 = vpack.c.b16 %v2443, %v2419
    %v3116 = vpack.c.b16 %v2444, %v2420
    %v3117 = vpack.c.b16 %v2445, %v2421
    %v3118 = vpack.c.b16 %v2446, %v2422
    %v3119 = vpack.c.b16 %v2447, %v2423
    %v3120 = vpack.c.b16 %v2448, %v2424
    %v3121 = vpack.c.b16 %v2449, %v2425
    %v3122 = vpack.c.b16 %v2450, %v2426
    %v3123 = vpack.c.b16 %v2451, %v2427
    %v3124 = vpack.c.b16 %v2476, %v2452
    %v3125 = vpack.c.b16 %v2477, %v2453
    %v3126 = vpack.c.b16 %v2478, %v2454
    %v3127 = vpack.c.b16 %v2479, %v2455
    %v3128 = vpack.c.b16 %v2480, %v2456
    %v3129 = vpack.c.b16 %v2481, %v2457
    %v3130 = vpack.c.b16 %v2482, %v2458
    %v3131 = vpack.c.b16 %v2483, %v2459
    %v3132 = vpack.c.b16 %v2484, %v2460
    %v3133 = vpack.c.b16 %v2485, %v2461
    %v3134 = vpack.c.b16 %v2486, %v2462
    %v3135 = vpack.c.b16 %v2487, %v2463
    %v3136 = vpack.c.b16 %v2488, %v2464
    %v3137 = vpack.c.b16 %v2489, %v2465
    %v3138 = vpack.c.b16 %v2490, %v2466
    %v3139 = vpack.c.b16 %v2491, %v2467
    %v3140 = vpack.c.b16 %v2492, %v2468
    %v3141 = vpack.c.b16 %v2493, %v2469
    %v3142 = vpack.c.b16 %v2494, %v2470
    %v3143 = vpack.c.b16 %v2495, %v2471
    %v3144 = vpack.c.b16 %v2496, %v2472
    %v3145 = vpack.c.b16 %v2497, %v2473
    %v3146 = vpack.c.b16 %v2498, %v2474
    %v3147 = vpack.c.b16 %v2499, %v2475
    %v3148 = vpack.c.b16 %v2524, %v2500
    %v3149 = vpack.c.b16 %v2525, %v2501
    %v3150 = vpack.c.b16 %v2526, %v2502
    %v3151 = vpack.c.b16 %v2527, %v2503
    %v3152 = vpack.c.b16 %v2528, %v2504
    %v3153 = vpack.c.b16 %v2529, %v2505
    %v3154 = vpack.c.b16 %v2530, %v2506
    %v3155 = vpack.c.b16 %v2531, %v2507
    %v3156 = vpack.c.b16 %v2532, %v2508
    %v3157 = vpack.c.b16 %v2533, %v2509
    %v3158 = vpack.c.b16 %v2534, %v2510
    %v3159 = vpack.c.b16 %v2535, %v2511
    %v3160 = vpack.c.b16 %v2536, %v2512
    %v3161 = vpack.c.b16 %v2537, %v2513
    %v3162 = vpack.c.b16 %v2538, %v2514
    %v3163 = vpack.c.b16 %v2539, %v2515
    %v3164 = vpack.c.b16 %v2540, %v2516
    %v3165 = vpack.c.b16 %v2541, %v2517
    %v3166 = vpack.c.b16 %v2542, %v2518
    %v3167 = vpack.c.b16 %v2543, %v2519
    %v3168 = vpack.c.b16 %v2544, %v2520
    %v3169 = vpack.c.b16 %v2545, %v2521
    %v3170 = vpack.c.b16 %v2546, %v2522
    %v3171 = vpack.c.b16 %v2547, %v2523
    %v3172 = vpack.c.b16 %v2572, %v2548
    %v3173 = vpack.c.b16 %v2573, %v2549
    %v3174 = vpack.c.b16 %v2574, %v2550
    %v3175 = vpack.c.b16 %v2575, %v2551
    %v3176 = vpack.c.b16 %v2576, %v2552
    %v3177 = vpack.c.b16 %v2577, %v2553
    %v3178 = vpack.c.b16 %v2578, %v2554
    %v3179 = vpack.c.b16 %v2579, %v2555
    %v3180 = vpack.c.b16 %v2580, %v2556
    %v3181 = vpack.c.b16 %v2581, %v2557
    %v3182 = vpack.c.b16 %v2582, %v2558
    %v3183 = vpack.c.b16 %v2583, %v2559
    %v3184 = vpack.c.b16 %v2584, %v2560
    %v3185 = vpack.c.b16 %v2585, %v2561
    %v3186 = vpack.c.b16 %v2586, %v2562
    %v3187 = vpack.c.b16 %v2587, %v2563
    %v3188 = vpack.c.b16 %v2588, %v2564
    %v3189 = vpack.c.b16 %v2589, %v2565
    %v3190 = vpack.c.b16 %v2590, %v2566
    %v3191 = vpack.c.b16 %v2591, %v2567
    %v3192 = vpack.c.b16 %v2592, %v2568
    %v3193 = vpack.c.b16 %v2593, %v2569
    %v3194 = vpack.c.b16 %v2594, %v2570
    %v3195 = vpack.c.b16 %v2595, %v2571
    %v3196 = vpack.c.b16 %v2620, %v2596
    %v3197 = vpack.c.b16 %v2621, %v2597
    %v3198 = vpack.c.b16 %v2622, %v2598
    %v3199 = vpack.c.b16 %v2623, %v2599
    %v3200 = vpack.c.b16 %v2624, %v2600
    %v3201 = vpack.c.b16 %v2625, %v2601
    %v3202 = vpack.c.b16 %v2626, %v2602
    %v3203 = vpack.c.b16 %v2627, %v2603
    %v3204 = vpack.c.b16 %v2628, %v2604
    %v3205 = vpack.c.b16 %v2629, %v2605
    %v3206 = vpack.c.b16 %v2630, %v2606
    %v3207 = vpack.c.b16 %v2631, %v2607
    %v3208 = vpack.c.b16 %v2632, %v2608
    %v3209 = vpack.c.b16 %v2633, %v2609
    %v3210 = vpack.c.b16 %v2634, %v2610
    %v3211 = vpack.c.b16 %v2635, %v2611
    %v3212 = vpack.c.b16 %v2636, %v2612
    %v3213 = vpack.c.b16 %v2637, %v2613
    %v3214 = vpack.c.b16 %v2638, %v2614
    %v3215 = vpack.c.b16 %v2639, %v2615
    %v3216 = vpack.c.b16 %v2640, %v2616
    %v3217 = vpack.c.b16 %v2641, %v2617
    %v3218 = vpack.c.b16 %v2642, %v2618
    %v3219 = vpack.c.b16 %v2643, %v2619
    %3796 = vmatprep.subr.bf16.mxu0 %v2813
    %3797 = vmatpush1.bf16.msra.mxu0 %v2812
    %3798 = vmatprep.subr.bf16.mxu0 %v2789
    %3799 = vmatpush1.bf16.msra.mxu0 %v2788
    %3800 = vmatprep.subr.bf16.mxu0 %v2765
    %3801 = vmatpush1.bf16.msra.mxu0 %v2764
    %3802 = vmatprep.subr.bf16.mxu0 %v2741
    %3803 = vmatpush1.bf16.msra.mxu0 %v2740
    %3804 = vmatprep.subr.bf16.mxu0 %v2717
    %3805 = vmatpush1.bf16.msra.mxu0 %v2716
    %3806 = vmatprep.subr.bf16.mxu0 %v2693
    %3807 = vmatpush1.bf16.msra.mxu0 %v2692
    %3808 = vmatprep.subr.bf16.mxu0 %v2669
    %3809 = vmatpush1.bf16.msra.mxu0 %v2668
    %3810 = vmatprep.subr.bf16.mxu0 %v2645
    %3811 = vmatpush1.bf16.msra.mxu0 %v2644
    %3812 = vmatprep.subr.bf16.mxu0 %v3005
    %3813 = vmatpush2.bf16.msra.mxu0 %v3004
    %3814 = vmatprep.subr.bf16.mxu0 %v2981
    %3815 = vmatpush2.bf16.msra.mxu0 %v2980
    %3816 = vmatprep.subr.bf16.mxu0 %v2957
    %3817 = vmatpush2.bf16.msra.mxu0 %v2956
    %3818 = vmatprep.subr.bf16.mxu0 %v2933
    %3819 = vmatpush2.bf16.msra.mxu0 %v2932
    %3820 = vmatprep.subr.bf16.mxu0 %v2909
    %3821 = vmatpush2.bf16.msra.mxu0 %v2908
    %3822 = vmatprep.subr.bf16.mxu0 %v2885
    %3823 = vmatpush2.bf16.msra.mxu0 %v2884
    %3824 = vmatprep.subr.bf16.mxu0 %v2861
    %3825 = vmatpush2.bf16.msra.mxu0 %v2860
    %3826 = vmatprep.subr.bf16.mxu0 %v2837
    %3827 = vmatpush2.bf16.msra.mxu0 %v2836
    %3828 = vmatprep.mubr.bf16.mxu0 %v893
    %3829 = vmatmul.mubr.bf16.gmra.mxu0 %v892
    %v3830 = vpop.f32.mrf.mxu0
    %v3831 = vadd.f32 %v735, %v3830
    %v3832 = vpop.f32.mrf.mxu0
    %v3833 = vadd.f32 %v739, %v3832
    %v3834 = vpop.f32.mrf.mxu0
    %v3835 = vadd.f32 %v735, %v3834
    %v3836 = vpop.f32.mrf.mxu0
    %v3837 = vadd.f32 %v739, %v3836
    %3838 = vmatprep.mubr.bf16.mxu0 %v896
    %3839 = vmatmul.mubr.bf16.gmra.mxu0 %v895
    %v3840 = vpop.f32.mrf.mxu0
    %v3841 = vadd.f32 %v735, %v3840
    %v3842 = vpop.f32.mrf.mxu0
    %v3843 = vadd.f32 %v739, %v3842
    %v3844 = vpop.f32.mrf.mxu0
    %v3845 = vadd.f32 %v735, %v3844
    %v3846 = vpop.f32.mrf.mxu0
    %v3847 = vadd.f32 %v739, %v3846
    %3848 = vmatprep.mubr.bf16.mxu0 %v899
    %3849 = vmatmul.mubr.bf16.gmra.mxu0 %v898
    %v3850 = vpop.f32.mrf.mxu0
    %v3851 = vadd.f32 %v735, %v3850
    %v3852 = vpop.f32.mrf.mxu0
    %v3853 = vadd.f32 %v739, %v3852
    %v3854 = vpop.f32.mrf.mxu0
    %v3855 = vadd.f32 %v735, %v3854
    %v3856 = vpop.f32.mrf.mxu0
    %v3857 = vadd.f32 %v739, %v3856
    %3858 = vmatprep.mubr.bf16.mxu0 %v902
    %3859 = vmatmul.mubr.bf16.gmra.mxu0 %v901
    %v3860 = vpop.f32.mrf.mxu0
    %v3861 = vadd.f32 %v735, %v3860
    %v3862 = vpop.f32.mrf.mxu0
    %v3863 = vadd.f32 %v739, %v3862
    %v3864 = vpop.f32.mrf.mxu0
    %v3865 = vadd.f32 %v735, %v3864
    %v3866 = vpop.f32.mrf.mxu0
    %v3867 = vadd.f32 %v739, %v3866
    %3868 = vdwg.mxu0
    %3869 = vmatprep.subr.bf16.mxu0 %v3197
    %3870 = vmatpush1.bf16.msra.mxu0 %v3196
    %3871 = vmatprep.subr.bf16.mxu0 %v3173
    %3872 = vmatpush1.bf16.msra.mxu0 %v3172
    %3873 = vmatprep.subr.bf16.mxu0 %v3149
    %3874 = vmatpush1.bf16.msra.mxu0 %v3148
    %3875 = vmatprep.subr.bf16.mxu0 %v3125
    %3876 = vmatpush1.bf16.msra.mxu0 %v3124
    %3877 = vmatprep.subr.bf16.mxu0 %v3101
    %3878 = vmatpush1.bf16.msra.mxu0 %v3100
    %3879 = vmatprep.subr.bf16.mxu0 %v3077
    %3880 = vmatpush1.bf16.msra.mxu0 %v3076
    %3881 = vmatprep.subr.bf16.mxu0 %v3053
    %3882 = vmatpush1.bf16.msra.mxu0 %v3052
    %3883 = vmatprep.subr.bf16.mxu0 %v3029
    %3884 = vmatpush1.bf16.msra.mxu0 %v3028
    %3885 = vmatprep.subr.bf16.mxu0 0
    %3886 = vmatpush2.bf16.msra.mxu0 0
    %3887 = vmatprep.subr.bf16.mxu0 0
    %3888 = vmatpush2.bf16.msra.mxu0 0
    %3889 = vmatprep.subr.bf16.mxu0 0
    %3890 = vmatpush2.bf16.msra.mxu0 0
    %3891 = vmatprep.subr.bf16.mxu0 0
    %3892 = vmatpush2.bf16.msra.mxu0 0
    %3893 = vmatprep.subr.bf16.mxu0 0
    %3894 = vmatpush2.bf16.msra.mxu0 0
    %3895 = vmatprep.subr.bf16.mxu0 0
    %3896 = vmatpush2.bf16.msra.mxu0 0
    %3897 = vmatprep.subr.bf16.mxu0 0
    %3898 = vmatpush2.bf16.msra.mxu0 0
    %3899 = vmatprep.subr.bf16.mxu0 0
    %3900 = vmatpush2.bf16.msra.mxu0 0
    %3901 = vmatprep.mubr.bf16.mxu0 0
    %3902 = vmatmul.mubr.bf16.gmra.mxu0 %v894
    %v3903 = vpop.f32.mrf.mxu0
    %v3904 = vadd.f32 %v3831, %v3903
    %v3905 = vpop.f32.mrf.mxu0
    %v3906 = vadd.f32 %v3833, %v3905
    %v3907 = vpop.f32.mrf.mxu0
    %v3908 = vadd.f32 %v3835, %v3907
    %v3909 = vpop.f32.mrf.mxu0
    %v3910 = vadd.f32 %v3837, %v3909
    %3911 = vmatprep.mubr.bf16.mxu0 0
    %3912 = vmatmul.mubr.bf16.gmra.mxu0 %v897
    %v3913 = vpop.f32.mrf.mxu0
    %v3914 = vadd.f32 %v3841, %v3913
    %v3915 = vpop.f32.mrf.mxu0
    %v3916 = vadd.f32 %v3843, %v3915
    %v3917 = vpop.f32.mrf.mxu0
    %v3918 = vadd.f32 %v3845, %v3917
    %v3919 = vpop.f32.mrf.mxu0
    %v3920 = vadd.f32 %v3847, %v3919
    %3921 = vmatprep.mubr.bf16.mxu0 0
    %3922 = vmatmul.mubr.bf16.gmra.mxu0 %v900
    %v3923 = vpop.f32.mrf.mxu0
    %v3924 = vadd.f32 %v3851, %v3923
    %v3925 = vpop.f32.mrf.mxu0
    %v3926 = vadd.f32 %v3853, %v3925
    %v3927 = vpop.f32.mrf.mxu0
    %v3928 = vadd.f32 %v3855, %v3927
    %v3929 = vpop.f32.mrf.mxu0
    %v3930 = vadd.f32 %v3857, %v3929
    %3931 = vmatprep.mubr.bf16.mxu0 0
    %3932 = vmatmul.mubr.bf16.gmra.mxu0 %v903
    %v3933 = vpop.f32.mrf.mxu0
    %v3934 = vadd.f32 %v3861, %v3933
    %v3935 = vpop.f32.mrf.mxu0
    %v3936 = vadd.f32 %v3863, %v3935
    %v3937 = vpop.f32.mrf.mxu0
    %v3938 = vadd.f32 %v3865, %v3937
    %v3939 = vpop.f32.mrf.mxu0
    %v3940 = vadd.f32 %v3867, %v3939
    %3941 = vdwg.mxu0
    %3942 = vmatprep.subr.bf16.mxu0 %v2815
    %3943 = vmatpush1.bf16.msra.mxu0 %v2814
    %3944 = vmatprep.subr.bf16.mxu0 %v2791
    %3945 = vmatpush1.bf16.msra.mxu0 %v2790
    %3946 = vmatprep.subr.bf16.mxu0 %v2767
    %3947 = vmatpush1.bf16.msra.mxu0 %v2766
    %3948 = vmatprep.subr.bf16.mxu0 %v2743
    %3949 = vmatpush1.bf16.msra.mxu0 %v2742
    %3950 = vmatprep.subr.bf16.mxu0 %v2719
    %3951 = vmatpush1.bf16.msra.mxu0 %v2718
    %3952 = vmatprep.subr.bf16.mxu0 %v2695
    %3953 = vmatpush1.bf16.msra.mxu0 %v2694
    %3954 = vmatprep.subr.bf16.mxu0 %v2671
    %3955 = vmatpush1.bf16.msra.mxu0 %v2670
    %3956 = vmatprep.subr.bf16.mxu0 %v2647
    %3957 = vmatpush1.bf16.msra.mxu0 %v2646
    %3958 = vmatprep.subr.bf16.mxu0 %v3007
    %3959 = vmatpush2.bf16.msra.mxu0 %v3006
    %3960 = vmatprep.subr.bf16.mxu0 %v2983
    %3961 = vmatpush2.bf16.msra.mxu0 %v2982
    %3962 = vmatprep.subr.bf16.mxu0 %v2959
    %3963 = vmatpush2.bf16.msra.mxu0 %v2958
    %3964 = vmatprep.subr.bf16.mxu0 %v2935
    %3965 = vmatpush2.bf16.msra.mxu0 %v2934
    %3966 = vmatprep.subr.bf16.mxu0 %v2911
    %3967 = vmatpush2.bf16.msra.mxu0 %v2910
    %3968 = vmatprep.subr.bf16.mxu0 %v2887
    %3969 = vmatpush2.bf16.msra.mxu0 %v2886
    %3970 = vmatprep.subr.bf16.mxu0 %v2863
    %3971 = vmatpush2.bf16.msra.mxu0 %v2862
    %3972 = vmatprep.subr.bf16.mxu0 %v2839
    %3973 = vmatpush2.bf16.msra.mxu0 %v2838
    %3974 = vmatprep.mubr.bf16.mxu0 %v893
    %3975 = vmatmul.mubr.bf16.gmra.mxu0 %v892
    %v3976 = vpop.f32.mrf.mxu0
    %v3977 = vadd.f32 %v743, %v3976
    %v3978 = vpop.f32.mrf.mxu0
    %v3979 = vadd.f32 %v747, %v3978
    %v3980 = vpop.f32.mrf.mxu0
    %v3981 = vadd.f32 %v743, %v3980
    %v3982 = vpop.f32.mrf.mxu0
    %v3983 = vadd.f32 %v747, %v3982
    %3984 = vmatprep.mubr.bf16.mxu0 %v896
    %3985 = vmatmul.mubr.bf16.gmra.mxu0 %v895
    %v3986 = vpop.f32.mrf.mxu0
    %v3987 = vadd.f32 %v743, %v3986
    %v3988 = vpop.f32.mrf.mxu0
    %v3989 = vadd.f32 %v747, %v3988
    %v3990 = vpop.f32.mrf.mxu0
    %v3991 = vadd.f32 %v743, %v3990
    %v3992 = vpop.f32.mrf.mxu0
    %v3993 = vadd.f32 %v747, %v3992
    %3994 = vmatprep.mubr.bf16.mxu0 %v899
    %3995 = vmatmul.mubr.bf16.gmra.mxu0 %v898
    %v3996 = vpop.f32.mrf.mxu0
    %v3997 = vadd.f32 %v743, %v3996
    %v3998 = vpop.f32.mrf.mxu0
    %v3999 = vadd.f32 %v747, %v3998
    %v4000 = vpop.f32.mrf.mxu0
    %v4001 = vadd.f32 %v743, %v4000
    %v4002 = vpop.f32.mrf.mxu0
    %v4003 = vadd.f32 %v747, %v4002
    %4004 = vmatprep.mubr.bf16.mxu0 %v902
    %4005 = vmatmul.mubr.bf16.gmra.mxu0 %v901
    %v4006 = vpop.f32.mrf.mxu0
    %v4007 = vadd.f32 %v743, %v4006
    %v4008 = vpop.f32.mrf.mxu0
    %v4009 = vadd.f32 %v747, %v4008
    %v4010 = vpop.f32.mrf.mxu0
    %v4011 = vadd.f32 %v743, %v4010
    %v4012 = vpop.f32.mrf.mxu0
    %v4013 = vadd.f32 %v747, %v4012
    %4014 = vdwg.mxu0
    %4015 = vmatprep.subr.bf16.mxu0 %v3199
    %4016 = vmatpush1.bf16.msra.mxu0 %v3198
    %4017 = vmatprep.subr.bf16.mxu0 %v3175
    %4018 = vmatpush1.bf16.msra.mxu0 %v3174
    %4019 = vmatprep.subr.bf16.mxu0 %v3151
    %4020 = vmatpush1.bf16.msra.mxu0 %v3150
    %4021 = vmatprep.subr.bf16.mxu0 %v3127
    %4022 = vmatpush1.bf16.msra.mxu0 %v3126
    %4023 = vmatprep.subr.bf16.mxu0 %v3103
    %4024 = vmatpush1.bf16.msra.mxu0 %v3102
    %4025 = vmatprep.subr.bf16.mxu0 %v3079
    %4026 = vmatpush1.bf16.msra.mxu0 %v3078
    %4027 = vmatprep.subr.bf16.mxu0 %v3055
    %4028 = vmatpush1.bf16.msra.mxu0 %v3054
    %4029 = vmatprep.subr.bf16.mxu0 %v3031
    %4030 = vmatpush1.bf16.msra.mxu0 %v3030
    %4031 = vmatprep.subr.bf16.mxu0 0
    %4032 = vmatpush2.bf16.msra.mxu0 0
    %4033 = vmatprep.subr.bf16.mxu0 0
    %4034 = vmatpush2.bf16.msra.mxu0 0
    %4035 = vmatprep.subr.bf16.mxu0 0
    %4036 = vmatpush2.bf16.msra.mxu0 0
    %4037 = vmatprep.subr.bf16.mxu0 0
    %4038 = vmatpush2.bf16.msra.mxu0 0
    %4039 = vmatprep.subr.bf16.mxu0 0
    %4040 = vmatpush2.bf16.msra.mxu0 0
    %4041 = vmatprep.subr.bf16.mxu0 0
    %4042 = vmatpush2.bf16.msra.mxu0 0
    %4043 = vmatprep.subr.bf16.mxu0 0
    %4044 = vmatpush2.bf16.msra.mxu0 0
    %4045 = vmatprep.subr.bf16.mxu0 0
    %4046 = vmatpush2.bf16.msra.mxu0 0
    %4047 = vmatprep.mubr.bf16.mxu0 0
    %4048 = vmatmul.mubr.bf16.gmra.mxu0 %v894
    %v4049 = vpop.f32.mrf.mxu0
    %v4050 = vadd.f32 %v3977, %v4049
    %v4051 = vpop.f32.mrf.mxu0
    %v4052 = vadd.f32 %v3979, %v4051
    %v4053 = vpop.f32.mrf.mxu0
    %v4054 = vadd.f32 %v3981, %v4053
    %v4055 = vpop.f32.mrf.mxu0
    %v4056 = vadd.f32 %v3983, %v4055
    %4057 = vmatprep.mubr.bf16.mxu0 0
    %4058 = vmatmul.mubr.bf16.gmra.mxu0 %v897
    %v4059 = vpop.f32.mrf.mxu0
    %v4060 = vadd.f32 %v3987, %v4059
    %v4061 = vpop.f32.mrf.mxu0
    %v4062 = vadd.f32 %v3989, %v4061
    %v4063 = vpop.f32.mrf.mxu0
    %v4064 = vadd.f32 %v3991, %v4063
    %v4065 = vpop.f32.mrf.mxu0
    %v4066 = vadd.f32 %v3993, %v4065
    %4067 = vmatprep.mubr.bf16.mxu0 0
    %4068 = vmatmul.mubr.bf16.gmra.mxu0 %v900
    %v4069 = vpop.f32.mrf.mxu0
    %v4070 = vadd.f32 %v3997, %v4069
    %v4071 = vpop.f32.mrf.mxu0
    %v4072 = vadd.f32 %v3999, %v4071
    %v4073 = vpop.f32.mrf.mxu0
    %v4074 = vadd.f32 %v4001, %v4073
    %v4075 = vpop.f32.mrf.mxu0
    %v4076 = vadd.f32 %v4003, %v4075
    %4077 = vmatprep.mubr.bf16.mxu0 0
    %4078 = vmatmul.mubr.bf16.gmra.mxu0 %v903
    %v4079 = vpop.f32.mrf.mxu0
    %v4080 = vadd.f32 %v4007, %v4079
    %v4081 = vpop.f32.mrf.mxu0
    %v4082 = vadd.f32 %v4009, %v4081
    %v4083 = vpop.f32.mrf.mxu0
    %v4084 = vadd.f32 %v4011, %v4083
    %v4085 = vpop.f32.mrf.mxu0
    %v4086 = vadd.f32 %v4013, %v4085
    %4087 = vdwg.mxu0
    %4088 = vmatprep.subr.bf16.mxu0 %v2817
    %4089 = vmatpush1.bf16.msra.mxu0 %v2816
    %4090 = vmatprep.subr.bf16.mxu0 %v2793
    %4091 = vmatpush1.bf16.msra.mxu0 %v2792
    %4092 = vmatprep.subr.bf16.mxu0 %v2769
    %4093 = vmatpush1.bf16.msra.mxu0 %v2768
    %4094 = vmatprep.subr.bf16.mxu0 %v2745
    %4095 = vmatpush1.bf16.msra.mxu0 %v2744
    %4096 = vmatprep.subr.bf16.mxu0 %v2721
    %4097 = vmatpush1.bf16.msra.mxu0 %v2720
    %4098 = vmatprep.subr.bf16.mxu0 %v2697
    %4099 = vmatpush1.bf16.msra.mxu0 %v2696
    %4100 = vmatprep.subr.bf16.mxu0 %v2673
    %4101 = vmatpush1.bf16.msra.mxu0 %v2672
    %4102 = vmatprep.subr.bf16.mxu0 %v2649
    %4103 = vmatpush1.bf16.msra.mxu0 %v2648
    %4104 = vmatprep.subr.bf16.mxu0 %v3009
    %4105 = vmatpush2.bf16.msra.mxu0 %v3008
    %4106 = vmatprep.subr.bf16.mxu0 %v2985
    %4107 = vmatpush2.bf16.msra.mxu0 %v2984
    %4108 = vmatprep.subr.bf16.mxu0 %v2961
    %4109 = vmatpush2.bf16.msra.mxu0 %v2960
    %4110 = vmatprep.subr.bf16.mxu0 %v2937
    %4111 = vmatpush2.bf16.msra.mxu0 %v2936
    %4112 = vmatprep.subr.bf16.mxu0 %v2913
    %4113 = vmatpush2.bf16.msra.mxu0 %v2912
    %4114 = vmatprep.subr.bf16.mxu0 %v2889
    %4115 = vmatpush2.bf16.msra.mxu0 %v2888
    %4116 = vmatprep.subr.bf16.mxu0 %v2865
    %4117 = vmatpush2.bf16.msra.mxu0 %v2864
    %4118 = vmatprep.subr.bf16.mxu0 %v2841
    %4119 = vmatpush2.bf16.msra.mxu0 %v2840
    %4120 = vmatprep.mubr.bf16.mxu0 %v893
    %4121 = vmatmul.mubr.bf16.gmra.mxu0 %v892
    %v4122 = vpop.f32.mrf.mxu0
    %v4123 = vadd.f32 %v751, %v4122
    %v4124 = vpop.f32.mrf.mxu0
    %v4125 = vadd.f32 %v755, %v4124
    %v4126 = vpop.f32.mrf.mxu0
    %v4127 = vadd.f32 %v751, %v4126
    %v4128 = vpop.f32.mrf.mxu0
    %v4129 = vadd.f32 %v755, %v4128
    %4130 = vmatprep.mubr.bf16.mxu0 %v896
    %4131 = vmatmul.mubr.bf16.gmra.mxu0 %v895
    %v4132 = vpop.f32.mrf.mxu0
    %v4133 = vadd.f32 %v751, %v4132
    %v4134 = vpop.f32.mrf.mxu0
    %v4135 = vadd.f32 %v755, %v4134
    %v4136 = vpop.f32.mrf.mxu0
    %v4137 = vadd.f32 %v751, %v4136
    %v4138 = vpop.f32.mrf.mxu0
    %v4139 = vadd.f32 %v755, %v4138
    %4140 = vmatprep.mubr.bf16.mxu0 %v899
    %4141 = vmatmul.mubr.bf16.gmra.mxu0 %v898
    %v4142 = vpop.f32.mrf.mxu0
    %v4143 = vadd.f32 %v751, %v4142
    %v4144 = vpop.f32.mrf.mxu0
    %v4145 = vadd.f32 %v755, %v4144
    %v4146 = vpop.f32.mrf.mxu0
    %v4147 = vadd.f32 %v751, %v4146
    %v4148 = vpop.f32.mrf.mxu0
    %v4149 = vadd.f32 %v755, %v4148
    %4150 = vmatprep.mubr.bf16.mxu0 %v902
    %4151 = vmatmul.mubr.bf16.gmra.mxu0 %v901
    %v4152 = vpop.f32.mrf.mxu0
    %v4153 = vadd.f32 %v751, %v4152
    %v4154 = vpop.f32.mrf.mxu0
    %v4155 = vadd.f32 %v755, %v4154
    %v4156 = vpop.f32.mrf.mxu0
    %v4157 = vadd.f32 %v751, %v4156
    %v4158 = vpop.f32.mrf.mxu0
    %v4159 = vadd.f32 %v755, %v4158
    %4160 = vdwg.mxu0
    %4161 = vmatprep.subr.bf16.mxu0 %v3201
    %4162 = vmatpush1.bf16.msra.mxu0 %v3200
    %4163 = vmatprep.subr.bf16.mxu0 %v3177
    %4164 = vmatpush1.bf16.msra.mxu0 %v3176
    %4165 = vmatprep.subr.bf16.mxu0 %v3153
    %4166 = vmatpush1.bf16.msra.mxu0 %v3152
    %4167 = vmatprep.subr.bf16.mxu0 %v3129
    %4168 = vmatpush1.bf16.msra.mxu0 %v3128
    %4169 = vmatprep.subr.bf16.mxu0 %v3105
    %4170 = vmatpush1.bf16.msra.mxu0 %v3104
    %4171 = vmatprep.subr.bf16.mxu0 %v3081
    %4172 = vmatpush1.bf16.msra.mxu0 %v3080
    %4173 = vmatprep.subr.bf16.mxu0 %v3057
    %4174 = vmatpush1.bf16.msra.mxu0 %v3056
    %4175 = vmatprep.subr.bf16.mxu0 %v3033
    %4176 = vmatpush1.bf16.msra.mxu0 %v3032
    %4177 = vmatprep.subr.bf16.mxu0 0
    %4178 = vmatpush2.bf16.msra.mxu0 0
    %4179 = vmatprep.subr.bf16.mxu0 0
    %4180 = vmatpush2.bf16.msra.mxu0 0
    %4181 = vmatprep.subr.bf16.mxu0 0
    %4182 = vmatpush2.bf16.msra.mxu0 0
    %4183 = vmatprep.subr.bf16.mxu0 0
    %4184 = vmatpush2.bf16.msra.mxu0 0
    %4185 = vmatprep.subr.bf16.mxu0 0
    %4186 = vmatpush2.bf16.msra.mxu0 0
    %4187 = vmatprep.subr.bf16.mxu0 0
    %4188 = vmatpush2.bf16.msra.mxu0 0
    %4189 = vmatprep.subr.bf16.mxu0 0
    %4190 = vmatpush2.bf16.msra.mxu0 0
    %4191 = vmatprep.subr.bf16.mxu0 0
    %4192 = vmatpush2.bf16.msra.mxu0 0
    %4193 = vmatprep.mubr.bf16.mxu0 0
    %4194 = vmatmul.mubr.bf16.gmra.mxu0 %v894
    %v4195 = vpop.f32.mrf.mxu0
    %v4196 = vadd.f32 %v4123, %v4195
    %v4197 = vpop.f32.mrf.mxu0
    %v4198 = vadd.f32 %v4125, %v4197
    %v4199 = vpop.f32.mrf.mxu0
    %v4200 = vadd.f32 %v4127, %v4199
    %v4201 = vpop.f32.mrf.mxu0
    %v4202 = vadd.f32 %v4129, %v4201
    %4203 = vmatprep.mubr.bf16.mxu0 0
    %4204 = vmatmul.mubr.bf16.gmra.mxu0 %v897
    %v4205 = vpop.f32.mrf.mxu0
    %v4206 = vadd.f32 %v4133, %v4205
    %v4207 = vpop.f32.mrf.mxu0
    %v4208 = vadd.f32 %v4135, %v4207
    %v4209 = vpop.f32.mrf.mxu0
    %v4210 = vadd.f32 %v4137, %v4209
    %v4211 = vpop.f32.mrf.mxu0
    %v4212 = vadd.f32 %v4139, %v4211
    %4213 = vmatprep.mubr.bf16.mxu0 0
    %4214 = vmatmul.mubr.bf16.gmra.mxu0 %v900
    %v4215 = vpop.f32.mrf.mxu0
    %v4216 = vadd.f32 %v4143, %v4215
    %v4217 = vpop.f32.mrf.mxu0
    %v4218 = vadd.f32 %v4145, %v4217
    %v4219 = vpop.f32.mrf.mxu0
    %v4220 = vadd.f32 %v4147, %v4219
    %v4221 = vpop.f32.mrf.mxu0
    %v4222 = vadd.f32 %v4149, %v4221
    %4223 = vmatprep.mubr.bf16.mxu0 0
    %4224 = vmatmul.mubr.bf16.gmra.mxu0 %v903
    %v4225 = vpop.f32.mrf.mxu0
    %v4226 = vadd.f32 %v4153, %v4225
    %v4227 = vpop.f32.mrf.mxu0
    %v4228 = vadd.f32 %v4155, %v4227
    %v4229 = vpop.f32.mrf.mxu0
    %v4230 = vadd.f32 %v4157, %v4229
    %v4231 = vpop.f32.mrf.mxu0
    %v4232 = vadd.f32 %v4159, %v4231
    %4233 = vdwg.mxu0
    %4234 = vmatprep.subr.bf16.mxu0 %v2819
    %4235 = vmatpush1.bf16.msra.mxu0 %v2818
    %4236 = vmatprep.subr.bf16.mxu0 %v2795
    %4237 = vmatpush1.bf16.msra.mxu0 %v2794
    %4238 = vmatprep.subr.bf16.mxu0 %v2771
    %4239 = vmatpush1.bf16.msra.mxu0 %v2770
    %4240 = vmatprep.subr.bf16.mxu0 %v2747
    %4241 = vmatpush1.bf16.msra.mxu0 %v2746
    %4242 = vmatprep.subr.bf16.mxu0 %v2723
    %4243 = vmatpush1.bf16.msra.mxu0 %v2722
    %4244 = vmatprep.subr.bf16.mxu0 %v2699
    %4245 = vmatpush1.bf16.msra.mxu0 %v2698
    %4246 = vmatprep.subr.bf16.mxu0 %v2675
    %4247 = vmatpush1.bf16.msra.mxu0 %v2674
    %4248 = vmatprep.subr.bf16.mxu0 %v2651
    %4249 = vmatpush1.bf16.msra.mxu0 %v2650
    %4250 = vmatprep.subr.bf16.mxu0 %v3011
    %4251 = vmatpush2.bf16.msra.mxu0 %v3010
    %4252 = vmatprep.subr.bf16.mxu0 %v2987
    %4253 = vmatpush2.bf16.msra.mxu0 %v2986
    %4254 = vmatprep.subr.bf16.mxu0 %v2963
    %4255 = vmatpush2.bf16.msra.mxu0 %v2962
    %4256 = vmatprep.subr.bf16.mxu0 %v2939
    %4257 = vmatpush2.bf16.msra.mxu0 %v2938
    %4258 = vmatprep.subr.bf16.mxu0 %v2915
    %4259 = vmatpush2.bf16.msra.mxu0 %v2914
    %4260 = vmatprep.subr.bf16.mxu0 %v2891
    %4261 = vmatpush2.bf16.msra.mxu0 %v2890
    %4262 = vmatprep.subr.bf16.mxu0 %v2867
    %4263 = vmatpush2.bf16.msra.mxu0 %v2866
    %4264 = vmatprep.subr.bf16.mxu0 %v2843
    %4265 = vmatpush2.bf16.msra.mxu0 %v2842
    %4266 = vmatprep.mubr.bf16.mxu0 %v893
    %4267 = vmatmul.mubr.bf16.gmra.mxu0 %v892
    %v4268 = vpop.f32.mrf.mxu0
    %v4269 = vadd.f32 %v759, %v4268
    %v4270 = vpop.f32.mrf.mxu0
    %v4271 = vadd.f32 %v763, %v4270
    %v4272 = vpop.f32.mrf.mxu0
    %v4273 = vadd.f32 %v759, %v4272
    %v4274 = vpop.f32.mrf.mxu0
    %v4275 = vadd.f32 %v763, %v4274
    %4276 = vmatprep.mubr.bf16.mxu0 %v896
    %4277 = vmatmul.mubr.bf16.gmra.mxu0 %v895
    %v4278 = vpop.f32.mrf.mxu0
    %v4279 = vadd.f32 %v759, %v4278
    %v4280 = vpop.f32.mrf.mxu0
    %v4281 = vadd.f32 %v763, %v4280
    %v4282 = vpop.f32.mrf.mxu0
    %v4283 = vadd.f32 %v759, %v4282
    %v4284 = vpop.f32.mrf.mxu0
    %v4285 = vadd.f32 %v763, %v4284
    %4286 = vmatprep.mubr.bf16.mxu0 %v899
    %4287 = vmatmul.mubr.bf16.gmra.mxu0 %v898
    %v4288 = vpop.f32.mrf.mxu0
    %v4289 = vadd.f32 %v759, %v4288
    %v4290 = vpop.f32.mrf.mxu0
    %v4291 = vadd.f32 %v763, %v4290
    %v4292 = vpop.f32.mrf.mxu0
    %v4293 = vadd.f32 %v759, %v4292
    %v4294 = vpop.f32.mrf.mxu0
    %v4295 = vadd.f32 %v763, %v4294
    %4296 = vmatprep.mubr.bf16.mxu0 %v902
    %4297 = vmatmul.mubr.bf16.gmra.mxu0 %v901
    %v4298 = vpop.f32.mrf.mxu0
    %v4299 = vadd.f32 %v759, %v4298
    %v4300 = vpop.f32.mrf.mxu0
    %v4301 = vadd.f32 %v763, %v4300
    %v4302 = vpop.f32.mrf.mxu0
    %v4303 = vadd.f32 %v759, %v4302
    %v4304 = vpop.f32.mrf.mxu0
    %v4305 = vadd.f32 %v763, %v4304
    %4306 = vdwg.mxu0
    %4307 = vmatprep.subr.bf16.mxu0 %v3203
    %4308 = vmatpush1.bf16.msra.mxu0 %v3202
    %4309 = vmatprep.subr.bf16.mxu0 %v3179
    %4310 = vmatpush1.bf16.msra.mxu0 %v3178
    %4311 = vmatprep.subr.bf16.mxu0 %v3155
    %4312 = vmatpush1.bf16.msra.mxu0 %v3154
    %4313 = vmatprep.subr.bf16.mxu0 %v3131
    %4314 = vmatpush1.bf16.msra.mxu0 %v3130
    %4315 = vmatprep.subr.bf16.mxu0 %v3107
    %4316 = vmatpush1.bf16.msra.mxu0 %v3106
    %4317 = vmatprep.subr.bf16.mxu0 %v3083
    %4318 = vmatpush1.bf16.msra.mxu0 %v3082
    %4319 = vmatprep.subr.bf16.mxu0 %v3059
    %4320 = vmatpush1.bf16.msra.mxu0 %v3058
    %4321 = vmatprep.subr.bf16.mxu0 %v3035
    %4322 = vmatpush1.bf16.msra.mxu0 %v3034
    %4323 = vmatprep.subr.bf16.mxu0 0
    %4324 = vmatpush2.bf16.msra.mxu0 0
    %4325 = vmatprep.subr.bf16.mxu0 0
    %4326 = vmatpush2.bf16.msra.mxu0 0
    %4327 = vmatprep.subr.bf16.mxu0 0
    %4328 = vmatpush2.bf16.msra.mxu0 0
    %4329 = vmatprep.subr.bf16.mxu0 0
    %4330 = vmatpush2.bf16.msra.mxu0 0
    %4331 = vmatprep.subr.bf16.mxu0 0
    %4332 = vmatpush2.bf16.msra.mxu0 0
    %4333 = vmatprep.subr.bf16.mxu0 0
    %4334 = vmatpush2.bf16.msra.mxu0 0
    %4335 = vmatprep.subr.bf16.mxu0 0
    %4336 = vmatpush2.bf16.msra.mxu0 0
    %4337 = vmatprep.subr.bf16.mxu0 0
    %4338 = vmatpush2.bf16.msra.mxu0 0
    %4339 = vmatprep.mubr.bf16.mxu0 0
    %4340 = vmatmul.mubr.bf16.gmra.mxu0 %v894
    %v4341 = vpop.f32.mrf.mxu0
    %v4342 = vadd.f32 %v4269, %v4341
    %v4343 = vpop.f32.mrf.mxu0
    %v4344 = vadd.f32 %v4271, %v4343
    %v4345 = vpop.f32.mrf.mxu0
    %v4346 = vadd.f32 %v4273, %v4345
    %v4347 = vpop.f32.mrf.mxu0
    %v4348 = vadd.f32 %v4275, %v4347
    %4349 = vmatprep.mubr.bf16.mxu0 0
    %4350 = vmatmul.mubr.bf16.gmra.mxu0 %v897
    %v4351 = vpop.f32.mrf.mxu0
    %v4352 = vadd.f32 %v4279, %v4351
    %v4353 = vpop.f32.mrf.mxu0
    %v4354 = vadd.f32 %v4281, %v4353
    %v4355 = vpop.f32.mrf.mxu0
    %v4356 = vadd.f32 %v4283, %v4355
    %v4357 = vpop.f32.mrf.mxu0
    %v4358 = vadd.f32 %v4285, %v4357
    %4359 = vmatprep.mubr.bf16.mxu0 0
    %4360 = vmatmul.mubr.bf16.gmra.mxu0 %v900
    %v4361 = vpop.f32.mrf.mxu0
    %v4362 = vadd.f32 %v4289, %v4361
    %v4363 = vpop.f32.mrf.mxu0
    %v4364 = vadd.f32 %v4291, %v4363
    %v4365 = vpop.f32.mrf.mxu0
    %v4366 = vadd.f32 %v4293, %v4365
    %v4367 = vpop.f32.mrf.mxu0
    %v4368 = vadd.f32 %v4295, %v4367
    %4369 = vmatprep.mubr.bf16.mxu0 0
    %4370 = vmatmul.mubr.bf16.gmra.mxu0 %v903
    %v4371 = vpop.f32.mrf.mxu0
    %v4372 = vadd.f32 %v4299, %v4371
    %v4373 = vpop.f32.mrf.mxu0
    %v4374 = vadd.f32 %v4301, %v4373
    %v4375 = vpop.f32.mrf.mxu0
    %v4376 = vadd.f32 %v4303, %v4375
    %v4377 = vpop.f32.mrf.mxu0
    %v4378 = vadd.f32 %v4305, %v4377
    %4379 = vdwg.mxu0
    %4380 = vmatprep.subr.bf16.mxu0 %v2821
    %4381 = vmatpush1.bf16.msra.mxu0 %v2820
    %4382 = vmatprep.subr.bf16.mxu0 %v2797
    %4383 = vmatpush1.bf16.msra.mxu0 %v2796
    %4384 = vmatprep.subr.bf16.mxu0 %v2773
    %4385 = vmatpush1.bf16.msra.mxu0 %v2772
    %4386 = vmatprep.subr.bf16.mxu0 %v2749
    %4387 = vmatpush1.bf16.msra.mxu0 %v2748
    %4388 = vmatprep.subr.bf16.mxu0 %v2725
    %4389 = vmatpush1.bf16.msra.mxu0 %v2724
    %4390 = vmatprep.subr.bf16.mxu0 %v2701
    %4391 = vmatpush1.bf16.msra.mxu0 %v2700
    %4392 = vmatprep.subr.bf16.mxu0 %v2677
    %4393 = vmatpush1.bf16.msra.mxu0 %v2676
    %4394 = vmatprep.subr.bf16.mxu0 %v2653
    %4395 = vmatpush1.bf16.msra.mxu0 %v2652
    %4396 = vmatprep.subr.bf16.mxu0 %v3013
    %4397 = vmatpush2.bf16.msra.mxu0 %v3012
    %4398 = vmatprep.subr.bf16.mxu0 %v2989
    %4399 = vmatpush2.bf16.msra.mxu0 %v2988
    %4400 = vmatprep.subr.bf16.mxu0 %v2965
    %4401 = vmatpush2.bf16.msra.mxu0 %v2964
    %4402 = vmatprep.subr.bf16.mxu0 %v2941
    %4403 = vmatpush2.bf16.msra.mxu0 %v2940
    %4404 = vmatprep.subr.bf16.mxu0 %v2917
    %4405 = vmatpush2.bf16.msra.mxu0 %v2916
    %4406 = vmatprep.subr.bf16.mxu0 %v2893
    %4407 = vmatpush2.bf16.msra.mxu0 %v2892
    %4408 = vmatprep.subr.bf16.mxu0 %v2869
    %4409 = vmatpush2.bf16.msra.mxu0 %v2868
    %4410 = vmatprep.subr.bf16.mxu0 %v2845
    %4411 = vmatpush2.bf16.msra.mxu0 %v2844
    %4412 = vmatprep.mubr.bf16.mxu0 %v893
    %4413 = vmatmul.mubr.bf16.gmra.mxu0 %v892
    %v4414 = vpop.f32.mrf.mxu0
    %v4415 = vadd.f32 %v767, %v4414
    %v4416 = vpop.f32.mrf.mxu0
    %v4417 = vadd.f32 %v771, %v4416
    %v4418 = vpop.f32.mrf.mxu0
    %v4419 = vadd.f32 %v767, %v4418
    %v4420 = vpop.f32.mrf.mxu0
    %v4421 = vadd.f32 %v771, %v4420
    %4422 = vmatprep.mubr.bf16.mxu0 %v896
    %4423 = vmatmul.mubr.bf16.gmra.mxu0 %v895
    %v4424 = vpop.f32.mrf.mxu0
    %v4425 = vadd.f32 %v767, %v4424
    %v4426 = vpop.f32.mrf.mxu0
    %v4427 = vadd.f32 %v771, %v4426
    %v4428 = vpop.f32.mrf.mxu0
    %v4429 = vadd.f32 %v767, %v4428
    %v4430 = vpop.f32.mrf.mxu0
    %v4431 = vadd.f32 %v771, %v4430
    %4432 = vmatprep.mubr.bf16.mxu0 %v899
    %4433 = vmatmul.mubr.bf16.gmra.mxu0 %v898
    %v4434 = vpop.f32.mrf.mxu0
    %v4435 = vadd.f32 %v767, %v4434
    %v4436 = vpop.f32.mrf.mxu0
    %v4437 = vadd.f32 %v771, %v4436
    %v4438 = vpop.f32.mrf.mxu0
    %v4439 = vadd.f32 %v767, %v4438
    %v4440 = vpop.f32.mrf.mxu0
    %v4441 = vadd.f32 %v771, %v4440
    %4442 = vmatprep.mubr.bf16.mxu0 %v902
    %4443 = vmatmul.mubr.bf16.gmra.mxu0 %v901
    %v4444 = vpop.f32.mrf.mxu0
    %v4445 = vadd.f32 %v767, %v4444
    %v4446 = vpop.f32.mrf.mxu0
    %v4447 = vadd.f32 %v771, %v4446
    %v4448 = vpop.f32.mrf.mxu0
    %v4449 = vadd.f32 %v767, %v4448
    %v4450 = vpop.f32.mrf.mxu0
    %v4451 = vadd.f32 %v771, %v4450
    %4452 = vdwg.mxu0
    %4453 = vmatprep.subr.bf16.mxu0 %v3205
    %4454 = vmatpush1.bf16.msra.mxu0 %v3204
    %4455 = vmatprep.subr.bf16.mxu0 %v3181
    %4456 = vmatpush1.bf16.msra.mxu0 %v3180
    %4457 = vmatprep.subr.bf16.mxu0 %v3157
    %4458 = vmatpush1.bf16.msra.mxu0 %v3156
    %4459 = vmatprep.subr.bf16.mxu0 %v3133
    %4460 = vmatpush1.bf16.msra.mxu0 %v3132
    %4461 = vmatprep.subr.bf16.mxu0 %v3109
    %4462 = vmatpush1.bf16.msra.mxu0 %v3108
    %4463 = vmatprep.subr.bf16.mxu0 %v3085
    %4464 = vmatpush1.bf16.msra.mxu0 %v3084
    %4465 = vmatprep.subr.bf16.mxu0 %v3061
    %4466 = vmatpush1.bf16.msra.mxu0 %v3060
    %4467 = vmatprep.subr.bf16.mxu0 %v3037
    %4468 = vmatpush1.bf16.msra.mxu0 %v3036
    %4469 = vmatprep.subr.bf16.mxu0 0
    %4470 = vmatpush2.bf16.msra.mxu0 0
    %4471 = vmatprep.subr.bf16.mxu0 0
    %4472 = vmatpush2.bf16.msra.mxu0 0
    %4473 = vmatprep.subr.bf16.mxu0 0
    %4474 = vmatpush2.bf16.msra.mxu0 0
    %4475 = vmatprep.subr.bf16.mxu0 0
    %4476 = vmatpush2.bf16.msra.mxu0 0
    %4477 = vmatprep.subr.bf16.mxu0 0
    %4478 = vmatpush2.bf16.msra.mxu0 0
    %4479 = vmatprep.subr.bf16.mxu0 0
    %4480 = vmatpush2.bf16.msra.mxu0 0
    %4481 = vmatprep.subr.bf16.mxu0 0
    %4482 = vmatpush2.bf16.msra.mxu0 0
    %4483 = vmatprep.subr.bf16.mxu0 0
    %4484 = vmatpush2.bf16.msra.mxu0 0
    %4485 = vmatprep.mubr.bf16.mxu0 0
    %4486 = vmatmul.mubr.bf16.gmra.mxu0 %v894
    %v4487 = vpop.f32.mrf.mxu0
    %v4488 = vadd.f32 %v4415, %v4487
    %v4489 = vpop.f32.mrf.mxu0
    %v4490 = vadd.f32 %v4417, %v4489
    %v4491 = vpop.f32.mrf.mxu0
    %v4492 = vadd.f32 %v4419, %v4491
    %v4493 = vpop.f32.mrf.mxu0
    %v4494 = vadd.f32 %v4421, %v4493
    %4495 = vmatprep.mubr.bf16.mxu0 0
    %4496 = vmatmul.mubr.bf16.gmra.mxu0 %v897
    %v4497 = vpop.f32.mrf.mxu0
    %v4498 = vadd.f32 %v4425, %v4497
    %v4499 = vpop.f32.mrf.mxu0
    %v4500 = vadd.f32 %v4427, %v4499
    %v4501 = vpop.f32.mrf.mxu0
    %v4502 = vadd.f32 %v4429, %v4501
    %v4503 = vpop.f32.mrf.mxu0
    %v4504 = vadd.f32 %v4431, %v4503
    %4505 = vmatprep.mubr.bf16.mxu0 0
    %4506 = vmatmul.mubr.bf16.gmra.mxu0 %v900
    %v4507 = vpop.f32.mrf.mxu0
    %v4508 = vadd.f32 %v4435, %v4507
    %v4509 = vpop.f32.mrf.mxu0
    %v4510 = vadd.f32 %v4437, %v4509
    %v4511 = vpop.f32.mrf.mxu0
    %v4512 = vadd.f32 %v4439, %v4511
    %v4513 = vpop.f32.mrf.mxu0
    %v4514 = vadd.f32 %v4441, %v4513
    %4515 = vmatprep.mubr.bf16.mxu0 0
    %4516 = vmatmul.mubr.bf16.gmra.mxu0 %v903
    %v4517 = vpop.f32.mrf.mxu0
    %v4518 = vadd.f32 %v4445, %v4517
    %v4519 = vpop.f32.mrf.mxu0
    %v4520 = vadd.f32 %v4447, %v4519
    %v4521 = vpop.f32.mrf.mxu0
    %v4522 = vadd.f32 %v4449, %v4521
    %v4523 = vpop.f32.mrf.mxu0
    %v4524 = vadd.f32 %v4451, %v4523
    %4525 = vdwg.mxu0
    %4526 = vmatprep.subr.bf16.mxu0 %v2823
    %4527 = vmatpush1.bf16.msra.mxu0 %v2822
    %4528 = vmatprep.subr.bf16.mxu0 %v2799
    %4529 = vmatpush1.bf16.msra.mxu0 %v2798
    %4530 = vmatprep.subr.bf16.mxu0 %v2775
    %4531 = vmatpush1.bf16.msra.mxu0 %v2774
    %4532 = vmatprep.subr.bf16.mxu0 %v2751
    %4533 = vmatpush1.bf16.msra.mxu0 %v2750
    %4534 = vmatprep.subr.bf16.mxu0 %v2727
    %4535 = vmatpush1.bf16.msra.mxu0 %v2726
    %4536 = vmatprep.subr.bf16.mxu0 %v2703
    %4537 = vmatpush1.bf16.msra.mxu0 %v2702
    %4538 = vmatprep.subr.bf16.mxu0 %v2679
    %4539 = vmatpush1.bf16.msra.mxu0 %v2678
    %4540 = vmatprep.subr.bf16.mxu0 %v2655
    %4541 = vmatpush1.bf16.msra.mxu0 %v2654
    %4542 = vmatprep.subr.bf16.mxu0 %v3015
    %4543 = vmatpush2.bf16.msra.mxu0 %v3014
    %4544 = vmatprep.subr.bf16.mxu0 %v2991
    %4545 = vmatpush2.bf16.msra.mxu0 %v2990
    %4546 = vmatprep.subr.bf16.mxu0 %v2967
    %4547 = vmatpush2.bf16.msra.mxu0 %v2966
    %4548 = vmatprep.subr.bf16.mxu0 %v2943
    %4549 = vmatpush2.bf16.msra.mxu0 %v2942
    %4550 = vmatprep.subr.bf16.mxu0 %v2919
    %4551 = vmatpush2.bf16.msra.mxu0 %v2918
    %4552 = vmatprep.subr.bf16.mxu0 %v2895
    %4553 = vmatpush2.bf16.msra.mxu0 %v2894
    %4554 = vmatprep.subr.bf16.mxu0 %v2871
    %4555 = vmatpush2.bf16.msra.mxu0 %v2870
    %4556 = vmatprep.subr.bf16.mxu0 %v2847
    %4557 = vmatpush2.bf16.msra.mxu0 %v2846
    %4558 = vmatprep.mubr.bf16.mxu0 %v893
    %4559 = vmatmul.mubr.bf16.gmra.mxu0 %v892
    %v4560 = vpop.f32.mrf.mxu0
    %v4561 = vadd.f32 %v775, %v4560
    %v4562 = vpop.f32.mrf.mxu0
    %v4563 = vadd.f32 %v779, %v4562
    %v4564 = vpop.f32.mrf.mxu0
    %v4565 = vadd.f32 %v775, %v4564
    %v4566 = vpop.f32.mrf.mxu0
    %v4567 = vadd.f32 %v779, %v4566
    %4568 = vmatprep.mubr.bf16.mxu0 %v896
    %4569 = vmatmul.mubr.bf16.gmra.mxu0 %v895
    %v4570 = vpop.f32.mrf.mxu0
    %v4571 = vadd.f32 %v775, %v4570
    %v4572 = vpop.f32.mrf.mxu0
    %v4573 = vadd.f32 %v779, %v4572
    %v4574 = vpop.f32.mrf.mxu0
    %v4575 = vadd.f32 %v775, %v4574
    %v4576 = vpop.f32.mrf.mxu0
    %v4577 = vadd.f32 %v779, %v4576
    %4578 = vmatprep.mubr.bf16.mxu0 %v899
    %4579 = vmatmul.mubr.bf16.gmra.mxu0 %v898
    %v4580 = vpop.f32.mrf.mxu0
    %v4581 = vadd.f32 %v775, %v4580
    %v4582 = vpop.f32.mrf.mxu0
    %v4583 = vadd.f32 %v779, %v4582
    %v4584 = vpop.f32.mrf.mxu0
    %v4585 = vadd.f32 %v775, %v4584
    %v4586 = vpop.f32.mrf.mxu0
    %v4587 = vadd.f32 %v779, %v4586
    %4588 = vmatprep.mubr.bf16.mxu0 %v902
    %4589 = vmatmul.mubr.bf16.gmra.mxu0 %v901
    %v4590 = vpop.f32.mrf.mxu0
    %v4591 = vadd.f32 %v775, %v4590
    %v4592 = vpop.f32.mrf.mxu0
    %v4593 = vadd.f32 %v779, %v4592
    %v4594 = vpop.f32.mrf.mxu0
    %v4595 = vadd.f32 %v775, %v4594
    %v4596 = vpop.f32.mrf.mxu0
    %v4597 = vadd.f32 %v779, %v4596
    %4598 = vdwg.mxu0
    %4599 = vmatprep.subr.bf16.mxu0 %v3207
    %4600 = vmatpush1.bf16.msra.mxu0 %v3206
    %4601 = vmatprep.subr.bf16.mxu0 %v3183
    %4602 = vmatpush1.bf16.msra.mxu0 %v3182
    %4603 = vmatprep.subr.bf16.mxu0 %v3159
    %4604 = vmatpush1.bf16.msra.mxu0 %v3158
    %4605 = vmatprep.subr.bf16.mxu0 %v3135
    %4606 = vmatpush1.bf16.msra.mxu0 %v3134
    %4607 = vmatprep.subr.bf16.mxu0 %v3111
    %4608 = vmatpush1.bf16.msra.mxu0 %v3110
    %4609 = vmatprep.subr.bf16.mxu0 %v3087
    %4610 = vmatpush1.bf16.msra.mxu0 %v3086
    %4611 = vmatprep.subr.bf16.mxu0 %v3063
    %4612 = vmatpush1.bf16.msra.mxu0 %v3062
    %4613 = vmatprep.subr.bf16.mxu0 %v3039
    %4614 = vmatpush1.bf16.msra.mxu0 %v3038
    %4615 = vmatprep.subr.bf16.mxu0 0
    %4616 = vmatpush2.bf16.msra.mxu0 0
    %4617 = vmatprep.subr.bf16.mxu0 0
    %4618 = vmatpush2.bf16.msra.mxu0 0
    %4619 = vmatprep.subr.bf16.mxu0 0
    %4620 = vmatpush2.bf16.msra.mxu0 0
    %4621 = vmatprep.subr.bf16.mxu0 0
    %4622 = vmatpush2.bf16.msra.mxu0 0
    %4623 = vmatprep.subr.bf16.mxu0 0
    %4624 = vmatpush2.bf16.msra.mxu0 0
    %4625 = vmatprep.subr.bf16.mxu0 0
    %4626 = vmatpush2.bf16.msra.mxu0 0
    %4627 = vmatprep.subr.bf16.mxu0 0
    %4628 = vmatpush2.bf16.msra.mxu0 0
    %4629 = vmatprep.subr.bf16.mxu0 0
    %4630 = vmatpush2.bf16.msra.mxu0 0
    %4631 = vmatprep.mubr.bf16.mxu0 0
    %4632 = vmatmul.mubr.bf16.gmra.mxu0 %v894
    %v4633 = vpop.f32.mrf.mxu0
    %v4634 = vadd.f32 %v4561, %v4633
    %v4635 = vpop.f32.mrf.mxu0
    %v4636 = vadd.f32 %v4563, %v4635
    %v4637 = vpop.f32.mrf.mxu0
    %v4638 = vadd.f32 %v4565, %v4637
    %v4639 = vpop.f32.mrf.mxu0
    %v4640 = vadd.f32 %v4567, %v4639
    %4641 = vmatprep.mubr.bf16.mxu0 0
    %4642 = vmatmul.mubr.bf16.gmra.mxu0 %v897
    %v4643 = vpop.f32.mrf.mxu0
    %v4644 = vadd.f32 %v4571, %v4643
    %v4645 = vpop.f32.mrf.mxu0
    %v4646 = vadd.f32 %v4573, %v4645
    %v4647 = vpop.f32.mrf.mxu0
    %v4648 = vadd.f32 %v4575, %v4647
    %v4649 = vpop.f32.mrf.mxu0
    %v4650 = vadd.f32 %v4577, %v4649
    %4651 = vmatprep.mubr.bf16.mxu0 0
    %4652 = vmatmul.mubr.bf16.gmra.mxu0 %v900
    %v4653 = vpop.f32.mrf.mxu0
    %v4654 = vadd.f32 %v4581, %v4653
    %v4655 = vpop.f32.mrf.mxu0
    %v4656 = vadd.f32 %v4583, %v4655
    %v4657 = vpop.f32.mrf.mxu0
    %v4658 = vadd.f32 %v4585, %v4657
    %v4659 = vpop.f32.mrf.mxu0
    %v4660 = vadd.f32 %v4587, %v4659
    %4661 = vmatprep.mubr.bf16.mxu0 0
    %4662 = vmatmul.mubr.bf16.gmra.mxu0 %v903
    %v4663 = vpop.f32.mrf.mxu0
    %v4664 = vadd.f32 %v4591, %v4663
    %v4665 = vpop.f32.mrf.mxu0
    %v4666 = vadd.f32 %v4593, %v4665
    %v4667 = vpop.f32.mrf.mxu0
    %v4668 = vadd.f32 %v4595, %v4667
    %v4669 = vpop.f32.mrf.mxu0
    %v4670 = vadd.f32 %v4597, %v4669
    %4671 = vdwg.mxu0
    %4672 = vmatprep.subr.bf16.mxu0 %v2825
    %4673 = vmatpush1.bf16.msra.mxu0 %v2824
    %4674 = vmatprep.subr.bf16.mxu0 %v2801
    %4675 = vmatpush1.bf16.msra.mxu0 %v2800
    %4676 = vmatprep.subr.bf16.mxu0 %v2777
    %4677 = vmatpush1.bf16.msra.mxu0 %v2776
    %4678 = vmatprep.subr.bf16.mxu0 %v2753
    %4679 = vmatpush1.bf16.msra.mxu0 %v2752
    %4680 = vmatprep.subr.bf16.mxu0 %v2729
    %4681 = vmatpush1.bf16.msra.mxu0 %v2728
    %4682 = vmatprep.subr.bf16.mxu0 %v2705
    %4683 = vmatpush1.bf16.msra.mxu0 %v2704
    %4684 = vmatprep.subr.bf16.mxu0 %v2681
    %4685 = vmatpush1.bf16.msra.mxu0 %v2680
    %4686 = vmatprep.subr.bf16.mxu0 %v2657
    %4687 = vmatpush1.bf16.msra.mxu0 %v2656
    %4688 = vmatprep.subr.bf16.mxu0 %v3017
    %4689 = vmatpush2.bf16.msra.mxu0 %v3016
    %4690 = vmatprep.subr.bf16.mxu0 %v2993
    %4691 = vmatpush2.bf16.msra.mxu0 %v2992
    %4692 = vmatprep.subr.bf16.mxu0 %v2969
    %4693 = vmatpush2.bf16.msra.mxu0 %v2968
    %4694 = vmatprep.subr.bf16.mxu0 %v2945
    %4695 = vmatpush2.bf16.msra.mxu0 %v2944
    %4696 = vmatprep.subr.bf16.mxu0 %v2921
    %4697 = vmatpush2.bf16.msra.mxu0 %v2920
    %4698 = vmatprep.subr.bf16.mxu0 %v2897
    %4699 = vmatpush2.bf16.msra.mxu0 %v2896
    %4700 = vmatprep.subr.bf16.mxu0 %v2873
    %4701 = vmatpush2.bf16.msra.mxu0 %v2872
    %4702 = vmatprep.subr.bf16.mxu0 %v2849
    %4703 = vmatpush2.bf16.msra.mxu0 %v2848
    %4704 = vmatprep.mubr.bf16.mxu0 %v893
    %4705 = vmatmul.mubr.bf16.gmra.mxu0 %v892
    %v4706 = vpop.f32.mrf.mxu0
    %v4707 = vadd.f32 %v783, %v4706
    %v4708 = vpop.f32.mrf.mxu0
    %v4709 = vadd.f32 %v787, %v4708
    %v4710 = vpop.f32.mrf.mxu0
    %v4711 = vadd.f32 %v783, %v4710
    %v4712 = vpop.f32.mrf.mxu0
    %v4713 = vadd.f32 %v787, %v4712
    %4714 = vmatprep.mubr.bf16.mxu0 %v896
    %4715 = vmatmul.mubr.bf16.gmra.mxu0 %v895
    %v4716 = vpop.f32.mrf.mxu0
    %v4717 = vadd.f32 %v783, %v4716
    %v4718 = vpop.f32.mrf.mxu0
    %v4719 = vadd.f32 %v787, %v4718
    %v4720 = vpop.f32.mrf.mxu0
    %v4721 = vadd.f32 %v783, %v4720
    %v4722 = vpop.f32.mrf.mxu0
    %v4723 = vadd.f32 %v787, %v4722
    %4724 = vmatprep.mubr.bf16.mxu0 %v899
    %4725 = vmatmul.mubr.bf16.gmra.mxu0 %v898
    %v4726 = vpop.f32.mrf.mxu0
    %v4727 = vadd.f32 %v783, %v4726
    %v4728 = vpop.f32.mrf.mxu0
    %v4729 = vadd.f32 %v787, %v4728
    %v4730 = vpop.f32.mrf.mxu0
    %v4731 = vadd.f32 %v783, %v4730
    %v4732 = vpop.f32.mrf.mxu0
    %v4733 = vadd.f32 %v787, %v4732
    %4734 = vmatprep.mubr.bf16.mxu0 %v902
    %4735 = vmatmul.mubr.bf16.gmra.mxu0 %v901
    %v4736 = vpop.f32.mrf.mxu0
    %v4737 = vadd.f32 %v783, %v4736
    %v4738 = vpop.f32.mrf.mxu0
    %v4739 = vadd.f32 %v787, %v4738
    %v4740 = vpop.f32.mrf.mxu0
    %v4741 = vadd.f32 %v783, %v4740
    %v4742 = vpop.f32.mrf.mxu0
    %v4743 = vadd.f32 %v787, %v4742
    %4744 = vdwg.mxu0
    %4745 = vmatprep.subr.bf16.mxu0 %v3209
    %4746 = vmatpush1.bf16.msra.mxu0 %v3208
    %4747 = vmatprep.subr.bf16.mxu0 %v3185
    %4748 = vmatpush1.bf16.msra.mxu0 %v3184
    %4749 = vmatprep.subr.bf16.mxu0 %v3161
    %4750 = vmatpush1.bf16.msra.mxu0 %v3160
    %4751 = vmatprep.subr.bf16.mxu0 %v3137
    %4752 = vmatpush1.bf16.msra.mxu0 %v3136
    %4753 = vmatprep.subr.bf16.mxu0 %v3113
    %4754 = vmatpush1.bf16.msra.mxu0 %v3112
    %4755 = vmatprep.subr.bf16.mxu0 %v3089
    %4756 = vmatpush1.bf16.msra.mxu0 %v3088
    %4757 = vmatprep.subr.bf16.mxu0 %v3065
    %4758 = vmatpush1.bf16.msra.mxu0 %v3064
    %4759 = vmatprep.subr.bf16.mxu0 %v3041
    %4760 = vmatpush1.bf16.msra.mxu0 %v3040
    %4761 = vmatprep.subr.bf16.mxu0 0
    %4762 = vmatpush2.bf16.msra.mxu0 0
    %4763 = vmatprep.subr.bf16.mxu0 0
    %4764 = vmatpush2.bf16.msra.mxu0 0
    %4765 = vmatprep.subr.bf16.mxu0 0
    %4766 = vmatpush2.bf16.msra.mxu0 0
    %4767 = vmatprep.subr.bf16.mxu0 0
    %4768 = vmatpush2.bf16.msra.mxu0 0
    %4769 = vmatprep.subr.bf16.mxu0 0
    %4770 = vmatpush2.bf16.msra.mxu0 0
    %4771 = vmatprep.subr.bf16.mxu0 0
    %4772 = vmatpush2.bf16.msra.mxu0 0
    %4773 = vmatprep.subr.bf16.mxu0 0
    %4774 = vmatpush2.bf16.msra.mxu0 0
    %4775 = vmatprep.subr.bf16.mxu0 0
    %4776 = vmatpush2.bf16.msra.mxu0 0
    %4777 = vmatprep.mubr.bf16.mxu0 0
    %4778 = vmatmul.mubr.bf16.gmra.mxu0 %v894
    %v4779 = vpop.f32.mrf.mxu0
    %v4780 = vadd.f32 %v4707, %v4779
    %v4781 = vpop.f32.mrf.mxu0
    %v4782 = vadd.f32 %v4709, %v4781
    %v4783 = vpop.f32.mrf.mxu0
    %v4784 = vadd.f32 %v4711, %v4783
    %v4785 = vpop.f32.mrf.mxu0
    %v4786 = vadd.f32 %v4713, %v4785
    %4787 = vmatprep.mubr.bf16.mxu0 0
    %4788 = vmatmul.mubr.bf16.gmra.mxu0 %v897
    %v4789 = vpop.f32.mrf.mxu0
    %v4790 = vadd.f32 %v4717, %v4789
    %v4791 = vpop.f32.mrf.mxu0
    %v4792 = vadd.f32 %v4719, %v4791
    %v4793 = vpop.f32.mrf.mxu0
    %v4794 = vadd.f32 %v4721, %v4793
    %v4795 = vpop.f32.mrf.mxu0
    %v4796 = vadd.f32 %v4723, %v4795
    %4797 = vmatprep.mubr.bf16.mxu0 0
    %4798 = vmatmul.mubr.bf16.gmra.mxu0 %v900
    %v4799 = vpop.f32.mrf.mxu0
    %v4800 = vadd.f32 %v4727, %v4799
    %v4801 = vpop.f32.mrf.mxu0
    %v4802 = vadd.f32 %v4729, %v4801
    %v4803 = vpop.f32.mrf.mxu0
    %v4804 = vadd.f32 %v4731, %v4803
    %v4805 = vpop.f32.mrf.mxu0
    %v4806 = vadd.f32 %v4733, %v4805
    %4807 = vmatprep.mubr.bf16.mxu0 0
    %4808 = vmatmul.mubr.bf16.gmra.mxu0 %v903
    %v4809 = vpop.f32.mrf.mxu0
    %v4810 = vadd.f32 %v4737, %v4809
    %v4811 = vpop.f32.mrf.mxu0
    %v4812 = vadd.f32 %v4739, %v4811
    %v4813 = vpop.f32.mrf.mxu0
    %v4814 = vadd.f32 %v4741, %v4813
    %v4815 = vpop.f32.mrf.mxu0
    %v4816 = vadd.f32 %v4743, %v4815
    %4817 = vdwg.mxu0
    %4818 = vmatprep.subr.bf16.mxu0 %v2827
    %4819 = vmatpush1.bf16.msra.mxu0 %v2826
    %4820 = vmatprep.subr.bf16.mxu0 %v2803
    %4821 = vmatpush1.bf16.msra.mxu0 %v2802
    %4822 = vmatprep.subr.bf16.mxu0 %v2779
    %4823 = vmatpush1.bf16.msra.mxu0 %v2778
    %4824 = vmatprep.subr.bf16.mxu0 %v2755
    %4825 = vmatpush1.bf16.msra.mxu0 %v2754
    %4826 = vmatprep.subr.bf16.mxu0 %v2731
    %4827 = vmatpush1.bf16.msra.mxu0 %v2730
    %4828 = vmatprep.subr.bf16.mxu0 %v2707
    %4829 = vmatpush1.bf16.msra.mxu0 %v2706
    %4830 = vmatprep.subr.bf16.mxu0 %v2683
    %4831 = vmatpush1.bf16.msra.mxu0 %v2682
    %4832 = vmatprep.subr.bf16.mxu0 %v2659
    %4833 = vmatpush1.bf16.msra.mxu0 %v2658
    %4834 = vmatprep.subr.bf16.mxu0 %v3019
    %4835 = vmatpush2.bf16.msra.mxu0 %v3018
    %4836 = vmatprep.subr.bf16.mxu0 %v2995
    %4837 = vmatpush2.bf16.msra.mxu0 %v2994
    %4838 = vmatprep.subr.bf16.mxu0 %v2971
    %4839 = vmatpush2.bf16.msra.mxu0 %v2970
    %4840 = vmatprep.subr.bf16.mxu0 %v2947
    %4841 = vmatpush2.bf16.msra.mxu0 %v2946
    %4842 = vmatprep.subr.bf16.mxu0 %v2923
    %4843 = vmatpush2.bf16.msra.mxu0 %v2922
    %4844 = vmatprep.subr.bf16.mxu0 %v2899
    %4845 = vmatpush2.bf16.msra.mxu0 %v2898
    %4846 = vmatprep.subr.bf16.mxu0 %v2875
    %4847 = vmatpush2.bf16.msra.mxu0 %v2874
    %4848 = vmatprep.subr.bf16.mxu0 %v2851
    %4849 = vmatpush2.bf16.msra.mxu0 %v2850
    %4850 = vmatprep.mubr.bf16.mxu0 %v893
    %4851 = vmatmul.mubr.bf16.gmra.mxu0 %v892
    %v4852 = vpop.f32.mrf.mxu0
    %v4853 = vadd.f32 %v791, %v4852
    %v4854 = vpop.f32.mrf.mxu0
    %v4855 = vadd.f32 %v795, %v4854
    %v4856 = vpop.f32.mrf.mxu0
    %v4857 = vadd.f32 %v791, %v4856
    %v4858 = vpop.f32.mrf.mxu0
    %v4859 = vadd.f32 %v795, %v4858
    %4860 = vmatprep.mubr.bf16.mxu0 %v896
    %4861 = vmatmul.mubr.bf16.gmra.mxu0 %v895
    %v4862 = vpop.f32.mrf.mxu0
    %v4863 = vadd.f32 %v791, %v4862
    %v4864 = vpop.f32.mrf.mxu0
    %v4865 = vadd.f32 %v795, %v4864
    %v4866 = vpop.f32.mrf.mxu0
    %v4867 = vadd.f32 %v791, %v4866
    %v4868 = vpop.f32.mrf.mxu0
    %v4869 = vadd.f32 %v795, %v4868
    %4870 = vmatprep.mubr.bf16.mxu0 %v899
    %4871 = vmatmul.mubr.bf16.gmra.mxu0 %v898
    %v4872 = vpop.f32.mrf.mxu0
    %v4873 = vadd.f32 %v791, %v4872
    %v4874 = vpop.f32.mrf.mxu0
    %v4875 = vadd.f32 %v795, %v4874
    %v4876 = vpop.f32.mrf.mxu0
    %v4877 = vadd.f32 %v791, %v4876
    %v4878 = vpop.f32.mrf.mxu0
    %v4879 = vadd.f32 %v795, %v4878
    %4880 = vmatprep.mubr.bf16.mxu0 %v902
    %4881 = vmatmul.mubr.bf16.gmra.mxu0 %v901
    %v4882 = vpop.f32.mrf.mxu0
    %v4883 = vadd.f32 %v791, %v4882
    %v4884 = vpop.f32.mrf.mxu0
    %v4885 = vadd.f32 %v795, %v4884
    %v4886 = vpop.f32.mrf.mxu0
    %v4887 = vadd.f32 %v791, %v4886
    %v4888 = vpop.f32.mrf.mxu0
    %v4889 = vadd.f32 %v795, %v4888
    %4890 = vdwg.mxu0
    %4891 = vmatprep.subr.bf16.mxu0 %v3211
    %4892 = vmatpush1.bf16.msra.mxu0 %v3210
    %4893 = vmatprep.subr.bf16.mxu0 %v3187
    %4894 = vmatpush1.bf16.msra.mxu0 %v3186
    %4895 = vmatprep.subr.bf16.mxu0 %v3163
    %4896 = vmatpush1.bf16.msra.mxu0 %v3162
    %4897 = vmatprep.subr.bf16.mxu0 %v3139
    %4898 = vmatpush1.bf16.msra.mxu0 %v3138
    %4899 = vmatprep.subr.bf16.mxu0 %v3115
    %4900 = vmatpush1.bf16.msra.mxu0 %v3114
    %4901 = vmatprep.subr.bf16.mxu0 %v3091
    %4902 = vmatpush1.bf16.msra.mxu0 %v3090
    %4903 = vmatprep.subr.bf16.mxu0 %v3067
    %4904 = vmatpush1.bf16.msra.mxu0 %v3066
    %4905 = vmatprep.subr.bf16.mxu0 %v3043
    %4906 = vmatpush1.bf16.msra.mxu0 %v3042
    %4907 = vmatprep.subr.bf16.mxu0 0
    %4908 = vmatpush2.bf16.msra.mxu0 0
    %4909 = vmatprep.subr.bf16.mxu0 0
    %4910 = vmatpush2.bf16.msra.mxu0 0
    %4911 = vmatprep.subr.bf16.mxu0 0
    %4912 = vmatpush2.bf16.msra.mxu0 0
    %4913 = vmatprep.subr.bf16.mxu0 0
    %4914 = vmatpush2.bf16.msra.mxu0 0
    %4915 = vmatprep.subr.bf16.mxu0 0
    %4916 = vmatpush2.bf16.msra.mxu0 0
    %4917 = vmatprep.subr.bf16.mxu0 0
    %4918 = vmatpush2.bf16.msra.mxu0 0
    %4919 = vmatprep.subr.bf16.mxu0 0
    %4920 = vmatpush2.bf16.msra.mxu0 0
    %4921 = vmatprep.subr.bf16.mxu0 0
    %4922 = vmatpush2.bf16.msra.mxu0 0
    %4923 = vmatprep.mubr.bf16.mxu0 0
    %4924 = vmatmul.mubr.bf16.gmra.mxu0 %v894
    %v4925 = vpop.f32.mrf.mxu0
    %v4926 = vadd.f32 %v4853, %v4925
    %v4927 = vpop.f32.mrf.mxu0
    %v4928 = vadd.f32 %v4855, %v4927
    %v4929 = vpop.f32.mrf.mxu0
    %v4930 = vadd.f32 %v4857, %v4929
    %v4931 = vpop.f32.mrf.mxu0
    %v4932 = vadd.f32 %v4859, %v4931
    %4933 = vmatprep.mubr.bf16.mxu0 0
    %4934 = vmatmul.mubr.bf16.gmra.mxu0 %v897
    %v4935 = vpop.f32.mrf.mxu0
    %v4936 = vadd.f32 %v4863, %v4935
    %v4937 = vpop.f32.mrf.mxu0
    %v4938 = vadd.f32 %v4865, %v4937
    %v4939 = vpop.f32.mrf.mxu0
    %v4940 = vadd.f32 %v4867, %v4939
    %v4941 = vpop.f32.mrf.mxu0
    %v4942 = vadd.f32 %v4869, %v4941
    %4943 = vmatprep.mubr.bf16.mxu0 0
    %4944 = vmatmul.mubr.bf16.gmra.mxu0 %v900
    %v4945 = vpop.f32.mrf.mxu0
    %v4946 = vadd.f32 %v4873, %v4945
    %v4947 = vpop.f32.mrf.mxu0
    %v4948 = vadd.f32 %v4875, %v4947
    %v4949 = vpop.f32.mrf.mxu0
    %v4950 = vadd.f32 %v4877, %v4949
    %v4951 = vpop.f32.mrf.mxu0
    %v4952 = vadd.f32 %v4879, %v4951
    %4953 = vmatprep.mubr.bf16.mxu0 0
    %4954 = vmatmul.mubr.bf16.gmra.mxu0 %v903
    %v4955 = vpop.f32.mrf.mxu0
    %v4956 = vadd.f32 %v4883, %v4955
    %v4957 = vpop.f32.mrf.mxu0
    %v4958 = vadd.f32 %v4885, %v4957
    %v4959 = vpop.f32.mrf.mxu0
    %v4960 = vadd.f32 %v4887, %v4959
    %v4961 = vpop.f32.mrf.mxu0
    %v4962 = vadd.f32 %v4889, %v4961
    %4963 = vdwg.mxu0
    %4964 = vmatprep.subr.bf16.mxu0 %v2829
    %4965 = vmatpush1.bf16.msra.mxu0 %v2828
    %4966 = vmatprep.subr.bf16.mxu0 %v2805
    %4967 = vmatpush1.bf16.msra.mxu0 %v2804
    %4968 = vmatprep.subr.bf16.mxu0 %v2781
    %4969 = vmatpush1.bf16.msra.mxu0 %v2780
    %4970 = vmatprep.subr.bf16.mxu0 %v2757
    %4971 = vmatpush1.bf16.msra.mxu0 %v2756
    %4972 = vmatprep.subr.bf16.mxu0 %v2733
    %4973 = vmatpush1.bf16.msra.mxu0 %v2732
    %4974 = vmatprep.subr.bf16.mxu0 %v2709
    %4975 = vmatpush1.bf16.msra.mxu0 %v2708
    %4976 = vmatprep.subr.bf16.mxu0 %v2685
    %4977 = vmatpush1.bf16.msra.mxu0 %v2684
    %4978 = vmatprep.subr.bf16.mxu0 %v2661
    %4979 = vmatpush1.bf16.msra.mxu0 %v2660
    %4980 = vmatprep.subr.bf16.mxu0 %v3021
    %4981 = vmatpush2.bf16.msra.mxu0 %v3020
    %4982 = vmatprep.subr.bf16.mxu0 %v2997
    %4983 = vmatpush2.bf16.msra.mxu0 %v2996
    %4984 = vmatprep.subr.bf16.mxu0 %v2973
    %4985 = vmatpush2.bf16.msra.mxu0 %v2972
    %4986 = vmatprep.subr.bf16.mxu0 %v2949
    %4987 = vmatpush2.bf16.msra.mxu0 %v2948
    %4988 = vmatprep.subr.bf16.mxu0 %v2925
    %4989 = vmatpush2.bf16.msra.mxu0 %v2924
    %4990 = vmatprep.subr.bf16.mxu0 %v2901
    %4991 = vmatpush2.bf16.msra.mxu0 %v2900
    %4992 = vmatprep.subr.bf16.mxu0 %v2877
    %4993 = vmatpush2.bf16.msra.mxu0 %v2876
    %4994 = vmatprep.subr.bf16.mxu0 %v2853
    %4995 = vmatpush2.bf16.msra.mxu0 %v2852
    %4996 = vmatprep.mubr.bf16.mxu0 %v893
    %4997 = vmatmul.mubr.bf16.gmra.mxu0 %v892
    %v4998 = vpop.f32.mrf.mxu0
    %v4999 = vadd.f32 %v799, %v4998
    %v5000 = vpop.f32.mrf.mxu0
    %v5001 = vadd.f32 %v803, %v5000
    %v5002 = vpop.f32.mrf.mxu0
    %v5003 = vadd.f32 %v799, %v5002
    %v5004 = vpop.f32.mrf.mxu0
    %v5005 = vadd.f32 %v803, %v5004
    %5006 = vmatprep.mubr.bf16.mxu0 %v896
    %5007 = vmatmul.mubr.bf16.gmra.mxu0 %v895
    %v5008 = vpop.f32.mrf.mxu0
    %v5009 = vadd.f32 %v799, %v5008
    %v5010 = vpop.f32.mrf.mxu0
    %v5011 = vadd.f32 %v803, %v5010
    %v5012 = vpop.f32.mrf.mxu0
    %v5013 = vadd.f32 %v799, %v5012
    %v5014 = vpop.f32.mrf.mxu0
    %v5015 = vadd.f32 %v803, %v5014
    %5016 = vmatprep.mubr.bf16.mxu0 %v899
    %5017 = vmatmul.mubr.bf16.gmra.mxu0 %v898
    %v5018 = vpop.f32.mrf.mxu0
    %v5019 = vadd.f32 %v799, %v5018
    %v5020 = vpop.f32.mrf.mxu0
    %v5021 = vadd.f32 %v803, %v5020
    %v5022 = vpop.f32.mrf.mxu0
    %v5023 = vadd.f32 %v799, %v5022
    %v5024 = vpop.f32.mrf.mxu0
    %v5025 = vadd.f32 %v803, %v5024
    %5026 = vmatprep.mubr.bf16.mxu0 %v902
    %5027 = vmatmul.mubr.bf16.gmra.mxu0 %v901
    %v5028 = vpop.f32.mrf.mxu0
    %v5029 = vadd.f32 %v799, %v5028
    %v5030 = vpop.f32.mrf.mxu0
    %v5031 = vadd.f32 %v803, %v5030
    %v5032 = vpop.f32.mrf.mxu0
    %v5033 = vadd.f32 %v799, %v5032
    %v5034 = vpop.f32.mrf.mxu0
    %v5035 = vadd.f32 %v803, %v5034
    %5036 = vdwg.mxu0
    %5037 = vmatprep.subr.bf16.mxu0 %v3213
    %5038 = vmatpush1.bf16.msra.mxu0 %v3212
    %5039 = vmatprep.subr.bf16.mxu0 %v3189
    %5040 = vmatpush1.bf16.msra.mxu0 %v3188
    %5041 = vmatprep.subr.bf16.mxu0 %v3165
    %5042 = vmatpush1.bf16.msra.mxu0 %v3164
    %5043 = vmatprep.subr.bf16.mxu0 %v3141
    %5044 = vmatpush1.bf16.msra.mxu0 %v3140
    %5045 = vmatprep.subr.bf16.mxu0 %v3117
    %5046 = vmatpush1.bf16.msra.mxu0 %v3116
    %5047 = vmatprep.subr.bf16.mxu0 %v3093
    %5048 = vmatpush1.bf16.msra.mxu0 %v3092
    %5049 = vmatprep.subr.bf16.mxu0 %v3069
    %5050 = vmatpush1.bf16.msra.mxu0 %v3068
    %5051 = vmatprep.subr.bf16.mxu0 %v3045
    %5052 = vmatpush1.bf16.msra.mxu0 %v3044
    %5053 = vmatprep.subr.bf16.mxu0 0
    %5054 = vmatpush2.bf16.msra.mxu0 0
    %5055 = vmatprep.subr.bf16.mxu0 0
    %5056 = vmatpush2.bf16.msra.mxu0 0
    %5057 = vmatprep.subr.bf16.mxu0 0
    %5058 = vmatpush2.bf16.msra.mxu0 0
    %5059 = vmatprep.subr.bf16.mxu0 0
    %5060 = vmatpush2.bf16.msra.mxu0 0
    %5061 = vmatprep.subr.bf16.mxu0 0
    %5062 = vmatpush2.bf16.msra.mxu0 0
    %5063 = vmatprep.subr.bf16.mxu0 0
    %5064 = vmatpush2.bf16.msra.mxu0 0
    %5065 = vmatprep.subr.bf16.mxu0 0
    %5066 = vmatpush2.bf16.msra.mxu0 0
    %5067 = vmatprep.subr.bf16.mxu0 0
    %5068 = vmatpush2.bf16.msra.mxu0 0
    %5069 = vmatprep.mubr.bf16.mxu0 0
    %5070 = vmatmul.mubr.bf16.gmra.mxu0 %v894
    %v5071 = vpop.f32.mrf.mxu0
    %v5072 = vadd.f32 %v4999, %v5071
    %v5073 = vpop.f32.mrf.mxu0
    %v5074 = vadd.f32 %v5001, %v5073
    %v5075 = vpop.f32.mrf.mxu0
    %v5076 = vadd.f32 %v5003, %v5075
    %v5077 = vpop.f32.mrf.mxu0
    %v5078 = vadd.f32 %v5005, %v5077
    %5079 = vmatprep.mubr.bf16.mxu0 0
    %5080 = vmatmul.mubr.bf16.gmra.mxu0 %v897
    %v5081 = vpop.f32.mrf.mxu0
    %v5082 = vadd.f32 %v5009, %v5081
    %v5083 = vpop.f32.mrf.mxu0
    %v5084 = vadd.f32 %v5011, %v5083
    %v5085 = vpop.f32.mrf.mxu0
    %v5086 = vadd.f32 %v5013, %v5085
    %v5087 = vpop.f32.mrf.mxu0
    %v5088 = vadd.f32 %v5015, %v5087
    %5089 = vmatprep.mubr.bf16.mxu0 0
    %5090 = vmatmul.mubr.bf16.gmra.mxu0 %v900
    %v5091 = vpop.f32.mrf.mxu0
    %v5092 = vadd.f32 %v5019, %v5091
    %v5093 = vpop.f32.mrf.mxu0
    %v5094 = vadd.f32 %v5021, %v5093
    %v5095 = vpop.f32.mrf.mxu0
    %v5096 = vadd.f32 %v5023, %v5095
    %v5097 = vpop.f32.mrf.mxu0
    %v5098 = vadd.f32 %v5025, %v5097
    %5099 = vmatprep.mubr.bf16.mxu0 0
    %5100 = vmatmul.mubr.bf16.gmra.mxu0 %v903
    %v5101 = vpop.f32.mrf.mxu0
    %v5102 = vadd.f32 %v5029, %v5101
    %v5103 = vpop.f32.mrf.mxu0
    %v5104 = vadd.f32 %v5031, %v5103
    %v5105 = vpop.f32.mrf.mxu0
    %v5106 = vadd.f32 %v5033, %v5105
    %v5107 = vpop.f32.mrf.mxu0
    %v5108 = vadd.f32 %v5035, %v5107
    %5109 = vdwg.mxu0
    %5110 = vmatprep.subr.bf16.mxu0 %v2831
    %5111 = vmatpush1.bf16.msra.mxu0 %v2830
    %5112 = vmatprep.subr.bf16.mxu0 %v2807
    %5113 = vmatpush1.bf16.msra.mxu0 %v2806
    %5114 = vmatprep.subr.bf16.mxu0 %v2783
    %5115 = vmatpush1.bf16.msra.mxu0 %v2782
    %5116 = vmatprep.subr.bf16.mxu0 %v2759
    %5117 = vmatpush1.bf16.msra.mxu0 %v2758
    %5118 = vmatprep.subr.bf16.mxu0 %v2735
    %5119 = vmatpush1.bf16.msra.mxu0 %v2734
    %5120 = vmatprep.subr.bf16.mxu0 %v2711
    %5121 = vmatpush1.bf16.msra.mxu0 %v2710
    %5122 = vmatprep.subr.bf16.mxu0 %v2687
    %5123 = vmatpush1.bf16.msra.mxu0 %v2686
    %5124 = vmatprep.subr.bf16.mxu0 %v2663
    %5125 = vmatpush1.bf16.msra.mxu0 %v2662
    %5126 = vmatprep.subr.bf16.mxu0 %v3023
    %5127 = vmatpush2.bf16.msra.mxu0 %v3022
    %5128 = vmatprep.subr.bf16.mxu0 %v2999
    %5129 = vmatpush2.bf16.msra.mxu0 %v2998
    %5130 = vmatprep.subr.bf16.mxu0 %v2975
    %5131 = vmatpush2.bf16.msra.mxu0 %v2974
    %5132 = vmatprep.subr.bf16.mxu0 %v2951
    %5133 = vmatpush2.bf16.msra.mxu0 %v2950
    %5134 = vmatprep.subr.bf16.mxu0 %v2927
    %5135 = vmatpush2.bf16.msra.mxu0 %v2926
    %5136 = vmatprep.subr.bf16.mxu0 %v2903
    %5137 = vmatpush2.bf16.msra.mxu0 %v2902
    %5138 = vmatprep.subr.bf16.mxu0 %v2879
    %5139 = vmatpush2.bf16.msra.mxu0 %v2878
    %5140 = vmatprep.subr.bf16.mxu0 %v2855
    %5141 = vmatpush2.bf16.msra.mxu0 %v2854
    %5142 = vmatprep.mubr.bf16.mxu0 %v893
    %5143 = vmatmul.mubr.bf16.gmra.mxu0 %v892
    %v5144 = vpop.f32.mrf.mxu0
    %v5145 = vadd.f32 %v807, %v5144
    %v5146 = vpop.f32.mrf.mxu0
    %v5147 = vadd.f32 %v811, %v5146
    %v5148 = vpop.f32.mrf.mxu0
    %v5149 = vadd.f32 %v807, %v5148
    %v5150 = vpop.f32.mrf.mxu0
    %v5151 = vadd.f32 %v811, %v5150
    %5152 = vmatprep.mubr.bf16.mxu0 %v896
    %5153 = vmatmul.mubr.bf16.gmra.mxu0 %v895
    %v5154 = vpop.f32.mrf.mxu0
    %v5155 = vadd.f32 %v807, %v5154
    %v5156 = vpop.f32.mrf.mxu0
    %v5157 = vadd.f32 %v811, %v5156
    %v5158 = vpop.f32.mrf.mxu0
    %v5159 = vadd.f32 %v807, %v5158
    %v5160 = vpop.f32.mrf.mxu0
    %v5161 = vadd.f32 %v811, %v5160
    %5162 = vmatprep.mubr.bf16.mxu0 %v899
    %5163 = vmatmul.mubr.bf16.gmra.mxu0 %v898
    %v5164 = vpop.f32.mrf.mxu0
    %v5165 = vadd.f32 %v807, %v5164
    %v5166 = vpop.f32.mrf.mxu0
    %v5167 = vadd.f32 %v811, %v5166
    %v5168 = vpop.f32.mrf.mxu0
    %v5169 = vadd.f32 %v807, %v5168
    %v5170 = vpop.f32.mrf.mxu0
    %v5171 = vadd.f32 %v811, %v5170
    %5172 = vmatprep.mubr.bf16.mxu0 %v902
    %5173 = vmatmul.mubr.bf16.gmra.mxu0 %v901
    %v5174 = vpop.f32.mrf.mxu0
    %v5175 = vadd.f32 %v807, %v5174
    %v5176 = vpop.f32.mrf.mxu0
    %v5177 = vadd.f32 %v811, %v5176
    %v5178 = vpop.f32.mrf.mxu0
    %v5179 = vadd.f32 %v807, %v5178
    %v5180 = vpop.f32.mrf.mxu0
    %v5181 = vadd.f32 %v811, %v5180
    %5182 = vdwg.mxu0
    %5183 = vmatprep.subr.bf16.mxu0 %v3215
    %5184 = vmatpush1.bf16.msra.mxu0 %v3214
    %5185 = vmatprep.subr.bf16.mxu0 %v3191
    %5186 = vmatpush1.bf16.msra.mxu0 %v3190
    %5187 = vmatprep.subr.bf16.mxu0 %v3167
    %5188 = vmatpush1.bf16.msra.mxu0 %v3166
    %5189 = vmatprep.subr.bf16.mxu0 %v3143
    %5190 = vmatpush1.bf16.msra.mxu0 %v3142
    %5191 = vmatprep.subr.bf16.mxu0 %v3119
    %5192 = vmatpush1.bf16.msra.mxu0 %v3118
    %5193 = vmatprep.subr.bf16.mxu0 %v3095
    %5194 = vmatpush1.bf16.msra.mxu0 %v3094
    %5195 = vmatprep.subr.bf16.mxu0 %v3071
    %5196 = vmatpush1.bf16.msra.mxu0 %v3070
    %5197 = vmatprep.subr.bf16.mxu0 %v3047
    %5198 = vmatpush1.bf16.msra.mxu0 %v3046
    %5199 = vmatprep.subr.bf16.mxu0 0
    %5200 = vmatpush2.bf16.msra.mxu0 0
    %5201 = vmatprep.subr.bf16.mxu0 0
    %5202 = vmatpush2.bf16.msra.mxu0 0
    %5203 = vmatprep.subr.bf16.mxu0 0
    %5204 = vmatpush2.bf16.msra.mxu0 0
    %5205 = vmatprep.subr.bf16.mxu0 0
    %5206 = vmatpush2.bf16.msra.mxu0 0
    %5207 = vmatprep.subr.bf16.mxu0 0
    %5208 = vmatpush2.bf16.msra.mxu0 0
    %5209 = vmatprep.subr.bf16.mxu0 0
    %5210 = vmatpush2.bf16.msra.mxu0 0
    %5211 = vmatprep.subr.bf16.mxu0 0
    %5212 = vmatpush2.bf16.msra.mxu0 0
    %5213 = vmatprep.subr.bf16.mxu0 0
    %5214 = vmatpush2.bf16.msra.mxu0 0
    %5215 = vmatprep.mubr.bf16.mxu0 0
    %5216 = vmatmul.mubr.bf16.gmra.mxu0 %v894
    %v5217 = vpop.f32.mrf.mxu0
    %v5218 = vadd.f32 %v5145, %v5217
    %v5219 = vpop.f32.mrf.mxu0
    %v5220 = vadd.f32 %v5147, %v5219
    %v5221 = vpop.f32.mrf.mxu0
    %v5222 = vadd.f32 %v5149, %v5221
    %v5223 = vpop.f32.mrf.mxu0
    %v5224 = vadd.f32 %v5151, %v5223
    %5225 = vmatprep.mubr.bf16.mxu0 0
    %5226 = vmatmul.mubr.bf16.gmra.mxu0 %v897
    %v5227 = vpop.f32.mrf.mxu0
    %v5228 = vadd.f32 %v5155, %v5227
    %v5229 = vpop.f32.mrf.mxu0
    %v5230 = vadd.f32 %v5157, %v5229
    %v5231 = vpop.f32.mrf.mxu0
    %v5232 = vadd.f32 %v5159, %v5231
    %v5233 = vpop.f32.mrf.mxu0
    %v5234 = vadd.f32 %v5161, %v5233
    %5235 = vmatprep.mubr.bf16.mxu0 0
    %5236 = vmatmul.mubr.bf16.gmra.mxu0 %v900
    %v5237 = vpop.f32.mrf.mxu0
    %v5238 = vadd.f32 %v5165, %v5237
    %v5239 = vpop.f32.mrf.mxu0
    %v5240 = vadd.f32 %v5167, %v5239
    %v5241 = vpop.f32.mrf.mxu0
    %v5242 = vadd.f32 %v5169, %v5241
    %v5243 = vpop.f32.mrf.mxu0
    %v5244 = vadd.f32 %v5171, %v5243
    %5245 = vmatprep.mubr.bf16.mxu0 0
    %5246 = vmatmul.mubr.bf16.gmra.mxu0 %v903
    %v5247 = vpop.f32.mrf.mxu0
    %v5248 = vadd.f32 %v5175, %v5247
    %v5249 = vpop.f32.mrf.mxu0
    %v5250 = vadd.f32 %v5177, %v5249
    %v5251 = vpop.f32.mrf.mxu0
    %v5252 = vadd.f32 %v5179, %v5251
    %v5253 = vpop.f32.mrf.mxu0
    %v5254 = vadd.f32 %v5181, %v5253
    %5255 = vdwg.mxu0
    %5256 = vmatprep.subr.bf16.mxu0 %v2833
    %5257 = vmatpush1.bf16.msra.mxu0 %v2832
    %5258 = vmatprep.subr.bf16.mxu0 %v2809
    %5259 = vmatpush1.bf16.msra.mxu0 %v2808
    %5260 = vmatprep.subr.bf16.mxu0 %v2785
    %5261 = vmatpush1.bf16.msra.mxu0 %v2784
    %5262 = vmatprep.subr.bf16.mxu0 %v2761
    %5263 = vmatpush1.bf16.msra.mxu0 %v2760
    %5264 = vmatprep.subr.bf16.mxu0 %v2737
    %5265 = vmatpush1.bf16.msra.mxu0 %v2736
    %5266 = vmatprep.subr.bf16.mxu0 %v2713
    %5267 = vmatpush1.bf16.msra.mxu0 %v2712
    %5268 = vmatprep.subr.bf16.mxu0 %v2689
    %5269 = vmatpush1.bf16.msra.mxu0 %v2688
    %5270 = vmatprep.subr.bf16.mxu0 %v2665
    %5271 = vmatpush1.bf16.msra.mxu0 %v2664
    %5272 = vmatprep.subr.bf16.mxu0 %v3025
    %5273 = vmatpush2.bf16.msra.mxu0 %v3024
    %5274 = vmatprep.subr.bf16.mxu0 %v3001
    %5275 = vmatpush2.bf16.msra.mxu0 %v3000
    %5276 = vmatprep.subr.bf16.mxu0 %v2977
    %5277 = vmatpush2.bf16.msra.mxu0 %v2976
    %5278 = vmatprep.subr.bf16.mxu0 %v2953
    %5279 = vmatpush2.bf16.msra.mxu0 %v2952
    %5280 = vmatprep.subr.bf16.mxu0 %v2929
    %5281 = vmatpush2.bf16.msra.mxu0 %v2928
    %5282 = vmatprep.subr.bf16.mxu0 %v2905
    %5283 = vmatpush2.bf16.msra.mxu0 %v2904
    %5284 = vmatprep.subr.bf16.mxu0 %v2881
    %5285 = vmatpush2.bf16.msra.mxu0 %v2880
    %5286 = vmatprep.subr.bf16.mxu0 %v2857
    %5287 = vmatpush2.bf16.msra.mxu0 %v2856
    %5288 = vmatprep.mubr.bf16.mxu0 %v893
    %5289 = vmatmul.mubr.bf16.gmra.mxu0 %v892
    %v5290 = vpop.f32.mrf.mxu0
    %v5291 = vadd.f32 %v815, %v5290
    %v5292 = vpop.f32.mrf.mxu0
    %v5293 = vadd.f32 %v819, %v5292
    %v5294 = vpop.f32.mrf.mxu0
    %v5295 = vadd.f32 %v815, %v5294
    %v5296 = vpop.f32.mrf.mxu0
    %v5297 = vadd.f32 %v819, %v5296
    %5298 = vmatprep.mubr.bf16.mxu0 %v896
    %5299 = vmatmul.mubr.bf16.gmra.mxu0 %v895
    %v5300 = vpop.f32.mrf.mxu0
    %v5301 = vadd.f32 %v815, %v5300
    %v5302 = vpop.f32.mrf.mxu0
    %v5303 = vadd.f32 %v819, %v5302
    %v5304 = vpop.f32.mrf.mxu0
    %v5305 = vadd.f32 %v815, %v5304
    %v5306 = vpop.f32.mrf.mxu0
    %v5307 = vadd.f32 %v819, %v5306
    %5308 = vmatprep.mubr.bf16.mxu0 %v899
    %5309 = vmatmul.mubr.bf16.gmra.mxu0 %v898
    %v5310 = vpop.f32.mrf.mxu0
    %v5311 = vadd.f32 %v815, %v5310
    %v5312 = vpop.f32.mrf.mxu0
    %v5313 = vadd.f32 %v819, %v5312
    %v5314 = vpop.f32.mrf.mxu0
    %v5315 = vadd.f32 %v815, %v5314
    %v5316 = vpop.f32.mrf.mxu0
    %v5317 = vadd.f32 %v819, %v5316
    %5318 = vmatprep.mubr.bf16.mxu0 %v902
    %5319 = vmatmul.mubr.bf16.gmra.mxu0 %v901
    %v5320 = vpop.f32.mrf.mxu0
    %v5321 = vadd.f32 %v815, %v5320
    %v5322 = vpop.f32.mrf.mxu0
    %v5323 = vadd.f32 %v819, %v5322
    %v5324 = vpop.f32.mrf.mxu0
    %v5325 = vadd.f32 %v815, %v5324
    %v5326 = vpop.f32.mrf.mxu0
    %v5327 = vadd.f32 %v819, %v5326
    %5328 = vdwg.mxu0
    %5329 = vmatprep.subr.bf16.mxu0 %v3217
    %5330 = vmatpush1.bf16.msra.mxu0 %v3216
    %5331 = vmatprep.subr.bf16.mxu0 %v3193
    %5332 = vmatpush1.bf16.msra.mxu0 %v3192
    %5333 = vmatprep.subr.bf16.mxu0 %v3169
    %5334 = vmatpush1.bf16.msra.mxu0 %v3168
    %5335 = vmatprep.subr.bf16.mxu0 %v3145
    %5336 = vmatpush1.bf16.msra.mxu0 %v3144
    %5337 = vmatprep.subr.bf16.mxu0 %v3121
    %5338 = vmatpush1.bf16.msra.mxu0 %v3120
    %5339 = vmatprep.subr.bf16.mxu0 %v3097
    %5340 = vmatpush1.bf16.msra.mxu0 %v3096
    %5341 = vmatprep.subr.bf16.mxu0 %v3073
    %5342 = vmatpush1.bf16.msra.mxu0 %v3072
    %5343 = vmatprep.subr.bf16.mxu0 %v3049
    %5344 = vmatpush1.bf16.msra.mxu0 %v3048
    %5345 = vmatprep.subr.bf16.mxu0 0
    %5346 = vmatpush2.bf16.msra.mxu0 0
    %5347 = vmatprep.subr.bf16.mxu0 0
    %5348 = vmatpush2.bf16.msra.mxu0 0
    %5349 = vmatprep.subr.bf16.mxu0 0
    %5350 = vmatpush2.bf16.msra.mxu0 0
    %5351 = vmatprep.subr.bf16.mxu0 0
    %5352 = vmatpush2.bf16.msra.mxu0 0
    %5353 = vmatprep.subr.bf16.mxu0 0
    %5354 = vmatpush2.bf16.msra.mxu0 0
    %5355 = vmatprep.subr.bf16.mxu0 0
    %5356 = vmatpush2.bf16.msra.mxu0 0
    %5357 = vmatprep.subr.bf16.mxu0 0
    %5358 = vmatpush2.bf16.msra.mxu0 0
    %5359 = vmatprep.subr.bf16.mxu0 0
    %5360 = vmatpush2.bf16.msra.mxu0 0
    %5361 = vmatprep.mubr.bf16.mxu0 0
    %5362 = vmatmul.mubr.bf16.gmra.mxu0 %v894
    %v5363 = vpop.f32.mrf.mxu0
    %v5364 = vadd.f32 %v5291, %v5363
    %v5365 = vpop.f32.mrf.mxu0
    %v5366 = vadd.f32 %v5293, %v5365
    %v5367 = vpop.f32.mrf.mxu0
    %v5368 = vadd.f32 %v5295, %v5367
    %v5369 = vpop.f32.mrf.mxu0
    %v5370 = vadd.f32 %v5297, %v5369
    %5371 = vmatprep.mubr.bf16.mxu0 0
    %5372 = vmatmul.mubr.bf16.gmra.mxu0 %v897
    %v5373 = vpop.f32.mrf.mxu0
    %v5374 = vadd.f32 %v5301, %v5373
    %v5375 = vpop.f32.mrf.mxu0
    %v5376 = vadd.f32 %v5303, %v5375
    %v5377 = vpop.f32.mrf.mxu0
    %v5378 = vadd.f32 %v5305, %v5377
    %v5379 = vpop.f32.mrf.mxu0
    %v5380 = vadd.f32 %v5307, %v5379
    %5381 = vmatprep.mubr.bf16.mxu0 0
    %5382 = vmatmul.mubr.bf16.gmra.mxu0 %v900
    %v5383 = vpop.f32.mrf.mxu0
    %v5384 = vadd.f32 %v5311, %v5383
    %v5385 = vpop.f32.mrf.mxu0
    %v5386 = vadd.f32 %v5313, %v5385
    %v5387 = vpop.f32.mrf.mxu0
    %v5388 = vadd.f32 %v5315, %v5387
    %v5389 = vpop.f32.mrf.mxu0
    %v5390 = vadd.f32 %v5317, %v5389
    %5391 = vmatprep.mubr.bf16.mxu0 0
    %5392 = vmatmul.mubr.bf16.gmra.mxu0 %v903
    %v5393 = vpop.f32.mrf.mxu0
    %v5394 = vadd.f32 %v5321, %v5393
    %v5395 = vpop.f32.mrf.mxu0
    %v5396 = vadd.f32 %v5323, %v5395
    %v5397 = vpop.f32.mrf.mxu0
    %v5398 = vadd.f32 %v5325, %v5397
    %v5399 = vpop.f32.mrf.mxu0
    %v5400 = vadd.f32 %v5327, %v5399
    %5401 = vdwg.mxu0
    %5402 = vmatprep.subr.bf16.mxu0 %v2835
    %5403 = vmatpush1.bf16.msra.mxu0 %v2834
    %5404 = vmatprep.subr.bf16.mxu0 %v2811
    %5405 = vmatpush1.bf16.msra.mxu0 %v2810
    %5406 = vmatprep.subr.bf16.mxu0 %v2787
    %5407 = vmatpush1.bf16.msra.mxu0 %v2786
    %5408 = vmatprep.subr.bf16.mxu0 %v2763
    %5409 = vmatpush1.bf16.msra.mxu0 %v2762
    %5410 = vmatprep.subr.bf16.mxu0 %v2739
    %5411 = vmatpush1.bf16.msra.mxu0 %v2738
    %5412 = vmatprep.subr.bf16.mxu0 %v2715
    %5413 = vmatpush1.bf16.msra.mxu0 %v2714
    %5414 = vmatprep.subr.bf16.mxu0 %v2691
    %5415 = vmatpush1.bf16.msra.mxu0 %v2690
    %5416 = vmatprep.subr.bf16.mxu0 %v2667
    %5417 = vmatpush1.bf16.msra.mxu0 %v2666
    %5418 = vmatprep.subr.bf16.mxu0 %v3027
    %5419 = vmatpush2.bf16.msra.mxu0 %v3026
    %5420 = vmatprep.subr.bf16.mxu0 %v3003
    %5421 = vmatpush2.bf16.msra.mxu0 %v3002
    %5422 = vmatprep.subr.bf16.mxu0 %v2979
    %5423 = vmatpush2.bf16.msra.mxu0 %v2978
    %5424 = vmatprep.subr.bf16.mxu0 %v2955
    %5425 = vmatpush2.bf16.msra.mxu0 %v2954
    %5426 = vmatprep.subr.bf16.mxu0 %v2931
    %5427 = vmatpush2.bf16.msra.mxu0 %v2930
    %5428 = vmatprep.subr.bf16.mxu0 %v2907
    %5429 = vmatpush2.bf16.msra.mxu0 %v2906
    %5430 = vmatprep.subr.bf16.mxu0 %v2883
    %5431 = vmatpush2.bf16.msra.mxu0 %v2882
    %5432 = vmatprep.subr.bf16.mxu0 %v2859
    %5433 = vmatpush2.bf16.msra.mxu0 %v2858
    %5434 = vmatprep.mubr.bf16.mxu0 %v893
    %5435 = vmatmul.mubr.bf16.gmra.mxu0 %v892
    %v5436 = vpop.f32.mrf.mxu0
    %v5437 = vadd.f32 %v823, %v5436
    %v5438 = vpop.f32.mrf.mxu0
    %v5439 = vadd.f32 %v827, %v5438
    %v5440 = vpop.f32.mrf.mxu0
    %v5441 = vadd.f32 %v823, %v5440
    %v5442 = vpop.f32.mrf.mxu0
    %v5443 = vadd.f32 %v827, %v5442
    %5444 = vmatprep.mubr.bf16.mxu0 %v896
    %5445 = vmatmul.mubr.bf16.gmra.mxu0 %v895
    %v5446 = vpop.f32.mrf.mxu0
    %v5447 = vadd.f32 %v823, %v5446
    %v5448 = vpop.f32.mrf.mxu0
    %v5449 = vadd.f32 %v827, %v5448
    %v5450 = vpop.f32.mrf.mxu0
    %v5451 = vadd.f32 %v823, %v5450
    %v5452 = vpop.f32.mrf.mxu0
    %v5453 = vadd.f32 %v827, %v5452
    %5454 = vmatprep.mubr.bf16.mxu0 %v899
    %5455 = vmatmul.mubr.bf16.gmra.mxu0 %v898
    %v5456 = vpop.f32.mrf.mxu0
    %v5457 = vadd.f32 %v823, %v5456
    %v5458 = vpop.f32.mrf.mxu0
    %v5459 = vadd.f32 %v827, %v5458
    %v5460 = vpop.f32.mrf.mxu0
    %v5461 = vadd.f32 %v823, %v5460
    %v5462 = vpop.f32.mrf.mxu0
    %v5463 = vadd.f32 %v827, %v5462
    %5464 = vmatprep.mubr.bf16.mxu0 %v902
    %5465 = vmatmul.mubr.bf16.gmra.mxu0 %v901
    %v5466 = vpop.f32.mrf.mxu0
    %v5467 = vadd.f32 %v823, %v5466
    %v5468 = vpop.f32.mrf.mxu0
    %v5469 = vadd.f32 %v827, %v5468
    %v5470 = vpop.f32.mrf.mxu0
    %v5471 = vadd.f32 %v823, %v5470
    %v5472 = vpop.f32.mrf.mxu0
    %v5473 = vadd.f32 %v827, %v5472
    %5474 = vdwg.mxu0
    %5475 = vmatprep.subr.bf16.mxu0 %v3219
    %5476 = vmatpush1.bf16.msra.mxu0 %v3218
    %5477 = vmatprep.subr.bf16.mxu0 %v3195
    %5478 = vmatpush1.bf16.msra.mxu0 %v3194
    %5479 = vmatprep.subr.bf16.mxu0 %v3171
    %5480 = vmatpush1.bf16.msra.mxu0 %v3170
    %5481 = vmatprep.subr.bf16.mxu0 %v3147
    %5482 = vmatpush1.bf16.msra.mxu0 %v3146
    %5483 = vmatprep.subr.bf16.mxu0 %v3123
    %5484 = vmatpush1.bf16.msra.mxu0 %v3122
    %5485 = vmatprep.subr.bf16.mxu0 %v3099
    %5486 = vmatpush1.bf16.msra.mxu0 %v3098
    %5487 = vmatprep.subr.bf16.mxu0 %v3075
    %5488 = vmatpush1.bf16.msra.mxu0 %v3074
    %5489 = vmatprep.subr.bf16.mxu0 %v3051
    %5490 = vmatpush1.bf16.msra.mxu0 %v3050
    %5491 = vmatprep.subr.bf16.mxu0 0
    %5492 = vmatpush2.bf16.msra.mxu0 0
    %5493 = vmatprep.subr.bf16.mxu0 0
    %5494 = vmatpush2.bf16.msra.mxu0 0
    %5495 = vmatprep.subr.bf16.mxu0 0
    %5496 = vmatpush2.bf16.msra.mxu0 0
    %5497 = vmatprep.subr.bf16.mxu0 0
    %5498 = vmatpush2.bf16.msra.mxu0 0
    %5499 = vmatprep.subr.bf16.mxu0 0
    %5500 = vmatpush2.bf16.msra.mxu0 0
    %5501 = vmatprep.subr.bf16.mxu0 0
    %5502 = vmatpush2.bf16.msra.mxu0 0
    %5503 = vmatprep.subr.bf16.mxu0 0
    %5504 = vmatpush2.bf16.msra.mxu0 0
    %5505 = vmatprep.subr.bf16.mxu0 0
    %5506 = vmatpush2.bf16.msra.mxu0 0
    %5507 = vmatprep.mubr.bf16.mxu0 0
    %5508 = vmatmul.mubr.bf16.gmra.mxu0 %v894
    %v5509 = vpop.f32.mrf.mxu0
    %v5510 = vadd.f32 %v5437, %v5509
    %v5511 = vpop.f32.mrf.mxu0
    %v5512 = vadd.f32 %v5439, %v5511
    %v5513 = vpop.f32.mrf.mxu0
    %v5514 = vadd.f32 %v5441, %v5513
    %v5515 = vpop.f32.mrf.mxu0
    %v5516 = vadd.f32 %v5443, %v5515
    %5517 = vmatprep.mubr.bf16.mxu0 0
    %5518 = vmatmul.mubr.bf16.gmra.mxu0 %v897
    %v5519 = vpop.f32.mrf.mxu0
    %v5520 = vadd.f32 %v5447, %v5519
    %v5521 = vpop.f32.mrf.mxu0
    %v5522 = vadd.f32 %v5449, %v5521
    %v5523 = vpop.f32.mrf.mxu0
    %v5524 = vadd.f32 %v5451, %v5523
    %v5525 = vpop.f32.mrf.mxu0
    %v5526 = vadd.f32 %v5453, %v5525
    %5527 = vmatprep.mubr.bf16.mxu0 0
    %5528 = vmatmul.mubr.bf16.gmra.mxu0 %v900
    %v5529 = vpop.f32.mrf.mxu0
    %v5530 = vadd.f32 %v5457, %v5529
    %v5531 = vpop.f32.mrf.mxu0
    %v5532 = vadd.f32 %v5459, %v5531
    %v5533 = vpop.f32.mrf.mxu0
    %v5534 = vadd.f32 %v5461, %v5533
    %v5535 = vpop.f32.mrf.mxu0
    %v5536 = vadd.f32 %v5463, %v5535
    %5537 = vmatprep.mubr.bf16.mxu0 0
    %5538 = vmatmul.mubr.bf16.gmra.mxu0 %v903
    %v5539 = vpop.f32.mrf.mxu0
    %v5540 = vadd.f32 %v5467, %v5539
    %v5541 = vpop.f32.mrf.mxu0
    %v5542 = vadd.f32 %v5469, %v5541
    %v5543 = vpop.f32.mrf.mxu0
    %v5544 = vadd.f32 %v5471, %v5543
    %v5545 = vpop.f32.mrf.mxu0
    %v5546 = vadd.f32 %v5473, %v5545
    %5547 = vdwg.mxu0
    %v5548 = vmul.f32 %v3904, 0.5
    %v5549 = vmul.f32 %v3906, 0.5
    %v5550 = vmul.f32 %v4050, 0.5
    %v5551 = vmul.f32 %v4052, 0.5
    %v5552 = vmul.f32 %v4196, 0.5
    %v5553 = vmul.f32 %v4198, 0.5
    %v5554 = vmul.f32 %v4342, 0.5
    %v5555 = vmul.f32 %v4344, 0.5
    %v5556 = vmul.f32 %v4488, 0.5
    %v5557 = vmul.f32 %v4490, 0.5
    %v5558 = vmul.f32 %v4634, 0.5
    %v5559 = vmul.f32 %v4636, 0.5
    %v5560 = vmul.f32 %v4780, 0.5
    %v5561 = vmul.f32 %v4782, 0.5
    %v5562 = vmul.f32 %v4926, 0.5
    %v5563 = vmul.f32 %v4928, 0.5
    %v5564 = vmul.f32 %v5072, 0.5
    %v5565 = vmul.f32 %v5074, 0.5
    %v5566 = vmul.f32 %v5218, 0.5
    %v5567 = vmul.f32 %v5220, 0.5
    %v5568 = vmul.f32 %v5364, 0.5
    %v5569 = vmul.f32 %v5366, 0.5
    %v5570 = vmul.f32 %v5510, 0.5
    %v5571 = vmul.f32 %v5512, 0.5
    %v5572 = vmul.f32 %v3908, 0.5
    %v5573 = vmul.f32 %v3910, 0.5
    %v5574 = vmul.f32 %v4054, 0.5
    %v5575 = vmul.f32 %v4056, 0.5
    %v5576 = vmul.f32 %v4200, 0.5
    %v5577 = vmul.f32 %v4202, 0.5
    %v5578 = vmul.f32 %v4346, 0.5
    %v5579 = vmul.f32 %v4348, 0.5
    %v5580 = vmul.f32 %v4492, 0.5
    %v5581 = vmul.f32 %v4494, 0.5
    %v5582 = vmul.f32 %v4638, 0.5
    %v5583 = vmul.f32 %v4640, 0.5
    %v5584 = vmul.f32 %v4784, 0.5
    %v5585 = vmul.f32 %v4786, 0.5
    %v5586 = vmul.f32 %v4930, 0.5
    %v5587 = vmul.f32 %v4932, 0.5
    %v5588 = vmul.f32 %v5076, 0.5
    %v5589 = vmul.f32 %v5078, 0.5
    %v5590 = vmul.f32 %v5222, 0.5
    %v5591 = vmul.f32 %v5224, 0.5
    %v5592 = vmul.f32 %v5368, 0.5
    %v5593 = vmul.f32 %v5370, 0.5
    %v5594 = vmul.f32 %v5514, 0.5
    %v5595 = vmul.f32 %v5516, 0.5
    %v5596 = vmul.f32 %v3914, 0.5
    %v5597 = vmul.f32 %v3916, 0.5
    %v5598 = vmul.f32 %v4060, 0.5
    %v5599 = vmul.f32 %v4062, 0.5
    %v5600 = vmul.f32 %v4206, 0.5
    %v5601 = vmul.f32 %v4208, 0.5
    %v5602 = vmul.f32 %v4352, 0.5
    %v5603 = vmul.f32 %v4354, 0.5
    %v5604 = vmul.f32 %v4498, 0.5
    %v5605 = vmul.f32 %v4500, 0.5
    %v5606 = vmul.f32 %v4644, 0.5
    %v5607 = vmul.f32 %v4646, 0.5
    %v5608 = vmul.f32 %v4790, 0.5
    %v5609 = vmul.f32 %v4792, 0.5
    %v5610 = vmul.f32 %v4936, 0.5
    %v5611 = vmul.f32 %v4938, 0.5
    %v5612 = vmul.f32 %v5082, 0.5
    %v5613 = vmul.f32 %v5084, 0.5
    %v5614 = vmul.f32 %v5228, 0.5
    %v5615 = vmul.f32 %v5230, 0.5
    %v5616 = vmul.f32 %v5374, 0.5
    %v5617 = vmul.f32 %v5376, 0.5
    %v5618 = vmul.f32 %v5520, 0.5
    %v5619 = vmul.f32 %v5522, 0.5
    %v5620 = vmul.f32 %v3918, 0.5
    %v5621 = vmul.f32 %v3920, 0.5
    %v5622 = vmul.f32 %v4064, 0.5
    %v5623 = vmul.f32 %v4066, 0.5
    %v5624 = vmul.f32 %v4210, 0.5
    %v5625 = vmul.f32 %v4212, 0.5
    %v5626 = vmul.f32 %v4356, 0.5
    %v5627 = vmul.f32 %v4358, 0.5
    %v5628 = vmul.f32 %v4502, 0.5
    %v5629 = vmul.f32 %v4504, 0.5
    %v5630 = vmul.f32 %v4648, 0.5
    %v5631 = vmul.f32 %v4650, 0.5
    %v5632 = vmul.f32 %v4794, 0.5
    %v5633 = vmul.f32 %v4796, 0.5
    %v5634 = vmul.f32 %v4940, 0.5
    %v5635 = vmul.f32 %v4942, 0.5
    %v5636 = vmul.f32 %v5086, 0.5
    %v5637 = vmul.f32 %v5088, 0.5
    %v5638 = vmul.f32 %v5232, 0.5
    %v5639 = vmul.f32 %v5234, 0.5
    %v5640 = vmul.f32 %v5378, 0.5
    %v5641 = vmul.f32 %v5380, 0.5
    %v5642 = vmul.f32 %v5524, 0.5
    %v5643 = vmul.f32 %v5526, 0.5
    %v5644 = vmul.f32 %v3924, 0.5
    %v5645 = vmul.f32 %v3926, 0.5
    %v5646 = vmul.f32 %v4070, 0.5
    %v5647 = vmul.f32 %v4072, 0.5
    %v5648 = vmul.f32 %v4216, 0.5
    %v5649 = vmul.f32 %v4218, 0.5
    %v5650 = vmul.f32 %v4362, 0.5
    %v5651 = vmul.f32 %v4364, 0.5
    %v5652 = vmul.f32 %v4508, 0.5
    %v5653 = vmul.f32 %v4510, 0.5
    %v5654 = vmul.f32 %v4654, 0.5
    %v5655 = vmul.f32 %v4656, 0.5
    %v5656 = vmul.f32 %v4800, 0.5
    %v5657 = vmul.f32 %v4802, 0.5
    %v5658 = vmul.f32 %v4946, 0.5
    %v5659 = vmul.f32 %v4948, 0.5
    %v5660 = vmul.f32 %v5092, 0.5
    %v5661 = vmul.f32 %v5094, 0.5
    %v5662 = vmul.f32 %v5238, 0.5
    %v5663 = vmul.f32 %v5240, 0.5
    %v5664 = vmul.f32 %v5384, 0.5
    %v5665 = vmul.f32 %v5386, 0.5
    %v5666 = vmul.f32 %v5530, 0.5
    %v5667 = vmul.f32 %v5532, 0.5
    %v5668 = vmul.f32 %v3928, 0.5
    %v5669 = vmul.f32 %v3930, 0.5
    %v5670 = vmul.f32 %v4074, 0.5
    %v5671 = vmul.f32 %v4076, 0.5
    %v5672 = vmul.f32 %v4220, 0.5
    %v5673 = vmul.f32 %v4222, 0.5
    %v5674 = vmul.f32 %v4366, 0.5
    %v5675 = vmul.f32 %v4368, 0.5
    %v5676 = vmul.f32 %v4512, 0.5
    %v5677 = vmul.f32 %v4514, 0.5
    %v5678 = vmul.f32 %v4658, 0.5
    %v5679 = vmul.f32 %v4660, 0.5
    %v5680 = vmul.f32 %v4804, 0.5
    %v5681 = vmul.f32 %v4806, 0.5
    %v5682 = vmul.f32 %v4950, 0.5
    %v5683 = vmul.f32 %v4952, 0.5
    %v5684 = vmul.f32 %v5096, 0.5
    %v5685 = vmul.f32 %v5098, 0.5
    %v5686 = vmul.f32 %v5242, 0.5
    %v5687 = vmul.f32 %v5244, 0.5
    %v5688 = vmul.f32 %v5388, 0.5
    %v5689 = vmul.f32 %v5390, 0.5
    %v5690 = vmul.f32 %v5534, 0.5
    %v5691 = vmul.f32 %v5536, 0.5
    %v5692 = vmul.f32 %v3934, 0.5
    %v5693 = vmul.f32 %v3936, 0.5
    %v5694 = vmul.f32 %v4080, 0.5
    %v5695 = vmul.f32 %v4082, 0.5
    %v5696 = vmul.f32 %v4226, 0.5
    %v5697 = vmul.f32 %v4228, 0.5
    %v5698 = vmul.f32 %v4372, 0.5
    %v5699 = vmul.f32 %v4374, 0.5
    %v5700 = vmul.f32 %v4518, 0.5
    %v5701 = vmul.f32 %v4520, 0.5
    %v5702 = vmul.f32 %v4664, 0.5
    %v5703 = vmul.f32 %v4666, 0.5
    %v5704 = vmul.f32 %v4810, 0.5
    %v5705 = vmul.f32 %v4812, 0.5
    %v5706 = vmul.f32 %v4956, 0.5
    %v5707 = vmul.f32 %v4958, 0.5
    %v5708 = vmul.f32 %v5102, 0.5
    %v5709 = vmul.f32 %v5104, 0.5
    %v5710 = vmul.f32 %v5248, 0.5
    %v5711 = vmul.f32 %v5250, 0.5
    %v5712 = vmul.f32 %v5394, 0.5
    %v5713 = vmul.f32 %v5396, 0.5
    %v5714 = vmul.f32 %v5540, 0.5
    %v5715 = vmul.f32 %v5542, 0.5
    %v5716 = vmul.f32 %v3938, 0.5
    %v5717 = vmul.f32 %v3940, 0.5
    %v5718 = vmul.f32 %v4084, 0.5
    %v5719 = vmul.f32 %v4086, 0.5
    %v5720 = vmul.f32 %v4230, 0.5
    %v5721 = vmul.f32 %v4232, 0.5
    %v5722 = vmul.f32 %v4376, 0.5
    %v5723 = vmul.f32 %v4378, 0.5
    %v5724 = vmul.f32 %v4522, 0.5
    %v5725 = vmul.f32 %v4524, 0.5
    %v5726 = vmul.f32 %v4668, 0.5
    %v5727 = vmul.f32 %v4670, 0.5
    %v5728 = vmul.f32 %v4814, 0.5
    %v5729 = vmul.f32 %v4816, 0.5
    %v5730 = vmul.f32 %v4960, 0.5
    %v5731 = vmul.f32 %v4962, 0.5
    %v5732 = vmul.f32 %v5106, 0.5
    %v5733 = vmul.f32 %v5108, 0.5
    %v5734 = vmul.f32 %v5252, 0.5
    %v5735 = vmul.f32 %v5254, 0.5
    %v5736 = vmul.f32 %v5398, 0.5
    %v5737 = vmul.f32 %v5400, 0.5
    %v5738 = vmul.f32 %v5544, 0.5
    %v5739 = vmul.f32 %v5546, 0.5
    %v5740 = vmul.f32 %v3904, 0.70710677
    %v5741 = vmul.f32 %v3906, 0.70710677
    %v5742 = vmul.f32 %v4050, 0.70710677
    %v5743 = vmul.f32 %v4052, 0.70710677
    %v5744 = vmul.f32 %v4196, 0.70710677
    %v5745 = vmul.f32 %v4198, 0.70710677
    %v5746 = vmul.f32 %v4342, 0.70710677
    %v5747 = vmul.f32 %v4344, 0.70710677
    %v5748 = vmul.f32 %v4488, 0.70710677
    %v5749 = vmul.f32 %v4490, 0.70710677
    %v5750 = vmul.f32 %v4634, 0.70710677
    %v5751 = vmul.f32 %v4636, 0.70710677
    %v5752 = vmul.f32 %v4780, 0.70710677
    %v5753 = vmul.f32 %v4782, 0.70710677
    %v5754 = vmul.f32 %v4926, 0.70710677
    %v5755 = vmul.f32 %v4928, 0.70710677
    %v5756 = vmul.f32 %v5072, 0.70710677
    %v5757 = vmul.f32 %v5074, 0.70710677
    %v5758 = vmul.f32 %v5218, 0.70710677
    %v5759 = vmul.f32 %v5220, 0.70710677
    %v5760 = vmul.f32 %v5364, 0.70710677
    %v5761 = vmul.f32 %v5366, 0.70710677
    %v5762 = vmul.f32 %v5510, 0.70710677
    %v5763 = vmul.f32 %v5512, 0.70710677
    %v5764 = vmul.f32 %v3908, 0.70710677
    %v5765 = vmul.f32 %v3910, 0.70710677
    %v5766 = vmul.f32 %v4054, 0.70710677
    %v5767 = vmul.f32 %v4056, 0.70710677
    %v5768 = vmul.f32 %v4200, 0.70710677
    %v5769 = vmul.f32 %v4202, 0.70710677
    %v5770 = vmul.f32 %v4346, 0.70710677
    %v5771 = vmul.f32 %v4348, 0.70710677
    %v5772 = vmul.f32 %v4492, 0.70710677
    %v5773 = vmul.f32 %v4494, 0.70710677
    %v5774 = vmul.f32 %v4638, 0.70710677
    %v5775 = vmul.f32 %v4640, 0.70710677
    %v5776 = vmul.f32 %v4784, 0.70710677
    %v5777 = vmul.f32 %v4786, 0.70710677
    %v5778 = vmul.f32 %v4930, 0.70710677
    %v5779 = vmul.f32 %v4932, 0.70710677
    %v5780 = vmul.f32 %v5076, 0.70710677
    %v5781 = vmul.f32 %v5078, 0.70710677
    %v5782 = vmul.f32 %v5222, 0.70710677
    %v5783 = vmul.f32 %v5224, 0.70710677
    %v5784 = vmul.f32 %v5368, 0.70710677
    %v5785 = vmul.f32 %v5370, 0.70710677
    %v5786 = vmul.f32 %v5514, 0.70710677
    %v5787 = vmul.f32 %v5516, 0.70710677
    %v5788 = vmul.f32 %v3914, 0.70710677
    %v5789 = vmul.f32 %v3916, 0.70710677
    %v5790 = vmul.f32 %v4060, 0.70710677
    %v5791 = vmul.f32 %v4062, 0.70710677
    %v5792 = vmul.f32 %v4206, 0.70710677
    %v5793 = vmul.f32 %v4208, 0.70710677
    %v5794 = vmul.f32 %v4352, 0.70710677
    %v5795 = vmul.f32 %v4354, 0.70710677
    %v5796 = vmul.f32 %v4498, 0.70710677
    %v5797 = vmul.f32 %v4500, 0.70710677
    %v5798 = vmul.f32 %v4644, 0.70710677
    %v5799 = vmul.f32 %v4646, 0.70710677
    %v5800 = vmul.f32 %v4790, 0.70710677
    %v5801 = vmul.f32 %v4792, 0.70710677
    %v5802 = vmul.f32 %v4936, 0.70710677
    %v5803 = vmul.f32 %v4938, 0.70710677
    %v5804 = vmul.f32 %v5082, 0.70710677
    %v5805 = vmul.f32 %v5084, 0.70710677
    %v5806 = vmul.f32 %v5228, 0.70710677
    %v5807 = vmul.f32 %v5230, 0.70710677
    %v5808 = vmul.f32 %v5374, 0.70710677
    %v5809 = vmul.f32 %v5376, 0.70710677
    %v5810 = vmul.f32 %v5520, 0.70710677
    %v5811 = vmul.f32 %v5522, 0.70710677
    %v5812 = vmul.f32 %v3918, 0.70710677
    %v5813 = vmul.f32 %v3920, 0.70710677
    %v5814 = vmul.f32 %v4064, 0.70710677
    %v5815 = vmul.f32 %v4066, 0.70710677
    %v5816 = vmul.f32 %v4210, 0.70710677
    %v5817 = vmul.f32 %v4212, 0.70710677
    %v5818 = vmul.f32 %v4356, 0.70710677
    %v5819 = vmul.f32 %v4358, 0.70710677
    %v5820 = vmul.f32 %v4502, 0.70710677
    %v5821 = vmul.f32 %v4504, 0.70710677
    %v5822 = vmul.f32 %v4648, 0.70710677
    %v5823 = vmul.f32 %v4650, 0.70710677
    %v5824 = vmul.f32 %v4794, 0.70710677
    %v5825 = vmul.f32 %v4796, 0.70710677
    %v5826 = vmul.f32 %v4940, 0.70710677
    %v5827 = vmul.f32 %v4942, 0.70710677
    %v5828 = vmul.f32 %v5086, 0.70710677
    %v5829 = vmul.f32 %v5088, 0.70710677
    %v5830 = vmul.f32 %v5232, 0.70710677
    %v5831 = vmul.f32 %v5234, 0.70710677
    %v5832 = vmul.f32 %v5378, 0.70710677
    %v5833 = vmul.f32 %v5380, 0.70710677
    %v5834 = vmul.f32 %v5524, 0.70710677
    %v5835 = vmul.f32 %v5526, 0.70710677
    %v5836 = vmul.f32 %v3924, 0.70710677
    %v5837 = vmul.f32 %v3926, 0.70710677
    %v5838 = vmul.f32 %v4070, 0.70710677
    %v5839 = vmul.f32 %v4072, 0.70710677
    %v5840 = vmul.f32 %v4216, 0.70710677
    %v5841 = vmul.f32 %v4218, 0.70710677
    %v5842 = vmul.f32 %v4362, 0.70710677
    %v5843 = vmul.f32 %v4364, 0.70710677
    %v5844 = vmul.f32 %v4508, 0.70710677
    %v5845 = vmul.f32 %v4510, 0.70710677
    %v5846 = vmul.f32 %v4654, 0.70710677
    %v5847 = vmul.f32 %v4656, 0.70710677
    %v5848 = vmul.f32 %v4800, 0.70710677
    %v5849 = vmul.f32 %v4802, 0.70710677
    %v5850 = vmul.f32 %v4946, 0.70710677
    %v5851 = vmul.f32 %v4948, 0.70710677
    %v5852 = vmul.f32 %v5092, 0.70710677
    %v5853 = vmul.f32 %v5094, 0.70710677
    %v5854 = vmul.f32 %v5238, 0.70710677
    %v5855 = vmul.f32 %v5240, 0.70710677
    %v5856 = vmul.f32 %v5384, 0.70710677
    %v5857 = vmul.f32 %v5386, 0.70710677
    %v5858 = vmul.f32 %v5530, 0.70710677
    %v5859 = vmul.f32 %v5532, 0.70710677
    %v5860 = vmul.f32 %v3928, 0.70710677
    %v5861 = vmul.f32 %v3930, 0.70710677
    %v5862 = vmul.f32 %v4074, 0.70710677
    %v5863 = vmul.f32 %v4076, 0.70710677
    %v5864 = vmul.f32 %v4220, 0.70710677
    %v5865 = vmul.f32 %v4222, 0.70710677
    %v5866 = vmul.f32 %v4366, 0.70710677
    %v5867 = vmul.f32 %v4368, 0.70710677
    %v5868 = vmul.f32 %v4512, 0.70710677
    %v5869 = vmul.f32 %v4514, 0.70710677
    %v5870 = vmul.f32 %v4658, 0.70710677
    %v5871 = vmul.f32 %v4660, 0.70710677
    %v5872 = vmul.f32 %v4804, 0.70710677
    %v5873 = vmul.f32 %v4806, 0.70710677
    %v5874 = vmul.f32 %v4950, 0.70710677
    %v5875 = vmul.f32 %v4952, 0.70710677
    %v5876 = vmul.f32 %v5096, 0.70710677
    %v5877 = vmul.f32 %v5098, 0.70710677
    %v5878 = vmul.f32 %v5242, 0.70710677
    %v5879 = vmul.f32 %v5244, 0.70710677
    %v5880 = vmul.f32 %v5388, 0.70710677
    %v5881 = vmul.f32 %v5390, 0.70710677
    %v5882 = vmul.f32 %v5534, 0.70710677
    %v5883 = vmul.f32 %v5536, 0.70710677
    %v5884 = vmul.f32 %v3934, 0.70710677
    %v5885 = vmul.f32 %v3936, 0.70710677
    %v5886 = vmul.f32 %v4080, 0.70710677
    %v5887 = vmul.f32 %v4082, 0.70710677
    %v5888 = vmul.f32 %v4226, 0.70710677
    %v5889 = vmul.f32 %v4228, 0.70710677
    %v5890 = vmul.f32 %v4372, 0.70710677
    %v5891 = vmul.f32 %v4374, 0.70710677
    %v5892 = vmul.f32 %v4518, 0.70710677
    %v5893 = vmul.f32 %v4520, 0.70710677
    %v5894 = vmul.f32 %v4664, 0.70710677
    %v5895 = vmul.f32 %v4666, 0.70710677
    %v5896 = vmul.f32 %v4810, 0.70710677
    %v5897 = vmul.f32 %v4812, 0.70710677
    %v5898 = vmul.f32 %v4956, 0.70710677
    %v5899 = vmul.f32 %v4958, 0.70710677
    %v5900 = vmul.f32 %v5102, 0.70710677
    %v5901 = vmul.f32 %v5104, 0.70710677
    %v5902 = vmul.f32 %v5248, 0.70710677
    %v5903 = vmul.f32 %v5250, 0.70710677
    %v5904 = vmul.f32 %v5394, 0.70710677
    %v5905 = vmul.f32 %v5396, 0.70710677
    %v5906 = vmul.f32 %v5540, 0.70710677
    %v5907 = vmul.f32 %v5542, 0.70710677
    %v5908 = vmul.f32 %v3938, 0.70710677
    %v5909 = vmul.f32 %v3940, 0.70710677
    %v5910 = vmul.f32 %v4084, 0.70710677
    %v5911 = vmul.f32 %v4086, 0.70710677
    %v5912 = vmul.f32 %v4230, 0.70710677
    %v5913 = vmul.f32 %v4232, 0.70710677
    %v5914 = vmul.f32 %v4376, 0.70710677
    %v5915 = vmul.f32 %v4378, 0.70710677
    %v5916 = vmul.f32 %v4522, 0.70710677
    %v5917 = vmul.f32 %v4524, 0.70710677
    %v5918 = vmul.f32 %v4668, 0.70710677
    %v5919 = vmul.f32 %v4670, 0.70710677
    %v5920 = vmul.f32 %v4814, 0.70710677
    %v5921 = vmul.f32 %v4816, 0.70710677
    %v5922 = vmul.f32 %v4960, 0.70710677
    %v5923 = vmul.f32 %v4962, 0.70710677
    %v5924 = vmul.f32 %v5106, 0.70710677
    %v5925 = vmul.f32 %v5108, 0.70710677
    %v5926 = vmul.f32 %v5252, 0.70710677
    %v5927 = vmul.f32 %v5254, 0.70710677
    %v5928 = vmul.f32 %v5398, 0.70710677
    %v5929 = vmul.f32 %v5400, 0.70710677
    %v5930 = vmul.f32 %v5544, 0.70710677
    %v5931 = vmul.f32 %v5546, 0.70710677
    %v5932 = verf.f32.pop %v5740
    %v5933 = verf.f32.pop %v5741
    %v5934 = verf.f32.pop %v5742
    %v5935 = verf.f32.pop %v5743
    %v5936 = verf.f32.pop %v5744
    %v5937 = verf.f32.pop %v5745
    %v5938 = verf.f32.pop %v5746
    %v5939 = verf.f32.pop %v5747
    %v5940 = verf.f32.pop %v5748
    %v5941 = verf.f32.pop %v5749
    %v5942 = verf.f32.pop %v5750
    %v5943 = verf.f32.pop %v5751
    %v5944 = verf.f32.pop %v5752
    %v5945 = verf.f32.pop %v5753
    %v5946 = verf.f32.pop %v5754
    %v5947 = verf.f32.pop %v5755
    %v5948 = verf.f32.pop %v5756
    %v5949 = verf.f32.pop %v5757
    %v5950 = verf.f32.pop %v5758
    %v5951 = verf.f32.pop %v5759
    %v5952 = verf.f32.pop %v5760
    %v5953 = verf.f32.pop %v5761
    %v5954 = verf.f32.pop %v5762
    %v5955 = verf.f32.pop %v5763
    %v5956 = verf.f32.pop %v5764
    %v5957 = verf.f32.pop %v5765
    %v5958 = verf.f32.pop %v5766
    %v5959 = verf.f32.pop %v5767
    %v5960 = verf.f32.pop %v5768
    %v5961 = verf.f32.pop %v5769
    %v5962 = verf.f32.pop %v5770
    %v5963 = verf.f32.pop %v5771
    %v5964 = verf.f32.pop %v5772
    %v5965 = verf.f32.pop %v5773
    %v5966 = verf.f32.pop %v5774
    %v5967 = verf.f32.pop %v5775
    %v5968 = verf.f32.pop %v5776
    %v5969 = verf.f32.pop %v5777
    %v5970 = verf.f32.pop %v5778
    %v5971 = verf.f32.pop %v5779
    %v5972 = verf.f32.pop %v5780
    %v5973 = verf.f32.pop %v5781
    %v5974 = verf.f32.pop %v5782
    %v5975 = verf.f32.pop %v5783
    %v5976 = verf.f32.pop %v5784
    %v5977 = verf.f32.pop %v5785
    %v5978 = verf.f32.pop %v5786
    %v5979 = verf.f32.pop %v5787
    %v5980 = verf.f32.pop %v5788
    %v5981 = verf.f32.pop %v5789
    %v5982 = verf.f32.pop %v5790
    %v5983 = verf.f32.pop %v5791
    %v5984 = verf.f32.pop %v5792
    %v5985 = verf.f32.pop %v5793
    %v5986 = verf.f32.pop %v5794
    %v5987 = verf.f32.pop %v5795
    %v5988 = verf.f32.pop %v5796
    %v5989 = verf.f32.pop %v5797
    %v5990 = verf.f32.pop %v5798
    %v5991 = verf.f32.pop %v5799
    %v5992 = verf.f32.pop %v5800
    %v5993 = verf.f32.pop %v5801
    %v5994 = verf.f32.pop %v5802
    %v5995 = verf.f32.pop %v5803
    %v5996 = verf.f32.pop %v5804
    %v5997 = verf.f32.pop %v5805
    %v5998 = verf.f32.pop %v5806
    %v5999 = verf.f32.pop %v5807
    %v6000 = verf.f32.pop %v5808
    %v6001 = verf.f32.pop %v5809
    %v6002 = verf.f32.pop %v5810
    %v6003 = verf.f32.pop %v5811
    %v6004 = verf.f32.pop %v5812
    %v6005 = verf.f32.pop %v5813
    %v6006 = verf.f32.pop %v5814
    %v6007 = verf.f32.pop %v5815
    %v6008 = verf.f32.pop %v5816
    %v6009 = verf.f32.pop %v5817
    %v6010 = verf.f32.pop %v5818
    %v6011 = verf.f32.pop %v5819
    %v6012 = verf.f32.pop %v5820
    %v6013 = verf.f32.pop %v5821
    %v6014 = verf.f32.pop %v5822
    %v6015 = verf.f32.pop %v5823
    %v6016 = verf.f32.pop %v5824
    %v6017 = verf.f32.pop %v5825
    %v6018 = verf.f32.pop %v5826
    %v6019 = verf.f32.pop %v5827
    %v6020 = verf.f32.pop %v5828
    %v6021 = verf.f32.pop %v5829
    %v6022 = verf.f32.pop %v5830
    %v6023 = verf.f32.pop %v5831
    %v6024 = verf.f32.pop %v5832
    %v6025 = verf.f32.pop %v5833
    %v6026 = verf.f32.pop %v5834
    %v6027 = verf.f32.pop %v5835
    %v6028 = verf.f32.pop %v5836
    %v6029 = verf.f32.pop %v5837
    %v6030 = verf.f32.pop %v5838
    %v6031 = verf.f32.pop %v5839
    %v6032 = verf.f32.pop %v5840
    %v6033 = verf.f32.pop %v5841
    %v6034 = verf.f32.pop %v5842
    %v6035 = verf.f32.pop %v5843
    %v6036 = verf.f32.pop %v5844
    %v6037 = verf.f32.pop %v5845
    %v6038 = verf.f32.pop %v5846
    %v6039 = verf.f32.pop %v5847
    %v6040 = verf.f32.pop %v5848
    %v6041 = verf.f32.pop %v5849
    %v6042 = verf.f32.pop %v5850
    %v6043 = verf.f32.pop %v5851
    %v6044 = verf.f32.pop %v5852
    %v6045 = verf.f32.pop %v5853
    %v6046 = verf.f32.pop %v5854
    %v6047 = verf.f32.pop %v5855
    %v6048 = verf.f32.pop %v5856
    %v6049 = verf.f32.pop %v5857
    %v6050 = verf.f32.pop %v5858
    %v6051 = verf.f32.pop %v5859
    %v6052 = verf.f32.pop %v5860
    %v6053 = verf.f32.pop %v5861
    %v6054 = verf.f32.pop %v5862
    %v6055 = verf.f32.pop %v5863
    %v6056 = verf.f32.pop %v5864
    %v6057 = verf.f32.pop %v5865
    %v6058 = verf.f32.pop %v5866
    %v6059 = verf.f32.pop %v5867
    %v6060 = verf.f32.pop %v5868
    %v6061 = verf.f32.pop %v5869
    %v6062 = verf.f32.pop %v5870
    %v6063 = verf.f32.pop %v5871
    %v6064 = verf.f32.pop %v5872
    %v6065 = verf.f32.pop %v5873
    %v6066 = verf.f32.pop %v5874
    %v6067 = verf.f32.pop %v5875
    %v6068 = verf.f32.pop %v5876
    %v6069 = verf.f32.pop %v5877
    %v6070 = verf.f32.pop %v5878
    %v6071 = verf.f32.pop %v5879
    %v6072 = verf.f32.pop %v5880
    %v6073 = verf.f32.pop %v5881
    %v6074 = verf.f32.pop %v5882
    %v6075 = verf.f32.pop %v5883
    %v6076 = verf.f32.pop %v5884
    %v6077 = verf.f32.pop %v5885
    %v6078 = verf.f32.pop %v5886
    %v6079 = verf.f32.pop %v5887
    %v6080 = verf.f32.pop %v5888
    %v6081 = verf.f32.pop %v5889
    %v6082 = verf.f32.pop %v5890
    %v6083 = verf.f32.pop %v5891
    %v6084 = verf.f32.pop %v5892
    %v6085 = verf.f32.pop %v5893
    %v6086 = verf.f32.pop %v5894
    %v6087 = verf.f32.pop %v5895
    %v6088 = verf.f32.pop %v5896
    %v6089 = verf.f32.pop %v5897
    %v6090 = verf.f32.pop %v5898
    %v6091 = verf.f32.pop %v5899
    %v6092 = verf.f32.pop %v5900
    %v6093 = verf.f32.pop %v5901
    %v6094 = verf.f32.pop %v5902
    %v6095 = verf.f32.pop %v5903
    %v6096 = verf.f32.pop %v5904
    %v6097 = verf.f32.pop %v5905
    %v6098 = verf.f32.pop %v5906
    %v6099 = verf.f32.pop %v5907
    %v6100 = verf.f32.pop %v5908
    %v6101 = verf.f32.pop %v5909
    %v6102 = verf.f32.pop %v5910
    %v6103 = verf.f32.pop %v5911
    %v6104 = verf.f32.pop %v5912
    %v6105 = verf.f32.pop %v5913
    %v6106 = verf.f32.pop %v5914
    %v6107 = verf.f32.pop %v5915
    %v6108 = verf.f32.pop %v5916
    %v6109 = verf.f32.pop %v5917
    %v6110 = verf.f32.pop %v5918
    %v6111 = verf.f32.pop %v5919
    %v6112 = verf.f32.pop %v5920
    %v6113 = verf.f32.pop %v5921
    %v6114 = verf.f32.pop %v5922
    %v6115 = verf.f32.pop %v5923
    %v6116 = verf.f32.pop %v5924
    %v6117 = verf.f32.pop %v5925
    %v6118 = verf.f32.pop %v5926
    %v6119 = verf.f32.pop %v5927
    %v6120 = verf.f32.pop %v5928
    %v6121 = verf.f32.pop %v5929
    %v6122 = verf.f32.pop %v5930
    %v6123 = verf.f32.pop %v5931
    %v6124 = vadd.f32 %v5932, 1.0
    %v6125 = vadd.f32 %v5933, 1.0
    %v6126 = vadd.f32 %v5934, 1.0
    %v6127 = vadd.f32 %v5935, 1.0
    %v6128 = vadd.f32 %v5936, 1.0
    %v6129 = vadd.f32 %v5937, 1.0
    %v6130 = vadd.f32 %v5938, 1.0
    %v6131 = vadd.f32 %v5939, 1.0
    %v6132 = vadd.f32 %v5940, 1.0
    %v6133 = vadd.f32 %v5941, 1.0
    %v6134 = vadd.f32 %v5942, 1.0
    %v6135 = vadd.f32 %v5943, 1.0
    %v6136 = vadd.f32 %v5944, 1.0
    %v6137 = vadd.f32 %v5945, 1.0
    %v6138 = vadd.f32 %v5946, 1.0
    %v6139 = vadd.f32 %v5947, 1.0
    %v6140 = vadd.f32 %v5948, 1.0
    %v6141 = vadd.f32 %v5949, 1.0
    %v6142 = vadd.f32 %v5950, 1.0
    %v6143 = vadd.f32 %v5951, 1.0
    %v6144 = vadd.f32 %v5952, 1.0
    %v6145 = vadd.f32 %v5953, 1.0
    %v6146 = vadd.f32 %v5954, 1.0
    %v6147 = vadd.f32 %v5955, 1.0
    %v6148 = vadd.f32 %v5956, 1.0
    %v6149 = vadd.f32 %v5957, 1.0
    %v6150 = vadd.f32 %v5958, 1.0
    %v6151 = vadd.f32 %v5959, 1.0
    %v6152 = vadd.f32 %v5960, 1.0
    %v6153 = vadd.f32 %v5961, 1.0
    %v6154 = vadd.f32 %v5962, 1.0
    %v6155 = vadd.f32 %v5963, 1.0
    %v6156 = vadd.f32 %v5964, 1.0
    %v6157 = vadd.f32 %v5965, 1.0
    %v6158 = vadd.f32 %v5966, 1.0
    %v6159 = vadd.f32 %v5967, 1.0
    %v6160 = vadd.f32 %v5968, 1.0
    %v6161 = vadd.f32 %v5969, 1.0
    %v6162 = vadd.f32 %v5970, 1.0
    %v6163 = vadd.f32 %v5971, 1.0
    %v6164 = vadd.f32 %v5972, 1.0
    %v6165 = vadd.f32 %v5973, 1.0
    %v6166 = vadd.f32 %v5974, 1.0
    %v6167 = vadd.f32 %v5975, 1.0
    %v6168 = vadd.f32 %v5976, 1.0
    %v6169 = vadd.f32 %v5977, 1.0
    %v6170 = vadd.f32 %v5978, 1.0
    %v6171 = vadd.f32 %v5979, 1.0
    %v6172 = vadd.f32 %v5980, 1.0
    %v6173 = vadd.f32 %v5981, 1.0
    %v6174 = vadd.f32 %v5982, 1.0
    %v6175 = vadd.f32 %v5983, 1.0
    %v6176 = vadd.f32 %v5984, 1.0
    %v6177 = vadd.f32 %v5985, 1.0
    %v6178 = vadd.f32 %v5986, 1.0
    %v6179 = vadd.f32 %v5987, 1.0
    %v6180 = vadd.f32 %v5988, 1.0
    %v6181 = vadd.f32 %v5989, 1.0
    %v6182 = vadd.f32 %v5990, 1.0
    %v6183 = vadd.f32 %v5991, 1.0
    %v6184 = vadd.f32 %v5992, 1.0
    %v6185 = vadd.f32 %v5993, 1.0
    %v6186 = vadd.f32 %v5994, 1.0
    %v6187 = vadd.f32 %v5995, 1.0
    %v6188 = vadd.f32 %v5996, 1.0
    %v6189 = vadd.f32 %v5997, 1.0
    %v6190 = vadd.f32 %v5998, 1.0
    %v6191 = vadd.f32 %v5999, 1.0
    %v6192 = vadd.f32 %v6000, 1.0
    %v6193 = vadd.f32 %v6001, 1.0
    %v6194 = vadd.f32 %v6002, 1.0
    %v6195 = vadd.f32 %v6003, 1.0
    %v6196 = vadd.f32 %v6004, 1.0
    %v6197 = vadd.f32 %v6005, 1.0
    %v6198 = vadd.f32 %v6006, 1.0
    %v6199 = vadd.f32 %v6007, 1.0
    %v6200 = vadd.f32 %v6008, 1.0
    %v6201 = vadd.f32 %v6009, 1.0
    %v6202 = vadd.f32 %v6010, 1.0
    %v6203 = vadd.f32 %v6011, 1.0
    %v6204 = vadd.f32 %v6012, 1.0
    %v6205 = vadd.f32 %v6013, 1.0
    %v6206 = vadd.f32 %v6014, 1.0
    %v6207 = vadd.f32 %v6015, 1.0
    %v6208 = vadd.f32 %v6016, 1.0
    %v6209 = vadd.f32 %v6017, 1.0
    %v6210 = vadd.f32 %v6018, 1.0
    %v6211 = vadd.f32 %v6019, 1.0
    %v6212 = vadd.f32 %v6020, 1.0
    %v6213 = vadd.f32 %v6021, 1.0
    %v6214 = vadd.f32 %v6022, 1.0
    %v6215 = vadd.f32 %v6023, 1.0
    %v6216 = vadd.f32 %v6024, 1.0
    %v6217 = vadd.f32 %v6025, 1.0
    %v6218 = vadd.f32 %v6026, 1.0
    %v6219 = vadd.f32 %v6027, 1.0
    %v6220 = vadd.f32 %v6028, 1.0
    %v6221 = vadd.f32 %v6029, 1.0
    %v6222 = vadd.f32 %v6030, 1.0
    %v6223 = vadd.f32 %v6031, 1.0
    %v6224 = vadd.f32 %v6032, 1.0
    %v6225 = vadd.f32 %v6033, 1.0
    %v6226 = vadd.f32 %v6034, 1.0
    %v6227 = vadd.f32 %v6035, 1.0
    %v6228 = vadd.f32 %v6036, 1.0
    %v6229 = vadd.f32 %v6037, 1.0
    %v6230 = vadd.f32 %v6038, 1.0
    %v6231 = vadd.f32 %v6039, 1.0
    %v6232 = vadd.f32 %v6040, 1.0
    %v6233 = vadd.f32 %v6041, 1.0
    %v6234 = vadd.f32 %v6042, 1.0
    %v6235 = vadd.f32 %v6043, 1.0
    %v6236 = vadd.f32 %v6044, 1.0
    %v6237 = vadd.f32 %v6045, 1.0
    %v6238 = vadd.f32 %v6046, 1.0
    %v6239 = vadd.f32 %v6047, 1.0
    %v6240 = vadd.f32 %v6048, 1.0
    %v6241 = vadd.f32 %v6049, 1.0
    %v6242 = vadd.f32 %v6050, 1.0
    %v6243 = vadd.f32 %v6051, 1.0
    %v6244 = vadd.f32 %v6052, 1.0
    %v6245 = vadd.f32 %v6053, 1.0
    %v6246 = vadd.f32 %v6054, 1.0
    %v6247 = vadd.f32 %v6055, 1.0
    %v6248 = vadd.f32 %v6056, 1.0
    %v6249 = vadd.f32 %v6057, 1.0
    %v6250 = vadd.f32 %v6058, 1.0
    %v6251 = vadd.f32 %v6059, 1.0
    %v6252 = vadd.f32 %v6060, 1.0
    %v6253 = vadd.f32 %v6061, 1.0
    %v6254 = vadd.f32 %v6062, 1.0
    %v6255 = vadd.f32 %v6063, 1.0
    %v6256 = vadd.f32 %v6064, 1.0
    %v6257 = vadd.f32 %v6065, 1.0
    %v6258 = vadd.f32 %v6066, 1.0
    %v6259 = vadd.f32 %v6067, 1.0
    %v6260 = vadd.f32 %v6068, 1.0
    %v6261 = vadd.f32 %v6069, 1.0
    %v6262 = vadd.f32 %v6070, 1.0
    %v6263 = vadd.f32 %v6071, 1.0
    %v6264 = vadd.f32 %v6072, 1.0
    %v6265 = vadd.f32 %v6073, 1.0
    %v6266 = vadd.f32 %v6074, 1.0
    %v6267 = vadd.f32 %v6075, 1.0
    %v6268 = vadd.f32 %v6076, 1.0
    %v6269 = vadd.f32 %v6077, 1.0
    %v6270 = vadd.f32 %v6078, 1.0
    %v6271 = vadd.f32 %v6079, 1.0
    %v6272 = vadd.f32 %v6080, 1.0
    %v6273 = vadd.f32 %v6081, 1.0
    %v6274 = vadd.f32 %v6082, 1.0
    %v6275 = vadd.f32 %v6083, 1.0
    %v6276 = vadd.f32 %v6084, 1.0
    %v6277 = vadd.f32 %v6085, 1.0
    %v6278 = vadd.f32 %v6086, 1.0
    %v6279 = vadd.f32 %v6087, 1.0
    %v6280 = vadd.f32 %v6088, 1.0
    %v6281 = vadd.f32 %v6089, 1.0
    %v6282 = vadd.f32 %v6090, 1.0
    %v6283 = vadd.f32 %v6091, 1.0
    %v6284 = vadd.f32 %v6092, 1.0
    %v6285 = vadd.f32 %v6093, 1.0
    %v6286 = vadd.f32 %v6094, 1.0
    %v6287 = vadd.f32 %v6095, 1.0
    %v6288 = vadd.f32 %v6096, 1.0
    %v6289 = vadd.f32 %v6097, 1.0
    %v6290 = vadd.f32 %v6098, 1.0
    %v6291 = vadd.f32 %v6099, 1.0
    %v6292 = vadd.f32 %v6100, 1.0
    %v6293 = vadd.f32 %v6101, 1.0
    %v6294 = vadd.f32 %v6102, 1.0
    %v6295 = vadd.f32 %v6103, 1.0
    %v6296 = vadd.f32 %v6104, 1.0
    %v6297 = vadd.f32 %v6105, 1.0
    %v6298 = vadd.f32 %v6106, 1.0
    %v6299 = vadd.f32 %v6107, 1.0
    %v6300 = vadd.f32 %v6108, 1.0
    %v6301 = vadd.f32 %v6109, 1.0
    %v6302 = vadd.f32 %v6110, 1.0
    %v6303 = vadd.f32 %v6111, 1.0
    %v6304 = vadd.f32 %v6112, 1.0
    %v6305 = vadd.f32 %v6113, 1.0
    %v6306 = vadd.f32 %v6114, 1.0
    %v6307 = vadd.f32 %v6115, 1.0
    %v6308 = vadd.f32 %v6116, 1.0
    %v6309 = vadd.f32 %v6117, 1.0
    %v6310 = vadd.f32 %v6118, 1.0
    %v6311 = vadd.f32 %v6119, 1.0
    %v6312 = vadd.f32 %v6120, 1.0
    %v6313 = vadd.f32 %v6121, 1.0
    %v6314 = vadd.f32 %v6122, 1.0
    %v6315 = vadd.f32 %v6123, 1.0
    %v6316 = vmul.f32 %v5548, %v6124
    %v6317 = vmul.f32 %v5549, %v6125
    %v6318 = vmul.f32 %v5550, %v6126
    %v6319 = vmul.f32 %v5551, %v6127
    %v6320 = vmul.f32 %v5552, %v6128
    %v6321 = vmul.f32 %v5553, %v6129
    %v6322 = vmul.f32 %v5554, %v6130
    %v6323 = vmul.f32 %v5555, %v6131
    %v6324 = vmul.f32 %v5556, %v6132
    %v6325 = vmul.f32 %v5557, %v6133
    %v6326 = vmul.f32 %v5558, %v6134
    %v6327 = vmul.f32 %v5559, %v6135
    %v6328 = vmul.f32 %v5560, %v6136
    %v6329 = vmul.f32 %v5561, %v6137
    %v6330 = vmul.f32 %v5562, %v6138
    %v6331 = vmul.f32 %v5563, %v6139
    %v6332 = vmul.f32 %v5564, %v6140
    %v6333 = vmul.f32 %v5565, %v6141
    %v6334 = vmul.f32 %v5566, %v6142
    %v6335 = vmul.f32 %v5567, %v6143
    %v6336 = vmul.f32 %v5568, %v6144
    %v6337 = vmul.f32 %v5569, %v6145
    %v6338 = vmul.f32 %v5570, %v6146
    %v6339 = vmul.f32 %v5571, %v6147
    %v6340 = vmul.f32 %v5572, %v6148
    %v6341 = vmul.f32 %v5573, %v6149
    %v6342 = vmul.f32 %v5574, %v6150
    %v6343 = vmul.f32 %v5575, %v6151
    %v6344 = vmul.f32 %v5576, %v6152
    %v6345 = vmul.f32 %v5577, %v6153
    %v6346 = vmul.f32 %v5578, %v6154
    %v6347 = vmul.f32 %v5579, %v6155
    %v6348 = vmul.f32 %v5580, %v6156
    %v6349 = vmul.f32 %v5581, %v6157
    %v6350 = vmul.f32 %v5582, %v6158
    %v6351 = vmul.f32 %v5583, %v6159
    %v6352 = vmul.f32 %v5584, %v6160
    %v6353 = vmul.f32 %v5585, %v6161
    %v6354 = vmul.f32 %v5586, %v6162
    %v6355 = vmul.f32 %v5587, %v6163
    %v6356 = vmul.f32 %v5588, %v6164
    %v6357 = vmul.f32 %v5589, %v6165
    %v6358 = vmul.f32 %v5590, %v6166
    %v6359 = vmul.f32 %v5591, %v6167
    %v6360 = vmul.f32 %v5592, %v6168
    %v6361 = vmul.f32 %v5593, %v6169
    %v6362 = vmul.f32 %v5594, %v6170
    %v6363 = vmul.f32 %v5595, %v6171
    %v6364 = vmul.f32 %v5596, %v6172
    %v6365 = vmul.f32 %v5597, %v6173
    %v6366 = vmul.f32 %v5598, %v6174
    %v6367 = vmul.f32 %v5599, %v6175
    %v6368 = vmul.f32 %v5600, %v6176
    %v6369 = vmul.f32 %v5601, %v6177
    %v6370 = vmul.f32 %v5602, %v6178
    %v6371 = vmul.f32 %v5603, %v6179
    %v6372 = vmul.f32 %v5604, %v6180
    %v6373 = vmul.f32 %v5605, %v6181
    %v6374 = vmul.f32 %v5606, %v6182
    %v6375 = vmul.f32 %v5607, %v6183
    %v6376 = vmul.f32 %v5608, %v6184
    %v6377 = vmul.f32 %v5609, %v6185
    %v6378 = vmul.f32 %v5610, %v6186
    %v6379 = vmul.f32 %v5611, %v6187
    %v6380 = vmul.f32 %v5612, %v6188
    %v6381 = vmul.f32 %v5613, %v6189
    %v6382 = vmul.f32 %v5614, %v6190
    %v6383 = vmul.f32 %v5615, %v6191
    %v6384 = vmul.f32 %v5616, %v6192
    %v6385 = vmul.f32 %v5617, %v6193
    %v6386 = vmul.f32 %v5618, %v6194
    %v6387 = vmul.f32 %v5619, %v6195
    %v6388 = vmul.f32 %v5620, %v6196
    %v6389 = vmul.f32 %v5621, %v6197
    %v6390 = vmul.f32 %v5622, %v6198
    %v6391 = vmul.f32 %v5623, %v6199
    %v6392 = vmul.f32 %v5624, %v6200
    %v6393 = vmul.f32 %v5625, %v6201
    %v6394 = vmul.f32 %v5626, %v6202
    %v6395 = vmul.f32 %v5627, %v6203
    %v6396 = vmul.f32 %v5628, %v6204
    %v6397 = vmul.f32 %v5629, %v6205
    %v6398 = vmul.f32 %v5630, %v6206
    %v6399 = vmul.f32 %v5631, %v6207
    %v6400 = vmul.f32 %v5632, %v6208
    %v6401 = vmul.f32 %v5633, %v6209
    %v6402 = vmul.f32 %v5634, %v6210
    %v6403 = vmul.f32 %v5635, %v6211
    %v6404 = vmul.f32 %v5636, %v6212
    %v6405 = vmul.f32 %v5637, %v6213
    %v6406 = vmul.f32 %v5638, %v6214
    %v6407 = vmul.f32 %v5639, %v6215
    %v6408 = vmul.f32 %v5640, %v6216
    %v6409 = vmul.f32 %v5641, %v6217
    %v6410 = vmul.f32 %v5642, %v6218
    %v6411 = vmul.f32 %v5643, %v6219
    %v6412 = vmul.f32 %v5644, %v6220
    %v6413 = vmul.f32 %v5645, %v6221
    %v6414 = vmul.f32 %v5646, %v6222
    %v6415 = vmul.f32 %v5647, %v6223
    %v6416 = vmul.f32 %v5648, %v6224
    %v6417 = vmul.f32 %v5649, %v6225
    %v6418 = vmul.f32 %v5650, %v6226
    %v6419 = vmul.f32 %v5651, %v6227
    %v6420 = vmul.f32 %v5652, %v6228
    %v6421 = vmul.f32 %v5653, %v6229
    %v6422 = vmul.f32 %v5654, %v6230
    %v6423 = vmul.f32 %v5655, %v6231
    %v6424 = vmul.f32 %v5656, %v6232
    %v6425 = vmul.f32 %v5657, %v6233
    %v6426 = vmul.f32 %v5658, %v6234
    %v6427 = vmul.f32 %v5659, %v6235
    %v6428 = vmul.f32 %v5660, %v6236
    %v6429 = vmul.f32 %v5661, %v6237
    %v6430 = vmul.f32 %v5662, %v6238
    %v6431 = vmul.f32 %v5663, %v6239
    %v6432 = vmul.f32 %v5664, %v6240
    %v6433 = vmul.f32 %v5665, %v6241
    %v6434 = vmul.f32 %v5666, %v6242
    %v6435 = vmul.f32 %v5667, %v6243
    %v6436 = vmul.f32 %v5668, %v6244
    %v6437 = vmul.f32 %v5669, %v6245
    %v6438 = vmul.f32 %v5670, %v6246
    %v6439 = vmul.f32 %v5671, %v6247
    %v6440 = vmul.f32 %v5672, %v6248
    %v6441 = vmul.f32 %v5673, %v6249
    %v6442 = vmul.f32 %v5674, %v6250
    %v6443 = vmul.f32 %v5675, %v6251
    %v6444 = vmul.f32 %v5676, %v6252
    %v6445 = vmul.f32 %v5677, %v6253
    %v6446 = vmul.f32 %v5678, %v6254
    %v6447 = vmul.f32 %v5679, %v6255
    %v6448 = vmul.f32 %v5680, %v6256
    %v6449 = vmul.f32 %v5681, %v6257
    %v6450 = vmul.f32 %v5682, %v6258
    %v6451 = vmul.f32 %v5683, %v6259
    %v6452 = vmul.f32 %v5684, %v6260
    %v6453 = vmul.f32 %v5685, %v6261
    %v6454 = vmul.f32 %v5686, %v6262
    %v6455 = vmul.f32 %v5687, %v6263
    %v6456 = vmul.f32 %v5688, %v6264
    %v6457 = vmul.f32 %v5689, %v6265
    %v6458 = vmul.f32 %v5690, %v6266
    %v6459 = vmul.f32 %v5691, %v6267
    %v6460 = vmul.f32 %v5692, %v6268
    %v6461 = vmul.f32 %v5693, %v6269
    %v6462 = vmul.f32 %v5694, %v6270
    %v6463 = vmul.f32 %v5695, %v6271
    %v6464 = vmul.f32 %v5696, %v6272
    %v6465 = vmul.f32 %v5697, %v6273
    %v6466 = vmul.f32 %v5698, %v6274
    %v6467 = vmul.f32 %v5699, %v6275
    %v6468 = vmul.f32 %v5700, %v6276
    %v6469 = vmul.f32 %v5701, %v6277
    %v6470 = vmul.f32 %v5702, %v6278
    %v6471 = vmul.f32 %v5703, %v6279
    %v6472 = vmul.f32 %v5704, %v6280
    %v6473 = vmul.f32 %v5705, %v6281
    %v6474 = vmul.f32 %v5706, %v6282
    %v6475 = vmul.f32 %v5707, %v6283
    %v6476 = vmul.f32 %v5708, %v6284
    %v6477 = vmul.f32 %v5709, %v6285
    %v6478 = vmul.f32 %v5710, %v6286
    %v6479 = vmul.f32 %v5711, %v6287
    %v6480 = vmul.f32 %v5712, %v6288
    %v6481 = vmul.f32 %v5713, %v6289
    %v6482 = vmul.f32 %v5714, %v6290
    %v6483 = vmul.f32 %v5715, %v6291
    %v6484 = vmul.f32 %v5716, %v6292
    %v6485 = vmul.f32 %v5717, %v6293
    %v6486 = vmul.f32 %v5718, %v6294
    %v6487 = vmul.f32 %v5719, %v6295
    %v6488 = vmul.f32 %v5720, %v6296
    %v6489 = vmul.f32 %v5721, %v6297
    %v6490 = vmul.f32 %v5722, %v6298
    %v6491 = vmul.f32 %v5723, %v6299
    %v6492 = vmul.f32 %v5724, %v6300
    %v6493 = vmul.f32 %v5725, %v6301
    %v6494 = vmul.f32 %v5726, %v6302
    %v6495 = vmul.f32 %v5727, %v6303
    %v6496 = vmul.f32 %v5728, %v6304
    %v6497 = vmul.f32 %v5729, %v6305
    %v6498 = vmul.f32 %v5730, %v6306
    %v6499 = vmul.f32 %v5731, %v6307
    %v6500 = vmul.f32 %v5732, %v6308
    %v6501 = vmul.f32 %v5733, %v6309
    %v6502 = vmul.f32 %v5734, %v6310
    %v6503 = vmul.f32 %v5735, %v6311
    %v6504 = vmul.f32 %v5736, %v6312
    %v6505 = vmul.f32 %v5737, %v6313
    %v6506 = vmul.f32 %v5738, %v6314
    %v6507 = vmul.f32 %v5739, %v6315
    %v6508 = vpack.c.bf16 %v6340, %v6316
    %v6509 = vpack.c.bf16 %v6341, %v6317
    %v6510 = vpack.c.bf16 %v6342, %v6318
    %v6511 = vpack.c.bf16 %v6343, %v6319
    %v6512 = vpack.c.bf16 %v6344, %v6320
    %v6513 = vpack.c.bf16 %v6345, %v6321
    %v6514 = vpack.c.bf16 %v6346, %v6322
    %v6515 = vpack.c.bf16 %v6347, %v6323
    %v6516 = vpack.c.bf16 %v6348, %v6324
    %v6517 = vpack.c.bf16 %v6349, %v6325
    %v6518 = vpack.c.bf16 %v6350, %v6326
    %v6519 = vpack.c.bf16 %v6351, %v6327
    %v6520 = vpack.c.bf16 %v6352, %v6328
    %v6521 = vpack.c.bf16 %v6353, %v6329
    %v6522 = vpack.c.bf16 %v6354, %v6330
    %v6523 = vpack.c.bf16 %v6355, %v6331
    %v6524 = vpack.c.bf16 %v6356, %v6332
    %v6525 = vpack.c.bf16 %v6357, %v6333
    %v6526 = vpack.c.bf16 %v6358, %v6334
    %v6527 = vpack.c.bf16 %v6359, %v6335
    %v6528 = vpack.c.bf16 %v6360, %v6336
    %v6529 = vpack.c.bf16 %v6361, %v6337
    %v6530 = vpack.c.bf16 %v6362, %v6338
    %v6531 = vpack.c.bf16 %v6363, %v6339
    %v6532 = vpack.c.bf16 %v6388, %v6364
    %v6533 = vpack.c.bf16 %v6389, %v6365
    %v6534 = vpack.c.bf16 %v6390, %v6366
    %v6535 = vpack.c.bf16 %v6391, %v6367
    %v6536 = vpack.c.bf16 %v6392, %v6368
    %v6537 = vpack.c.bf16 %v6393, %v6369
    %v6538 = vpack.c.bf16 %v6394, %v6370
    %v6539 = vpack.c.bf16 %v6395, %v6371
    %v6540 = vpack.c.bf16 %v6396, %v6372
    %v6541 = vpack.c.bf16 %v6397, %v6373
    %v6542 = vpack.c.bf16 %v6398, %v6374
    %v6543 = vpack.c.bf16 %v6399, %v6375
    %v6544 = vpack.c.bf16 %v6400, %v6376
    %v6545 = vpack.c.bf16 %v6401, %v6377
    %v6546 = vpack.c.bf16 %v6402, %v6378
    %v6547 = vpack.c.bf16 %v6403, %v6379
    %v6548 = vpack.c.bf16 %v6404, %v6380
    %v6549 = vpack.c.bf16 %v6405, %v6381
    %v6550 = vpack.c.bf16 %v6406, %v6382
    %v6551 = vpack.c.bf16 %v6407, %v6383
    %v6552 = vpack.c.bf16 %v6408, %v6384
    %v6553 = vpack.c.bf16 %v6409, %v6385
    %v6554 = vpack.c.bf16 %v6410, %v6386
    %v6555 = vpack.c.bf16 %v6411, %v6387
    %v6556 = vpack.c.bf16 %v6436, %v6412
    %v6557 = vpack.c.bf16 %v6437, %v6413
    %v6558 = vpack.c.bf16 %v6438, %v6414
    %v6559 = vpack.c.bf16 %v6439, %v6415
    %v6560 = vpack.c.bf16 %v6440, %v6416
    %v6561 = vpack.c.bf16 %v6441, %v6417
    %v6562 = vpack.c.bf16 %v6442, %v6418
    %v6563 = vpack.c.bf16 %v6443, %v6419
    %v6564 = vpack.c.bf16 %v6444, %v6420
    %v6565 = vpack.c.bf16 %v6445, %v6421
    %v6566 = vpack.c.bf16 %v6446, %v6422
    %v6567 = vpack.c.bf16 %v6447, %v6423
    %v6568 = vpack.c.bf16 %v6448, %v6424
    %v6569 = vpack.c.bf16 %v6449, %v6425
    %v6570 = vpack.c.bf16 %v6450, %v6426
    %v6571 = vpack.c.bf16 %v6451, %v6427
    %v6572 = vpack.c.bf16 %v6452, %v6428
    %v6573 = vpack.c.bf16 %v6453, %v6429
    %v6574 = vpack.c.bf16 %v6454, %v6430
    %v6575 = vpack.c.bf16 %v6455, %v6431
    %v6576 = vpack.c.bf16 %v6456, %v6432
    %v6577 = vpack.c.bf16 %v6457, %v6433
    %v6578 = vpack.c.bf16 %v6458, %v6434
    %v6579 = vpack.c.bf16 %v6459, %v6435
    %v6580 = vpack.c.bf16 %v6484, %v6460
    %v6581 = vpack.c.bf16 %v6485, %v6461
    %v6582 = vpack.c.bf16 %v6486, %v6462
    %v6583 = vpack.c.bf16 %v6487, %v6463
    %v6584 = vpack.c.bf16 %v6488, %v6464
    %v6585 = vpack.c.bf16 %v6489, %v6465
    %v6586 = vpack.c.bf16 %v6490, %v6466
    %v6587 = vpack.c.bf16 %v6491, %v6467
    %v6588 = vpack.c.bf16 %v6492, %v6468
    %v6589 = vpack.c.bf16 %v6493, %v6469
    %v6590 = vpack.c.bf16 %v6494, %v6470
    %v6591 = vpack.c.bf16 %v6495, %v6471
    %v6592 = vpack.c.bf16 %v6496, %v6472
    %v6593 = vpack.c.bf16 %v6497, %v6473
    %v6594 = vpack.c.bf16 %v6498, %v6474
    %v6595 = vpack.c.bf16 %v6499, %v6475
    %v6596 = vpack.c.bf16 %v6500, %v6476
    %v6597 = vpack.c.bf16 %v6501, %v6477
    %v6598 = vpack.c.bf16 %v6502, %v6478
    %v6599 = vpack.c.bf16 %v6503, %v6479
    %v6600 = vpack.c.bf16 %v6504, %v6480
    %v6601 = vpack.c.bf16 %v6505, %v6481
    %v6602 = vpack.c.bf16 %v6506, %v6482
    %v6603 = vpack.c.bf16 %v6507, %v6483
    %v6604 = vld [vmem:[#allocation10] sm:$0xff]
    %v6605 = vld [vmem:[#allocation10 + $0x8] sm:$0xff]
    %v6606 = vld [vmem:[#allocation10 + $0x10] sm:$0xff]
    %v6607 = vld [vmem:[#allocation10 + $0x18] sm:$0xff]
    %v6608 = vld [vmem:[#allocation10 + $0x20] sm:$0xff]
    %v6609 = vld [vmem:[#allocation10 + $0x28] sm:$0xff]
    %v6610 = vld [vmem:[#allocation10 + $0x30] sm:$0xff]
    %v6611 = vld [vmem:[#allocation10 + $0x38] sm:$0xff]
    %v6612 = vld [vmem:[#allocation10 + $0x40] sm:$0xff]
    %v6613 = vld [vmem:[#allocation10 + $0x48] sm:$0xff]
    %v6614 = vld [vmem:[#allocation10 + $0x50] sm:$0xff]
    %v6615 = vld [vmem:[#allocation10 + $0x58] sm:$0xff]
    %v6616 = vld [vmem:[#allocation10 + $0x60] sm:$0xff]
    %v6617 = vld [vmem:[#allocation10 + $0x68] sm:$0xff]
    %v6618 = vld [vmem:[#allocation10 + $0x70] sm:$0xff]
    %v6619 = vld [vmem:[#allocation10 + $0x78] sm:$0xff]
    %v6620 = vld [vmem:[#allocation10 + $0x80] sm:$0xff]
    %v6621 = vld [vmem:[#allocation10 + $0x88] sm:$0xff]
    %v6622 = vld [vmem:[#allocation10 + $0x90] sm:$0xff]
    %v6623 = vld [vmem:[#allocation10 + $0x98] sm:$0xff]
    %v6624 = vld [vmem:[#allocation10 + $0xa0] sm:$0xff]
    %v6625 = vld [vmem:[#allocation10 + $0xa8] sm:$0xff]
    %v6626 = vld [vmem:[#allocation10 + $0xb0] sm:$0xff]
    %v6627 = vld [vmem:[#allocation10 + $0xb8] sm:$0xff]
    %v6628 = vld [vmem:[#allocation10 + $0xc0] sm:$0xff]
    %v6629 = vld [vmem:[#allocation10 + $0xc8] sm:$0xff]
    %v6630 = vld [vmem:[#allocation10 + $0xd0] sm:$0xff]
    %v6631 = vld [vmem:[#allocation10 + $0xd8] sm:$0xff]
    %v6632 = vld [vmem:[#allocation10 + $0xe0] sm:$0xff]
    %v6633 = vld [vmem:[#allocation10 + $0xe8] sm:$0xff]
    %v6634 = vld [vmem:[#allocation10 + $0xf0] sm:$0xff]
    %v6635 = vld [vmem:[#allocation10 + $0xf8] sm:$0xff]
    %v6636 = vld [vmem:[#allocation10 + $0x100] sm:$0xff]
    %v6637 = vld [vmem:[#allocation10 + $0x108] sm:$0xff]
    %v6638 = vld [vmem:[#allocation10 + $0x110] sm:$0xff]
    %v6639 = vld [vmem:[#allocation10 + $0x118] sm:$0xff]
    %v6640 = vld [vmem:[#allocation10 + $0x120] sm:$0xff]
    %v6641 = vld [vmem:[#allocation10 + $0x128] sm:$0xff]
    %v6642 = vld [vmem:[#allocation10 + $0x130] sm:$0xff]
    %v6643 = vld [vmem:[#allocation10 + $0x138] sm:$0xff]
    %v6644 = vld [vmem:[#allocation10 + $0x140] sm:$0xff]
    %v6645 = vld [vmem:[#allocation10 + $0x148] sm:$0xff]
    %v6646 = vld [vmem:[#allocation10 + $0x150] sm:$0xff]
    %v6647 = vld [vmem:[#allocation10 + $0x158] sm:$0xff]
    %v6648 = vld [vmem:[#allocation10 + $0x160] sm:$0xff]
    %v6649 = vld [vmem:[#allocation10 + $0x168] sm:$0xff]
    %v6650 = vld [vmem:[#allocation10 + $0x170] sm:$0xff]
    %v6651 = vld [vmem:[#allocation10 + $0x178] sm:$0xff]
    %v6652 = vld [vmem:[#allocation10 + $0x180] sm:$0xff]
    %v6653 = vld [vmem:[#allocation10 + $0x188] sm:$0xff]
    %v6654 = vld [vmem:[#allocation10 + $0x190] sm:$0xff]
    %v6655 = vld [vmem:[#allocation10 + $0x198] sm:$0xff]
    %v6656 = vld [vmem:[#allocation10 + $0x1a0] sm:$0xff]
    %v6657 = vld [vmem:[#allocation10 + $0x1a8] sm:$0xff]
    %v6658 = vld [vmem:[#allocation10 + $0x1b0] sm:$0xff]
    %v6659 = vld [vmem:[#allocation10 + $0x1b8] sm:$0xff]
    %v6660 = vld [vmem:[#allocation10 + $0x1c0] sm:$0xff]
    %v6661 = vld [vmem:[#allocation10 + $0x1c8] sm:$0xff]
    %v6662 = vld [vmem:[#allocation10 + $0x1d0] sm:$0xff]
    %v6663 = vld [vmem:[#allocation10 + $0x1d8] sm:$0xff]
    %v6664 = vld [vmem:[#allocation10 + $0x1e0] sm:$0xff]
    %v6665 = vld [vmem:[#allocation10 + $0x1e8] sm:$0xff]
    %v6666 = vld [vmem:[#allocation10 + $0x1f0] sm:$0xff]
    %v6667 = vld [vmem:[#allocation10 + $0x1f8] sm:$0xff]
    %v6668 = vld [vmem:[#allocation10 + $0x200] sm:$0xff]
    %v6669 = vld [vmem:[#allocation10 + $0x208] sm:$0xff]
    %v6670 = vld [vmem:[#allocation10 + $0x210] sm:$0xff]
    %v6671 = vld [vmem:[#allocation10 + $0x218] sm:$0xff]
    %v6672 = vld [vmem:[#allocation10 + $0x220] sm:$0xff]
    %v6673 = vld [vmem:[#allocation10 + $0x228] sm:$0xff]
    %v6674 = vld [vmem:[#allocation10 + $0x230] sm:$0xff]
    %v6675 = vld [vmem:[#allocation10 + $0x238] sm:$0xff]
    %v6676 = vld [vmem:[#allocation10 + $0x240] sm:$0xff]
    %v6677 = vld [vmem:[#allocation10 + $0x248] sm:$0xff]
    %v6678 = vld [vmem:[#allocation10 + $0x250] sm:$0xff]
    %v6679 = vld [vmem:[#allocation10 + $0x258] sm:$0xff]
    %v6680 = vld [vmem:[#allocation10 + $0x260] sm:$0xff]
    %v6681 = vld [vmem:[#allocation10 + $0x268] sm:$0xff]
    %v6682 = vld [vmem:[#allocation10 + $0x270] sm:$0xff]
    %v6683 = vld [vmem:[#allocation10 + $0x278] sm:$0xff]
    %v6684 = vld [vmem:[#allocation10 + $0x280] sm:$0xff]
    %v6685 = vld [vmem:[#allocation10 + $0x288] sm:$0xff]
    %v6686 = vld [vmem:[#allocation10 + $0x290] sm:$0xff]
    %v6687 = vld [vmem:[#allocation10 + $0x298] sm:$0xff]
    %v6688 = vld [vmem:[#allocation10 + $0x2a0] sm:$0xff]
    %v6689 = vld [vmem:[#allocation10 + $0x2a8] sm:$0xff]
    %v6690 = vld [vmem:[#allocation10 + $0x2b0] sm:$0xff]
    %v6691 = vld [vmem:[#allocation10 + $0x2b8] sm:$0xff]
    %v6692 = vld [vmem:[#allocation10 + $0x2c0] sm:$0xff]
    %v6693 = vld [vmem:[#allocation10 + $0x2c8] sm:$0xff]
    %v6694 = vld [vmem:[#allocation10 + $0x2d0] sm:$0xff]
    %v6695 = vld [vmem:[#allocation10 + $0x2d8] sm:$0xff]
    %v6696 = vld [vmem:[#allocation10 + $0x2e0] sm:$0xff]
    %v6697 = vld [vmem:[#allocation10 + $0x2e8] sm:$0xff]
    %v6698 = vld [vmem:[#allocation10 + $0x2f0] sm:$0xff]
    %v6699 = vld [vmem:[#allocation10 + $0x2f8] sm:$0xff]
    %v6700 = vld [vmem:[#allocation10 + $0x300] sm:$0xff]
    %v6701 = vld [vmem:[#allocation10 + $0x308] sm:$0xff]
    %v6702 = vld [vmem:[#allocation10 + $0x310] sm:$0xff]
    %v6703 = vld [vmem:[#allocation10 + $0x318] sm:$0xff]
    %v6704 = vld [vmem:[#allocation10 + $0x320] sm:$0xff]
    %v6705 = vld [vmem:[#allocation10 + $0x328] sm:$0xff]
    %v6706 = vld [vmem:[#allocation10 + $0x330] sm:$0xff]
    %v6707 = vld [vmem:[#allocation10 + $0x338] sm:$0xff]
    %v6708 = vld [vmem:[#allocation10 + $0x340] sm:$0xff]
    %v6709 = vld [vmem:[#allocation10 + $0x348] sm:$0xff]
    %v6710 = vld [vmem:[#allocation10 + $0x350] sm:$0xff]
    %v6711 = vld [vmem:[#allocation10 + $0x358] sm:$0xff]
    %v6712 = vld [vmem:[#allocation10 + $0x360] sm:$0xff]
    %v6713 = vld [vmem:[#allocation10 + $0x368] sm:$0xff]
    %v6714 = vld [vmem:[#allocation10 + $0x370] sm:$0xff]
    %v6715 = vld [vmem:[#allocation10 + $0x378] sm:$0xff]
    %v6716 = vld [vmem:[#allocation10 + $0x380] sm:$0xff]
    %v6717 = vld [vmem:[#allocation10 + $0x388] sm:$0xff]
    %v6718 = vld [vmem:[#allocation10 + $0x390] sm:$0xff]
    %v6719 = vld [vmem:[#allocation10 + $0x398] sm:$0xff]
    %v6720 = vld [vmem:[#allocation10 + $0x3a0] sm:$0xff]
    %v6721 = vld [vmem:[#allocation10 + $0x3a8] sm:$0xff]
    %v6722 = vld [vmem:[#allocation10 + $0x3b0] sm:$0xff]
    %v6723 = vld [vmem:[#allocation10 + $0x3b8] sm:$0xff]
    %v6724 = vld [vmem:[#allocation10 + $0x3c0] sm:$0xff]
    %v6725 = vld [vmem:[#allocation10 + $0x3c8] sm:$0xff]
    %v6726 = vld [vmem:[#allocation10 + $0x3d0] sm:$0xff]
    %v6727 = vld [vmem:[#allocation10 + $0x3d8] sm:$0xff]
    %v6728 = vld [vmem:[#allocation10 + $0x3e0] sm:$0xff]
    %v6729 = vld [vmem:[#allocation10 + $0x3e8] sm:$0xff]
    %v6730 = vld [vmem:[#allocation10 + $0x3f0] sm:$0xff]
    %v6731 = vld [vmem:[#allocation10 + $0x3f8] sm:$0xff]
    %v6732 = vld [vmem:[#allocation10 + $0x400] sm:$0xff]
    %v6733 = vld [vmem:[#allocation10 + $0x408] sm:$0xff]
    %v6734 = vld [vmem:[#allocation10 + $0x410] sm:$0xff]
    %v6735 = vld [vmem:[#allocation10 + $0x418] sm:$0xff]
    %v6736 = vld [vmem:[#allocation10 + $0x420] sm:$0xff]
    %v6737 = vld [vmem:[#allocation10 + $0x428] sm:$0xff]
    %v6738 = vld [vmem:[#allocation10 + $0x430] sm:$0xff]
    %v6739 = vld [vmem:[#allocation10 + $0x438] sm:$0xff]
    %v6740 = vld [vmem:[#allocation10 + $0x440] sm:$0xff]
    %v6741 = vld [vmem:[#allocation10 + $0x448] sm:$0xff]
    %v6742 = vld [vmem:[#allocation10 + $0x450] sm:$0xff]
    %v6743 = vld [vmem:[#allocation10 + $0x458] sm:$0xff]
    %v6744 = vld [vmem:[#allocation10 + $0x460] sm:$0xff]
    %v6745 = vld [vmem:[#allocation10 + $0x468] sm:$0xff]
    %v6746 = vld [vmem:[#allocation10 + $0x470] sm:$0xff]
    %v6747 = vld [vmem:[#allocation10 + $0x478] sm:$0xff]
    %v6748 = vld [vmem:[#allocation10 + $0x480] sm:$0xff]
    %v6749 = vld [vmem:[#allocation10 + $0x488] sm:$0xff]
    %v6750 = vld [vmem:[#allocation10 + $0x490] sm:$0xff]
    %v6751 = vld [vmem:[#allocation10 + $0x498] sm:$0xff]
    %v6752 = vld [vmem:[#allocation10 + $0x4a0] sm:$0xff]
    %v6753 = vld [vmem:[#allocation10 + $0x4a8] sm:$0xff]
    %v6754 = vld [vmem:[#allocation10 + $0x4b0] sm:$0xff]
    %v6755 = vld [vmem:[#allocation10 + $0x4b8] sm:$0xff]
    %v6756 = vld [vmem:[#allocation10 + $0x4c0] sm:$0xff]
    %v6757 = vld [vmem:[#allocation10 + $0x4c8] sm:$0xff]
    %v6758 = vld [vmem:[#allocation10 + $0x4d0] sm:$0xff]
    %v6759 = vld [vmem:[#allocation10 + $0x4d8] sm:$0xff]
    %v6760 = vld [vmem:[#allocation10 + $0x4e0] sm:$0xff]
    %v6761 = vld [vmem:[#allocation10 + $0x4e8] sm:$0xff]
    %v6762 = vld [vmem:[#allocation10 + $0x4f0] sm:$0xff]
    %v6763 = vld [vmem:[#allocation10 + $0x4f8] sm:$0xff]
    %v6764 = vld [vmem:[#allocation10 + $0x500] sm:$0xff]
    %v6765 = vld [vmem:[#allocation10 + $0x508] sm:$0xff]
    %v6766 = vld [vmem:[#allocation10 + $0x510] sm:$0xff]
    %v6767 = vld [vmem:[#allocation10 + $0x518] sm:$0xff]
    %v6768 = vld [vmem:[#allocation10 + $0x520] sm:$0xff]
    %v6769 = vld [vmem:[#allocation10 + $0x528] sm:$0xff]
    %v6770 = vld [vmem:[#allocation10 + $0x530] sm:$0xff]
    %v6771 = vld [vmem:[#allocation10 + $0x538] sm:$0xff]
    %v6772 = vld [vmem:[#allocation10 + $0x540] sm:$0xff]
    %v6773 = vld [vmem:[#allocation10 + $0x548] sm:$0xff]
    %v6774 = vld [vmem:[#allocation10 + $0x550] sm:$0xff]
    %v6775 = vld [vmem:[#allocation10 + $0x558] sm:$0xff]
    %v6776 = vld [vmem:[#allocation10 + $0x560] sm:$0xff]
    %v6777 = vld [vmem:[#allocation10 + $0x568] sm:$0xff]
    %v6778 = vld [vmem:[#allocation10 + $0x570] sm:$0xff]
    %v6779 = vld [vmem:[#allocation10 + $0x578] sm:$0xff]
    %v6780 = vld [vmem:[#allocation10 + $0x580] sm:$0xff]
    %v6781 = vld [vmem:[#allocation10 + $0x588] sm:$0xff]
    %v6782 = vld [vmem:[#allocation10 + $0x590] sm:$0xff]
    %v6783 = vld [vmem:[#allocation10 + $0x598] sm:$0xff]
    %v6784 = vld [vmem:[#allocation10 + $0x5a0] sm:$0xff]
    %v6785 = vld [vmem:[#allocation10 + $0x5a8] sm:$0xff]
    %v6786 = vld [vmem:[#allocation10 + $0x5b0] sm:$0xff]
    %v6787 = vld [vmem:[#allocation10 + $0x5b8] sm:$0xff]
    %v6788 = vld [vmem:[#allocation10 + $0x5c0] sm:$0xff]
    %v6789 = vld [vmem:[#allocation10 + $0x5c8] sm:$0xff]
    %v6790 = vld [vmem:[#allocation10 + $0x5d0] sm:$0xff]
    %v6791 = vld [vmem:[#allocation10 + $0x5d8] sm:$0xff]
    %v6792 = vld [vmem:[#allocation10 + $0x5e0] sm:$0xff]
    %v6793 = vld [vmem:[#allocation10 + $0x5e8] sm:$0xff]
    %v6794 = vld [vmem:[#allocation10 + $0x5f0] sm:$0xff]
    %v6795 = vld [vmem:[#allocation10 + $0x5f8] sm:$0xff]
    %v6796 = vld [vmem:[#allocation12] sm:$0x3]
    %v6798 = vlaneseq
    %v6799 = vshrl.u32 %v6798, 7
    %v6800 = vsub.s32 0, %v6799
    %v6801 = vrot.slane %v6796, %v6800
    %v6802 = vlaneseq
    %v6803 = vshrl.u32 %v6802, 7
    %v6804 = vsub.s32 1, %v6803
    %v6805 = vrot.slane %v6796, %v6804
    %v7000 = vunpack.c.l.b16 %v6604
    %v7001 = vunpack.c.h.b16 %v6604
    %v7002 = vunpack.c.l.b16 %v6605
    %v7003 = vunpack.c.h.b16 %v6605
    %v7004 = vunpack.c.l.b16 %v6606
    %v7005 = vunpack.c.h.b16 %v6606
    %v7006 = vunpack.c.l.b16 %v6607
    %v7007 = vunpack.c.h.b16 %v6607
    %v7008 = vunpack.c.l.b16 %v6608
    %v7009 = vunpack.c.h.b16 %v6608
    %v7010 = vunpack.c.l.b16 %v6609
    %v7011 = vunpack.c.h.b16 %v6609
    %v7012 = vunpack.c.l.b16 %v6610
    %v7013 = vunpack.c.h.b16 %v6610
    %v7014 = vunpack.c.l.b16 %v6611
    %v7015 = vunpack.c.h.b16 %v6611
    %v7016 = vunpack.c.l.b16 %v6612
    %v7017 = vunpack.c.h.b16 %v6612
    %v7018 = vunpack.c.l.b16 %v6613
    %v7019 = vunpack.c.h.b16 %v6613
    %v7020 = vunpack.c.l.b16 %v6614
    %v7021 = vunpack.c.h.b16 %v6614
    %v7022 = vunpack.c.l.b16 %v6615
    %v7023 = vunpack.c.h.b16 %v6615
    %v7024 = vunpack.c.l.b16 %v6616
    %v7025 = vunpack.c.h.b16 %v6616
    %v7026 = vunpack.c.l.b16 %v6617
    %v7027 = vunpack.c.h.b16 %v6617
    %v7028 = vunpack.c.l.b16 %v6618
    %v7029 = vunpack.c.h.b16 %v6618
    %v7030 = vunpack.c.l.b16 %v6619
    %v7031 = vunpack.c.h.b16 %v6619
    %v7032 = vunpack.c.l.b16 %v6620
    %v7033 = vunpack.c.h.b16 %v6620
    %v7034 = vunpack.c.l.b16 %v6621
    %v7035 = vunpack.c.h.b16 %v6621
    %v7036 = vunpack.c.l.b16 %v6622
    %v7037 = vunpack.c.h.b16 %v6622
    %v7038 = vunpack.c.l.b16 %v6623
    %v7039 = vunpack.c.h.b16 %v6623
    %v7040 = vunpack.c.l.b16 %v6624
    %v7041 = vunpack.c.h.b16 %v6624
    %v7042 = vunpack.c.l.b16 %v6625
    %v7043 = vunpack.c.h.b16 %v6625
    %v7044 = vunpack.c.l.b16 %v6626
    %v7045 = vunpack.c.h.b16 %v6626
    %v7046 = vunpack.c.l.b16 %v6627
    %v7047 = vunpack.c.h.b16 %v6627
    %v7048 = vunpack.c.l.b16 %v6628
    %v7049 = vunpack.c.h.b16 %v6628
    %v7050 = vunpack.c.l.b16 %v6629
    %v7051 = vunpack.c.h.b16 %v6629
    %v7052 = vunpack.c.l.b16 %v6630
    %v7053 = vunpack.c.h.b16 %v6630
    %v7054 = vunpack.c.l.b16 %v6631
    %v7055 = vunpack.c.h.b16 %v6631
    %v7056 = vunpack.c.l.b16 %v6632
    %v7057 = vunpack.c.h.b16 %v6632
    %v7058 = vunpack.c.l.b16 %v6633
    %v7059 = vunpack.c.h.b16 %v6633
    %v7060 = vunpack.c.l.b16 %v6634
    %v7061 = vunpack.c.h.b16 %v6634
    %v7062 = vunpack.c.l.b16 %v6635
    %v7063 = vunpack.c.h.b16 %v6635
    %v7064 = vunpack.c.l.b16 %v6636
    %v7065 = vunpack.c.h.b16 %v6636
    %v7066 = vunpack.c.l.b16 %v6637
    %v7067 = vunpack.c.h.b16 %v6637
    %v7068 = vunpack.c.l.b16 %v6638
    %v7069 = vunpack.c.h.b16 %v6638
    %v7070 = vunpack.c.l.b16 %v6639
    %v7071 = vunpack.c.h.b16 %v6639
    %v7072 = vunpack.c.l.b16 %v6640
    %v7073 = vunpack.c.h.b16 %v6640
    %v7074 = vunpack.c.l.b16 %v6641
    %v7075 = vunpack.c.h.b16 %v6641
    %v7076 = vunpack.c.l.b16 %v6642
    %v7077 = vunpack.c.h.b16 %v6642
    %v7078 = vunpack.c.l.b16 %v6643
    %v7079 = vunpack.c.h.b16 %v6643
    %v7080 = vunpack.c.l.b16 %v6644
    %v7081 = vunpack.c.h.b16 %v6644
    %v7082 = vunpack.c.l.b16 %v6645
    %v7083 = vunpack.c.h.b16 %v6645
    %v7084 = vunpack.c.l.b16 %v6646
    %v7085 = vunpack.c.h.b16 %v6646
    %v7086 = vunpack.c.l.b16 %v6647
    %v7087 = vunpack.c.h.b16 %v6647
    %v7088 = vunpack.c.l.b16 %v6648
    %v7089 = vunpack.c.h.b16 %v6648
    %v7090 = vunpack.c.l.b16 %v6649
    %v7091 = vunpack.c.h.b16 %v6649
    %v7092 = vunpack.c.l.b16 %v6650
    %v7093 = vunpack.c.h.b16 %v6650
    %v7094 = vunpack.c.l.b16 %v6651
    %v7095 = vunpack.c.h.b16 %v6651
    %v7096 = vunpack.c.l.b16 %v6652
    %v7097 = vunpack.c.h.b16 %v6652
    %v7098 = vunpack.c.l.b16 %v6653
    %v7099 = vunpack.c.h.b16 %v6653
    %v7100 = vunpack.c.l.b16 %v6654
    %v7101 = vunpack.c.h.b16 %v6654
    %v7102 = vunpack.c.l.b16 %v6655
    %v7103 = vunpack.c.h.b16 %v6655
    %v7104 = vunpack.c.l.b16 %v6656
    %v7105 = vunpack.c.h.b16 %v6656
    %v7106 = vunpack.c.l.b16 %v6657
    %v7107 = vunpack.c.h.b16 %v6657
    %v7108 = vunpack.c.l.b16 %v6658
    %v7109 = vunpack.c.h.b16 %v6658
    %v7110 = vunpack.c.l.b16 %v6659
    %v7111 = vunpack.c.h.b16 %v6659
    %v7112 = vunpack.c.l.b16 %v6660
    %v7113 = vunpack.c.h.b16 %v6660
    %v7114 = vunpack.c.l.b16 %v6661
    %v7115 = vunpack.c.h.b16 %v6661
    %v7116 = vunpack.c.l.b16 %v6662
    %v7117 = vunpack.c.h.b16 %v6662
    %v7118 = vunpack.c.l.b16 %v6663
    %v7119 = vunpack.c.h.b16 %v6663
    %v7120 = vunpack.c.l.b16 %v6664
    %v7121 = vunpack.c.h.b16 %v6664
    %v7122 = vunpack.c.l.b16 %v6665
    %v7123 = vunpack.c.h.b16 %v6665
    %v7124 = vunpack.c.l.b16 %v6666
    %v7125 = vunpack.c.h.b16 %v6666
    %v7126 = vunpack.c.l.b16 %v6667
    %v7127 = vunpack.c.h.b16 %v6667
    %v7128 = vunpack.c.l.b16 %v6668
    %v7129 = vunpack.c.h.b16 %v6668
    %v7130 = vunpack.c.l.b16 %v6669
    %v7131 = vunpack.c.h.b16 %v6669
    %v7132 = vunpack.c.l.b16 %v6670
    %v7133 = vunpack.c.h.b16 %v6670
    %v7134 = vunpack.c.l.b16 %v6671
    %v7135 = vunpack.c.h.b16 %v6671
    %v7136 = vunpack.c.l.b16 %v6672
    %v7137 = vunpack.c.h.b16 %v6672
    %v7138 = vunpack.c.l.b16 %v6673
    %v7139 = vunpack.c.h.b16 %v6673
    %v7140 = vunpack.c.l.b16 %v6674
    %v7141 = vunpack.c.h.b16 %v6674
    %v7142 = vunpack.c.l.b16 %v6675
    %v7143 = vunpack.c.h.b16 %v6675
    %v7144 = vunpack.c.l.b16 %v6676
    %v7145 = vunpack.c.h.b16 %v6676
    %v7146 = vunpack.c.l.b16 %v6677
    %v7147 = vunpack.c.h.b16 %v6677
    %v7148 = vunpack.c.l.b16 %v6678
    %v7149 = vunpack.c.h.b16 %v6678
    %v7150 = vunpack.c.l.b16 %v6679
    %v7151 = vunpack.c.h.b16 %v6679
    %v7152 = vunpack.c.l.b16 %v6680
    %v7153 = vunpack.c.h.b16 %v6680
    %v7154 = vunpack.c.l.b16 %v6681
    %v7155 = vunpack.c.h.b16 %v6681
    %v7156 = vunpack.c.l.b16 %v6682
    %v7157 = vunpack.c.h.b16 %v6682
    %v7158 = vunpack.c.l.b16 %v6683
    %v7159 = vunpack.c.h.b16 %v6683
    %v7160 = vunpack.c.l.b16 %v6684
    %v7161 = vunpack.c.h.b16 %v6684
    %v7162 = vunpack.c.l.b16 %v6685
    %v7163 = vunpack.c.h.b16 %v6685
    %v7164 = vunpack.c.l.b16 %v6686
    %v7165 = vunpack.c.h.b16 %v6686
    %v7166 = vunpack.c.l.b16 %v6687
    %v7167 = vunpack.c.h.b16 %v6687
    %v7168 = vunpack.c.l.b16 %v6688
    %v7169 = vunpack.c.h.b16 %v6688
    %v7170 = vunpack.c.l.b16 %v6689
    %v7171 = vunpack.c.h.b16 %v6689
    %v7172 = vunpack.c.l.b16 %v6690
    %v7173 = vunpack.c.h.b16 %v6690
    %v7174 = vunpack.c.l.b16 %v6691
    %v7175 = vunpack.c.h.b16 %v6691
    %v7176 = vunpack.c.l.b16 %v6692
    %v7177 = vunpack.c.h.b16 %v6692
    %v7178 = vunpack.c.l.b16 %v6693
    %v7179 = vunpack.c.h.b16 %v6693
    %v7180 = vunpack.c.l.b16 %v6694
    %v7181 = vunpack.c.h.b16 %v6694
    %v7182 = vunpack.c.l.b16 %v6695
    %v7183 = vunpack.c.h.b16 %v6695
    %v7184 = vunpack.c.l.b16 %v6696
    %v7185 = vunpack.c.h.b16 %v6696
    %v7186 = vunpack.c.l.b16 %v6697
    %v7187 = vunpack.c.h.b16 %v6697
    %v7188 = vunpack.c.l.b16 %v6698
    %v7189 = vunpack.c.h.b16 %v6698
    %v7190 = vunpack.c.l.b16 %v6699
    %v7191 = vunpack.c.h.b16 %v6699
    %v7192 = vunpack.c.l.b16 %v6700
    %v7193 = vunpack.c.h.b16 %v6700
    %v7194 = vunpack.c.l.b16 %v6701
    %v7195 = vunpack.c.h.b16 %v6701
    %v7196 = vunpack.c.l.b16 %v6702
    %v7197 = vunpack.c.h.b16 %v6702
    %v7198 = vunpack.c.l.b16 %v6703
    %v7199 = vunpack.c.h.b16 %v6703
    %v7200 = vunpack.c.l.b16 %v6704
    %v7201 = vunpack.c.h.b16 %v6704
    %v7202 = vunpack.c.l.b16 %v6705
    %v7203 = vunpack.c.h.b16 %v6705
    %v7204 = vunpack.c.l.b16 %v6706
    %v7205 = vunpack.c.h.b16 %v6706
    %v7206 = vunpack.c.l.b16 %v6707
    %v7207 = vunpack.c.h.b16 %v6707
    %v7208 = vunpack.c.l.b16 %v6708
    %v7209 = vunpack.c.h.b16 %v6708
    %v7210 = vunpack.c.l.b16 %v6709
    %v7211 = vunpack.c.h.b16 %v6709
    %v7212 = vunpack.c.l.b16 %v6710
    %v7213 = vunpack.c.h.b16 %v6710
    %v7214 = vunpack.c.l.b16 %v6711
    %v7215 = vunpack.c.h.b16 %v6711
    %v7216 = vunpack.c.l.b16 %v6712
    %v7217 = vunpack.c.h.b16 %v6712
    %v7218 = vunpack.c.l.b16 %v6713
    %v7219 = vunpack.c.h.b16 %v6713
    %v7220 = vunpack.c.l.b16 %v6714
    %v7221 = vunpack.c.h.b16 %v6714
    %v7222 = vunpack.c.l.b16 %v6715
    %v7223 = vunpack.c.h.b16 %v6715
    %v7224 = vunpack.c.l.b16 %v6716
    %v7225 = vunpack.c.h.b16 %v6716
    %v7226 = vunpack.c.l.b16 %v6717
    %v7227 = vunpack.c.h.b16 %v6717
    %v7228 = vunpack.c.l.b16 %v6718
    %v7229 = vunpack.c.h.b16 %v6718
    %v7230 = vunpack.c.l.b16 %v6719
    %v7231 = vunpack.c.h.b16 %v6719
    %v7232 = vunpack.c.l.b16 %v6720
    %v7233 = vunpack.c.h.b16 %v6720
    %v7234 = vunpack.c.l.b16 %v6721
    %v7235 = vunpack.c.h.b16 %v6721
    %v7236 = vunpack.c.l.b16 %v6722
    %v7237 = vunpack.c.h.b16 %v6722
    %v7238 = vunpack.c.l.b16 %v6723
    %v7239 = vunpack.c.h.b16 %v6723
    %v7240 = vunpack.c.l.b16 %v6724
    %v7241 = vunpack.c.h.b16 %v6724
    %v7242 = vunpack.c.l.b16 %v6725
    %v7243 = vunpack.c.h.b16 %v6725
    %v7244 = vunpack.c.l.b16 %v6726
    %v7245 = vunpack.c.h.b16 %v6726
    %v7246 = vunpack.c.l.b16 %v6727
    %v7247 = vunpack.c.h.b16 %v6727
    %v7248 = vunpack.c.l.b16 %v6728
    %v7249 = vunpack.c.h.b16 %v6728
    %v7250 = vunpack.c.l.b16 %v6729
    %v7251 = vunpack.c.h.b16 %v6729
    %v7252 = vunpack.c.l.b16 %v6730
    %v7253 = vunpack.c.h.b16 %v6730
    %v7254 = vunpack.c.l.b16 %v6731
    %v7255 = vunpack.c.h.b16 %v6731
    %v7256 = vunpack.c.l.b16 %v6732
    %v7257 = vunpack.c.h.b16 %v6732
    %v7258 = vunpack.c.l.b16 %v6733
    %v7259 = vunpack.c.h.b16 %v6733
    %v7260 = vunpack.c.l.b16 %v6734
    %v7261 = vunpack.c.h.b16 %v6734
    %v7262 = vunpack.c.l.b16 %v6735
    %v7263 = vunpack.c.h.b16 %v6735
    %v7264 = vunpack.c.l.b16 %v6736
    %v7265 = vunpack.c.h.b16 %v6736
    %v7266 = vunpack.c.l.b16 %v6737
    %v7267 = vunpack.c.h.b16 %v6737
    %v7268 = vunpack.c.l.b16 %v6738
    %v7269 = vunpack.c.h.b16 %v6738
    %v7270 = vunpack.c.l.b16 %v6739
    %v7271 = vunpack.c.h.b16 %v6739
    %v7272 = vunpack.c.l.b16 %v6740
    %v7273 = vunpack.c.h.b16 %v6740
    %v7274 = vunpack.c.l.b16 %v6741
    %v7275 = vunpack.c.h.b16 %v6741
    %v7276 = vunpack.c.l.b16 %v6742
    %v7277 = vunpack.c.h.b16 %v6742
    %v7278 = vunpack.c.l.b16 %v6743
    %v7279 = vunpack.c.h.b16 %v6743
    %v7280 = vunpack.c.l.b16 %v6744
    %v7281 = vunpack.c.h.b16 %v6744
    %v7282 = vunpack.c.l.b16 %v6745
    %v7283 = vunpack.c.h.b16 %v6745
    %v7284 = vunpack.c.l.b16 %v6746
    %v7285 = vunpack.c.h.b16 %v6746
    %v7286 = vunpack.c.l.b16 %v6747
    %v7287 = vunpack.c.h.b16 %v6747
    %v7288 = vunpack.c.l.b16 %v6748
    %v7289 = vunpack.c.h.b16 %v6748
    %v7290 = vunpack.c.l.b16 %v6749
    %v7291 = vunpack.c.h.b16 %v6749
    %v7292 = vunpack.c.l.b16 %v6750
    %v7293 = vunpack.c.h.b16 %v6750
    %v7294 = vunpack.c.l.b16 %v6751
    %v7295 = vunpack.c.h.b16 %v6751
    %v7296 = vunpack.c.l.b16 %v6752
    %v7297 = vunpack.c.h.b16 %v6752
    %v7298 = vunpack.c.l.b16 %v6753
    %v7299 = vunpack.c.h.b16 %v6753
    %v7300 = vunpack.c.l.b16 %v6754
    %v7301 = vunpack.c.h.b16 %v6754
    %v7302 = vunpack.c.l.b16 %v6755
    %v7303 = vunpack.c.h.b16 %v6755
    %v7304 = vunpack.c.l.b16 %v6756
    %v7305 = vunpack.c.h.b16 %v6756
    %v7306 = vunpack.c.l.b16 %v6757
    %v7307 = vunpack.c.h.b16 %v6757
    %v7308 = vunpack.c.l.b16 %v6758
    %v7309 = vunpack.c.h.b16 %v6758
    %v7310 = vunpack.c.l.b16 %v6759
    %v7311 = vunpack.c.h.b16 %v6759
    %v7312 = vunpack.c.l.b16 %v6760
    %v7313 = vunpack.c.h.b16 %v6760
    %v7314 = vunpack.c.l.b16 %v6761
    %v7315 = vunpack.c.h.b16 %v6761
    %v7316 = vunpack.c.l.b16 %v6762
    %v7317 = vunpack.c.h.b16 %v6762
    %v7318 = vunpack.c.l.b16 %v6763
    %v7319 = vunpack.c.h.b16 %v6763
    %v7320 = vunpack.c.l.b16 %v6764
    %v7321 = vunpack.c.h.b16 %v6764
    %v7322 = vunpack.c.l.b16 %v6765
    %v7323 = vunpack.c.h.b16 %v6765
    %v7324 = vunpack.c.l.b16 %v6766
    %v7325 = vunpack.c.h.b16 %v6766
    %v7326 = vunpack.c.l.b16 %v6767
    %v7327 = vunpack.c.h.b16 %v6767
    %v7328 = vunpack.c.l.b16 %v6768
    %v7329 = vunpack.c.h.b16 %v6768
    %v7330 = vunpack.c.l.b16 %v6769
    %v7331 = vunpack.c.h.b16 %v6769
    %v7332 = vunpack.c.l.b16 %v6770
    %v7333 = vunpack.c.h.b16 %v6770
    %v7334 = vunpack.c.l.b16 %v6771
    %v7335 = vunpack.c.h.b16 %v6771
    %v7336 = vunpack.c.l.b16 %v6772
    %v7337 = vunpack.c.h.b16 %v6772
    %v7338 = vunpack.c.l.b16 %v6773
    %v7339 = vunpack.c.h.b16 %v6773
    %v7340 = vunpack.c.l.b16 %v6774
    %v7341 = vunpack.c.h.b16 %v6774
    %v7342 = vunpack.c.l.b16 %v6775
    %v7343 = vunpack.c.h.b16 %v6775
    %v7344 = vunpack.c.l.b16 %v6776
    %v7345 = vunpack.c.h.b16 %v6776
    %v7346 = vunpack.c.l.b16 %v6777
    %v7347 = vunpack.c.h.b16 %v6777
    %v7348 = vunpack.c.l.b16 %v6778
    %v7349 = vunpack.c.h.b16 %v6778
    %v7350 = vunpack.c.l.b16 %v6779
    %v7351 = vunpack.c.h.b16 %v6779
    %v7352 = vunpack.c.l.b16 %v6780
    %v7353 = vunpack.c.h.b16 %v6780
    %v7354 = vunpack.c.l.b16 %v6781
    %v7355 = vunpack.c.h.b16 %v6781
    %v7356 = vunpack.c.l.b16 %v6782
    %v7357 = vunpack.c.h.b16 %v6782
    %v7358 = vunpack.c.l.b16 %v6783
    %v7359 = vunpack.c.h.b16 %v6783
    %v7360 = vunpack.c.l.b16 %v6784
    %v7361 = vunpack.c.h.b16 %v6784
    %v7362 = vunpack.c.l.b16 %v6785
    %v7363 = vunpack.c.h.b16 %v6785
    %v7364 = vunpack.c.l.b16 %v6786
    %v7365 = vunpack.c.h.b16 %v6786
    %v7366 = vunpack.c.l.b16 %v6787
    %v7367 = vunpack.c.h.b16 %v6787
    %v7368 = vunpack.c.l.b16 %v6788
    %v7369 = vunpack.c.h.b16 %v6788
    %v7370 = vunpack.c.l.b16 %v6789
    %v7371 = vunpack.c.h.b16 %v6789
    %v7372 = vunpack.c.l.b16 %v6790
    %v7373 = vunpack.c.h.b16 %v6790
    %v7374 = vunpack.c.l.b16 %v6791
    %v7375 = vunpack.c.h.b16 %v6791
    %v7376 = vunpack.c.l.b16 %v6792
    %v7377 = vunpack.c.h.b16 %v6792
    %v7378 = vunpack.c.l.b16 %v6793
    %v7379 = vunpack.c.h.b16 %v6793
    %v7380 = vunpack.c.l.b16 %v6794
    %v7381 = vunpack.c.h.b16 %v6794
    %v7382 = vunpack.c.l.b16 %v6795
    %v7383 = vunpack.c.h.b16 %v6795
    %v7384 = vpack.c.b16 %v7002, %v7000
    %v7385 = vpack.c.b16 %v7003, %v7001
    %v7386 = vpack.c.b16 %v7006, %v7004
    %v7387 = vpack.c.b16 %v7007, %v7005
    %v7388 = vpack.c.b16 %v7010, %v7008
    %v7389 = vpack.c.b16 %v7011, %v7009
    %v7390 = vpack.c.b16 %v7014, %v7012
    %v7391 = vpack.c.b16 %v7015, %v7013
    %v7392 = vpack.c.b16 %v7018, %v7016
    %v7393 = vpack.c.b16 %v7019, %v7017
    %v7394 = vpack.c.b16 %v7022, %v7020
    %v7395 = vpack.c.b16 %v7023, %v7021
    %v7396 = vpack.c.b16 %v7026, %v7024
    %v7397 = vpack.c.b16 %v7027, %v7025
    %v7398 = vpack.c.b16 %v7030, %v7028
    %v7399 = vpack.c.b16 %v7031, %v7029
    %v7400 = vpack.c.b16 %v7034, %v7032
    %v7401 = vpack.c.b16 %v7035, %v7033
    %v7402 = vpack.c.b16 %v7038, %v7036
    %v7403 = vpack.c.b16 %v7039, %v7037
    %v7404 = vpack.c.b16 %v7042, %v7040
    %v7405 = vpack.c.b16 %v7043, %v7041
    %v7406 = vpack.c.b16 %v7046, %v7044
    %v7407 = vpack.c.b16 %v7047, %v7045
    %v7408 = vpack.c.b16 %v7050, %v7048
    %v7409 = vpack.c.b16 %v7051, %v7049
    %v7410 = vpack.c.b16 %v7054, %v7052
    %v7411 = vpack.c.b16 %v7055, %v7053
    %v7412 = vpack.c.b16 %v7058, %v7056
    %v7413 = vpack.c.b16 %v7059, %v7057
    %v7414 = vpack.c.b16 %v7062, %v7060
    %v7415 = vpack.c.b16 %v7063, %v7061
    %v7416 = vpack.c.b16 %v7066, %v7064
    %v7417 = vpack.c.b16 %v7067, %v7065
    %v7418 = vpack.c.b16 %v7070, %v7068
    %v7419 = vpack.c.b16 %v7071, %v7069
    %v7420 = vpack.c.b16 %v7074, %v7072
    %v7421 = vpack.c.b16 %v7075, %v7073
    %v7422 = vpack.c.b16 %v7078, %v7076
    %v7423 = vpack.c.b16 %v7079, %v7077
    %v7424 = vpack.c.b16 %v7082, %v7080
    %v7425 = vpack.c.b16 %v7083, %v7081
    %v7426 = vpack.c.b16 %v7086, %v7084
    %v7427 = vpack.c.b16 %v7087, %v7085
    %v7428 = vpack.c.b16 %v7090, %v7088
    %v7429 = vpack.c.b16 %v7091, %v7089
    %v7430 = vpack.c.b16 %v7094, %v7092
    %v7431 = vpack.c.b16 %v7095, %v7093
    %v7432 = vpack.c.b16 %v7098, %v7096
    %v7433 = vpack.c.b16 %v7099, %v7097
    %v7434 = vpack.c.b16 %v7102, %v7100
    %v7435 = vpack.c.b16 %v7103, %v7101
    %v7436 = vpack.c.b16 %v7106, %v7104
    %v7437 = vpack.c.b16 %v7107, %v7105
    %v7438 = vpack.c.b16 %v7110, %v7108
    %v7439 = vpack.c.b16 %v7111, %v7109
    %v7440 = vpack.c.b16 %v7114, %v7112
    %v7441 = vpack.c.b16 %v7115, %v7113
    %v7442 = vpack.c.b16 %v7118, %v7116
    %v7443 = vpack.c.b16 %v7119, %v7117
    %v7444 = vpack.c.b16 %v7122, %v7120
    %v7445 = vpack.c.b16 %v7123, %v7121
    %v7446 = vpack.c.b16 %v7126, %v7124
    %v7447 = vpack.c.b16 %v7127, %v7125
    %v7448 = vpack.c.b16 %v7130, %v7128
    %v7449 = vpack.c.b16 %v7131, %v7129
    %v7450 = vpack.c.b16 %v7134, %v7132
    %v7451 = vpack.c.b16 %v7135, %v7133
    %v7452 = vpack.c.b16 %v7138, %v7136
    %v7453 = vpack.c.b16 %v7139, %v7137
    %v7454 = vpack.c.b16 %v7142, %v7140
    %v7455 = vpack.c.b16 %v7143, %v7141
    %v7456 = vpack.c.b16 %v7146, %v7144
    %v7457 = vpack.c.b16 %v7147, %v7145
    %v7458 = vpack.c.b16 %v7150, %v7148
    %v7459 = vpack.c.b16 %v7151, %v7149
    %v7460 = vpack.c.b16 %v7154, %v7152
    %v7461 = vpack.c.b16 %v7155, %v7153
    %v7462 = vpack.c.b16 %v7158, %v7156
    %v7463 = vpack.c.b16 %v7159, %v7157
    %v7464 = vpack.c.b16 %v7162, %v7160
    %v7465 = vpack.c.b16 %v7163, %v7161
    %v7466 = vpack.c.b16 %v7166, %v7164
    %v7467 = vpack.c.b16 %v7167, %v7165
    %v7468 = vpack.c.b16 %v7170, %v7168
    %v7469 = vpack.c.b16 %v7171, %v7169
    %v7470 = vpack.c.b16 %v7174, %v7172
    %v7471 = vpack.c.b16 %v7175, %v7173
    %v7472 = vpack.c.b16 %v7178, %v7176
    %v7473 = vpack.c.b16 %v7179, %v7177
    %v7474 = vpack.c.b16 %v7182, %v7180
    %v7475 = vpack.c.b16 %v7183, %v7181
    %v7476 = vpack.c.b16 %v7186, %v7184
    %v7477 = vpack.c.b16 %v7187, %v7185
    %v7478 = vpack.c.b16 %v7190, %v7188
    %v7479 = vpack.c.b16 %v7191, %v7189
    %v7480 = vpack.c.b16 %v7194, %v7192
    %v7481 = vpack.c.b16 %v7195, %v7193
    %v7482 = vpack.c.b16 %v7198, %v7196
    %v7483 = vpack.c.b16 %v7199, %v7197
    %v7484 = vpack.c.b16 %v7202, %v7200
    %v7485 = vpack.c.b16 %v7203, %v7201
    %v7486 = vpack.c.b16 %v7206, %v7204
    %v7487 = vpack.c.b16 %v7207, %v7205
    %v7488 = vpack.c.b16 %v7210, %v7208
    %v7489 = vpack.c.b16 %v7211, %v7209
    %v7490 = vpack.c.b16 %v7214, %v7212
    %v7491 = vpack.c.b16 %v7215, %v7213
    %v7492 = vpack.c.b16 %v7218, %v7216
    %v7493 = vpack.c.b16 %v7219, %v7217
    %v7494 = vpack.c.b16 %v7222, %v7220
    %v7495 = vpack.c.b16 %v7223, %v7221
    %v7496 = vpack.c.b16 %v7226, %v7224
    %v7497 = vpack.c.b16 %v7227, %v7225
    %v7498 = vpack.c.b16 %v7230, %v7228
    %v7499 = vpack.c.b16 %v7231, %v7229
    %v7500 = vpack.c.b16 %v7234, %v7232
    %v7501 = vpack.c.b16 %v7235, %v7233
    %v7502 = vpack.c.b16 %v7238, %v7236
    %v7503 = vpack.c.b16 %v7239, %v7237
    %v7504 = vpack.c.b16 %v7242, %v7240
    %v7505 = vpack.c.b16 %v7243, %v7241
    %v7506 = vpack.c.b16 %v7246, %v7244
    %v7507 = vpack.c.b16 %v7247, %v7245
    %v7508 = vpack.c.b16 %v7250, %v7248
    %v7509 = vpack.c.b16 %v7251, %v7249
    %v7510 = vpack.c.b16 %v7254, %v7252
    %v7511 = vpack.c.b16 %v7255, %v7253
    %v7512 = vpack.c.b16 %v7258, %v7256
    %v7513 = vpack.c.b16 %v7259, %v7257
    %v7514 = vpack.c.b16 %v7262, %v7260
    %v7515 = vpack.c.b16 %v7263, %v7261
    %v7516 = vpack.c.b16 %v7266, %v7264
    %v7517 = vpack.c.b16 %v7267, %v7265
    %v7518 = vpack.c.b16 %v7270, %v7268
    %v7519 = vpack.c.b16 %v7271, %v7269
    %v7520 = vpack.c.b16 %v7274, %v7272
    %v7521 = vpack.c.b16 %v7275, %v7273
    %v7522 = vpack.c.b16 %v7278, %v7276
    %v7523 = vpack.c.b16 %v7279, %v7277
    %v7524 = vpack.c.b16 %v7282, %v7280
    %v7525 = vpack.c.b16 %v7283, %v7281
    %v7526 = vpack.c.b16 %v7286, %v7284
    %v7527 = vpack.c.b16 %v7287, %v7285
    %v7528 = vpack.c.b16 %v7290, %v7288
    %v7529 = vpack.c.b16 %v7291, %v7289
    %v7530 = vpack.c.b16 %v7294, %v7292
    %v7531 = vpack.c.b16 %v7295, %v7293
    %v7532 = vpack.c.b16 %v7298, %v7296
    %v7533 = vpack.c.b16 %v7299, %v7297
    %v7534 = vpack.c.b16 %v7302, %v7300
    %v7535 = vpack.c.b16 %v7303, %v7301
    %v7536 = vpack.c.b16 %v7306, %v7304
    %v7537 = vpack.c.b16 %v7307, %v7305
    %v7538 = vpack.c.b16 %v7310, %v7308
    %v7539 = vpack.c.b16 %v7311, %v7309
    %v7540 = vpack.c.b16 %v7314, %v7312
    %v7541 = vpack.c.b16 %v7315, %v7313
    %v7542 = vpack.c.b16 %v7318, %v7316
    %v7543 = vpack.c.b16 %v7319, %v7317
    %v7544 = vpack.c.b16 %v7322, %v7320
    %v7545 = vpack.c.b16 %v7323, %v7321
    %v7546 = vpack.c.b16 %v7326, %v7324
    %v7547 = vpack.c.b16 %v7327, %v7325
    %v7548 = vpack.c.b16 %v7330, %v7328
    %v7549 = vpack.c.b16 %v7331, %v7329
    %v7550 = vpack.c.b16 %v7334, %v7332
    %v7551 = vpack.c.b16 %v7335, %v7333
    %v7552 = vpack.c.b16 %v7338, %v7336
    %v7553 = vpack.c.b16 %v7339, %v7337
    %v7554 = vpack.c.b16 %v7342, %v7340
    %v7555 = vpack.c.b16 %v7343, %v7341
    %v7556 = vpack.c.b16 %v7346, %v7344
    %v7557 = vpack.c.b16 %v7347, %v7345
    %v7558 = vpack.c.b16 %v7350, %v7348
    %v7559 = vpack.c.b16 %v7351, %v7349
    %v7560 = vpack.c.b16 %v7354, %v7352
    %v7561 = vpack.c.b16 %v7355, %v7353
    %v7562 = vpack.c.b16 %v7358, %v7356
    %v7563 = vpack.c.b16 %v7359, %v7357
    %v7564 = vpack.c.b16 %v7362, %v7360
    %v7565 = vpack.c.b16 %v7363, %v7361
    %v7566 = vpack.c.b16 %v7366, %v7364
    %v7567 = vpack.c.b16 %v7367, %v7365
    %v7568 = vpack.c.b16 %v7370, %v7368
    %v7569 = vpack.c.b16 %v7371, %v7369
    %v7570 = vpack.c.b16 %v7374, %v7372
    %v7571 = vpack.c.b16 %v7375, %v7373
    %v7572 = vpack.c.b16 %v7378, %v7376
    %v7573 = vpack.c.b16 %v7379, %v7377
    %v7574 = vpack.c.b16 %v7382, %v7380
    %v7575 = vpack.c.b16 %v7383, %v7381
    %7768 = vmatprep.subr.bf16.mxu0 %v7399
    %7769 = vmatpush1.bf16.msra.mxu0 %v7398
    %7770 = vmatprep.subr.bf16.mxu0 %v7397
    %7771 = vmatpush1.bf16.msra.mxu0 %v7396
    %7772 = vmatprep.subr.bf16.mxu0 %v7395
    %7773 = vmatpush1.bf16.msra.mxu0 %v7394
    %7774 = vmatprep.subr.bf16.mxu0 %v7393
    %7775 = vmatpush1.bf16.msra.mxu0 %v7392
    %7776 = vmatprep.subr.bf16.mxu0 %v7391
    %7777 = vmatpush1.bf16.msra.mxu0 %v7390
    %7778 = vmatprep.subr.bf16.mxu0 %v7389
    %7779 = vmatpush1.bf16.msra.mxu0 %v7388
    %7780 = vmatprep.subr.bf16.mxu0 %v7387
    %7781 = vmatpush1.bf16.msra.mxu0 %v7386
    %7782 = vmatprep.subr.bf16.mxu0 %v7385
    %7783 = vmatpush1.bf16.msra.mxu0 %v7384
    %7784 = vmatprep.subr.bf16.mxu0 %v7415
    %7785 = vmatpush2.bf16.msra.mxu0 %v7414
    %7786 = vmatprep.subr.bf16.mxu0 %v7413
    %7787 = vmatpush2.bf16.msra.mxu0 %v7412
    %7788 = vmatprep.subr.bf16.mxu0 %v7411
    %7789 = vmatpush2.bf16.msra.mxu0 %v7410
    %7790 = vmatprep.subr.bf16.mxu0 %v7409
    %7791 = vmatpush2.bf16.msra.mxu0 %v7408
    %7792 = vmatprep.subr.bf16.mxu0 %v7407
    %7793 = vmatpush2.bf16.msra.mxu0 %v7406
    %7794 = vmatprep.subr.bf16.mxu0 %v7405
    %7795 = vmatpush2.bf16.msra.mxu0 %v7404
    %7796 = vmatprep.subr.bf16.mxu0 %v7403
    %7797 = vmatpush2.bf16.msra.mxu0 %v7402
    %7798 = vmatprep.subr.bf16.mxu0 %v7401
    %7799 = vmatpush2.bf16.msra.mxu0 %v7400
    %7800 = vmatprep.mubr.bf16.mxu0 %v6509
    %7801 = vmatmul.mubr.bf16.gmra.mxu0 %v6508
    %v7802 = vpop.f32.mrf.mxu0
    %v7803 = vadd.f32 %v6801, %v7802
    %v7804 = vpop.f32.mrf.mxu0
    %v7805 = vadd.f32 %v6805, %v7804
    %v7806 = vpop.f32.mrf.mxu0
    %v7807 = vadd.f32 %v6801, %v7806
    %v7808 = vpop.f32.mrf.mxu0
    %v7809 = vadd.f32 %v6805, %v7808
    %7810 = vmatprep.mubr.bf16.mxu0 %v6533
    %7811 = vmatmul.mubr.bf16.gmra.mxu0 %v6532
    %v7812 = vpop.f32.mrf.mxu0
    %v7813 = vadd.f32 %v6801, %v7812
    %v7814 = vpop.f32.mrf.mxu0
    %v7815 = vadd.f32 %v6805, %v7814
    %v7816 = vpop.f32.mrf.mxu0
    %v7817 = vadd.f32 %v6801, %v7816
    %v7818 = vpop.f32.mrf.mxu0
    %v7819 = vadd.f32 %v6805, %v7818
    %7820 = vmatprep.mubr.bf16.mxu0 %v6557
    %7821 = vmatmul.mubr.bf16.gmra.mxu0 %v6556
    %v7822 = vpop.f32.mrf.mxu0
    %v7823 = vadd.f32 %v6801, %v7822
    %v7824 = vpop.f32.mrf.mxu0
    %v7825 = vadd.f32 %v6805, %v7824
    %v7826 = vpop.f32.mrf.mxu0
    %v7827 = vadd.f32 %v6801, %v7826
    %v7828 = vpop.f32.mrf.mxu0
    %v7829 = vadd.f32 %v6805, %v7828
    %7830 = vmatprep.mubr.bf16.mxu0 %v6581
    %7831 = vmatmul.mubr.bf16.gmra.mxu0 %v6580
    %v7832 = vpop.f32.mrf.mxu0
    %v7833 = vadd.f32 %v6801, %v7832
    %v7834 = vpop.f32.mrf.mxu0
    %v7835 = vadd.f32 %v6805, %v7834
    %v7836 = vpop.f32.mrf.mxu0
    %v7837 = vadd.f32 %v6801, %v7836
    %v7838 = vpop.f32.mrf.mxu0
    %v7839 = vadd.f32 %v6805, %v7838
    %7840 = vdwg.mxu0
    %7841 = vmatprep.subr.bf16.mxu0 %v7431
    %7842 = vmatpush1.bf16.msra.mxu0 %v7430
    %7843 = vmatprep.subr.bf16.mxu0 %v7429
    %7844 = vmatpush1.bf16.msra.mxu0 %v7428
    %7845 = vmatprep.subr.bf16.mxu0 %v7427
    %7846 = vmatpush1.bf16.msra.mxu0 %v7426
    %7847 = vmatprep.subr.bf16.mxu0 %v7425
    %7848 = vmatpush1.bf16.msra.mxu0 %v7424
    %7849 = vmatprep.subr.bf16.mxu0 %v7423
    %7850 = vmatpush1.bf16.msra.mxu0 %v7422
    %7851 = vmatprep.subr.bf16.mxu0 %v7421
    %7852 = vmatpush1.bf16.msra.mxu0 %v7420
    %7853 = vmatprep.subr.bf16.mxu0 %v7419
    %7854 = vmatpush1.bf16.msra.mxu0 %v7418
    %7855 = vmatprep.subr.bf16.mxu0 %v7417
    %7856 = vmatpush1.bf16.msra.mxu0 %v7416
    %7857 = vmatprep.subr.bf16.mxu0 %v7447
    %7858 = vmatpush2.bf16.msra.mxu0 %v7446
    %7859 = vmatprep.subr.bf16.mxu0 %v7445
    %7860 = vmatpush2.bf16.msra.mxu0 %v7444
    %7861 = vmatprep.subr.bf16.mxu0 %v7443
    %7862 = vmatpush2.bf16.msra.mxu0 %v7442
    %7863 = vmatprep.subr.bf16.mxu0 %v7441
    %7864 = vmatpush2.bf16.msra.mxu0 %v7440
    %7865 = vmatprep.subr.bf16.mxu0 %v7439
    %7866 = vmatpush2.bf16.msra.mxu0 %v7438
    %7867 = vmatprep.subr.bf16.mxu0 %v7437
    %7868 = vmatpush2.bf16.msra.mxu0 %v7436
    %7869 = vmatprep.subr.bf16.mxu0 %v7435
    %7870 = vmatpush2.bf16.msra.mxu0 %v7434
    %7871 = vmatprep.subr.bf16.mxu0 %v7433
    %7872 = vmatpush2.bf16.msra.mxu0 %v7432
    %7873 = vmatprep.mubr.bf16.mxu0 %v6511
    %7874 = vmatmul.mubr.bf16.gmra.mxu0 %v6510
    %v7875 = vpop.f32.mrf.mxu0
    %v7876 = vadd.f32 %v7803, %v7875
    %v7877 = vpop.f32.mrf.mxu0
    %v7878 = vadd.f32 %v7805, %v7877
    %v7879 = vpop.f32.mrf.mxu0
    %v7880 = vadd.f32 %v7807, %v7879
    %v7881 = vpop.f32.mrf.mxu0
    %v7882 = vadd.f32 %v7809, %v7881
    %7883 = vmatprep.mubr.bf16.mxu0 %v6535
    %7884 = vmatmul.mubr.bf16.gmra.mxu0 %v6534
    %v7885 = vpop.f32.mrf.mxu0
    %v7886 = vadd.f32 %v7813, %v7885
    %v7887 = vpop.f32.mrf.mxu0
    %v7888 = vadd.f32 %v7815, %v7887
    %v7889 = vpop.f32.mrf.mxu0
    %v7890 = vadd.f32 %v7817, %v7889
    %v7891 = vpop.f32.mrf.mxu0
    %v7892 = vadd.f32 %v7819, %v7891
    %7893 = vmatprep.mubr.bf16.mxu0 %v6559
    %7894 = vmatmul.mubr.bf16.gmra.mxu0 %v6558
    %v7895 = vpop.f32.mrf.mxu0
    %v7896 = vadd.f32 %v7823, %v7895
    %v7897 = vpop.f32.mrf.mxu0
    %v7898 = vadd.f32 %v7825, %v7897
    %v7899 = vpop.f32.mrf.mxu0
    %v7900 = vadd.f32 %v7827, %v7899
    %v7901 = vpop.f32.mrf.mxu0
    %v7902 = vadd.f32 %v7829, %v7901
    %7903 = vmatprep.mubr.bf16.mxu0 %v6583
    %7904 = vmatmul.mubr.bf16.gmra.mxu0 %v6582
    %v7905 = vpop.f32.mrf.mxu0
    %v7906 = vadd.f32 %v7833, %v7905
    %v7907 = vpop.f32.mrf.mxu0
    %v7908 = vadd.f32 %v7835, %v7907
    %v7909 = vpop.f32.mrf.mxu0
    %v7910 = vadd.f32 %v7837, %v7909
    %v7911 = vpop.f32.mrf.mxu0
    %v7912 = vadd.f32 %v7839, %v7911
    %7913 = vdwg.mxu0
    %7914 = vmatprep.subr.bf16.mxu0 %v7463
    %7915 = vmatpush1.bf16.msra.mxu0 %v7462
    %7916 = vmatprep.subr.bf16.mxu0 %v7461
    %7917 = vmatpush1.bf16.msra.mxu0 %v7460
    %7918 = vmatprep.subr.bf16.mxu0 %v7459
    %7919 = vmatpush1.bf16.msra.mxu0 %v7458
    %7920 = vmatprep.subr.bf16.mxu0 %v7457
    %7921 = vmatpush1.bf16.msra.mxu0 %v7456
    %7922 = vmatprep.subr.bf16.mxu0 %v7455
    %7923 = vmatpush1.bf16.msra.mxu0 %v7454
    %7924 = vmatprep.subr.bf16.mxu0 %v7453
    %7925 = vmatpush1.bf16.msra.mxu0 %v7452
    %7926 = vmatprep.subr.bf16.mxu0 %v7451
    %7927 = vmatpush1.bf16.msra.mxu0 %v7450
    %7928 = vmatprep.subr.bf16.mxu0 %v7449
    %7929 = vmatpush1.bf16.msra.mxu0 %v7448
    %7930 = vmatprep.subr.bf16.mxu0 %v7479
    %7931 = vmatpush2.bf16.msra.mxu0 %v7478
    %7932 = vmatprep.subr.bf16.mxu0 %v7477
    %7933 = vmatpush2.bf16.msra.mxu0 %v7476
    %7934 = vmatprep.subr.bf16.mxu0 %v7475
    %7935 = vmatpush2.bf16.msra.mxu0 %v7474
    %7936 = vmatprep.subr.bf16.mxu0 %v7473
    %7937 = vmatpush2.bf16.msra.mxu0 %v7472
    %7938 = vmatprep.subr.bf16.mxu0 %v7471
    %7939 = vmatpush2.bf16.msra.mxu0 %v7470
    %7940 = vmatprep.subr.bf16.mxu0 %v7469
    %7941 = vmatpush2.bf16.msra.mxu0 %v7468
    %7942 = vmatprep.subr.bf16.mxu0 %v7467
    %7943 = vmatpush2.bf16.msra.mxu0 %v7466
    %7944 = vmatprep.subr.bf16.mxu0 %v7465
    %7945 = vmatpush2.bf16.msra.mxu0 %v7464
    %7946 = vmatprep.mubr.bf16.mxu0 %v6513
    %7947 = vmatmul.mubr.bf16.gmra.mxu0 %v6512
    %v7948 = vpop.f32.mrf.mxu0
    %v7949 = vadd.f32 %v7876, %v7948
    %v7950 = vpop.f32.mrf.mxu0
    %v7951 = vadd.f32 %v7878, %v7950
    %v7952 = vpop.f32.mrf.mxu0
    %v7953 = vadd.f32 %v7880, %v7952
    %v7954 = vpop.f32.mrf.mxu0
    %v7955 = vadd.f32 %v7882, %v7954
    %7956 = vmatprep.mubr.bf16.mxu0 %v6537
    %7957 = vmatmul.mubr.bf16.gmra.mxu0 %v6536
    %v7958 = vpop.f32.mrf.mxu0
    %v7959 = vadd.f32 %v7886, %v7958
    %v7960 = vpop.f32.mrf.mxu0
    %v7961 = vadd.f32 %v7888, %v7960
    %v7962 = vpop.f32.mrf.mxu0
    %v7963 = vadd.f32 %v7890, %v7962
    %v7964 = vpop.f32.mrf.mxu0
    %v7965 = vadd.f32 %v7892, %v7964
    %7966 = vmatprep.mubr.bf16.mxu0 %v6561
    %7967 = vmatmul.mubr.bf16.gmra.mxu0 %v6560
    %v7968 = vpop.f32.mrf.mxu0
    %v7969 = vadd.f32 %v7896, %v7968
    %v7970 = vpop.f32.mrf.mxu0
    %v7971 = vadd.f32 %v7898, %v7970
    %v7972 = vpop.f32.mrf.mxu0
    %v7973 = vadd.f32 %v7900, %v7972
    %v7974 = vpop.f32.mrf.mxu0
    %v7975 = vadd.f32 %v7902, %v7974
    %7976 = vmatprep.mubr.bf16.mxu0 %v6585
    %7977 = vmatmul.mubr.bf16.gmra.mxu0 %v6584
    %v7978 = vpop.f32.mrf.mxu0
    %v7979 = vadd.f32 %v7906, %v7978
    %v7980 = vpop.f32.mrf.mxu0
    %v7981 = vadd.f32 %v7908, %v7980
    %v7982 = vpop.f32.mrf.mxu0
    %v7983 = vadd.f32 %v7910, %v7982
    %v7984 = vpop.f32.mrf.mxu0
    %v7985 = vadd.f32 %v7912, %v7984
    %7986 = vdwg.mxu0
    %7987 = vmatprep.subr.bf16.mxu0 %v7495
    %7988 = vmatpush1.bf16.msra.mxu0 %v7494
    %7989 = vmatprep.subr.bf16.mxu0 %v7493
    %7990 = vmatpush1.bf16.msra.mxu0 %v7492
    %7991 = vmatprep.subr.bf16.mxu0 %v7491
    %7992 = vmatpush1.bf16.msra.mxu0 %v7490
    %7993 = vmatprep.subr.bf16.mxu0 %v7489
    %7994 = vmatpush1.bf16.msra.mxu0 %v7488
    %7995 = vmatprep.subr.bf16.mxu0 %v7487
    %7996 = vmatpush1.bf16.msra.mxu0 %v7486
    %7997 = vmatprep.subr.bf16.mxu0 %v7485
    %7998 = vmatpush1.bf16.msra.mxu0 %v7484
    %7999 = vmatprep.subr.bf16.mxu0 %v7483
    %8000 = vmatpush1.bf16.msra.mxu0 %v7482
    %8001 = vmatprep.subr.bf16.mxu0 %v7481
    %8002 = vmatpush1.bf16.msra.mxu0 %v7480
    %8003 = vmatprep.subr.bf16.mxu0 %v7511
    %8004 = vmatpush2.bf16.msra.mxu0 %v7510
    %8005 = vmatprep.subr.bf16.mxu0 %v7509
    %8006 = vmatpush2.bf16.msra.mxu0 %v7508
    %8007 = vmatprep.subr.bf16.mxu0 %v7507
    %8008 = vmatpush2.bf16.msra.mxu0 %v7506
    %8009 = vmatprep.subr.bf16.mxu0 %v7505
    %8010 = vmatpush2.bf16.msra.mxu0 %v7504
    %8011 = vmatprep.subr.bf16.mxu0 %v7503
    %8012 = vmatpush2.bf16.msra.mxu0 %v7502
    %8013 = vmatprep.subr.bf16.mxu0 %v7501
    %8014 = vmatpush2.bf16.msra.mxu0 %v7500
    %8015 = vmatprep.subr.bf16.mxu0 %v7499
    %8016 = vmatpush2.bf16.msra.mxu0 %v7498
    %8017 = vmatprep.subr.bf16.mxu0 %v7497
    %8018 = vmatpush2.bf16.msra.mxu0 %v7496
    %8019 = vmatprep.mubr.bf16.mxu0 %v6515
    %8020 = vmatmul.mubr.bf16.gmra.mxu0 %v6514
    %v8021 = vpop.f32.mrf.mxu0
    %v8022 = vadd.f32 %v7949, %v8021
    %v8023 = vpop.f32.mrf.mxu0
    %v8024 = vadd.f32 %v7951, %v8023
    %v8025 = vpop.f32.mrf.mxu0
    %v8026 = vadd.f32 %v7953, %v8025
    %v8027 = vpop.f32.mrf.mxu0
    %v8028 = vadd.f32 %v7955, %v8027
    %8029 = vmatprep.mubr.bf16.mxu0 %v6539
    %8030 = vmatmul.mubr.bf16.gmra.mxu0 %v6538
    %v8031 = vpop.f32.mrf.mxu0
    %v8032 = vadd.f32 %v7959, %v8031
    %v8033 = vpop.f32.mrf.mxu0
    %v8034 = vadd.f32 %v7961, %v8033
    %v8035 = vpop.f32.mrf.mxu0
    %v8036 = vadd.f32 %v7963, %v8035
    %v8037 = vpop.f32.mrf.mxu0
    %v8038 = vadd.f32 %v7965, %v8037
    %8039 = vmatprep.mubr.bf16.mxu0 %v6563
    %8040 = vmatmul.mubr.bf16.gmra.mxu0 %v6562
    %v8041 = vpop.f32.mrf.mxu0
    %v8042 = vadd.f32 %v7969, %v8041
    %v8043 = vpop.f32.mrf.mxu0
    %v8044 = vadd.f32 %v7971, %v8043
    %v8045 = vpop.f32.mrf.mxu0
    %v8046 = vadd.f32 %v7973, %v8045
    %v8047 = vpop.f32.mrf.mxu0
    %v8048 = vadd.f32 %v7975, %v8047
    %8049 = vmatprep.mubr.bf16.mxu0 %v6587
    %8050 = vmatmul.mubr.bf16.gmra.mxu0 %v6586
    %v8051 = vpop.f32.mrf.mxu0
    %v8052 = vadd.f32 %v7979, %v8051
    %v8053 = vpop.f32.mrf.mxu0
    %v8054 = vadd.f32 %v7981, %v8053
    %v8055 = vpop.f32.mrf.mxu0
    %v8056 = vadd.f32 %v7983, %v8055
    %v8057 = vpop.f32.mrf.mxu0
    %v8058 = vadd.f32 %v7985, %v8057
    %8059 = vdwg.mxu0
    %8060 = vmatprep.subr.bf16.mxu0 %v7527
    %8061 = vmatpush1.bf16.msra.mxu0 %v7526
    %8062 = vmatprep.subr.bf16.mxu0 %v7525
    %8063 = vmatpush1.bf16.msra.mxu0 %v7524
    %8064 = vmatprep.subr.bf16.mxu0 %v7523
    %8065 = vmatpush1.bf16.msra.mxu0 %v7522
    %8066 = vmatprep.subr.bf16.mxu0 %v7521
    %8067 = vmatpush1.bf16.msra.mxu0 %v7520
    %8068 = vmatprep.subr.bf16.mxu0 %v7519
    %8069 = vmatpush1.bf16.msra.mxu0 %v7518
    %8070 = vmatprep.subr.bf16.mxu0 %v7517
    %8071 = vmatpush1.bf16.msra.mxu0 %v7516
    %8072 = vmatprep.subr.bf16.mxu0 %v7515
    %8073 = vmatpush1.bf16.msra.mxu0 %v7514
    %8074 = vmatprep.subr.bf16.mxu0 %v7513
    %8075 = vmatpush1.bf16.msra.mxu0 %v7512
    %8076 = vmatprep.subr.bf16.mxu0 %v7543
    %8077 = vmatpush2.bf16.msra.mxu0 %v7542
    %8078 = vmatprep.subr.bf16.mxu0 %v7541
    %8079 = vmatpush2.bf16.msra.mxu0 %v7540
    %8080 = vmatprep.subr.bf16.mxu0 %v7539
    %8081 = vmatpush2.bf16.msra.mxu0 %v7538
    %8082 = vmatprep.subr.bf16.mxu0 %v7537
    %8083 = vmatpush2.bf16.msra.mxu0 %v7536
    %8084 = vmatprep.subr.bf16.mxu0 %v7535
    %8085 = vmatpush2.bf16.msra.mxu0 %v7534
    %8086 = vmatprep.subr.bf16.mxu0 %v7533
    %8087 = vmatpush2.bf16.msra.mxu0 %v7532
    %8088 = vmatprep.subr.bf16.mxu0 %v7531
    %8089 = vmatpush2.bf16.msra.mxu0 %v7530
    %8090 = vmatprep.subr.bf16.mxu0 %v7529
    %8091 = vmatpush2.bf16.msra.mxu0 %v7528
    %8092 = vmatprep.mubr.bf16.mxu0 %v6517
    %8093 = vmatmul.mubr.bf16.gmra.mxu0 %v6516
    %v8094 = vpop.f32.mrf.mxu0
    %v8095 = vadd.f32 %v8022, %v8094
    %v8096 = vpop.f32.mrf.mxu0
    %v8097 = vadd.f32 %v8024, %v8096
    %v8098 = vpop.f32.mrf.mxu0
    %v8099 = vadd.f32 %v8026, %v8098
    %v8100 = vpop.f32.mrf.mxu0
    %v8101 = vadd.f32 %v8028, %v8100
    %8102 = vmatprep.mubr.bf16.mxu0 %v6541
    %8103 = vmatmul.mubr.bf16.gmra.mxu0 %v6540
    %v8104 = vpop.f32.mrf.mxu0
    %v8105 = vadd.f32 %v8032, %v8104
    %v8106 = vpop.f32.mrf.mxu0
    %v8107 = vadd.f32 %v8034, %v8106
    %v8108 = vpop.f32.mrf.mxu0
    %v8109 = vadd.f32 %v8036, %v8108
    %v8110 = vpop.f32.mrf.mxu0
    %v8111 = vadd.f32 %v8038, %v8110
    %8112 = vmatprep.mubr.bf16.mxu0 %v6565
    %8113 = vmatmul.mubr.bf16.gmra.mxu0 %v6564
    %v8114 = vpop.f32.mrf.mxu0
    %v8115 = vadd.f32 %v8042, %v8114
    %v8116 = vpop.f32.mrf.mxu0
    %v8117 = vadd.f32 %v8044, %v8116
    %v8118 = vpop.f32.mrf.mxu0
    %v8119 = vadd.f32 %v8046, %v8118
    %v8120 = vpop.f32.mrf.mxu0
    %v8121 = vadd.f32 %v8048, %v8120
    %8122 = vmatprep.mubr.bf16.mxu0 %v6589
    %8123 = vmatmul.mubr.bf16.gmra.mxu0 %v6588
    %v8124 = vpop.f32.mrf.mxu0
    %v8125 = vadd.f32 %v8052, %v8124
    %v8126 = vpop.f32.mrf.mxu0
    %v8127 = vadd.f32 %v8054, %v8126
    %v8128 = vpop.f32.mrf.mxu0
    %v8129 = vadd.f32 %v8056, %v8128
    %v8130 = vpop.f32.mrf.mxu0
    %v8131 = vadd.f32 %v8058, %v8130
    %8132 = vdwg.mxu0
    %8133 = vmatprep.subr.bf16.mxu0 %v7559
    %8134 = vmatpush1.bf16.msra.mxu0 %v7558
    %8135 = vmatprep.subr.bf16.mxu0 %v7557
    %8136 = vmatpush1.bf16.msra.mxu0 %v7556
    %8137 = vmatprep.subr.bf16.mxu0 %v7555
    %8138 = vmatpush1.bf16.msra.mxu0 %v7554
    %8139 = vmatprep.subr.bf16.mxu0 %v7553
    %8140 = vmatpush1.bf16.msra.mxu0 %v7552
    %8141 = vmatprep.subr.bf16.mxu0 %v7551
    %8142 = vmatpush1.bf16.msra.mxu0 %v7550
    %8143 = vmatprep.subr.bf16.mxu0 %v7549
    %8144 = vmatpush1.bf16.msra.mxu0 %v7548
    %8145 = vmatprep.subr.bf16.mxu0 %v7547
    %8146 = vmatpush1.bf16.msra.mxu0 %v7546
    %8147 = vmatprep.subr.bf16.mxu0 %v7545
    %8148 = vmatpush1.bf16.msra.mxu0 %v7544
    %8149 = vmatprep.subr.bf16.mxu0 %v7575
    %8150 = vmatpush2.bf16.msra.mxu0 %v7574
    %8151 = vmatprep.subr.bf16.mxu0 %v7573
    %8152 = vmatpush2.bf16.msra.mxu0 %v7572
    %8153 = vmatprep.subr.bf16.mxu0 %v7571
    %8154 = vmatpush2.bf16.msra.mxu0 %v7570
    %8155 = vmatprep.subr.bf16.mxu0 %v7569
    %8156 = vmatpush2.bf16.msra.mxu0 %v7568
    %8157 = vmatprep.subr.bf16.mxu0 %v7567
    %8158 = vmatpush2.bf16.msra.mxu0 %v7566
    %8159 = vmatprep.subr.bf16.mxu0 %v7565
    %8160 = vmatpush2.bf16.msra.mxu0 %v7564
    %8161 = vmatprep.subr.bf16.mxu0 %v7563
    %8162 = vmatpush2.bf16.msra.mxu0 %v7562
    %8163 = vmatprep.subr.bf16.mxu0 %v7561
    %8164 = vmatpush2.bf16.msra.mxu0 %v7560
    %8165 = vmatprep.mubr.bf16.mxu0 %v6519
    %8166 = vmatmul.mubr.bf16.gmra.mxu0 %v6518
    %v8167 = vpop.f32.mrf.mxu0
    %v8168 = vadd.f32 %v8095, %v8167
    %v8169 = vpop.f32.mrf.mxu0
    %v8170 = vadd.f32 %v8097, %v8169
    %v8171 = vpop.f32.mrf.mxu0
    %v8172 = vadd.f32 %v8099, %v8171
    %v8173 = vpop.f32.mrf.mxu0
    %v8174 = vadd.f32 %v8101, %v8173
    %8175 = vmatprep.mubr.bf16.mxu0 %v6543
    %8176 = vmatmul.mubr.bf16.gmra.mxu0 %v6542
    %v8177 = vpop.f32.mrf.mxu0
    %v8178 = vadd.f32 %v8105, %v8177
    %v8179 = vpop.f32.mrf.mxu0
    %v8180 = vadd.f32 %v8107, %v8179
    %v8181 = vpop.f32.mrf.mxu0
    %v8182 = vadd.f32 %v8109, %v8181
    %v8183 = vpop.f32.mrf.mxu0
    %v8184 = vadd.f32 %v8111, %v8183
    %8185 = vmatprep.mubr.bf16.mxu0 %v6567
    %8186 = vmatmul.mubr.bf16.gmra.mxu0 %v6566
    %v8187 = vpop.f32.mrf.mxu0
    %v8188 = vadd.f32 %v8115, %v8187
    %v8189 = vpop.f32.mrf.mxu0
    %v8190 = vadd.f32 %v8117, %v8189
    %v8191 = vpop.f32.mrf.mxu0
    %v8192 = vadd.f32 %v8119, %v8191
    %v8193 = vpop.f32.mrf.mxu0
    %v8194 = vadd.f32 %v8121, %v8193
    %8195 = vmatprep.mubr.bf16.mxu0 %v6591
    %8196 = vmatmul.mubr.bf16.gmra.mxu0 %v6590
    %v8197 = vpop.f32.mrf.mxu0
    %v8198 = vadd.f32 %v8125, %v8197
    %v8199 = vpop.f32.mrf.mxu0
    %v8200 = vadd.f32 %v8127, %v8199
    %v8201 = vpop.f32.mrf.mxu0
    %v8202 = vadd.f32 %v8129, %v8201
    %v8203 = vpop.f32.mrf.mxu0
    %v8204 = vadd.f32 %v8131, %v8203
    %8205 = vdwg.mxu0
    %v8206 = vld [vmem:[#allocation13] sm:$0xff]
    %v8207 = vld [vmem:[#allocation13 + $0x8] sm:$0xff]
    %v8208 = vld [vmem:[#allocation13 + $0x10] sm:$0xff]
    %v8209 = vld [vmem:[#allocation13 + $0x18] sm:$0xff]
    %v8210 = vld [vmem:[#allocation13 + $0x20] sm:$0xff]
    %v8211 = vld [vmem:[#allocation13 + $0x28] sm:$0xff]
    %v8212 = vld [vmem:[#allocation13 + $0x30] sm:$0xff]
    %v8213 = vld [vmem:[#allocation13 + $0x38] sm:$0xff]
    %v8214 = vld [vmem:[#allocation13 + $0x40] sm:$0xff]
    %v8215 = vld [vmem:[#allocation13 + $0x48] sm:$0xff]
    %v8216 = vld [vmem:[#allocation13 + $0x50] sm:$0xff]
    %v8217 = vld [vmem:[#allocation13 + $0x58] sm:$0xff]
    %v8218 = vld [vmem:[#allocation13 + $0x60] sm:$0xff]
    %v8219 = vld [vmem:[#allocation13 + $0x68] sm:$0xff]
    %v8220 = vld [vmem:[#allocation13 + $0x70] sm:$0xff]
    %v8221 = vld [vmem:[#allocation13 + $0x78] sm:$0xff]
    %v8222 = vld [vmem:[#allocation13 + $0x80] sm:$0xff]
    %v8223 = vld [vmem:[#allocation13 + $0x88] sm:$0xff]
    %v8224 = vld [vmem:[#allocation13 + $0x90] sm:$0xff]
    %v8225 = vld [vmem:[#allocation13 + $0x98] sm:$0xff]
    %v8226 = vld [vmem:[#allocation13 + $0xa0] sm:$0xff]
    %v8227 = vld [vmem:[#allocation13 + $0xa8] sm:$0xff]
    %v8228 = vld [vmem:[#allocation13 + $0xb0] sm:$0xff]
    %v8229 = vld [vmem:[#allocation13 + $0xb8] sm:$0xff]
    %v8230 = vld [vmem:[#allocation13 + $0xc0] sm:$0xff]
    %v8231 = vld [vmem:[#allocation13 + $0xc8] sm:$0xff]
    %v8232 = vld [vmem:[#allocation13 + $0xd0] sm:$0xff]
    %v8233 = vld [vmem:[#allocation13 + $0xd8] sm:$0xff]
    %v8234 = vld [vmem:[#allocation13 + $0xe0] sm:$0xff]
    %v8235 = vld [vmem:[#allocation13 + $0xe8] sm:$0xff]
    %v8236 = vld [vmem:[#allocation13 + $0xf0] sm:$0xff]
    %v8237 = vld [vmem:[#allocation13 + $0xf8] sm:$0xff]
    %v8238 = vld [vmem:[#allocation13 + $0x100] sm:$0xff]
    %v8239 = vld [vmem:[#allocation13 + $0x108] sm:$0xff]
    %v8240 = vld [vmem:[#allocation13 + $0x110] sm:$0xff]
    %v8241 = vld [vmem:[#allocation13 + $0x118] sm:$0xff]
    %v8242 = vld [vmem:[#allocation13 + $0x120] sm:$0xff]
    %v8243 = vld [vmem:[#allocation13 + $0x128] sm:$0xff]
    %v8244 = vld [vmem:[#allocation13 + $0x130] sm:$0xff]
    %v8245 = vld [vmem:[#allocation13 + $0x138] sm:$0xff]
    %v8246 = vld [vmem:[#allocation13 + $0x140] sm:$0xff]
    %v8247 = vld [vmem:[#allocation13 + $0x148] sm:$0xff]
    %v8248 = vld [vmem:[#allocation13 + $0x150] sm:$0xff]
    %v8249 = vld [vmem:[#allocation13 + $0x158] sm:$0xff]
    %v8250 = vld [vmem:[#allocation13 + $0x160] sm:$0xff]
    %v8251 = vld [vmem:[#allocation13 + $0x168] sm:$0xff]
    %v8252 = vld [vmem:[#allocation13 + $0x170] sm:$0xff]
    %v8253 = vld [vmem:[#allocation13 + $0x178] sm:$0xff]
    %v8254 = vld [vmem:[#allocation13 + $0x180] sm:$0xff]
    %v8255 = vld [vmem:[#allocation13 + $0x188] sm:$0xff]
    %v8256 = vld [vmem:[#allocation13 + $0x190] sm:$0xff]
    %v8257 = vld [vmem:[#allocation13 + $0x198] sm:$0xff]
    %v8258 = vld [vmem:[#allocation13 + $0x1a0] sm:$0xff]
    %v8259 = vld [vmem:[#allocation13 + $0x1a8] sm:$0xff]
    %v8260 = vld [vmem:[#allocation13 + $0x1b0] sm:$0xff]
    %v8261 = vld [vmem:[#allocation13 + $0x1b8] sm:$0xff]
    %v8262 = vld [vmem:[#allocation13 + $0x1c0] sm:$0xff]
    %v8263 = vld [vmem:[#allocation13 + $0x1c8] sm:$0xff]
    %v8264 = vld [vmem:[#allocation13 + $0x1d0] sm:$0xff]
    %v8265 = vld [vmem:[#allocation13 + $0x1d8] sm:$0xff]
    %v8266 = vld [vmem:[#allocation13 + $0x1e0] sm:$0xff]
    %v8267 = vld [vmem:[#allocation13 + $0x1e8] sm:$0xff]
    %v8268 = vld [vmem:[#allocation13 + $0x1f0] sm:$0xff]
    %v8269 = vld [vmem:[#allocation13 + $0x1f8] sm:$0xff]
    %v8270 = vld [vmem:[#allocation13 + $0x200] sm:$0xff]
    %v8271 = vld [vmem:[#allocation13 + $0x208] sm:$0xff]
    %v8272 = vld [vmem:[#allocation13 + $0x210] sm:$0xff]
    %v8273 = vld [vmem:[#allocation13 + $0x218] sm:$0xff]
    %v8274 = vld [vmem:[#allocation13 + $0x220] sm:$0xff]
    %v8275 = vld [vmem:[#allocation13 + $0x228] sm:$0xff]
    %v8276 = vld [vmem:[#allocation13 + $0x230] sm:$0xff]
    %v8277 = vld [vmem:[#allocation13 + $0x238] sm:$0xff]
    %v8278 = vld [vmem:[#allocation13 + $0x240] sm:$0xff]
    %v8279 = vld [vmem:[#allocation13 + $0x248] sm:$0xff]
    %v8280 = vld [vmem:[#allocation13 + $0x250] sm:$0xff]
    %v8281 = vld [vmem:[#allocation13 + $0x258] sm:$0xff]
    %v8282 = vld [vmem:[#allocation13 + $0x260] sm:$0xff]
    %v8283 = vld [vmem:[#allocation13 + $0x268] sm:$0xff]
    %v8284 = vld [vmem:[#allocation13 + $0x270] sm:$0xff]
    %v8285 = vld [vmem:[#allocation13 + $0x278] sm:$0xff]
    %v8286 = vld [vmem:[#allocation13 + $0x280] sm:$0xff]
    %v8287 = vld [vmem:[#allocation13 + $0x288] sm:$0xff]
    %v8288 = vld [vmem:[#allocation13 + $0x290] sm:$0xff]
    %v8289 = vld [vmem:[#allocation13 + $0x298] sm:$0xff]
    %v8290 = vld [vmem:[#allocation13 + $0x2a0] sm:$0xff]
    %v8291 = vld [vmem:[#allocation13 + $0x2a8] sm:$0xff]
    %v8292 = vld [vmem:[#allocation13 + $0x2b0] sm:$0xff]
    %v8293 = vld [vmem:[#allocation13 + $0x2b8] sm:$0xff]
    %v8294 = vld [vmem:[#allocation13 + $0x2c0] sm:$0xff]
    %v8295 = vld [vmem:[#allocation13 + $0x2c8] sm:$0xff]
    %v8296 = vld [vmem:[#allocation13 + $0x2d0] sm:$0xff]
    %v8297 = vld [vmem:[#allocation13 + $0x2d8] sm:$0xff]
    %v8298 = vld [vmem:[#allocation13 + $0x2e0] sm:$0xff]
    %v8299 = vld [vmem:[#allocation13 + $0x2e8] sm:$0xff]
    %v8300 = vld [vmem:[#allocation13 + $0x2f0] sm:$0xff]
    %v8301 = vld [vmem:[#allocation13 + $0x2f8] sm:$0xff]
    %v8302 = vld [vmem:[#allocation13 + $0x300] sm:$0xff]
    %v8303 = vld [vmem:[#allocation13 + $0x308] sm:$0xff]
    %v8304 = vld [vmem:[#allocation13 + $0x310] sm:$0xff]
    %v8305 = vld [vmem:[#allocation13 + $0x318] sm:$0xff]
    %v8306 = vld [vmem:[#allocation13 + $0x320] sm:$0xff]
    %v8307 = vld [vmem:[#allocation13 + $0x328] sm:$0xff]
    %v8308 = vld [vmem:[#allocation13 + $0x330] sm:$0xff]
    %v8309 = vld [vmem:[#allocation13 + $0x338] sm:$0xff]
    %v8310 = vld [vmem:[#allocation13 + $0x340] sm:$0xff]
    %v8311 = vld [vmem:[#allocation13 + $0x348] sm:$0xff]
    %v8312 = vld [vmem:[#allocation13 + $0x350] sm:$0xff]
    %v8313 = vld [vmem:[#allocation13 + $0x358] sm:$0xff]
    %v8314 = vld [vmem:[#allocation13 + $0x360] sm:$0xff]
    %v8315 = vld [vmem:[#allocation13 + $0x368] sm:$0xff]
    %v8316 = vld [vmem:[#allocation13 + $0x370] sm:$0xff]
    %v8317 = vld [vmem:[#allocation13 + $0x378] sm:$0xff]
    %v8318 = vld [vmem:[#allocation13 + $0x380] sm:$0xff]
    %v8319 = vld [vmem:[#allocation13 + $0x388] sm:$0xff]
    %v8320 = vld [vmem:[#allocation13 + $0x390] sm:$0xff]
    %v8321 = vld [vmem:[#allocation13 + $0x398] sm:$0xff]
    %v8322 = vld [vmem:[#allocation13 + $0x3a0] sm:$0xff]
    %v8323 = vld [vmem:[#allocation13 + $0x3a8] sm:$0xff]
    %v8324 = vld [vmem:[#allocation13 + $0x3b0] sm:$0xff]
    %v8325 = vld [vmem:[#allocation13 + $0x3b8] sm:$0xff]
    %v8326 = vld [vmem:[#allocation13 + $0x3c0] sm:$0xff]
    %v8327 = vld [vmem:[#allocation13 + $0x3c8] sm:$0xff]
    %v8328 = vld [vmem:[#allocation13 + $0x3d0] sm:$0xff]
    %v8329 = vld [vmem:[#allocation13 + $0x3d8] sm:$0xff]
    %v8330 = vld [vmem:[#allocation13 + $0x3e0] sm:$0xff]
    %v8331 = vld [vmem:[#allocation13 + $0x3e8] sm:$0xff]
    %v8332 = vld [vmem:[#allocation13 + $0x3f0] sm:$0xff]
    %v8333 = vld [vmem:[#allocation13 + $0x3f8] sm:$0xff]
    %v8334 = vld [vmem:[#allocation13 + $0x400] sm:$0xff]
    %v8335 = vld [vmem:[#allocation13 + $0x408] sm:$0xff]
    %v8336 = vld [vmem:[#allocation13 + $0x410] sm:$0xff]
    %v8337 = vld [vmem:[#allocation13 + $0x418] sm:$0xff]
    %v8338 = vld [vmem:[#allocation13 + $0x420] sm:$0xff]
    %v8339 = vld [vmem:[#allocation13 + $0x428] sm:$0xff]
    %v8340 = vld [vmem:[#allocation13 + $0x430] sm:$0xff]
    %v8341 = vld [vmem:[#allocation13 + $0x438] sm:$0xff]
    %v8342 = vld [vmem:[#allocation13 + $0x440] sm:$0xff]
    %v8343 = vld [vmem:[#allocation13 + $0x448] sm:$0xff]
    %v8344 = vld [vmem:[#allocation13 + $0x450] sm:$0xff]
    %v8345 = vld [vmem:[#allocation13 + $0x458] sm:$0xff]
    %v8346 = vld [vmem:[#allocation13 + $0x460] sm:$0xff]
    %v8347 = vld [vmem:[#allocation13 + $0x468] sm:$0xff]
    %v8348 = vld [vmem:[#allocation13 + $0x470] sm:$0xff]
    %v8349 = vld [vmem:[#allocation13 + $0x478] sm:$0xff]
    %v8350 = vld [vmem:[#allocation13 + $0x480] sm:$0xff]
    %v8351 = vld [vmem:[#allocation13 + $0x488] sm:$0xff]
    %v8352 = vld [vmem:[#allocation13 + $0x490] sm:$0xff]
    %v8353 = vld [vmem:[#allocation13 + $0x498] sm:$0xff]
    %v8354 = vld [vmem:[#allocation13 + $0x4a0] sm:$0xff]
    %v8355 = vld [vmem:[#allocation13 + $0x4a8] sm:$0xff]
    %v8356 = vld [vmem:[#allocation13 + $0x4b0] sm:$0xff]
    %v8357 = vld [vmem:[#allocation13 + $0x4b8] sm:$0xff]
    %v8358 = vld [vmem:[#allocation13 + $0x4c0] sm:$0xff]
    %v8359 = vld [vmem:[#allocation13 + $0x4c8] sm:$0xff]
    %v8360 = vld [vmem:[#allocation13 + $0x4d0] sm:$0xff]
    %v8361 = vld [vmem:[#allocation13 + $0x4d8] sm:$0xff]
    %v8362 = vld [vmem:[#allocation13 + $0x4e0] sm:$0xff]
    %v8363 = vld [vmem:[#allocation13 + $0x4e8] sm:$0xff]
    %v8364 = vld [vmem:[#allocation13 + $0x4f0] sm:$0xff]
    %v8365 = vld [vmem:[#allocation13 + $0x4f8] sm:$0xff]
    %v8366 = vld [vmem:[#allocation13 + $0x500] sm:$0xff]
    %v8367 = vld [vmem:[#allocation13 + $0x508] sm:$0xff]
    %v8368 = vld [vmem:[#allocation13 + $0x510] sm:$0xff]
    %v8369 = vld [vmem:[#allocation13 + $0x518] sm:$0xff]
    %v8370 = vld [vmem:[#allocation13 + $0x520] sm:$0xff]
    %v8371 = vld [vmem:[#allocation13 + $0x528] sm:$0xff]
    %v8372 = vld [vmem:[#allocation13 + $0x530] sm:$0xff]
    %v8373 = vld [vmem:[#allocation13 + $0x538] sm:$0xff]
    %v8374 = vld [vmem:[#allocation13 + $0x540] sm:$0xff]
    %v8375 = vld [vmem:[#allocation13 + $0x548] sm:$0xff]
    %v8376 = vld [vmem:[#allocation13 + $0x550] sm:$0xff]
    %v8377 = vld [vmem:[#allocation13 + $0x558] sm:$0xff]
    %v8378 = vld [vmem:[#allocation13 + $0x560] sm:$0xff]
    %v8379 = vld [vmem:[#allocation13 + $0x568] sm:$0xff]
    %v8380 = vld [vmem:[#allocation13 + $0x570] sm:$0xff]
    %v8381 = vld [vmem:[#allocation13 + $0x578] sm:$0xff]
    %v8382 = vld [vmem:[#allocation13 + $0x580] sm:$0xff]
    %v8383 = vld [vmem:[#allocation13 + $0x588] sm:$0xff]
    %v8384 = vld [vmem:[#allocation13 + $0x590] sm:$0xff]
    %v8385 = vld [vmem:[#allocation13 + $0x598] sm:$0xff]
    %v8386 = vld [vmem:[#allocation13 + $0x5a0] sm:$0xff]
    %v8387 = vld [vmem:[#allocation13 + $0x5a8] sm:$0xff]
    %v8388 = vld [vmem:[#allocation13 + $0x5b0] sm:$0xff]
    %v8389 = vld [vmem:[#allocation13 + $0x5b8] sm:$0xff]
    %v8390 = vld [vmem:[#allocation13 + $0x5c0] sm:$0xff]
    %v8391 = vld [vmem:[#allocation13 + $0x5c8] sm:$0xff]
    %v8392 = vld [vmem:[#allocation13 + $0x5d0] sm:$0xff]
    %v8393 = vld [vmem:[#allocation13 + $0x5d8] sm:$0xff]
    %v8394 = vld [vmem:[#allocation13 + $0x5e0] sm:$0xff]
    %v8395 = vld [vmem:[#allocation13 + $0x5e8] sm:$0xff]
    %v8396 = vld [vmem:[#allocation13 + $0x5f0] sm:$0xff]
    %v8397 = vld [vmem:[#allocation13 + $0x5f8] sm:$0xff]
    %v8398 = vld [vmem:[#allocation15] sm:$0x3]
    %v8400 = vlaneseq
    %v8401 = vshrl.u32 %v8400, 7
    %v8402 = vsub.s32 0, %v8401
    %v8403 = vrot.slane %v8398, %v8402
    %v8404 = vlaneseq
    %v8405 = vshrl.u32 %v8404, 7
    %v8406 = vsub.s32 1, %v8405
    %v8407 = vrot.slane %v8398, %v8406
    %v8602 = vunpack.c.l.b16 %v8206
    %v8603 = vunpack.c.h.b16 %v8206
    %v8604 = vunpack.c.l.b16 %v8207
    %v8605 = vunpack.c.h.b16 %v8207
    %v8606 = vunpack.c.l.b16 %v8208
    %v8607 = vunpack.c.h.b16 %v8208
    %v8608 = vunpack.c.l.b16 %v8209
    %v8609 = vunpack.c.h.b16 %v8209
    %v8610 = vunpack.c.l.b16 %v8210
    %v8611 = vunpack.c.h.b16 %v8210
    %v8612 = vunpack.c.l.b16 %v8211
    %v8613 = vunpack.c.h.b16 %v8211
    %v8614 = vunpack.c.l.b16 %v8212
    %v8615 = vunpack.c.h.b16 %v8212
    %v8616 = vunpack.c.l.b16 %v8213
    %v8617 = vunpack.c.h.b16 %v8213
    %v8618 = vunpack.c.l.b16 %v8214
    %v8619 = vunpack.c.h.b16 %v8214
    %v8620 = vunpack.c.l.b16 %v8215
    %v8621 = vunpack.c.h.b16 %v8215
    %v8622 = vunpack.c.l.b16 %v8216
    %v8623 = vunpack.c.h.b16 %v8216
    %v8624 = vunpack.c.l.b16 %v8217
    %v8625 = vunpack.c.h.b16 %v8217
    %v8626 = vunpack.c.l.b16 %v8218
    %v8627 = vunpack.c.h.b16 %v8218
    %v8628 = vunpack.c.l.b16 %v8219
    %v8629 = vunpack.c.h.b16 %v8219
    %v8630 = vunpack.c.l.b16 %v8220
    %v8631 = vunpack.c.h.b16 %v8220
    %v8632 = vunpack.c.l.b16 %v8221
    %v8633 = vunpack.c.h.b16 %v8221
    %v8634 = vunpack.c.l.b16 %v8222
    %v8635 = vunpack.c.h.b16 %v8222
    %v8636 = vunpack.c.l.b16 %v8223
    %v8637 = vunpack.c.h.b16 %v8223
    %v8638 = vunpack.c.l.b16 %v8224
    %v8639 = vunpack.c.h.b16 %v8224
    %v8640 = vunpack.c.l.b16 %v8225
    %v8641 = vunpack.c.h.b16 %v8225
    %v8642 = vunpack.c.l.b16 %v8226
    %v8643 = vunpack.c.h.b16 %v8226
    %v8644 = vunpack.c.l.b16 %v8227
    %v8645 = vunpack.c.h.b16 %v8227
    %v8646 = vunpack.c.l.b16 %v8228
    %v8647 = vunpack.c.h.b16 %v8228
    %v8648 = vunpack.c.l.b16 %v8229
    %v8649 = vunpack.c.h.b16 %v8229
    %v8650 = vunpack.c.l.b16 %v8230
    %v8651 = vunpack.c.h.b16 %v8230
    %v8652 = vunpack.c.l.b16 %v8231
    %v8653 = vunpack.c.h.b16 %v8231
    %v8654 = vunpack.c.l.b16 %v8232
    %v8655 = vunpack.c.h.b16 %v8232
    %v8656 = vunpack.c.l.b16 %v8233
    %v8657 = vunpack.c.h.b16 %v8233
    %v8658 = vunpack.c.l.b16 %v8234
    %v8659 = vunpack.c.h.b16 %v8234
    %v8660 = vunpack.c.l.b16 %v8235
    %v8661 = vunpack.c.h.b16 %v8235
    %v8662 = vunpack.c.l.b16 %v8236
    %v8663 = vunpack.c.h.b16 %v8236
    %v8664 = vunpack.c.l.b16 %v8237
    %v8665 = vunpack.c.h.b16 %v8237
    %v8666 = vunpack.c.l.b16 %v8238
    %v8667 = vunpack.c.h.b16 %v8238
    %v8668 = vunpack.c.l.b16 %v8239
    %v8669 = vunpack.c.h.b16 %v8239
    %v8670 = vunpack.c.l.b16 %v8240
    %v8671 = vunpack.c.h.b16 %v8240
    %v8672 = vunpack.c.l.b16 %v8241
    %v8673 = vunpack.c.h.b16 %v8241
    %v8674 = vunpack.c.l.b16 %v8242
    %v8675 = vunpack.c.h.b16 %v8242
    %v8676 = vunpack.c.l.b16 %v8243
    %v8677 = vunpack.c.h.b16 %v8243
    %v8678 = vunpack.c.l.b16 %v8244
    %v8679 = vunpack.c.h.b16 %v8244
    %v8680 = vunpack.c.l.b16 %v8245
    %v8681 = vunpack.c.h.b16 %v8245
    %v8682 = vunpack.c.l.b16 %v8246
    %v8683 = vunpack.c.h.b16 %v8246
    %v8684 = vunpack.c.l.b16 %v8247
    %v8685 = vunpack.c.h.b16 %v8247
    %v8686 = vunpack.c.l.b16 %v8248
    %v8687 = vunpack.c.h.b16 %v8248
    %v8688 = vunpack.c.l.b16 %v8249
    %v8689 = vunpack.c.h.b16 %v8249
    %v8690 = vunpack.c.l.b16 %v8250
    %v8691 = vunpack.c.h.b16 %v8250
    %v8692 = vunpack.c.l.b16 %v8251
    %v8693 = vunpack.c.h.b16 %v8251
    %v8694 = vunpack.c.l.b16 %v8252
    %v8695 = vunpack.c.h.b16 %v8252
    %v8696 = vunpack.c.l.b16 %v8253
    %v8697 = vunpack.c.h.b16 %v8253
    %v8698 = vunpack.c.l.b16 %v8254
    %v8699 = vunpack.c.h.b16 %v8254
    %v8700 = vunpack.c.l.b16 %v8255
    %v8701 = vunpack.c.h.b16 %v8255
    %v8702 = vunpack.c.l.b16 %v8256
    %v8703 = vunpack.c.h.b16 %v8256
    %v8704 = vunpack.c.l.b16 %v8257
    %v8705 = vunpack.c.h.b16 %v8257
    %v8706 = vunpack.c.l.b16 %v8258
    %v8707 = vunpack.c.h.b16 %v8258
    %v8708 = vunpack.c.l.b16 %v8259
    %v8709 = vunpack.c.h.b16 %v8259
    %v8710 = vunpack.c.l.b16 %v8260
    %v8711 = vunpack.c.h.b16 %v8260
    %v8712 = vunpack.c.l.b16 %v8261
    %v8713 = vunpack.c.h.b16 %v8261
    %v8714 = vunpack.c.l.b16 %v8262
    %v8715 = vunpack.c.h.b16 %v8262
    %v8716 = vunpack.c.l.b16 %v8263
    %v8717 = vunpack.c.h.b16 %v8263
    %v8718 = vunpack.c.l.b16 %v8264
    %v8719 = vunpack.c.h.b16 %v8264
    %v8720 = vunpack.c.l.b16 %v8265
    %v8721 = vunpack.c.h.b16 %v8265
    %v8722 = vunpack.c.l.b16 %v8266
    %v8723 = vunpack.c.h.b16 %v8266
    %v8724 = vunpack.c.l.b16 %v8267
    %v8725 = vunpack.c.h.b16 %v8267
    %v8726 = vunpack.c.l.b16 %v8268
    %v8727 = vunpack.c.h.b16 %v8268
    %v8728 = vunpack.c.l.b16 %v8269
    %v8729 = vunpack.c.h.b16 %v8269
    %v8730 = vunpack.c.l.b16 %v8270
    %v8731 = vunpack.c.h.b16 %v8270
    %v8732 = vunpack.c.l.b16 %v8271
    %v8733 = vunpack.c.h.b16 %v8271
    %v8734 = vunpack.c.l.b16 %v8272
    %v8735 = vunpack.c.h.b16 %v8272
    %v8736 = vunpack.c.l.b16 %v8273
    %v8737 = vunpack.c.h.b16 %v8273
    %v8738 = vunpack.c.l.b16 %v8274
    %v8739 = vunpack.c.h.b16 %v8274
    %v8740 = vunpack.c.l.b16 %v8275
    %v8741 = vunpack.c.h.b16 %v8275
    %v8742 = vunpack.c.l.b16 %v8276
    %v8743 = vunpack.c.h.b16 %v8276
    %v8744 = vunpack.c.l.b16 %v8277
    %v8745 = vunpack.c.h.b16 %v8277
    %v8746 = vunpack.c.l.b16 %v8278
    %v8747 = vunpack.c.h.b16 %v8278
    %v8748 = vunpack.c.l.b16 %v8279
    %v8749 = vunpack.c.h.b16 %v8279
    %v8750 = vunpack.c.l.b16 %v8280
    %v8751 = vunpack.c.h.b16 %v8280
    %v8752 = vunpack.c.l.b16 %v8281
    %v8753 = vunpack.c.h.b16 %v8281
    %v8754 = vunpack.c.l.b16 %v8282
    %v8755 = vunpack.c.h.b16 %v8282
    %v8756 = vunpack.c.l.b16 %v8283
    %v8757 = vunpack.c.h.b16 %v8283
    %v8758 = vunpack.c.l.b16 %v8284
    %v8759 = vunpack.c.h.b16 %v8284
    %v8760 = vunpack.c.l.b16 %v8285
    %v8761 = vunpack.c.h.b16 %v8285
    %v8762 = vunpack.c.l.b16 %v8286
    %v8763 = vunpack.c.h.b16 %v8286
    %v8764 = vunpack.c.l.b16 %v8287
    %v8765 = vunpack.c.h.b16 %v8287
    %v8766 = vunpack.c.l.b16 %v8288
    %v8767 = vunpack.c.h.b16 %v8288
    %v8768 = vunpack.c.l.b16 %v8289
    %v8769 = vunpack.c.h.b16 %v8289
    %v8770 = vunpack.c.l.b16 %v8290
    %v8771 = vunpack.c.h.b16 %v8290
    %v8772 = vunpack.c.l.b16 %v8291
    %v8773 = vunpack.c.h.b16 %v8291
    %v8774 = vunpack.c.l.b16 %v8292
    %v8775 = vunpack.c.h.b16 %v8292
    %v8776 = vunpack.c.l.b16 %v8293
    %v8777 = vunpack.c.h.b16 %v8293
    %v8778 = vunpack.c.l.b16 %v8294
    %v8779 = vunpack.c.h.b16 %v8294
    %v8780 = vunpack.c.l.b16 %v8295
    %v8781 = vunpack.c.h.b16 %v8295
    %v8782 = vunpack.c.l.b16 %v8296
    %v8783 = vunpack.c.h.b16 %v8296
    %v8784 = vunpack.c.l.b16 %v8297
    %v8785 = vunpack.c.h.b16 %v8297
    %v8786 = vunpack.c.l.b16 %v8298
    %v8787 = vunpack.c.h.b16 %v8298
    %v8788 = vunpack.c.l.b16 %v8299
    %v8789 = vunpack.c.h.b16 %v8299
    %v8790 = vunpack.c.l.b16 %v8300
    %v8791 = vunpack.c.h.b16 %v8300
    %v8792 = vunpack.c.l.b16 %v8301
    %v8793 = vunpack.c.h.b16 %v8301
    %v8794 = vunpack.c.l.b16 %v8302
    %v8795 = vunpack.c.h.b16 %v8302
    %v8796 = vunpack.c.l.b16 %v8303
    %v8797 = vunpack.c.h.b16 %v8303
    %v8798 = vunpack.c.l.b16 %v8304
    %v8799 = vunpack.c.h.b16 %v8304
    %v8800 = vunpack.c.l.b16 %v8305
    %v8801 = vunpack.c.h.b16 %v8305
    %v8802 = vunpack.c.l.b16 %v8306
    %v8803 = vunpack.c.h.b16 %v8306
    %v8804 = vunpack.c.l.b16 %v8307
    %v8805 = vunpack.c.h.b16 %v8307
    %v8806 = vunpack.c.l.b16 %v8308
    %v8807 = vunpack.c.h.b16 %v8308
    %v8808 = vunpack.c.l.b16 %v8309
    %v8809 = vunpack.c.h.b16 %v8309
    %v8810 = vunpack.c.l.b16 %v8310
    %v8811 = vunpack.c.h.b16 %v8310
    %v8812 = vunpack.c.l.b16 %v8311
    %v8813 = vunpack.c.h.b16 %v8311
    %v8814 = vunpack.c.l.b16 %v8312
    %v8815 = vunpack.c.h.b16 %v8312
    %v8816 = vunpack.c.l.b16 %v8313
    %v8817 = vunpack.c.h.b16 %v8313
    %v8818 = vunpack.c.l.b16 %v8314
    %v8819 = vunpack.c.h.b16 %v8314
    %v8820 = vunpack.c.l.b16 %v8315
    %v8821 = vunpack.c.h.b16 %v8315
    %v8822 = vunpack.c.l.b16 %v8316
    %v8823 = vunpack.c.h.b16 %v8316
    %v8824 = vunpack.c.l.b16 %v8317
    %v8825 = vunpack.c.h.b16 %v8317
    %v8826 = vunpack.c.l.b16 %v8318
    %v8827 = vunpack.c.h.b16 %v8318
    %v8828 = vunpack.c.l.b16 %v8319
    %v8829 = vunpack.c.h.b16 %v8319
    %v8830 = vunpack.c.l.b16 %v8320
    %v8831 = vunpack.c.h.b16 %v8320
    %v8832 = vunpack.c.l.b16 %v8321
    %v8833 = vunpack.c.h.b16 %v8321
    %v8834 = vunpack.c.l.b16 %v8322
    %v8835 = vunpack.c.h.b16 %v8322
    %v8836 = vunpack.c.l.b16 %v8323
    %v8837 = vunpack.c.h.b16 %v8323
    %v8838 = vunpack.c.l.b16 %v8324
    %v8839 = vunpack.c.h.b16 %v8324
    %v8840 = vunpack.c.l.b16 %v8325
    %v8841 = vunpack.c.h.b16 %v8325
    %v8842 = vunpack.c.l.b16 %v8326
    %v8843 = vunpack.c.h.b16 %v8326
    %v8844 = vunpack.c.l.b16 %v8327
    %v8845 = vunpack.c.h.b16 %v8327
    %v8846 = vunpack.c.l.b16 %v8328
    %v8847 = vunpack.c.h.b16 %v8328
    %v8848 = vunpack.c.l.b16 %v8329
    %v8849 = vunpack.c.h.b16 %v8329
    %v8850 = vunpack.c.l.b16 %v8330
    %v8851 = vunpack.c.h.b16 %v8330
    %v8852 = vunpack.c.l.b16 %v8331
    %v8853 = vunpack.c.h.b16 %v8331
    %v8854 = vunpack.c.l.b16 %v8332
    %v8855 = vunpack.c.h.b16 %v8332
    %v8856 = vunpack.c.l.b16 %v8333
    %v8857 = vunpack.c.h.b16 %v8333
    %v8858 = vunpack.c.l.b16 %v8334
    %v8859 = vunpack.c.h.b16 %v8334
    %v8860 = vunpack.c.l.b16 %v8335
    %v8861 = vunpack.c.h.b16 %v8335
    %v8862 = vunpack.c.l.b16 %v8336
    %v8863 = vunpack.c.h.b16 %v8336
    %v8864 = vunpack.c.l.b16 %v8337
    %v8865 = vunpack.c.h.b16 %v8337
    %v8866 = vunpack.c.l.b16 %v8338
    %v8867 = vunpack.c.h.b16 %v8338
    %v8868 = vunpack.c.l.b16 %v8339
    %v8869 = vunpack.c.h.b16 %v8339
    %v8870 = vunpack.c.l.b16 %v8340
    %v8871 = vunpack.c.h.b16 %v8340
    %v8872 = vunpack.c.l.b16 %v8341
    %v8873 = vunpack.c.h.b16 %v8341
    %v8874 = vunpack.c.l.b16 %v8342
    %v8875 = vunpack.c.h.b16 %v8342
    %v8876 = vunpack.c.l.b16 %v8343
    %v8877 = vunpack.c.h.b16 %v8343
    %v8878 = vunpack.c.l.b16 %v8344
    %v8879 = vunpack.c.h.b16 %v8344
    %v8880 = vunpack.c.l.b16 %v8345
    %v8881 = vunpack.c.h.b16 %v8345
    %v8882 = vunpack.c.l.b16 %v8346
    %v8883 = vunpack.c.h.b16 %v8346
    %v8884 = vunpack.c.l.b16 %v8347
    %v8885 = vunpack.c.h.b16 %v8347
    %v8886 = vunpack.c.l.b16 %v8348
    %v8887 = vunpack.c.h.b16 %v8348
    %v8888 = vunpack.c.l.b16 %v8349
    %v8889 = vunpack.c.h.b16 %v8349
    %v8890 = vunpack.c.l.b16 %v8350
    %v8891 = vunpack.c.h.b16 %v8350
    %v8892 = vunpack.c.l.b16 %v8351
    %v8893 = vunpack.c.h.b16 %v8351
    %v8894 = vunpack.c.l.b16 %v8352
    %v8895 = vunpack.c.h.b16 %v8352
    %v8896 = vunpack.c.l.b16 %v8353
    %v8897 = vunpack.c.h.b16 %v8353
    %v8898 = vunpack.c.l.b16 %v8354
    %v8899 = vunpack.c.h.b16 %v8354
    %v8900 = vunpack.c.l.b16 %v8355
    %v8901 = vunpack.c.h.b16 %v8355
    %v8902 = vunpack.c.l.b16 %v8356
    %v8903 = vunpack.c.h.b16 %v8356
    %v8904 = vunpack.c.l.b16 %v8357
    %v8905 = vunpack.c.h.b16 %v8357
    %v8906 = vunpack.c.l.b16 %v8358
    %v8907 = vunpack.c.h.b16 %v8358
    %v8908 = vunpack.c.l.b16 %v8359
    %v8909 = vunpack.c.h.b16 %v8359
    %v8910 = vunpack.c.l.b16 %v8360
    %v8911 = vunpack.c.h.b16 %v8360
    %v8912 = vunpack.c.l.b16 %v8361
    %v8913 = vunpack.c.h.b16 %v8361
    %v8914 = vunpack.c.l.b16 %v8362
    %v8915 = vunpack.c.h.b16 %v8362
    %v8916 = vunpack.c.l.b16 %v8363
    %v8917 = vunpack.c.h.b16 %v8363
    %v8918 = vunpack.c.l.b16 %v8364
    %v8919 = vunpack.c.h.b16 %v8364
    %v8920 = vunpack.c.l.b16 %v8365
    %v8921 = vunpack.c.h.b16 %v8365
    %v8922 = vunpack.c.l.b16 %v8366
    %v8923 = vunpack.c.h.b16 %v8366
    %v8924 = vunpack.c.l.b16 %v8367
    %v8925 = vunpack.c.h.b16 %v8367
    %v8926 = vunpack.c.l.b16 %v8368
    %v8927 = vunpack.c.h.b16 %v8368
    %v8928 = vunpack.c.l.b16 %v8369
    %v8929 = vunpack.c.h.b16 %v8369
    %v8930 = vunpack.c.l.b16 %v8370
    %v8931 = vunpack.c.h.b16 %v8370
    %v8932 = vunpack.c.l.b16 %v8371
    %v8933 = vunpack.c.h.b16 %v8371
    %v8934 = vunpack.c.l.b16 %v8372
    %v8935 = vunpack.c.h.b16 %v8372
    %v8936 = vunpack.c.l.b16 %v8373
    %v8937 = vunpack.c.h.b16 %v8373
    %v8938 = vunpack.c.l.b16 %v8374
    %v8939 = vunpack.c.h.b16 %v8374
    %v8940 = vunpack.c.l.b16 %v8375
    %v8941 = vunpack.c.h.b16 %v8375
    %v8942 = vunpack.c.l.b16 %v8376
    %v8943 = vunpack.c.h.b16 %v8376
    %v8944 = vunpack.c.l.b16 %v8377
    %v8945 = vunpack.c.h.b16 %v8377
    %v8946 = vunpack.c.l.b16 %v8378
    %v8947 = vunpack.c.h.b16 %v8378
    %v8948 = vunpack.c.l.b16 %v8379
    %v8949 = vunpack.c.h.b16 %v8379
    %v8950 = vunpack.c.l.b16 %v8380
    %v8951 = vunpack.c.h.b16 %v8380
    %v8952 = vunpack.c.l.b16 %v8381
    %v8953 = vunpack.c.h.b16 %v8381
    %v8954 = vunpack.c.l.b16 %v8382
    %v8955 = vunpack.c.h.b16 %v8382
    %v8956 = vunpack.c.l.b16 %v8383
    %v8957 = vunpack.c.h.b16 %v8383
    %v8958 = vunpack.c.l.b16 %v8384
    %v8959 = vunpack.c.h.b16 %v8384
    %v8960 = vunpack.c.l.b16 %v8385
    %v8961 = vunpack.c.h.b16 %v8385
    %v8962 = vunpack.c.l.b16 %v8386
    %v8963 = vunpack.c.h.b16 %v8386
    %v8964 = vunpack.c.l.b16 %v8387
    %v8965 = vunpack.c.h.b16 %v8387
    %v8966 = vunpack.c.l.b16 %v8388
    %v8967 = vunpack.c.h.b16 %v8388
    %v8968 = vunpack.c.l.b16 %v8389
    %v8969 = vunpack.c.h.b16 %v8389
    %v8970 = vunpack.c.l.b16 %v8390
    %v8971 = vunpack.c.h.b16 %v8390
    %v8972 = vunpack.c.l.b16 %v8391
    %v8973 = vunpack.c.h.b16 %v8391
    %v8974 = vunpack.c.l.b16 %v8392
    %v8975 = vunpack.c.h.b16 %v8392
    %v8976 = vunpack.c.l.b16 %v8393
    %v8977 = vunpack.c.h.b16 %v8393
    %v8978 = vunpack.c.l.b16 %v8394
    %v8979 = vunpack.c.h.b16 %v8394
    %v8980 = vunpack.c.l.b16 %v8395
    %v8981 = vunpack.c.h.b16 %v8395
    %v8982 = vunpack.c.l.b16 %v8396
    %v8983 = vunpack.c.h.b16 %v8396
    %v8984 = vunpack.c.l.b16 %v8397
    %v8985 = vunpack.c.h.b16 %v8397
    %v8986 = vpack.c.b16 %v8604, %v8602
    %v8987 = vpack.c.b16 %v8605, %v8603
    %v8988 = vpack.c.b16 %v8608, %v8606
    %v8989 = vpack.c.b16 %v8609, %v8607
    %v8990 = vpack.c.b16 %v8612, %v8610
    %v8991 = vpack.c.b16 %v8613, %v8611
    %v8992 = vpack.c.b16 %v8616, %v8614
    %v8993 = vpack.c.b16 %v8617, %v8615
    %v8994 = vpack.c.b16 %v8620, %v8618
    %v8995 = vpack.c.b16 %v8621, %v8619
    %v8996 = vpack.c.b16 %v8624, %v8622
    %v8997 = vpack.c.b16 %v8625, %v8623
    %v8998 = vpack.c.b16 %v8628, %v8626
    %v8999 = vpack.c.b16 %v8629, %v8627
    %v9000 = vpack.c.b16 %v8632, %v8630
    %v9001 = vpack.c.b16 %v8633, %v8631
    %v9002 = vpack.c.b16 %v8636, %v8634
    %v9003 = vpack.c.b16 %v8637, %v8635
    %v9004 = vpack.c.b16 %v8640, %v8638
    %v9005 = vpack.c.b16 %v8641, %v8639
    %v9006 = vpack.c.b16 %v8644, %v8642
    %v9007 = vpack.c.b16 %v8645, %v8643
    %v9008 = vpack.c.b16 %v8648, %v8646
    %v9009 = vpack.c.b16 %v8649, %v8647
    %v9010 = vpack.c.b16 %v8652, %v8650
    %v9011 = vpack.c.b16 %v8653, %v8651
    %v9012 = vpack.c.b16 %v8656, %v8654
    %v9013 = vpack.c.b16 %v8657, %v8655
    %v9014 = vpack.c.b16 %v8660, %v8658
    %v9015 = vpack.c.b16 %v8661, %v8659
    %v9016 = vpack.c.b16 %v8664, %v8662
    %v9017 = vpack.c.b16 %v8665, %v8663
    %v9018 = vpack.c.b16 %v8668, %v8666
    %v9019 = vpack.c.b16 %v8669, %v8667
    %v9020 = vpack.c.b16 %v8672, %v8670
    %v9021 = vpack.c.b16 %v8673, %v8671
    %v9022 = vpack.c.b16 %v8676, %v8674
    %v9023 = vpack.c.b16 %v8677, %v8675
    %v9024 = vpack.c.b16 %v8680, %v8678
    %v9025 = vpack.c.b16 %v8681, %v8679
    %v9026 = vpack.c.b16 %v8684, %v8682
    %v9027 = vpack.c.b16 %v8685, %v8683
    %v9028 = vpack.c.b16 %v8688, %v8686
    %v9029 = vpack.c.b16 %v8689, %v8687
    %v9030 = vpack.c.b16 %v8692, %v8690
    %v9031 = vpack.c.b16 %v8693, %v8691
    %v9032 = vpack.c.b16 %v8696, %v8694
    %v9033 = vpack.c.b16 %v8697, %v8695
    %v9034 = vpack.c.b16 %v8700, %v8698
    %v9035 = vpack.c.b16 %v8701, %v8699
    %v9036 = vpack.c.b16 %v8704, %v8702
    %v9037 = vpack.c.b16 %v8705, %v8703
    %v9038 = vpack.c.b16 %v8708, %v8706
    %v9039 = vpack.c.b16 %v8709, %v8707
    %v9040 = vpack.c.b16 %v8712, %v8710
    %v9041 = vpack.c.b16 %v8713, %v8711
    %v9042 = vpack.c.b16 %v8716, %v8714
    %v9043 = vpack.c.b16 %v8717, %v8715
    %v9044 = vpack.c.b16 %v8720, %v8718
    %v9045 = vpack.c.b16 %v8721, %v8719
    %v9046 = vpack.c.b16 %v8724, %v8722
    %v9047 = vpack.c.b16 %v8725, %v8723
    %v9048 = vpack.c.b16 %v8728, %v8726
    %v9049 = vpack.c.b16 %v8729, %v8727
    %v9050 = vpack.c.b16 %v8732, %v8730
    %v9051 = vpack.c.b16 %v8733, %v8731
    %v9052 = vpack.c.b16 %v8736, %v8734
    %v9053 = vpack.c.b16 %v8737, %v8735
    %v9054 = vpack.c.b16 %v8740, %v8738
    %v9055 = vpack.c.b16 %v8741, %v8739
    %v9056 = vpack.c.b16 %v8744, %v8742
    %v9057 = vpack.c.b16 %v8745, %v8743
    %v9058 = vpack.c.b16 %v8748, %v8746
    %v9059 = vpack.c.b16 %v8749, %v8747
    %v9060 = vpack.c.b16 %v8752, %v8750
    %v9061 = vpack.c.b16 %v8753, %v8751
    %v9062 = vpack.c.b16 %v8756, %v8754
    %v9063 = vpack.c.b16 %v8757, %v8755
    %v9064 = vpack.c.b16 %v8760, %v8758
    %v9065 = vpack.c.b16 %v8761, %v8759
    %v9066 = vpack.c.b16 %v8764, %v8762
    %v9067 = vpack.c.b16 %v8765, %v8763
    %v9068 = vpack.c.b16 %v8768, %v8766
    %v9069 = vpack.c.b16 %v8769, %v8767
    %v9070 = vpack.c.b16 %v8772, %v8770
    %v9071 = vpack.c.b16 %v8773, %v8771
    %v9072 = vpack.c.b16 %v8776, %v8774
    %v9073 = vpack.c.b16 %v8777, %v8775
    %v9074 = vpack.c.b16 %v8780, %v8778
    %v9075 = vpack.c.b16 %v8781, %v8779
    %v9076 = vpack.c.b16 %v8784, %v8782
    %v9077 = vpack.c.b16 %v8785, %v8783
    %v9078 = vpack.c.b16 %v8788, %v8786
    %v9079 = vpack.c.b16 %v8789, %v8787
    %v9080 = vpack.c.b16 %v8792, %v8790
    %v9081 = vpack.c.b16 %v8793, %v8791
    %v9082 = vpack.c.b16 %v8796, %v8794
    %v9083 = vpack.c.b16 %v8797, %v8795
    %v9084 = vpack.c.b16 %v8800, %v8798
    %v9085 = vpack.c.b16 %v8801, %v8799
    %v9086 = vpack.c.b16 %v8804, %v8802
    %v9087 = vpack.c.b16 %v8805, %v8803
    %v9088 = vpack.c.b16 %v8808, %v8806
    %v9089 = vpack.c.b16 %v8809, %v8807
    %v9090 = vpack.c.b16 %v8812, %v8810
    %v9091 = vpack.c.b16 %v8813, %v8811
    %v9092 = vpack.c.b16 %v8816, %v8814
    %v9093 = vpack.c.b16 %v8817, %v8815
    %v9094 = vpack.c.b16 %v8820, %v8818
    %v9095 = vpack.c.b16 %v8821, %v8819
    %v9096 = vpack.c.b16 %v8824, %v8822
    %v9097 = vpack.c.b16 %v8825, %v8823
    %v9098 = vpack.c.b16 %v8828, %v8826
    %v9099 = vpack.c.b16 %v8829, %v8827
    %v9100 = vpack.c.b16 %v8832, %v8830
    %v9101 = vpack.c.b16 %v8833, %v8831
    %v9102 = vpack.c.b16 %v8836, %v8834
    %v9103 = vpack.c.b16 %v8837, %v8835
    %v9104 = vpack.c.b16 %v8840, %v8838
    %v9105 = vpack.c.b16 %v8841, %v8839
    %v9106 = vpack.c.b16 %v8844, %v8842
    %v9107 = vpack.c.b16 %v8845, %v8843
    %v9108 = vpack.c.b16 %v8848, %v8846
    %v9109 = vpack.c.b16 %v8849, %v8847
    %v9110 = vpack.c.b16 %v8852, %v8850
    %v9111 = vpack.c.b16 %v8853, %v8851
    %v9112 = vpack.c.b16 %v8856, %v8854
    %v9113 = vpack.c.b16 %v8857, %v8855
    %v9114 = vpack.c.b16 %v8860, %v8858
    %v9115 = vpack.c.b16 %v8861, %v8859
    %v9116 = vpack.c.b16 %v8864, %v8862
    %v9117 = vpack.c.b16 %v8865, %v8863
    %v9118 = vpack.c.b16 %v8868, %v8866
    %v9119 = vpack.c.b16 %v8869, %v8867
    %v9120 = vpack.c.b16 %v8872, %v8870
    %v9121 = vpack.c.b16 %v8873, %v8871
    %v9122 = vpack.c.b16 %v8876, %v8874
    %v9123 = vpack.c.b16 %v8877, %v8875
    %v9124 = vpack.c.b16 %v8880, %v8878
    %v9125 = vpack.c.b16 %v8881, %v8879
    %v9126 = vpack.c.b16 %v8884, %v8882
    %v9127 = vpack.c.b16 %v8885, %v8883
    %v9128 = vpack.c.b16 %v8888, %v8886
    %v9129 = vpack.c.b16 %v8889, %v8887
    %v9130 = vpack.c.b16 %v8892, %v8890
    %v9131 = vpack.c.b16 %v8893, %v8891
    %v9132 = vpack.c.b16 %v8896, %v8894
    %v9133 = vpack.c.b16 %v8897, %v8895
    %v9134 = vpack.c.b16 %v8900, %v8898
    %v9135 = vpack.c.b16 %v8901, %v8899
    %v9136 = vpack.c.b16 %v8904, %v8902
    %v9137 = vpack.c.b16 %v8905, %v8903
    %v9138 = vpack.c.b16 %v8908, %v8906
    %v9139 = vpack.c.b16 %v8909, %v8907
    %v9140 = vpack.c.b16 %v8912, %v8910
    %v9141 = vpack.c.b16 %v8913, %v8911
    %v9142 = vpack.c.b16 %v8916, %v8914
    %v9143 = vpack.c.b16 %v8917, %v8915
    %v9144 = vpack.c.b16 %v8920, %v8918
    %v9145 = vpack.c.b16 %v8921, %v8919
    %v9146 = vpack.c.b16 %v8924, %v8922
    %v9147 = vpack.c.b16 %v8925, %v8923
    %v9148 = vpack.c.b16 %v8928, %v8926
    %v9149 = vpack.c.b16 %v8929, %v8927
    %v9150 = vpack.c.b16 %v8932, %v8930
    %v9151 = vpack.c.b16 %v8933, %v8931
    %v9152 = vpack.c.b16 %v8936, %v8934
    %v9153 = vpack.c.b16 %v8937, %v8935
    %v9154 = vpack.c.b16 %v8940, %v8938
    %v9155 = vpack.c.b16 %v8941, %v8939
    %v9156 = vpack.c.b16 %v8944, %v8942
    %v9157 = vpack.c.b16 %v8945, %v8943
    %v9158 = vpack.c.b16 %v8948, %v8946
    %v9159 = vpack.c.b16 %v8949, %v8947
    %v9160 = vpack.c.b16 %v8952, %v8950
    %v9161 = vpack.c.b16 %v8953, %v8951
    %v9162 = vpack.c.b16 %v8956, %v8954
    %v9163 = vpack.c.b16 %v8957, %v8955
    %v9164 = vpack.c.b16 %v8960, %v8958
    %v9165 = vpack.c.b16 %v8961, %v8959
    %v9166 = vpack.c.b16 %v8964, %v8962
    %v9167 = vpack.c.b16 %v8965, %v8963
    %v9168 = vpack.c.b16 %v8968, %v8966
    %v9169 = vpack.c.b16 %v8969, %v8967
    %v9170 = vpack.c.b16 %v8972, %v8970
    %v9171 = vpack.c.b16 %v8973, %v8971
    %v9172 = vpack.c.b16 %v8976, %v8974
    %v9173 = vpack.c.b16 %v8977, %v8975
    %v9174 = vpack.c.b16 %v8980, %v8978
    %v9175 = vpack.c.b16 %v8981, %v8979
    %v9176 = vpack.c.b16 %v8984, %v8982
    %v9177 = vpack.c.b16 %v8985, %v8983
    %9370 = vmatprep.subr.bf16.mxu0 %v9001
    %9371 = vmatpush1.bf16.msra.mxu0 %v9000
    %9372 = vmatprep.subr.bf16.mxu0 %v8999
    %9373 = vmatpush1.bf16.msra.mxu0 %v8998
    %9374 = vmatprep.subr.bf16.mxu0 %v8997
    %9375 = vmatpush1.bf16.msra.mxu0 %v8996
    %9376 = vmatprep.subr.bf16.mxu0 %v8995
    %9377 = vmatpush1.bf16.msra.mxu0 %v8994
    %9378 = vmatprep.subr.bf16.mxu0 %v8993
    %9379 = vmatpush1.bf16.msra.mxu0 %v8992
    %9380 = vmatprep.subr.bf16.mxu0 %v8991
    %9381 = vmatpush1.bf16.msra.mxu0 %v8990
    %9382 = vmatprep.subr.bf16.mxu0 %v8989
    %9383 = vmatpush1.bf16.msra.mxu0 %v8988
    %9384 = vmatprep.subr.bf16.mxu0 %v8987
    %9385 = vmatpush1.bf16.msra.mxu0 %v8986
    %9386 = vmatprep.subr.bf16.mxu0 %v9017
    %9387 = vmatpush2.bf16.msra.mxu0 %v9016
    %9388 = vmatprep.subr.bf16.mxu0 %v9015
    %9389 = vmatpush2.bf16.msra.mxu0 %v9014
    %9390 = vmatprep.subr.bf16.mxu0 %v9013
    %9391 = vmatpush2.bf16.msra.mxu0 %v9012
    %9392 = vmatprep.subr.bf16.mxu0 %v9011
    %9393 = vmatpush2.bf16.msra.mxu0 %v9010
    %9394 = vmatprep.subr.bf16.mxu0 %v9009
    %9395 = vmatpush2.bf16.msra.mxu0 %v9008
    %9396 = vmatprep.subr.bf16.mxu0 %v9007
    %9397 = vmatpush2.bf16.msra.mxu0 %v9006
    %9398 = vmatprep.subr.bf16.mxu0 %v9005
    %9399 = vmatpush2.bf16.msra.mxu0 %v9004
    %9400 = vmatprep.subr.bf16.mxu0 %v9003
    %9401 = vmatpush2.bf16.msra.mxu0 %v9002
    %9402 = vmatprep.mubr.bf16.mxu0 %v6521
    %9403 = vmatmul.mubr.bf16.gmra.mxu0 %v6520
    %v9404 = vpop.f32.mrf.mxu0
    %v9405 = vadd.f32 %v8403, %v9404
    %v9406 = vpop.f32.mrf.mxu0
    %v9407 = vadd.f32 %v8407, %v9406
    %v9408 = vpop.f32.mrf.mxu0
    %v9409 = vadd.f32 %v8403, %v9408
    %v9410 = vpop.f32.mrf.mxu0
    %v9411 = vadd.f32 %v8407, %v9410
    %9412 = vmatprep.mubr.bf16.mxu0 %v6545
    %9413 = vmatmul.mubr.bf16.gmra.mxu0 %v6544
    %v9414 = vpop.f32.mrf.mxu0
    %v9415 = vadd.f32 %v8403, %v9414
    %v9416 = vpop.f32.mrf.mxu0
    %v9417 = vadd.f32 %v8407, %v9416
    %v9418 = vpop.f32.mrf.mxu0
    %v9419 = vadd.f32 %v8403, %v9418
    %v9420 = vpop.f32.mrf.mxu0
    %v9421 = vadd.f32 %v8407, %v9420
    %9422 = vmatprep.mubr.bf16.mxu0 %v6569
    %9423 = vmatmul.mubr.bf16.gmra.mxu0 %v6568
    %v9424 = vpop.f32.mrf.mxu0
    %v9425 = vadd.f32 %v8403, %v9424
    %v9426 = vpop.f32.mrf.mxu0
    %v9427 = vadd.f32 %v8407, %v9426
    %v9428 = vpop.f32.mrf.mxu0
    %v9429 = vadd.f32 %v8403, %v9428
    %v9430 = vpop.f32.mrf.mxu0
    %v9431 = vadd.f32 %v8407, %v9430
    %9432 = vmatprep.mubr.bf16.mxu0 %v6593
    %9433 = vmatmul.mubr.bf16.gmra.mxu0 %v6592
    %v9434 = vpop.f32.mrf.mxu0
    %v9435 = vadd.f32 %v8403, %v9434
    %v9436 = vpop.f32.mrf.mxu0
    %v9437 = vadd.f32 %v8407, %v9436
    %v9438 = vpop.f32.mrf.mxu0
    %v9439 = vadd.f32 %v8403, %v9438
    %v9440 = vpop.f32.mrf.mxu0
    %v9441 = vadd.f32 %v8407, %v9440
    %9442 = vdwg.mxu0
    %9443 = vmatprep.subr.bf16.mxu0 %v9033
    %9444 = vmatpush1.bf16.msra.mxu0 %v9032
    %9445 = vmatprep.subr.bf16.mxu0 %v9031
    %9446 = vmatpush1.bf16.msra.mxu0 %v9030
    %9447 = vmatprep.subr.bf16.mxu0 %v9029
    %9448 = vmatpush1.bf16.msra.mxu0 %v9028
    %9449 = vmatprep.subr.bf16.mxu0 %v9027
    %9450 = vmatpush1.bf16.msra.mxu0 %v9026
    %9451 = vmatprep.subr.bf16.mxu0 %v9025
    %9452 = vmatpush1.bf16.msra.mxu0 %v9024
    %9453 = vmatprep.subr.bf16.mxu0 %v9023
    %9454 = vmatpush1.bf16.msra.mxu0 %v9022
    %9455 = vmatprep.subr.bf16.mxu0 %v9021
    %9456 = vmatpush1.bf16.msra.mxu0 %v9020
    %9457 = vmatprep.subr.bf16.mxu0 %v9019
    %9458 = vmatpush1.bf16.msra.mxu0 %v9018
    %9459 = vmatprep.subr.bf16.mxu0 %v9049
    %9460 = vmatpush2.bf16.msra.mxu0 %v9048
    %9461 = vmatprep.subr.bf16.mxu0 %v9047
    %9462 = vmatpush2.bf16.msra.mxu0 %v9046
    %9463 = vmatprep.subr.bf16.mxu0 %v9045
    %9464 = vmatpush2.bf16.msra.mxu0 %v9044
    %9465 = vmatprep.subr.bf16.mxu0 %v9043
    %9466 = vmatpush2.bf16.msra.mxu0 %v9042
    %9467 = vmatprep.subr.bf16.mxu0 %v9041
    %9468 = vmatpush2.bf16.msra.mxu0 %v9040
    %9469 = vmatprep.subr.bf16.mxu0 %v9039
    %9470 = vmatpush2.bf16.msra.mxu0 %v9038
    %9471 = vmatprep.subr.bf16.mxu0 %v9037
    %9472 = vmatpush2.bf16.msra.mxu0 %v9036
    %9473 = vmatprep.subr.bf16.mxu0 %v9035
    %9474 = vmatpush2.bf16.msra.mxu0 %v9034
    %9475 = vmatprep.mubr.bf16.mxu0 %v6523
    %9476 = vmatmul.mubr.bf16.gmra.mxu0 %v6522
    %v9477 = vpop.f32.mrf.mxu0
    %v9478 = vadd.f32 %v9405, %v9477
    %v9479 = vpop.f32.mrf.mxu0
    %v9480 = vadd.f32 %v9407, %v9479
    %v9481 = vpop.f32.mrf.mxu0
    %v9482 = vadd.f32 %v9409, %v9481
    %v9483 = vpop.f32.mrf.mxu0
    %v9484 = vadd.f32 %v9411, %v9483
    %9485 = vmatprep.mubr.bf16.mxu0 %v6547
    %9486 = vmatmul.mubr.bf16.gmra.mxu0 %v6546
    %v9487 = vpop.f32.mrf.mxu0
    %v9488 = vadd.f32 %v9415, %v9487
    %v9489 = vpop.f32.mrf.mxu0
    %v9490 = vadd.f32 %v9417, %v9489
    %v9491 = vpop.f32.mrf.mxu0
    %v9492 = vadd.f32 %v9419, %v9491
    %v9493 = vpop.f32.mrf.mxu0
    %v9494 = vadd.f32 %v9421, %v9493
    %9495 = vmatprep.mubr.bf16.mxu0 %v6571
    %9496 = vmatmul.mubr.bf16.gmra.mxu0 %v6570
    %v9497 = vpop.f32.mrf.mxu0
    %v9498 = vadd.f32 %v9425, %v9497
    %v9499 = vpop.f32.mrf.mxu0
    %v9500 = vadd.f32 %v9427, %v9499
    %v9501 = vpop.f32.mrf.mxu0
    %v9502 = vadd.f32 %v9429, %v9501
    %v9503 = vpop.f32.mrf.mxu0
    %v9504 = vadd.f32 %v9431, %v9503
    %9505 = vmatprep.mubr.bf16.mxu0 %v6595
    %9506 = vmatmul.mubr.bf16.gmra.mxu0 %v6594
    %v9507 = vpop.f32.mrf.mxu0
    %v9508 = vadd.f32 %v9435, %v9507
    %v9509 = vpop.f32.mrf.mxu0
    %v9510 = vadd.f32 %v9437, %v9509
    %v9511 = vpop.f32.mrf.mxu0
    %v9512 = vadd.f32 %v9439, %v9511
    %v9513 = vpop.f32.mrf.mxu0
    %v9514 = vadd.f32 %v9441, %v9513
    %9515 = vdwg.mxu0
    %9516 = vmatprep.subr.bf16.mxu0 %v9065
    %9517 = vmatpush1.bf16.msra.mxu0 %v9064
    %9518 = vmatprep.subr.bf16.mxu0 %v9063
    %9519 = vmatpush1.bf16.msra.mxu0 %v9062
    %9520 = vmatprep.subr.bf16.mxu0 %v9061
    %9521 = vmatpush1.bf16.msra.mxu0 %v9060
    %9522 = vmatprep.subr.bf16.mxu0 %v9059
    %9523 = vmatpush1.bf16.msra.mxu0 %v9058
    %9524 = vmatprep.subr.bf16.mxu0 %v9057
    %9525 = vmatpush1.bf16.msra.mxu0 %v9056
    %9526 = vmatprep.subr.bf16.mxu0 %v9055
    %9527 = vmatpush1.bf16.msra.mxu0 %v9054
    %9528 = vmatprep.subr.bf16.mxu0 %v9053
    %9529 = vmatpush1.bf16.msra.mxu0 %v9052
    %9530 = vmatprep.subr.bf16.mxu0 %v9051
    %9531 = vmatpush1.bf16.msra.mxu0 %v9050
    %9532 = vmatprep.subr.bf16.mxu0 %v9081
    %9533 = vmatpush2.bf16.msra.mxu0 %v9080
    %9534 = vmatprep.subr.bf16.mxu0 %v9079
    %9535 = vmatpush2.bf16.msra.mxu0 %v9078
    %9536 = vmatprep.subr.bf16.mxu0 %v9077
    %9537 = vmatpush2.bf16.msra.mxu0 %v9076
    %9538 = vmatprep.subr.bf16.mxu0 %v9075
    %9539 = vmatpush2.bf16.msra.mxu0 %v9074
    %9540 = vmatprep.subr.bf16.mxu0 %v9073
    %9541 = vmatpush2.bf16.msra.mxu0 %v9072
    %9542 = vmatprep.subr.bf16.mxu0 %v9071
    %9543 = vmatpush2.bf16.msra.mxu0 %v9070
    %9544 = vmatprep.subr.bf16.mxu0 %v9069
    %9545 = vmatpush2.bf16.msra.mxu0 %v9068
    %9546 = vmatprep.subr.bf16.mxu0 %v9067
    %9547 = vmatpush2.bf16.msra.mxu0 %v9066
    %9548 = vmatprep.mubr.bf16.mxu0 %v6525
    %9549 = vmatmul.mubr.bf16.gmra.mxu0 %v6524
    %v9550 = vpop.f32.mrf.mxu0
    %v9551 = vadd.f32 %v9478, %v9550
    %v9552 = vpop.f32.mrf.mxu0
    %v9553 = vadd.f32 %v9480, %v9552
    %v9554 = vpop.f32.mrf.mxu0
    %v9555 = vadd.f32 %v9482, %v9554
    %v9556 = vpop.f32.mrf.mxu0
    %v9557 = vadd.f32 %v9484, %v9556
    %9558 = vmatprep.mubr.bf16.mxu0 %v6549
    %9559 = vmatmul.mubr.bf16.gmra.mxu0 %v6548
    %v9560 = vpop.f32.mrf.mxu0
    %v9561 = vadd.f32 %v9488, %v9560
    %v9562 = vpop.f32.mrf.mxu0
    %v9563 = vadd.f32 %v9490, %v9562
    %v9564 = vpop.f32.mrf.mxu0
    %v9565 = vadd.f32 %v9492, %v9564
    %v9566 = vpop.f32.mrf.mxu0
    %v9567 = vadd.f32 %v9494, %v9566
    %9568 = vmatprep.mubr.bf16.mxu0 %v6573
    %9569 = vmatmul.mubr.bf16.gmra.mxu0 %v6572
    %v9570 = vpop.f32.mrf.mxu0
    %v9571 = vadd.f32 %v9498, %v9570
    %v9572 = vpop.f32.mrf.mxu0
    %v9573 = vadd.f32 %v9500, %v9572
    %v9574 = vpop.f32.mrf.mxu0
    %v9575 = vadd.f32 %v9502, %v9574
    %v9576 = vpop.f32.mrf.mxu0
    %v9577 = vadd.f32 %v9504, %v9576
    %9578 = vmatprep.mubr.bf16.mxu0 %v6597
    %9579 = vmatmul.mubr.bf16.gmra.mxu0 %v6596
    %v9580 = vpop.f32.mrf.mxu0
    %v9581 = vadd.f32 %v9508, %v9580
    %v9582 = vpop.f32.mrf.mxu0
    %v9583 = vadd.f32 %v9510, %v9582
    %v9584 = vpop.f32.mrf.mxu0
    %v9585 = vadd.f32 %v9512, %v9584
    %v9586 = vpop.f32.mrf.mxu0
    %v9587 = vadd.f32 %v9514, %v9586
    %9588 = vdwg.mxu0
    %9589 = vmatprep.subr.bf16.mxu0 %v9097
    %9590 = vmatpush1.bf16.msra.mxu0 %v9096
    %9591 = vmatprep.subr.bf16.mxu0 %v9095
    %9592 = vmatpush1.bf16.msra.mxu0 %v9094
    %9593 = vmatprep.subr.bf16.mxu0 %v9093
    %9594 = vmatpush1.bf16.msra.mxu0 %v9092
    %9595 = vmatprep.subr.bf16.mxu0 %v9091
    %9596 = vmatpush1.bf16.msra.mxu0 %v9090
    %9597 = vmatprep.subr.bf16.mxu0 %v9089
    %9598 = vmatpush1.bf16.msra.mxu0 %v9088
    %9599 = vmatprep.subr.bf16.mxu0 %v9087
    %9600 = vmatpush1.bf16.msra.mxu0 %v9086
    %9601 = vmatprep.subr.bf16.mxu0 %v9085
    %9602 = vmatpush1.bf16.msra.mxu0 %v9084
    %9603 = vmatprep.subr.bf16.mxu0 %v9083
    %9604 = vmatpush1.bf16.msra.mxu0 %v9082
    %9605 = vmatprep.subr.bf16.mxu0 %v9113
    %9606 = vmatpush2.bf16.msra.mxu0 %v9112
    %9607 = vmatprep.subr.bf16.mxu0 %v9111
    %9608 = vmatpush2.bf16.msra.mxu0 %v9110
    %9609 = vmatprep.subr.bf16.mxu0 %v9109
    %9610 = vmatpush2.bf16.msra.mxu0 %v9108
    %9611 = vmatprep.subr.bf16.mxu0 %v9107
    %9612 = vmatpush2.bf16.msra.mxu0 %v9106
    %9613 = vmatprep.subr.bf16.mxu0 %v9105
    %9614 = vmatpush2.bf16.msra.mxu0 %v9104
    %9615 = vmatprep.subr.bf16.mxu0 %v9103
    %9616 = vmatpush2.bf16.msra.mxu0 %v9102
    %9617 = vmatprep.subr.bf16.mxu0 %v9101
    %9618 = vmatpush2.bf16.msra.mxu0 %v9100
    %9619 = vmatprep.subr.bf16.mxu0 %v9099
    %9620 = vmatpush2.bf16.msra.mxu0 %v9098
    %9621 = vmatprep.mubr.bf16.mxu0 %v6527
    %9622 = vmatmul.mubr.bf16.gmra.mxu0 %v6526
    %v9623 = vpop.f32.mrf.mxu0
    %v9624 = vadd.f32 %v9551, %v9623
    %v9625 = vpop.f32.mrf.mxu0
    %v9626 = vadd.f32 %v9553, %v9625
    %v9627 = vpop.f32.mrf.mxu0
    %v9628 = vadd.f32 %v9555, %v9627
    %v9629 = vpop.f32.mrf.mxu0
    %v9630 = vadd.f32 %v9557, %v9629
    %9631 = vmatprep.mubr.bf16.mxu0 %v6551
    %9632 = vmatmul.mubr.bf16.gmra.mxu0 %v6550
    %v9633 = vpop.f32.mrf.mxu0
    %v9634 = vadd.f32 %v9561, %v9633
    %v9635 = vpop.f32.mrf.mxu0
    %v9636 = vadd.f32 %v9563, %v9635
    %v9637 = vpop.f32.mrf.mxu0
    %v9638 = vadd.f32 %v9565, %v9637
    %v9639 = vpop.f32.mrf.mxu0
    %v9640 = vadd.f32 %v9567, %v9639
    %9641 = vmatprep.mubr.bf16.mxu0 %v6575
    %9642 = vmatmul.mubr.bf16.gmra.mxu0 %v6574
    %v9643 = vpop.f32.mrf.mxu0
    %v9644 = vadd.f32 %v9571, %v9643
    %v9645 = vpop.f32.mrf.mxu0
    %v9646 = vadd.f32 %v9573, %v9645
    %v9647 = vpop.f32.mrf.mxu0
    %v9648 = vadd.f32 %v9575, %v9647
    %v9649 = vpop.f32.mrf.mxu0
    %v9650 = vadd.f32 %v9577, %v9649
    %9651 = vmatprep.mubr.bf16.mxu0 %v6599
    %9652 = vmatmul.mubr.bf16.gmra.mxu0 %v6598
    %v9653 = vpop.f32.mrf.mxu0
    %v9654 = vadd.f32 %v9581, %v9653
    %v9655 = vpop.f32.mrf.mxu0
    %v9656 = vadd.f32 %v9583, %v9655
    %v9657 = vpop.f32.mrf.mxu0
    %v9658 = vadd.f32 %v9585, %v9657
    %v9659 = vpop.f32.mrf.mxu0
    %v9660 = vadd.f32 %v9587, %v9659
    %9661 = vdwg.mxu0
    %9662 = vmatprep.subr.bf16.mxu0 %v9129
    %9663 = vmatpush1.bf16.msra.mxu0 %v9128
    %9664 = vmatprep.subr.bf16.mxu0 %v9127
    %9665 = vmatpush1.bf16.msra.mxu0 %v9126
    %9666 = vmatprep.subr.bf16.mxu0 %v9125
    %9667 = vmatpush1.bf16.msra.mxu0 %v9124
    %9668 = vmatprep.subr.bf16.mxu0 %v9123
    %9669 = vmatpush1.bf16.msra.mxu0 %v9122
    %9670 = vmatprep.subr.bf16.mxu0 %v9121
    %9671 = vmatpush1.bf16.msra.mxu0 %v9120
    %9672 = vmatprep.subr.bf16.mxu0 %v9119
    %9673 = vmatpush1.bf16.msra.mxu0 %v9118
    %9674 = vmatprep.subr.bf16.mxu0 %v9117
    %9675 = vmatpush1.bf16.msra.mxu0 %v9116
    %9676 = vmatprep.subr.bf16.mxu0 %v9115
    %9677 = vmatpush1.bf16.msra.mxu0 %v9114
    %9678 = vmatprep.subr.bf16.mxu0 %v9145
    %9679 = vmatpush2.bf16.msra.mxu0 %v9144
    %9680 = vmatprep.subr.bf16.mxu0 %v9143
    %9681 = vmatpush2.bf16.msra.mxu0 %v9142
    %9682 = vmatprep.subr.bf16.mxu0 %v9141
    %9683 = vmatpush2.bf16.msra.mxu0 %v9140
    %9684 = vmatprep.subr.bf16.mxu0 %v9139
    %9685 = vmatpush2.bf16.msra.mxu0 %v9138
    %9686 = vmatprep.subr.bf16.mxu0 %v9137
    %9687 = vmatpush2.bf16.msra.mxu0 %v9136
    %9688 = vmatprep.subr.bf16.mxu0 %v9135
    %9689 = vmatpush2.bf16.msra.mxu0 %v9134
    %9690 = vmatprep.subr.bf16.mxu0 %v9133
    %9691 = vmatpush2.bf16.msra.mxu0 %v9132
    %9692 = vmatprep.subr.bf16.mxu0 %v9131
    %9693 = vmatpush2.bf16.msra.mxu0 %v9130
    %9694 = vmatprep.mubr.bf16.mxu0 %v6529
    %9695 = vmatmul.mubr.bf16.gmra.mxu0 %v6528
    %v9696 = vpop.f32.mrf.mxu0
    %v9697 = vadd.f32 %v9624, %v9696
    %v9698 = vpop.f32.mrf.mxu0
    %v9699 = vadd.f32 %v9626, %v9698
    %v9700 = vpop.f32.mrf.mxu0
    %v9701 = vadd.f32 %v9628, %v9700
    %v9702 = vpop.f32.mrf.mxu0
    %v9703 = vadd.f32 %v9630, %v9702
    %9704 = vmatprep.mubr.bf16.mxu0 %v6553
    %9705 = vmatmul.mubr.bf16.gmra.mxu0 %v6552
    %v9706 = vpop.f32.mrf.mxu0
    %v9707 = vadd.f32 %v9634, %v9706
    %v9708 = vpop.f32.mrf.mxu0
    %v9709 = vadd.f32 %v9636, %v9708
    %v9710 = vpop.f32.mrf.mxu0
    %v9711 = vadd.f32 %v9638, %v9710
    %v9712 = vpop.f32.mrf.mxu0
    %v9713 = vadd.f32 %v9640, %v9712
    %9714 = vmatprep.mubr.bf16.mxu0 %v6577
    %9715 = vmatmul.mubr.bf16.gmra.mxu0 %v6576
    %v9716 = vpop.f32.mrf.mxu0
    %v9717 = vadd.f32 %v9644, %v9716
    %v9718 = vpop.f32.mrf.mxu0
    %v9719 = vadd.f32 %v9646, %v9718
    %v9720 = vpop.f32.mrf.mxu0
    %v9721 = vadd.f32 %v9648, %v9720
    %v9722 = vpop.f32.mrf.mxu0
    %v9723 = vadd.f32 %v9650, %v9722
    %9724 = vmatprep.mubr.bf16.mxu0 %v6601
    %9725 = vmatmul.mubr.bf16.gmra.mxu0 %v6600
    %v9726 = vpop.f32.mrf.mxu0
    %v9727 = vadd.f32 %v9654, %v9726
    %v9728 = vpop.f32.mrf.mxu0
    %v9729 = vadd.f32 %v9656, %v9728
    %v9730 = vpop.f32.mrf.mxu0
    %v9731 = vadd.f32 %v9658, %v9730
    %v9732 = vpop.f32.mrf.mxu0
    %v9733 = vadd.f32 %v9660, %v9732
    %9734 = vdwg.mxu0
    %9735 = vmatprep.subr.bf16.mxu0 %v9161
    %9736 = vmatpush1.bf16.msra.mxu0 %v9160
    %9737 = vmatprep.subr.bf16.mxu0 %v9159
    %9738 = vmatpush1.bf16.msra.mxu0 %v9158
    %9739 = vmatprep.subr.bf16.mxu0 %v9157
    %9740 = vmatpush1.bf16.msra.mxu0 %v9156
    %9741 = vmatprep.subr.bf16.mxu0 %v9155
    %9742 = vmatpush1.bf16.msra.mxu0 %v9154
    %9743 = vmatprep.subr.bf16.mxu0 %v9153
    %9744 = vmatpush1.bf16.msra.mxu0 %v9152
    %9745 = vmatprep.subr.bf16.mxu0 %v9151
    %9746 = vmatpush1.bf16.msra.mxu0 %v9150
    %9747 = vmatprep.subr.bf16.mxu0 %v9149
    %9748 = vmatpush1.bf16.msra.mxu0 %v9148
    %9749 = vmatprep.subr.bf16.mxu0 %v9147
    %9750 = vmatpush1.bf16.msra.mxu0 %v9146
    %9751 = vmatprep.subr.bf16.mxu0 %v9177
    %9752 = vmatpush2.bf16.msra.mxu0 %v9176
    %9753 = vmatprep.subr.bf16.mxu0 %v9175
    %9754 = vmatpush2.bf16.msra.mxu0 %v9174
    %9755 = vmatprep.subr.bf16.mxu0 %v9173
    %9756 = vmatpush2.bf16.msra.mxu0 %v9172
    %9757 = vmatprep.subr.bf16.mxu0 %v9171
    %9758 = vmatpush2.bf16.msra.mxu0 %v9170
    %9759 = vmatprep.subr.bf16.mxu0 %v9169
    %9760 = vmatpush2.bf16.msra.mxu0 %v9168
    %9761 = vmatprep.subr.bf16.mxu0 %v9167
    %9762 = vmatpush2.bf16.msra.mxu0 %v9166
    %9763 = vmatprep.subr.bf16.mxu0 %v9165
    %9764 = vmatpush2.bf16.msra.mxu0 %v9164
    %9765 = vmatprep.subr.bf16.mxu0 %v9163
    %9766 = vmatpush2.bf16.msra.mxu0 %v9162
    %9767 = vmatprep.mubr.bf16.mxu0 %v6531
    %9768 = vmatmul.mubr.bf16.gmra.mxu0 %v6530
    %v9769 = vpop.f32.mrf.mxu0
    %v9770 = vadd.f32 %v9697, %v9769
    %v9771 = vpop.f32.mrf.mxu0
    %v9772 = vadd.f32 %v9699, %v9771
    %v9773 = vpop.f32.mrf.mxu0
    %v9774 = vadd.f32 %v9701, %v9773
    %v9775 = vpop.f32.mrf.mxu0
    %v9776 = vadd.f32 %v9703, %v9775
    %9777 = vmatprep.mubr.bf16.mxu0 %v6555
    %9778 = vmatmul.mubr.bf16.gmra.mxu0 %v6554
    %v9779 = vpop.f32.mrf.mxu0
    %v9780 = vadd.f32 %v9707, %v9779
    %v9781 = vpop.f32.mrf.mxu0
    %v9782 = vadd.f32 %v9709, %v9781
    %v9783 = vpop.f32.mrf.mxu0
    %v9784 = vadd.f32 %v9711, %v9783
    %v9785 = vpop.f32.mrf.mxu0
    %v9786 = vadd.f32 %v9713, %v9785
    %9787 = vmatprep.mubr.bf16.mxu0 %v6579
    %9788 = vmatmul.mubr.bf16.gmra.mxu0 %v6578
    %v9789 = vpop.f32.mrf.mxu0
    %v9790 = vadd.f32 %v9717, %v9789
    %v9791 = vpop.f32.mrf.mxu0
    %v9792 = vadd.f32 %v9719, %v9791
    %v9793 = vpop.f32.mrf.mxu0
    %v9794 = vadd.f32 %v9721, %v9793
    %v9795 = vpop.f32.mrf.mxu0
    %v9796 = vadd.f32 %v9723, %v9795
    %9797 = vmatprep.mubr.bf16.mxu0 %v6603
    %9798 = vmatmul.mubr.bf16.gmra.mxu0 %v6602
    %v9799 = vpop.f32.mrf.mxu0
    %v9800 = vadd.f32 %v9727, %v9799
    %v9801 = vpop.f32.mrf.mxu0
    %v9802 = vadd.f32 %v9729, %v9801
    %v9803 = vpop.f32.mrf.mxu0
    %v9804 = vadd.f32 %v9731, %v9803
    %v9805 = vpop.f32.mrf.mxu0
    %v9806 = vadd.f32 %v9733, %v9805
    %9807 = vdwg.mxu0
    %s9808 = sld [smem:[#allocation2]]
    %v9809 = vstv %s9808
    %v9810 = vmul.f32 %v8168, %v9809
    %v9811 = vmul.f32 %v8170, %v9809
    %v9812 = vmul.f32 %v8172, %v9809
    %v9813 = vmul.f32 %v8174, %v9809
    %v9814 = vmul.f32 %v8178, %v9809
    %v9815 = vmul.f32 %v8180, %v9809
    %v9816 = vmul.f32 %v8182, %v9809
    %v9817 = vmul.f32 %v8184, %v9809
    %v9818 = vmul.f32 %v8188, %v9809
    %v9819 = vmul.f32 %v8190, %v9809
    %v9820 = vmul.f32 %v8192, %v9809
    %v9821 = vmul.f32 %v8194, %v9809
    %v9822 = vmul.f32 %v8198, %v9809
    %v9823 = vmul.f32 %v8200, %v9809
    %v9824 = vmul.f32 %v8202, %v9809
    %v9825 = vmul.f32 %v8204, %v9809
    %9826 = vst [vmem:[#allocation16] sm:$0xff] %v9810
    %9827 = vst [vmem:[#allocation16 + $0x8] sm:$0xff] %v9811
    %9828 = vst [vmem:[#allocation16 + $0x10] sm:$0xff] %v9812
    %9829 = vst [vmem:[#allocation16 + $0x18] sm:$0xff] %v9813
    %9830 = vst [vmem:[#allocation16 + $0x20] sm:$0xff] %v9814
    %9831 = vst [vmem:[#allocation16 + $0x28] sm:$0xff] %v9815
    %9832 = vst [vmem:[#allocation16 + $0x30] sm:$0xff] %v9816
    %9833 = vst [vmem:[#allocation16 + $0x38] sm:$0xff] %v9817
    %9834 = vst [vmem:[#allocation16 + $0x40] sm:$0xff] %v9818
    %9835 = vst [vmem:[#allocation16 + $0x48] sm:$0xff] %v9819
    %9836 = vst [vmem:[#allocation16 + $0x50] sm:$0xff] %v9820
    %9837 = vst [vmem:[#allocation16 + $0x58] sm:$0xff] %v9821
    %9838 = vst [vmem:[#allocation16 + $0x60] sm:$0xff] %v9822
    %9839 = vst [vmem:[#allocation16 + $0x68] sm:$0xff] %v9823
    %9840 = vst [vmem:[#allocation16 + $0x70] sm:$0xff] %v9824
    %9841 = vst [vmem:[#allocation16 + $0x78] sm:$0xff] %v9825
    %v9842 = vmul.f32 %v9770, %v9809
    %v9843 = vmul.f32 %v9772, %v9809
    %v9844 = vmul.f32 %v9774, %v9809
    %v9845 = vmul.f32 %v9776, %v9809
    %v9846 = vmul.f32 %v9780, %v9809
    %v9847 = vmul.f32 %v9782, %v9809
    %v9848 = vmul.f32 %v9784, %v9809
    %v9849 = vmul.f32 %v9786, %v9809
    %v9850 = vmul.f32 %v9790, %v9809
    %v9851 = vmul.f32 %v9792, %v9809
    %v9852 = vmul.f32 %v9794, %v9809
    %v9853 = vmul.f32 %v9796, %v9809
    %v9854 = vmul.f32 %v9800, %v9809
    %v9855 = vmul.f32 %v9802, %v9809
    %v9856 = vmul.f32 %v9804, %v9809
    %v9857 = vmul.f32 %v9806, %v9809
    %9858 = vst [vmem:[#allocation17] sm:$0xff] %v9842
    %9859 = vst [vmem:[#allocation17 + $0x8] sm:$0xff] %v9843
    %9860 = vst [vmem:[#allocation17 + $0x10] sm:$0xff] %v9844
    %9861 = vst [vmem:[#allocation17 + $0x18] sm:$0xff] %v9845
    %9862 = vst [vmem:[#allocation17 + $0x20] sm:$0xff] %v9846
    %9863 = vst [vmem:[#allocation17 + $0x28] sm:$0xff] %v9847
    %9864 = vst [vmem:[#allocation17 + $0x30] sm:$0xff] %v9848
    %9865 = vst [vmem:[#allocation17 + $0x38] sm:$0xff] %v9849
    %9866 = vst [vmem:[#allocation17 + $0x40] sm:$0xff] %v9850
    %9867 = vst [vmem:[#allocation17 + $0x48] sm:$0xff] %v9851
    %9868 = vst [vmem:[#allocation17 + $0x50] sm:$0xff] %v9852
    %9869 = vst [vmem:[#allocation17 + $0x58] sm:$0xff] %v9853
    %9870 = vst [vmem:[#allocation17 + $0x60] sm:$0xff] %v9854
    %9871 = vst [vmem:[#allocation17 + $0x68] sm:$0xff] %v9855
    %9872 = vst [vmem:[#allocation17 + $0x70] sm:$0xff] %v9856
    %9873 = vst [vmem:[#allocation17 + $0x78] sm:$0xff] %v9857
    %s9874 = sld [smem:[#allocation2 + $0x1]]
    %v9875 = vstv %s9874
    %v9876 = vmul.f32 %v8168, %v9875
    %v9877 = vmul.f32 %v8170, %v9875
    %v9878 = vmul.f32 %v8172, %v9875
    %v9879 = vmul.f32 %v8174, %v9875
    %v9880 = vmul.f32 %v8178, %v9875
    %v9881 = vmul.f32 %v8180, %v9875
    %v9882 = vmul.f32 %v8182, %v9875
    %v9883 = vmul.f32 %v8184, %v9875
    %v9884 = vmul.f32 %v8188, %v9875
    %v9885 = vmul.f32 %v8190, %v9875
    %v9886 = vmul.f32 %v8192, %v9875
    %v9887 = vmul.f32 %v8194, %v9875
    %v9888 = vmul.f32 %v8198, %v9875
    %v9889 = vmul.f32 %v8200, %v9875
    %v9890 = vmul.f32 %v8202, %v9875
    %v9891 = vmul.f32 %v8204, %v9875
    %s9892 = scalar_lea.vmem [#allocation16], 128
    %9893 = vst [vmem:[%s9892] sm:$0xff] %v9876
    %9894 = vst [vmem:[%s9892 + $0x8] sm:$0xff] %v9877
    %9895 = vst [vmem:[%s9892 + $0x10] sm:$0xff] %v9878
    %9896 = vst [vmem:[%s9892 + $0x18] sm:$0xff] %v9879
    %9897 = vst [vmem:[%s9892 + $0x20] sm:$0xff] %v9880
    %9898 = vst [vmem:[%s9892 + $0x28] sm:$0xff] %v9881
    %9899 = vst [vmem:[%s9892 + $0x30] sm:$0xff] %v9882
    %9900 = vst [vmem:[%s9892 + $0x38] sm:$0xff] %v9883
    %9901 = vst [vmem:[%s9892 + $0x40] sm:$0xff] %v9884
    %9902 = vst [vmem:[%s9892 + $0x48] sm:$0xff] %v9885
    %9903 = vst [vmem:[%s9892 + $0x50] sm:$0xff] %v9886
    %9904 = vst [vmem:[%s9892 + $0x58] sm:$0xff] %v9887
    %9905 = vst [vmem:[%s9892 + $0x60] sm:$0xff] %v9888
    %9906 = vst [vmem:[%s9892 + $0x68] sm:$0xff] %v9889
    %9907 = vst [vmem:[%s9892 + $0x70] sm:$0xff] %v9890
    %9908 = vst [vmem:[%s9892 + $0x78] sm:$0xff] %v9891
    %v9909 = vmul.f32 %v9770, %v9875
    %v9910 = vmul.f32 %v9772, %v9875
    %v9911 = vmul.f32 %v9774, %v9875
    %v9912 = vmul.f32 %v9776, %v9875
    %v9913 = vmul.f32 %v9780, %v9875
    %v9914 = vmul.f32 %v9782, %v9875
    %v9915 = vmul.f32 %v9784, %v9875
    %v9916 = vmul.f32 %v9786, %v9875
    %v9917 = vmul.f32 %v9790, %v9875
    %v9918 = vmul.f32 %v9792, %v9875
    %v9919 = vmul.f32 %v9794, %v9875
    %v9920 = vmul.f32 %v9796, %v9875
    %v9921 = vmul.f32 %v9800, %v9875
    %v9922 = vmul.f32 %v9802, %v9875
    %v9923 = vmul.f32 %v9804, %v9875
    %v9924 = vmul.f32 %v9806, %v9875
    %s9925 = scalar_lea.vmem [#allocation17], 128
    %9926 = vst [vmem:[%s9925] sm:$0xff] %v9909
    %9927 = vst [vmem:[%s9925 + $0x8] sm:$0xff] %v9910
    %9928 = vst [vmem:[%s9925 + $0x10] sm:$0xff] %v9911
    %9929 = vst [vmem:[%s9925 + $0x18] sm:$0xff] %v9912
    %9930 = vst [vmem:[%s9925 + $0x20] sm:$0xff] %v9913
    %9931 = vst [vmem:[%s9925 + $0x28] sm:$0xff] %v9914
    %9932 = vst [vmem:[%s9925 + $0x30] sm:$0xff] %v9915
    %9933 = vst [vmem:[%s9925 + $0x38] sm:$0xff] %v9916
    %9934 = vst [vmem:[%s9925 + $0x40] sm:$0xff] %v9917
    %9935 = vst [vmem:[%s9925 + $0x48] sm:$0xff] %v9918
    %9936 = vst [vmem:[%s9925 + $0x50] sm:$0xff] %v9919
    %9937 = vst [vmem:[%s9925 + $0x58] sm:$0xff] %v9920
    %9938 = vst [vmem:[%s9925 + $0x60] sm:$0xff] %v9921
    %9939 = vst [vmem:[%s9925 + $0x68] sm:$0xff] %v9922
    %9940 = vst [vmem:[%s9925 + $0x70] sm:$0xff] %v9923
    %9941 = vst [vmem:[%s9925 + $0x78] sm:$0xff] %v9924
    %s9942 = sld [smem:[#allocation2 + $0x2]]
    %v9943 = vstv %s9942
    %v9944 = vmul.f32 %v8168, %v9943
    %v9945 = vmul.f32 %v8170, %v9943
    %v9946 = vmul.f32 %v8172, %v9943
    %v9947 = vmul.f32 %v8174, %v9943
    %v9948 = vmul.f32 %v8178, %v9943
    %v9949 = vmul.f32 %v8180, %v9943
    %v9950 = vmul.f32 %v8182, %v9943
    %v9951 = vmul.f32 %v8184, %v9943
    %v9952 = vmul.f32 %v8188, %v9943
    %v9953 = vmul.f32 %v8190, %v9943
    %v9954 = vmul.f32 %v8192, %v9943
    %v9955 = vmul.f32 %v8194, %v9943
    %v9956 = vmul.f32 %v8198, %v9943
    %v9957 = vmul.f32 %v8200, %v9943
    %v9958 = vmul.f32 %v8202, %v9943
    %v9959 = vmul.f32 %v8204, %v9943
    %s9960 = scalar_lea.vmem [#allocation16], 256
    %9961 = vst [vmem:[%s9960] sm:$0xff] %v9944
    %9962 = vst [vmem:[%s9960 + $0x8] sm:$0xff] %v9945
    %9963 = vst [vmem:[%s9960 + $0x10] sm:$0xff] %v9946
    %9964 = vst [vmem:[%s9960 + $0x18] sm:$0xff] %v9947
    %9965 = vst [vmem:[%s9960 + $0x20] sm:$0xff] %v9948
    %9966 = vst [vmem:[%s9960 + $0x28] sm:$0xff] %v9949
    %9967 = vst [vmem:[%s9960 + $0x30] sm:$0xff] %v9950
    %9968 = vst [vmem:[%s9960 + $0x38] sm:$0xff] %v9951
    %9969 = vst [vmem:[%s9960 + $0x40] sm:$0xff] %v9952
    %9970 = vst [vmem:[%s9960 + $0x48] sm:$0xff] %v9953
    %9971 = vst [vmem:[%s9960 + $0x50] sm:$0xff] %v9954
    %9972 = vst [vmem:[%s9960 + $0x58] sm:$0xff] %v9955
    %9973 = vst [vmem:[%s9960 + $0x60] sm:$0xff] %v9956
    %9974 = vst [vmem:[%s9960 + $0x68] sm:$0xff] %v9957
    %9975 = vst [vmem:[%s9960 + $0x70] sm:$0xff] %v9958
    %9976 = vst [vmem:[%s9960 + $0x78] sm:$0xff] %v9959
    %v9977 = vmul.f32 %v9770, %v9943
    %v9978 = vmul.f32 %v9772, %v9943
    %v9979 = vmul.f32 %v9774, %v9943
    %v9980 = vmul.f32 %v9776, %v9943
    %v9981 = vmul.f32 %v9780, %v9943
    %v9982 = vmul.f32 %v9782, %v9943
    %v9983 = vmul.f32 %v9784, %v9943
    %v9984 = vmul.f32 %v9786, %v9943
    %v9985 = vmul.f32 %v9790, %v9943
    %v9986 = vmul.f32 %v9792, %v9943
    %v9987 = vmul.f32 %v9794, %v9943
    %v9988 = vmul.f32 %v9796, %v9943
    %v9989 = vmul.f32 %v9800, %v9943
    %v9990 = vmul.f32 %v9802, %v9943
    %v9991 = vmul.f32 %v9804, %v9943
    %v9992 = vmul.f32 %v9806, %v9943
    %s9993 = scalar_lea.vmem [#allocation17], 256
    %9994 = vst [vmem:[%s9993] sm:$0xff] %v9977
    %9995 = vst [vmem:[%s9993 + $0x8] sm:$0xff] %v9978
    %9996 = vst [vmem:[%s9993 + $0x10] sm:$0xff] %v9979
    %9997 = vst [vmem:[%s9993 + $0x18] sm:$0xff] %v9980
    %9998 = vst [vmem:[%s9993 + $0x20] sm:$0xff] %v9981
    %9999 = vst [vmem:[%s9993 + $0x28] sm:$0xff] %v9982
    %10000 = vst [vmem:[%s9993 + $0x30] sm:$0xff] %v9983
    %10001 = vst [vmem:[%s9993 + $0x38] sm:$0xff] %v9984
    %10002 = vst [vmem:[%s9993 + $0x40] sm:$0xff] %v9985
    %10003 = vst [vmem:[%s9993 + $0x48] sm:$0xff] %v9986
    %10004 = vst [vmem:[%s9993 + $0x50] sm:$0xff] %v9987
    %10005 = vst [vmem:[%s9993 + $0x58] sm:$0xff] %v9988
    %10006 = vst [vmem:[%s9993 + $0x60] sm:$0xff] %v9989
    %10007 = vst [vmem:[%s9993 + $0x68] sm:$0xff] %v9990
    %10008 = vst [vmem:[%s9993 + $0x70] sm:$0xff] %v9991
    %10009 = vst [vmem:[%s9993 + $0x78] sm:$0xff] %v9992
    %s10010 = sld [smem:[#allocation2 + $0x3]]
    %v10011 = vstv %s10010
    %v10012 = vmul.f32 %v8168, %v10011
    %v10013 = vmul.f32 %v8170, %v10011
    %v10014 = vmul.f32 %v8172, %v10011
    %v10015 = vmul.f32 %v8174, %v10011
    %v10016 = vmul.f32 %v8178, %v10011
    %v10017 = vmul.f32 %v8180, %v10011
    %v10018 = vmul.f32 %v8182, %v10011
    %v10019 = vmul.f32 %v8184, %v10011
    %v10020 = vmul.f32 %v8188, %v10011
    %v10021 = vmul.f32 %v8190, %v10011
    %v10022 = vmul.f32 %v8192, %v10011
    %v10023 = vmul.f32 %v8194, %v10011
    %v10024 = vmul.f32 %v8198, %v10011
    %v10025 = vmul.f32 %v8200, %v10011
    %v10026 = vmul.f32 %v8202, %v10011
    %v10027 = vmul.f32 %v8204, %v10011
    %s10028 = scalar_lea.vmem [#allocation16], 384
    %10029 = vst [vmem:[%s10028] sm:$0xff] %v10012
    %10030 = vst [vmem:[%s10028 + $0x8] sm:$0xff] %v10013
    %10031 = vst [vmem:[%s10028 + $0x10] sm:$0xff] %v10014
    %10032 = vst [vmem:[%s10028 + $0x18] sm:$0xff] %v10015
    %10033 = vst [vmem:[%s10028 + $0x20] sm:$0xff] %v10016
    %10034 = vst [vmem:[%s10028 + $0x28] sm:$0xff] %v10017
    %10035 = vst [vmem:[%s10028 + $0x30] sm:$0xff] %v10018
    %10036 = vst [vmem:[%s10028 + $0x38] sm:$0xff] %v10019
    %10037 = vst [vmem:[%s10028 + $0x40] sm:$0xff] %v10020
    %10038 = vst [vmem:[%s10028 + $0x48] sm:$0xff] %v10021
    %10039 = vst [vmem:[%s10028 + $0x50] sm:$0xff] %v10022
    %10040 = vst [vmem:[%s10028 + $0x58] sm:$0xff] %v10023
    %10041 = vst [vmem:[%s10028 + $0x60] sm:$0xff] %v10024
    %10042 = vst [vmem:[%s10028 + $0x68] sm:$0xff] %v10025
    %10043 = vst [vmem:[%s10028 + $0x70] sm:$0xff] %v10026
    %10044 = vst [vmem:[%s10028 + $0x78] sm:$0xff] %v10027
    %v10045 = vmul.f32 %v9770, %v10011
    %v10046 = vmul.f32 %v9772, %v10011
    %v10047 = vmul.f32 %v9774, %v10011
    %v10048 = vmul.f32 %v9776, %v10011
    %v10049 = vmul.f32 %v9780, %v10011
    %v10050 = vmul.f32 %v9782, %v10011
    %v10051 = vmul.f32 %v9784, %v10011
    %v10052 = vmul.f32 %v9786, %v10011
    %v10053 = vmul.f32 %v9790, %v10011
    %v10054 = vmul.f32 %v9792, %v10011
    %v10055 = vmul.f32 %v9794, %v10011
    %v10056 = vmul.f32 %v9796, %v10011
    %v10057 = vmul.f32 %v9800, %v10011
    %v10058 = vmul.f32 %v9802, %v10011
    %v10059 = vmul.f32 %v9804, %v10011
    %v10060 = vmul.f32 %v9806, %v10011
    %s10061 = scalar_lea.vmem [#allocation17], 384
    %10062 = vst [vmem:[%s10061] sm:$0xff] %v10045
    %10063 = vst [vmem:[%s10061 + $0x8] sm:$0xff] %v10046
    %10064 = vst [vmem:[%s10061 + $0x10] sm:$0xff] %v10047
    %10065 = vst [vmem:[%s10061 + $0x18] sm:$0xff] %v10048
    %10066 = vst [vmem:[%s10061 + $0x20] sm:$0xff] %v10049
    %10067 = vst [vmem:[%s10061 + $0x28] sm:$0xff] %v10050
    %10068 = vst [vmem:[%s10061 + $0x30] sm:$0xff] %v10051
    %10069 = vst [vmem:[%s10061 + $0x38] sm:$0xff] %v10052
    %10070 = vst [vmem:[%s10061 + $0x40] sm:$0xff] %v10053
    %10071 = vst [vmem:[%s10061 + $0x48] sm:$0xff] %v10054
    %10072 = vst [vmem:[%s10061 + $0x50] sm:$0xff] %v10055
    %10073 = vst [vmem:[%s10061 + $0x58] sm:$0xff] %v10056
    %10074 = vst [vmem:[%s10061 + $0x60] sm:$0xff] %v10057
    %10075 = vst [vmem:[%s10061 + $0x68] sm:$0xff] %v10058
    %10076 = vst [vmem:[%s10061 + $0x70] sm:$0xff] %v10059
    %10077 = vst [vmem:[%s10061 + $0x78] sm:$0xff] %v10060
    // Predicated region
    $region66: #{tpu_custom_call.1} parent=1 // pred_check
      _
    $region67: #{tpu_custom_call.1} parent=1 // pred_check_branch
      %10079 = sbr.rel (0) target = $region69
    $region68: #{tpu_custom_call.1} parent=1 // pred_region
      %s10081 = ssub.s32 8192, 8192
      %10082 = vsyncadd [#allocation4], %s10081
      %s10083 = sshll.u32 [#allocation16], 4
      %s10084 = int_to_ptr.vmem [resolvable:$true] %s10083
      %10089 = dma.vmem_to_hbm [thread:$0]  %s10084, 8192, %s8, [#allocation4], 256, 256, 16
    $region69: #{tpu_custom_call.1} parent=1 // pred_fallthru
      _
    // Predicated region
    $region70: #{tpu_custom_call.1} parent=1 // pred_check
      _
    $region71: #{tpu_custom_call.1} parent=1 // pred_check_branch
      %10091 = sbr.rel (0) target = $region73
    $region72: #{tpu_custom_call.1} parent=1 // pred_region
      %s10093 = ssub.s32 8192, 8192
      %10094 = vsyncadd [#allocation18], %s10093
      %s10095 = sshll.u32 [#allocation17], 4
      %s10096 = int_to_ptr.vmem [resolvable:$true] %s10095
      %10101 = dma.vmem_to_hbm [thread:$0]  %s10096, 8192, %s9, [#allocation18], 256, 256, 16
    $region73: #{tpu_custom_call.1} parent=1 // pred_fallthru
      _
    // Predicated region
    $region74: #{tpu_custom_call.1} parent=1 // pred_check
      _
    $region75: #{tpu_custom_call.1} parent=1 // pred_check_branch
      %10103 = sbr.rel (0) target = $region77
    $region76: #{tpu_custom_call.1} parent=1 // pred_region
      %10104 = dma.done [#allocation4], 8192
    $region77: #{tpu_custom_call.1} parent=1 // pred_fallthru
      _
    // Predicated region
    $region78: #{tpu_custom_call.1} parent=1 // pred_check
      _
    $region79: #{tpu_custom_call.1} parent=1 // pred_check_branch
      %10106 = sbr.rel (0) target = $region81
    $region80: #{tpu_custom_call.1} parent=1 // pred_region
      %10107 = dma.done [#allocation18], 8192
    $region81: #{tpu_custom_call.1} parent=1 // pred_fallthru
      _
    %10108 = vsyncpa [#allocation3], 1
    %10109 = vsyncpa [#allocation8], 1
    %10110 = vsyncpa [#allocation11], 1
    %10111 = vsyncpa [#allocation14], 1
    %10112 = vsyncpa [#allocation4], 1
    %10113 = vsyncpa [#allocation18], 1
    %10114 = vsyncpa [#allocation5], 1

</llo_original>
